<compile_context>
chip_gen: v5e
topology: v5e:2x2
jax: 0.10.0
libtpu: 0.0.40
codegen_flags: <defaults>
</compile_context>

<pallas_src>
import math
import jax
import jax.numpy as jnp
from jax.experimental import pallas as pl
from jax.experimental.pallas import tpu as pltpu

NUM_HIDDEN = 32              # num_hidden
NUM_HEADS = 4                # h in Attention
NUM_LATENT = 32              # num_latent
LN_EPS = 1e-5                # nn.LayerNorm default


# ---------------------------------------------------------------------------
# Fused whole-forward kernel (TB sequences per grid step)
# ---------------------------------------------------------------------------

def _make_kernel(TB, S, DX, DY, H, L, NH):
    DH = H // NH
    ROWS = TB * S
    DIN = DX + DY
    scale = 1.0 / math.sqrt(DH)

    def kernel(x_ref, y_ref, w_ref, v_ref, mu_ref, sigma_ref):
        f32 = jnp.float32

        def vrow(i, width):                       # (1, width) packed vector row
            return v_ref[i:i + 1, :width]

        def wmat(i, width):                       # (H, width) packed weight matrix
            return w_ref[i, :, :width]

        # ---- input_projection(cat([x, y], -1)) ------------------------------
        # The concat never materializes: the tiny (DIN<=3) contraction is done
        # as rank-1 VPU updates against the packed input-projection rows.
        xf = x_ref[...].reshape(ROWS, DX).astype(f32)
        yf = y_ref[...].reshape(ROWS, DY).astype(f32)
        enc = xf[:, 0:1] * vrow(0, H)
        for d in range(1, DX):
            enc = enc + xf[:, d:d + 1] * vrow(d, H)
        for d in range(DY):
            enc = enc + yf[:, d:d + 1] * vrow(DX + d, H)
        enc = enc + vrow(DIN, H)                                     # (ROWS, H)

        # ---- one Attention(num_hidden, h=4) block ----------------------------
        def attention(x_in, wi, vi):
            residual = x_in
            wq, wk, wv = wmat(wi + 0, H), wmat(wi + 1, H), wmat(wi + 2, H)
            wf_res, wf_att = wmat(wi + 3, H), wmat(wi + 4, H)
            bf, lnw, lnb = vrow(vi + 0, H), vrow(vi + 1, H), vrow(vi + 2, H)

            # Dense QKV projections over all TB*S rows (one MXU matmul each).
            q = jnp.dot(x_in, wq, preferred_element_type=f32)
            k = jnp.dot(x_in, wk, preferred_element_type=f32)
            v = jnp.dot(x_in, wv, preferred_element_type=f32)

            # Per-head scaled-dot attention, batched over the TB sequences.
            ctx_heads = []
            for n in range(NH):
                lo = n * DH
                qn = q[:, lo:lo + DH].reshape(TB, S, DH)
                kn = k[:, lo:lo + DH].reshape(TB, S, DH)
                vn = v[:, lo:lo + DH].reshape(TB, S, DH)
                sc = jax.lax.dot_general(
                    qn, kn, (((2,), (2,)), ((0,), (0,))),
                    preferred_element_type=f32) * scale             # (TB, S, S)
                sc = sc - jnp.max(sc, axis=-1, keepdims=True)
                p = jnp.exp(sc)
                attn = p / jnp.sum(p, axis=-1, keepdims=True)
                # TODO(synk): attn_dropout / residual_dropout (p=0.1) are identity (eval mode).
                ctx = jax.lax.dot_general(
                    attn, vn, (((2,), (1,)), ((0,), (0,))),
                    preferred_element_type=f32)                     # (TB, S, DH)
                ctx_heads.append(ctx.reshape(ROWS, DH))
            merged = jnp.concatenate(ctx_heads, axis=-1)             # (ROWS, H), head-major

            # final_linear(cat([residual, result])) without materializing the concat:
            #   cat @ Wf == residual @ Wf[:H] + merged @ Wf[H:]
            out = (jnp.dot(residual, wf_res, preferred_element_type=f32)
                   + jnp.dot(merged, wf_att, preferred_element_type=f32)
                   + bf)
            out = out + residual

            # LayerNorm (biased variance, eps=1e-5 -- matches PyTorch).
            mean = jnp.mean(out, axis=-1, keepdims=True)
            var = jnp.mean((out - mean) ** 2, axis=-1, keepdims=True)
            return ((out - mean) * jax.lax.rsqrt(var + LN_EPS)) * lnw + lnb

        enc = attention(enc, 0, DIN + 1)
        enc = attention(enc, 5, DIN + 4)

        # ---- mean over sequence -> relu(penultimate) -> mu / sigma ------------
        hidden = jnp.mean(enc.reshape(TB, S, H), axis=1)             # (TB, H)
        hidden = (jnp.dot(hidden, wmat(10, H), preferred_element_type=f32)
                  + vrow(DIN + 7, H))
        hidden = jnp.maximum(hidden, 0.0)

        mu = (jnp.dot(hidden, wmat(11, L), preferred_element_type=f32)
              + vrow(DIN + 8, L))                                    # (TB, L)
        ls = (jnp.dot(hidden, wmat(12, L), preferred_element_type=f32)
              + vrow(DIN + 9, L))
        sigma = 0.1 + 0.9 / (1.0 + jnp.exp(-ls))

        mu_ref[0] = mu.astype(mu_ref.dtype)
        sigma_ref[0] = sigma.astype(sigma_ref.dtype)

    return kernel


# ---------------------------------------------------------------------------
# Host-side wrapper: weight packing + single pallas_call
# ---------------------------------------------------------------------------

def _choose_tb(batch, seq):
    """~128-256 matmul rows per grid step while keeping >=2 'parallel' steps."""
    target = max(1, 256 // max(seq, 1))
    divisors = [d for d in range(1, batch + 1) if batch % d == 0]
    cands = [d for d in divisors if d <= target and batch // d >= 2]
    if not cands:
        cands = [d for d in divisors if batch // d >= 2]
    if not cands:
        cands = divisors
    return max(cands)


def latent_encoder(x, y, params):
    """LatentEncoder forward. Returns (mu, sigma) of the Normal distribution."""
    B, S, DX = x.shape
    DY = y.shape[-1]
    H = params["input_w"].shape[1]
    L = params["mu_w"].shape[1]
    DIN = DX + DY
    WMAX = max(H, L)

    def pad_mat(w):
        return w if w.shape[1] == WMAX else jnp.pad(w, ((0, 0), (0, WMAX - w.shape[1])))

    def pad_vec(v):
        v = v.reshape(1, -1)
        return v if v.shape[1] == WMAX else jnp.pad(v, ((0, 0), (0, WMAX - v.shape[1])))

    # Pack every (H, *) weight into one slab and every H/L-wide vector
    # (input-projection rows, biases, LayerNorm params) into another slab.
    mats = []
    for p in params["attn"]:
        mats += [p["wq"], p["wk"], p["wv"], p["wf"][:H], p["wf"][H:]]
    mats += [params["pen_w"], params["mu_w"], params["ls_w"]]
    w_pack = jnp.stack([pad_mat(m) for m in mats])                   # (13, H, WMAX)

    vecs = [params["input_w"][d] for d in range(DIN)] + [params["input_b"]]
    for p in params["attn"]:
        vecs += [p["bf"], p["ln_w"], p["ln_b"]]
    vecs += [params["pen_b"], params["mu_b"], params["ls_b"]]
    v_pack = jnp.concatenate([pad_vec(v) for v in vecs], axis=0)     # (DIN+10, WMAX)

    TB = _choose_tb(B, S)
    nb = B // TB
    kernel = _make_kernel(TB, S, DX, DY, H, L, NUM_HEADS)

    flops = int(B * S * (2 * DIN * H + 20 * H * H + 8 * S * H)
                + B * (2 * H * H + 4 * H * L))
    transcendentals = int(B * S * 2 * NUM_HEADS * S + 2 * B * S + B * L)
    bytes_accessed = int(4 * (B * S * (DX + DY) + 2 * B * L
                              + w_pack.size + v_pack.size))

    mu, sigma = pl.pallas_call(
        kernel,
        grid=(nb,),
        out_shape=(jax.ShapeDtypeStruct((nb, TB, L), jnp.float32),
                   jax.ShapeDtypeStruct((nb, TB, L), jnp.float32)),
        in_specs=[
            pl.BlockSpec((TB, S, DX), lambda b: (b, 0, 0)),
            pl.BlockSpec((TB, S, DY), lambda b: (b, 0, 0)),
            pl.BlockSpec(w_pack.shape, lambda b: (0, 0, 0)),
            pl.BlockSpec(v_pack.shape, lambda b: (0, 0)),
        ],
        out_specs=(pl.BlockSpec((1, TB, L), lambda b: (b, 0, 0)),
                   pl.BlockSpec((1, TB, L), lambda b: (b, 0, 0))),
        compiler_params=pltpu.CompilerParams(dimension_semantics=("parallel",)),
        cost_estimate=pl.CostEstimate(flops=flops,
                                      transcendentals=transcendentals,
                                      bytes_accessed=bytes_accessed),
    )(x, y, w_pack, v_pack)
    return mu.reshape(B, L), sigma.reshape(B, L)


# ---------------------------------------------------------------------------
# Parameter construction (PyTorch-default-like init, weights stored (in, out))
# ---------------------------------------------------------------------------

def _xavier(key, in_dim, out_dim, gain=1.0):
    bound = gain * math.sqrt(6.0 / (in_dim + out_dim))
    return jax.random.uniform(key, (in_dim, out_dim), jnp.float32, -bound, bound)


def _bias(key, in_dim, out_dim):
    bound = 1.0 / math.sqrt(in_dim)
    return jax.random.uniform(key, (out_dim,), jnp.float32, -bound, bound)


def _attn_params(key, H):
    ks = jax.random.split(key, 5)
    return {
        "wq": _xavier(ks[0], H, H),
        "wk": _xavier(ks[1], H, H),
        "wv": _xavier(ks[2], H, H),
        "wf": _xavier(ks[3], 2 * H, H),
        "bf": _bias(ks[4], 2 * H, H),
        "ln_w": jnp.ones((H,), jnp.float32),
        "ln_b": jnp.zeros((H,), jnp.float32),
    }


def init_latent_encoder_params(key, num_hidden=NUM_HIDDEN,
                               num_latent=NUM_LATENT, input_dim=3):
    keys = jax.random.split(key, 12)
    ki = iter(keys)
    H, L = num_hidden, num_latent
    return {
        "input_w": _xavier(next(ki), input_dim, H),
        "input_b": _bias(next(ki), input_dim, H),
        "attn": [_attn_params(next(ki), H) for _ in range(2)],
        "pen_w": _xavier(next(ki), H, H, gain=math.sqrt(2.0)),      # w_init='relu'
        "pen_b": _bias(next(ki), H, H),
        "mu_w": _xavier(next(ki), H, L),
        "mu_b": _bias(next(ki), H, L),
        "ls_w": _xavier(next(ki), H, L),
        "ls_b": _bias(next(ki), H, L),
    }


if __name__ == "__main__":
    B, S, DX, DY = 16, 8, 2, 1           # x: (B,S,2), y: (B,S,1) -> input_dim = 3
    root = jax.random.PRNGKey(0)
    k_params, k_x, k_y = jax.random.split(root, 3)

    params = init_latent_encoder_params(k_params, input_dim=DX + DY)
    x = jax.random.normal(k_x, (B, S, DX), jnp.float32)
    y = jax.random.normal(k_y, (B, S, DY), jnp.float32)

    fwd = jax.jit(latent_encoder)
    mu, sigma = jax.block_until_ready(fwd(x, y, params))

    assert mu.shape == (B, NUM_LATENT), mu.shape
    assert sigma.shape == (B, NUM_LATENT), sigma.shape
    assert bool(jnp.all(jnp.isfinite(mu)))
    assert bool(jnp.all((sigma > 0.1) & (sigma < 1.0)))
    print("KERNEL_OK")
</pallas_src>

<mosaic_0001>
module attributes {stable_mosaic.version = 11 : i64} {
  func.func @kernel(%arg0: i32, %arg1: memref<8x8x2xf32, #tpu.memory_space<vmem>>, %arg2: memref<8x8x1xf32, #tpu.memory_space<vmem>>, %arg3: memref<13x32x32xf32, #tpu.memory_space<vmem>>, %arg4: memref<13x32xf32, #tpu.memory_space<vmem>>, %arg5: memref<1x8x32xf32, #tpu.memory_space<vmem>>, %arg6: memref<1x8x32xf32, #tpu.memory_space<vmem>>) attributes {dimension_semantics = [#tpu.dimension_semantics<parallel>], iteration_bounds = array<i64: 2>, scalar_prefetch = 0 : i64, scratch_operands = 0 : i64, tpu.core_type = #tpu.core_type<tc>, window_params = [{transform_indices = @transform_0, window_bounds = array<i64: 8, 8, 2>}, {transform_indices = @transform_1, window_bounds = array<i64: 8, 8, 1>}, {pipeline_mode = #tpu.pipeline_mode<synchronous>, transform_indices = @transform_2, window_bounds = array<i64: 13, 32, 32>}, {pipeline_mode = #tpu.pipeline_mode<synchronous>, transform_indices = @transform_3, window_bounds = array<i64: 13, 32>}, {transform_indices = @transform_4, window_bounds = array<i64: 1, 8, 32>}, {transform_indices = @transform_5, window_bounds = array<i64: 1, 8, 32>}]} {
    %c0 = arith.constant 0 : index
    %c0_0 = arith.constant 0 : index
    %c0_1 = arith.constant 0 : index
    %0 = vector.load %arg1[%c0, %c0_0, %c0_1] : memref<8x8x2xf32, #tpu.memory_space<vmem>>, vector<8x8x2xf32>
    %1 = vector.shape_cast %0 : vector<8x8x2xf32> to vector<64x2xf32>
    %c0_2 = arith.constant 0 : index
    %c0_3 = arith.constant 0 : index
    %c0_4 = arith.constant 0 : index
    %2 = vector.load %arg2[%c0_2, %c0_3, %c0_4] : memref<8x8x1xf32, #tpu.memory_space<vmem>>, vector<8x8x1xf32>
    %3 = vector.shape_cast %2 : vector<8x8x1xf32> to vector<64x1xf32>
    %4 = vector.extract_strided_slice %1 {offsets = [0, 0], sizes = [64, 1], strides = [1, 1]} : vector<64x2xf32> to vector<64x1xf32>
    %c0_5 = arith.constant 0 : index
    %c0_6 = arith.constant 0 : index
    %5 = vector.load %arg4[%c0_5, %c0_6] : memref<13x32xf32, #tpu.memory_space<vmem>>, vector<1x32xf32>
    %6 = vector.broadcast %4 : vector<64x1xf32> to vector<64x32xf32>
    %7 = vector.broadcast %5 : vector<1x32xf32> to vector<64x32xf32>
    %8 = arith.mulf %6, %7 : vector<64x32xf32>
    %9 = vector.extract_strided_slice %1 {offsets = [0, 1], sizes = [64, 1], strides = [1, 1]} : vector<64x2xf32> to vector<64x1xf32>
    %c1 = arith.constant 1 : index
    %c0_7 = arith.constant 0 : index
    %10 = vector.load %arg4[%c1, %c0_7] : memref<13x32xf32, #tpu.memory_space<vmem>>, vector<1x32xf32>
    %11 = vector.broadcast %9 : vector<64x1xf32> to vector<64x32xf32>
    %12 = vector.broadcast %10 : vector<1x32xf32> to vector<64x32xf32>
    %13 = arith.mulf %11, %12 : vector<64x32xf32>
    %14 = arith.addf %8, %13 : vector<64x32xf32>
    %c2 = arith.constant 2 : index
    %c0_8 = arith.constant 0 : index
    %15 = vector.load %arg4[%c2, %c0_8] : memref<13x32xf32, #tpu.memory_space<vmem>>, vector<1x32xf32>
    %16 = vector.broadcast %3 : vector<64x1xf32> to vector<64x32xf32>
    %17 = vector.broadcast %15 : vector<1x32xf32> to vector<64x32xf32>
    %18 = arith.mulf %16, %17 : vector<64x32xf32>
    %19 = arith.addf %14, %18 : vector<64x32xf32>
    %c3 = arith.constant 3 : index
    %c0_9 = arith.constant 0 : index
    %20 = vector.load %arg4[%c3, %c0_9] : memref<13x32xf32, #tpu.memory_space<vmem>>, vector<1x32xf32>
    %21 = vector.broadcast %20 : vector<1x32xf32> to vector<64x32xf32>
    %22 = arith.addf %19, %21 : vector<64x32xf32>
    %c0_10 = arith.constant 0 : index
    %c0_11 = arith.constant 0 : index
    %c0_12 = arith.constant 0 : index
    %23 = vector.load %arg3[%c0_10, %c0_11, %c0_12] : memref<13x32x32xf32, #tpu.memory_space<vmem>>, vector<1x32x32xf32>
    %24 = vector.shape_cast %23 : vector<1x32x32xf32> to vector<32x32xf32>
    %c1_13 = arith.constant 1 : index
    %c0_14 = arith.constant 0 : index
    %c0_15 = arith.constant 0 : index
    %25 = vector.load %arg3[%c1_13, %c0_14, %c0_15] : memref<13x32x32xf32, #tpu.memory_space<vmem>>, vector<1x32x32xf32>
    %26 = vector.shape_cast %25 : vector<1x32x32xf32> to vector<32x32xf32>
    %c2_16 = arith.constant 2 : index
    %c0_17 = arith.constant 0 : index
    %c0_18 = arith.constant 0 : index
    %27 = vector.load %arg3[%c2_16, %c0_17, %c0_18] : memref<13x32x32xf32, #tpu.memory_space<vmem>>, vector<1x32x32xf32>
    %28 = vector.shape_cast %27 : vector<1x32x32xf32> to vector<32x32xf32>
    %c3_19 = arith.constant 3 : index
    %c0_20 = arith.constant 0 : index
    %c0_21 = arith.constant 0 : index
    %29 = vector.load %arg3[%c3_19, %c0_20, %c0_21] : memref<13x32x32xf32, #tpu.memory_space<vmem>>, vector<1x32x32xf32>
    %30 = vector.shape_cast %29 : vector<1x32x32xf32> to vector<32x32xf32>
    %c4 = arith.constant 4 : index
    %c0_22 = arith.constant 0 : index
    %c0_23 = arith.constant 0 : index
    %31 = vector.load %arg3[%c4, %c0_22, %c0_23] : memref<13x32x32xf32, #tpu.memory_space<vmem>>, vector<1x32x32xf32>
    %32 = vector.shape_cast %31 : vector<1x32x32xf32> to vector<32x32xf32>
    %c4_24 = arith.constant 4 : index
    %c0_25 = arith.constant 0 : index
    %33 = vector.load %arg4[%c4_24, %c0_25] : memref<13x32xf32, #tpu.memory_space<vmem>>, vector<1x32xf32>
    %c5 = arith.constant 5 : index
    %c0_26 = arith.constant 0 : index
    %34 = vector.load %arg4[%c5, %c0_26] : memref<13x32xf32, #tpu.memory_space<vmem>>, vector<1x32xf32>
    %c6 = arith.constant 6 : index
    %c0_27 = arith.constant 0 : index
    %35 = vector.load %arg4[%c6, %c0_27] : memref<13x32xf32, #tpu.memory_space<vmem>>, vector<1x32xf32>
    %cst = arith.constant dense<0.000000e+00> : vector<64x32xf32>
    %36 = tpu.matmul %22, %24, %cst {dimension_numbers = #tpu.dot_dimension_numbers<[1], [0], [0], [1], [0, 0, 1, 1], [], []>} : vector<64x32xf32>, vector<32x32xf32>, vector<64x32xf32> -> vector<64x32xf32>
    %cst_28 = arith.constant dense<0.000000e+00> : vector<64x32xf32>
    %37 = tpu.matmul %22, %26, %cst_28 {dimension_numbers = #tpu.dot_dimension_numbers<[1], [0], [0], [1], [0, 0, 1, 1], [], []>} : vector<64x32xf32>, vector<32x32xf32>, vector<64x32xf32> -> vector<64x32xf32>
    %cst_29 = arith.constant dense<0.000000e+00> : vector<64x32xf32>
    %38 = tpu.matmul %22, %28, %cst_29 {dimension_numbers = #tpu.dot_dimension_numbers<[1], [0], [0], [1], [0, 0, 1, 1], [], []>} : vector<64x32xf32>, vector<32x32xf32>, vector<64x32xf32> -> vector<64x32xf32>
    %39 = vector.extract_strided_slice %36 {offsets = [0, 0], sizes = [64, 8], strides = [1, 1]} : vector<64x32xf32> to vector<64x8xf32>
    %40 = vector.shape_cast %39 : vector<64x8xf32> to vector<8x8x8xf32>
    %41 = vector.extract_strided_slice %37 {offsets = [0, 0], sizes = [64, 8], strides = [1, 1]} : vector<64x32xf32> to vector<64x8xf32>
    %42 = vector.shape_cast %41 : vector<64x8xf32> to vector<8x8x8xf32>
    %43 = vector.extract_strided_slice %38 {offsets = [0, 0], sizes = [64, 8], strides = [1, 1]} : vector<64x32xf32> to vector<64x8xf32>
    %44 = vector.shape_cast %43 : vector<64x8xf32> to vector<8x8x8xf32>
    %cst_30 = arith.constant dense<0.000000e+00> : vector<8x8x8xf32>
    %45 = tpu.matmul %40, %42, %cst_30 {dimension_numbers = #tpu.dot_dimension_numbers<[2], [2], [1], [1], [0, 0, 0, 1, 1, 1], [0], [0]>} : vector<8x8x8xf32>, vector<8x8x8xf32>, vector<8x8x8xf32> -> vector<8x8x8xf32>
    %cst_31 = arith.constant 0.353553385 : f32
    %46 = vector.broadcast %cst_31 : f32 to vector<8x8x8xf32>
    %47 = arith.mulf %45, %46 : vector<8x8x8xf32>
    %cst_32 = arith.constant dense<0xFF800000> : vector<8x8xf32>
    %48 = vector.multi_reduction <maximumf>, %47, %cst_32 [2] : vector<8x8x8xf32> to vector<8x8xf32>
    %49 = vector.shape_cast %48 : vector<8x8xf32> to vector<8x8x1xf32>
    %50 = vector.broadcast %49 : vector<8x8x1xf32> to vector<8x8x8xf32>
    %51 = arith.subf %47, %50 : vector<8x8x8xf32>
    %52 = math.exp %51 : vector<8x8x8xf32>
    %cst_33 = arith.constant dense<0.000000e+00> : vector<8x8xf32>
    %53 = vector.multi_reduction <add>, %52, %cst_33 [2] : vector<8x8x8xf32> to vector<8x8xf32>
    %54 = vector.shape_cast %53 : vector<8x8xf32> to vector<8x8x1xf32>
    %55 = vector.broadcast %54 : vector<8x8x1xf32> to vector<8x8x8xf32>
    %56 = arith.divf %52, %55 : vector<8x8x8xf32>
    %cst_34 = arith.constant dense<0.000000e+00> : vector<8x8x8xf32>
    %57 = tpu.matmul %56, %44, %cst_34 {dimension_numbers = #tpu.dot_dimension_numbers<[2], [1], [1], [2], [0, 0, 0, 1, 1, 2], [0], [0]>} : vector<8x8x8xf32>, vector<8x8x8xf32>, vector<8x8x8xf32> -> vector<8x8x8xf32>
    %58 = vector.shape_cast %57 : vector<8x8x8xf32> to vector<64x8xf32>
    %59 = vector.extract_strided_slice %36 {offsets = [0, 8], sizes = [64, 8], strides = [1, 1]} : vector<64x32xf32> to vector<64x8xf32>
    %60 = vector.shape_cast %59 : vector<64x8xf32> to vector<8x8x8xf32>
    %61 = vector.extract_strided_slice %37 {offsets = [0, 8], sizes = [64, 8], strides = [1, 1]} : vector<64x32xf32> to vector<64x8xf32>
    %62 = vector.shape_cast %61 : vector<64x8xf32> to vector<8x8x8xf32>
    %63 = vector.extract_strided_slice %38 {offsets = [0, 8], sizes = [64, 8], strides = [1, 1]} : vector<64x32xf32> to vector<64x8xf32>
    %64 = vector.shape_cast %63 : vector<64x8xf32> to vector<8x8x8xf32>
    %cst_35 = arith.constant dense<0.000000e+00> : vector<8x8x8xf32>
    %65 = tpu.matmul %60, %62, %cst_35 {dimension_numbers = #tpu.dot_dimension_numbers<[2], [2], [1], [1], [0, 0, 0, 1, 1, 1], [0], [0]>} : vector<8x8x8xf32>, vector<8x8x8xf32>, vector<8x8x8xf32> -> vector<8x8x8xf32>
    %cst_36 = arith.constant 0.353553385 : f32
    %66 = vector.broadcast %cst_36 : f32 to vector<8x8x8xf32>
    %67 = arith.mulf %65, %66 : vector<8x8x8xf32>
    %cst_37 = arith.constant dense<0xFF800000> : vector<8x8xf32>
    %68 = vector.multi_reduction <maximumf>, %67, %cst_37 [2] : vector<8x8x8xf32> to vector<8x8xf32>
    %69 = vector.shape_cast %68 : vector<8x8xf32> to vector<8x8x1xf32>
    %70 = vector.broadcast %69 : vector<8x8x1xf32> to vector<8x8x8xf32>
    %71 = arith.subf %67, %70 : vector<8x8x8xf32>
    %72 = math.exp %71 : vector<8x8x8xf32>
    %cst_38 = arith.constant dense<0.000000e+00> : vector<8x8xf32>
    %73 = vector.multi_reduction <add>, %72, %cst_38 [2] : vector<8x8x8xf32> to vector<8x8xf32>
    %74 = vector.shape_cast %73 : vector<8x8xf32> to vector<8x8x1xf32>
    %75 = vector.broadcast %74 : vector<8x8x1xf32> to vector<8x8x8xf32>
    %76 = arith.divf %72, %75 : vector<8x8x8xf32>
    %cst_39 = arith.constant dense<0.000000e+00> : vector<8x8x8xf32>
    %77 = tpu.matmul %76, %64, %cst_39 {dimension_numbers = #tpu.dot_dimension_numbers<[2], [1], [1], [2], [0, 0, 0, 1, 1, 2], [0], [0]>} : vector<8x8x8xf32>, vector<8x8x8xf32>, vector<8x8x8xf32> -> vector<8x8x8xf32>
    %78 = vector.shape_cast %77 : vector<8x8x8xf32> to vector<64x8xf32>
    %79 = vector.extract_strided_slice %36 {offsets = [0, 16], sizes = [64, 8], strides = [1, 1]} : vector<64x32xf32> to vector<64x8xf32>
    %80 = vector.shape_cast %79 : vector<64x8xf32> to vector<8x8x8xf32>
    %81 = vector.extract_strided_slice %37 {offsets = [0, 16], sizes = [64, 8], strides = [1, 1]} : vector<64x32xf32> to vector<64x8xf32>
    %82 = vector.shape_cast %81 : vector<64x8xf32> to vector<8x8x8xf32>
    %83 = vector.extract_strided_slice %38 {offsets = [0, 16], sizes = [64, 8], strides = [1, 1]} : vector<64x32xf32> to vector<64x8xf32>
    %84 = vector.shape_cast %83 : vector<64x8xf32> to vector<8x8x8xf32>
    %cst_40 = arith.constant dense<0.000000e+00> : vector<8x8x8xf32>
    %85 = tpu.matmul %80, %82, %cst_40 {dimension_numbers = #tpu.dot_dimension_numbers<[2], [2], [1], [1], [0, 0, 0, 1, 1, 1], [0], [0]>} : vector<8x8x8xf32>, vector<8x8x8xf32>, vector<8x8x8xf32> -> vector<8x8x8xf32>
    %cst_41 = arith.constant 0.353553385 : f32
    %86 = vector.broadcast %cst_41 : f32 to vector<8x8x8xf32>
    %87 = arith.mulf %85, %86 : vector<8x8x8xf32>
    %cst_42 = arith.constant dense<0xFF800000> : vector<8x8xf32>
    %88 = vector.multi_reduction <maximumf>, %87, %cst_42 [2] : vector<8x8x8xf32> to vector<8x8xf32>
    %89 = vector.shape_cast %88 : vector<8x8xf32> to vector<8x8x1xf32>
    %90 = vector.broadcast %89 : vector<8x8x1xf32> to vector<8x8x8xf32>
    %91 = arith.subf %87, %90 : vector<8x8x8xf32>
    %92 = math.exp %91 : vector<8x8x8xf32>
    %cst_43 = arith.constant dense<0.000000e+00> : vector<8x8xf32>
    %93 = vector.multi_reduction <add>, %92, %cst_43 [2] : vector<8x8x8xf32> to vector<8x8xf32>
    %94 = vector.shape_cast %93 : vector<8x8xf32> to vector<8x8x1xf32>
    %95 = vector.broadcast %94 : vector<8x8x1xf32> to vector<8x8x8xf32>
    %96 = arith.divf %92, %95 : vector<8x8x8xf32>
    %cst_44 = arith.constant dense<0.000000e+00> : vector<8x8x8xf32>
    %97 = tpu.matmul %96, %84, %cst_44 {dimension_numbers = #tpu.dot_dimension_numbers<[2], [1], [1], [2], [0, 0, 0, 1, 1, 2], [0], [0]>} : vector<8x8x8xf32>, vector<8x8x8xf32>, vector<8x8x8xf32> -> vector<8x8x8xf32>
    %98 = vector.shape_cast %97 : vector<8x8x8xf32> to vector<64x8xf32>
    %99 = vector.extract_strided_slice %36 {offsets = [0, 24], sizes = [64, 8], strides = [1, 1]} : vector<64x32xf32> to vector<64x8xf32>
    %100 = vector.shape_cast %99 : vector<64x8xf32> to vector<8x8x8xf32>
    %101 = vector.extract_strided_slice %37 {offsets = [0, 24], sizes = [64, 8], strides = [1, 1]} : vector<64x32xf32> to vector<64x8xf32>
    %102 = vector.shape_cast %101 : vector<64x8xf32> to vector<8x8x8xf32>
    %103 = vector.extract_strided_slice %38 {offsets = [0, 24], sizes = [64, 8], strides = [1, 1]} : vector<64x32xf32> to vector<64x8xf32>
    %104 = vector.shape_cast %103 : vector<64x8xf32> to vector<8x8x8xf32>
    %cst_45 = arith.constant dense<0.000000e+00> : vector<8x8x8xf32>
    %105 = tpu.matmul %100, %102, %cst_45 {dimension_numbers = #tpu.dot_dimension_numbers<[2], [2], [1], [1], [0, 0, 0, 1, 1, 1], [0], [0]>} : vector<8x8x8xf32>, vector<8x8x8xf32>, vector<8x8x8xf32> -> vector<8x8x8xf32>
    %cst_46 = arith.constant 0.353553385 : f32
    %106 = vector.broadcast %cst_46 : f32 to vector<8x8x8xf32>
    %107 = arith.mulf %105, %106 : vector<8x8x8xf32>
    %cst_47 = arith.constant dense<0xFF800000> : vector<8x8xf32>
    %108 = vector.multi_reduction <maximumf>, %107, %cst_47 [2] : vector<8x8x8xf32> to vector<8x8xf32>
    %109 = vector.shape_cast %108 : vector<8x8xf32> to vector<8x8x1xf32>
    %110 = vector.broadcast %109 : vector<8x8x1xf32> to vector<8x8x8xf32>
    %111 = arith.subf %107, %110 : vector<8x8x8xf32>
    %112 = math.exp %111 : vector<8x8x8xf32>
    %cst_48 = arith.constant dense<0.000000e+00> : vector<8x8xf32>
    %113 = vector.multi_reduction <add>, %112, %cst_48 [2] : vector<8x8x8xf32> to vector<8x8xf32>
    %114 = vector.shape_cast %113 : vector<8x8xf32> to vector<8x8x1xf32>
    %115 = vector.broadcast %114 : vector<8x8x1xf32> to vector<8x8x8xf32>
    %116 = arith.divf %112, %115 : vector<8x8x8xf32>
    %cst_49 = arith.constant dense<0.000000e+00> : vector<8x8x8xf32>
    %117 = tpu.matmul %116, %104, %cst_49 {dimension_numbers = #tpu.dot_dimension_numbers<[2], [1], [1], [2], [0, 0, 0, 1, 1, 2], [0], [0]>} : vector<8x8x8xf32>, vector<8x8x8xf32>, vector<8x8x8xf32> -> vector<8x8x8xf32>
    %118 = vector.shape_cast %117 : vector<8x8x8xf32> to vector<64x8xf32>
    %119 = tpu.concatenate %58, %78, %98, %118 in 1 : vector<64x8xf32>, vector<64x8xf32>, vector<64x8xf32>, vector<64x8xf32> -> vector<64x32xf32>
    %cst_50 = arith.constant dense<0.000000e+00> : vector<64x32xf32>
    %120 = tpu.matmul %22, %30, %cst_50 {dimension_numbers = #tpu.dot_dimension_numbers<[1], [0], [0], [1], [0, 0, 1, 1], [], []>} : vector<64x32xf32>, vector<32x32xf32>, vector<64x32xf32> -> vector<64x32xf32>
    %cst_51 = arith.constant dense<0.000000e+00> : vector<64x32xf32>
    %121 = tpu.matmul %119, %32, %cst_51 {dimension_numbers = #tpu.dot_dimension_numbers<[1], [0], [0], [1], [0, 0, 1, 1], [], []>} : vector<64x32xf32>, vector<32x32xf32>, vector<64x32xf32> -> vector<64x32xf32>
    %122 = arith.addf %120, %121 : vector<64x32xf32>
    %123 = vector.broadcast %33 : vector<1x32xf32> to vector<64x32xf32>
    %124 = arith.addf %122, %123 : vector<64x32xf32>
    %125 = arith.addf %124, %22 : vector<64x32xf32>
    %cst_52 = arith.constant dense<0.000000e+00> : vector<64xf32>
    %126 = vector.multi_reduction <add>, %125, %cst_52 [1] : vector<64x32xf32> to vector<64xf32>
    %127 = vector.shape_cast %126 : vector<64xf32> to vector<64x1xf32>
    %cst_53 = arith.constant 3.200000e+01 : f32
    %128 = vector.broadcast %cst_53 : f32 to vector<64x1xf32>
    %129 = arith.divf %127, %128 : vector<64x1xf32>
    %130 = vector.broadcast %129 : vector<64x1xf32> to vector<64x32xf32>
    %131 = arith.subf %125, %130 : vector<64x32xf32>
    %132 = arith.mulf %131, %131 : vector<64x32xf32>
    %cst_54 = arith.constant dense<0.000000e+00> : vector<64xf32>
    %133 = vector.multi_reduction <add>, %132, %cst_54 [1] : vector<64x32xf32> to vector<64xf32>
    %134 = vector.shape_cast %133 : vector<64xf32> to vector<64x1xf32>
    %cst_55 = arith.constant 3.200000e+01 : f32
    %135 = vector.broadcast %cst_55 : f32 to vector<64x1xf32>
    %136 = arith.divf %134, %135 : vector<64x1xf32>
    %137 = vector.broadcast %129 : vector<64x1xf32> to vector<64x32xf32>
    %138 = arith.subf %125, %137 : vector<64x32xf32>
    %cst_56 = arith.constant 9.99999974E-6 : f32
    %139 = vector.broadcast %cst_56 : f32 to vector<64x1xf32>
    %140 = arith.addf %136, %139 : vector<64x1xf32>
    %141 = math.rsqrt %140 : vector<64x1xf32>
    %142 = vector.broadcast %141 : vector<64x1xf32> to vector<64x32xf32>
    %143 = arith.mulf %138, %142 : vector<64x32xf32>
    %144 = vector.broadcast %34 : vector<1x32xf32> to vector<64x32xf32>
    %145 = arith.mulf %143, %144 : vector<64x32xf32>
    %146 = vector.broadcast %35 : vector<1x32xf32> to vector<64x32xf32>
    %147 = arith.addf %145, %146 : vector<64x32xf32>
    %c5_57 = arith.constant 5 : index
    %c0_58 = arith.constant 0 : index
    %c0_59 = arith.constant 0 : index
    %148 = vector.load %arg3[%c5_57, %c0_58, %c0_59] : memref<13x32x32xf32, #tpu.memory_space<vmem>>, vector<1x32x32xf32>
    %149 = vector.shape_cast %148 : vector<1x32x32xf32> to vector<32x32xf32>
    %c6_60 = arith.constant 6 : index
    %c0_61 = arith.constant 0 : index
    %c0_62 = arith.constant 0 : index
    %150 = vector.load %arg3[%c6_60, %c0_61, %c0_62] : memref<13x32x32xf32, #tpu.memory_space<vmem>>, vector<1x32x32xf32>
    %151 = vector.shape_cast %150 : vector<1x32x32xf32> to vector<32x32xf32>
    %c7 = arith.constant 7 : index
    %c0_63 = arith.constant 0 : index
    %c0_64 = arith.constant 0 : index
    %152 = vector.load %arg3[%c7, %c0_63, %c0_64] : memref<13x32x32xf32, #tpu.memory_space<vmem>>, vector<1x32x32xf32>
    %153 = vector.shape_cast %152 : vector<1x32x32xf32> to vector<32x32xf32>
    %c8 = arith.constant 8 : index
    %c0_65 = arith.constant 0 : index
    %c0_66 = arith.constant 0 : index
    %154 = vector.load %arg3[%c8, %c0_65, %c0_66] : memref<13x32x32xf32, #tpu.memory_space<vmem>>, vector<1x32x32xf32>
    %155 = vector.shape_cast %154 : vector<1x32x32xf32> to vector<32x32xf32>
    %c9 = arith.constant 9 : index
    %c0_67 = arith.constant 0 : index
    %c0_68 = arith.constant 0 : index
    %156 = vector.load %arg3[%c9, %c0_67, %c0_68] : memref<13x32x32xf32, #tpu.memory_space<vmem>>, vector<1x32x32xf32>
    %157 = vector.shape_cast %156 : vector<1x32x32xf32> to vector<32x32xf32>
    %c7_69 = arith.constant 7 : index
    %c0_70 = arith.constant 0 : index
    %158 = vector.load %arg4[%c7_69, %c0_70] : memref<13x32xf32, #tpu.memory_space<vmem>>, vector<1x32xf32>
    %c8_71 = arith.constant 8 : index
    %c0_72 = arith.constant 0 : index
    %159 = vector.load %arg4[%c8_71, %c0_72] : memref<13x32xf32, #tpu.memory_space<vmem>>, vector<1x32xf32>
    %c9_73 = arith.constant 9 : index
    %c0_74 = arith.constant 0 : index
    %160 = vector.load %arg4[%c9_73, %c0_74] : memref<13x32xf32, #tpu.memory_space<vmem>>, vector<1x32xf32>
    %cst_75 = arith.constant dense<0.000000e+00> : vector<64x32xf32>
    %161 = tpu.matmul %147, %149, %cst_75 {dimension_numbers = #tpu.dot_dimension_numbers<[1], [0], [0], [1], [0, 0, 1, 1], [], []>} : vector<64x32xf32>, vector<32x32xf32>, vector<64x32xf32> -> vector<64x32xf32>
    %cst_76 = arith.constant dense<0.000000e+00> : vector<64x32xf32>
    %162 = tpu.matmul %147, %151, %cst_76 {dimension_numbers = #tpu.dot_dimension_numbers<[1], [0], [0], [1], [0, 0, 1, 1], [], []>} : vector<64x32xf32>, vector<32x32xf32>, vector<64x32xf32> -> vector<64x32xf32>
    %cst_77 = arith.constant dense<0.000000e+00> : vector<64x32xf32>
    %163 = tpu.matmul %147, %153, %cst_77 {dimension_numbers = #tpu.dot_dimension_numbers<[1], [0], [0], [1], [0, 0, 1, 1], [], []>} : vector<64x32xf32>, vector<32x32xf32>, vector<64x32xf32> -> vector<64x32xf32>
    %164 = vector.extract_strided_slice %161 {offsets = [0, 0], sizes = [64, 8], strides = [1, 1]} : vector<64x32xf32> to vector<64x8xf32>
    %165 = vector.shape_cast %164 : vector<64x8xf32> to vector<8x8x8xf32>
    %166 = vector.extract_strided_slice %162 {offsets = [0, 0], sizes = [64, 8], strides = [1, 1]} : vector<64x32xf32> to vector<64x8xf32>
    %167 = vector.shape_cast %166 : vector<64x8xf32> to vector<8x8x8xf32>
    %168 = vector.extract_strided_slice %163 {offsets = [0, 0], sizes = [64, 8], strides = [1, 1]} : vector<64x32xf32> to vector<64x8xf32>
    %169 = vector.shape_cast %168 : vector<64x8xf32> to vector<8x8x8xf32>
    %cst_78 = arith.constant dense<0.000000e+00> : vector<8x8x8xf32>
    %170 = tpu.matmul %165, %167, %cst_78 {dimension_numbers = #tpu.dot_dimension_numbers<[2], [2], [1], [1], [0, 0, 0, 1, 1, 1], [0], [0]>} : vector<8x8x8xf32>, vector<8x8x8xf32>, vector<8x8x8xf32> -> vector<8x8x8xf32>
    %cst_79 = arith.constant 0.353553385 : f32
    %171 = vector.broadcast %cst_79 : f32 to vector<8x8x8xf32>
    %172 = arith.mulf %170, %171 : vector<8x8x8xf32>
    %cst_80 = arith.constant dense<0xFF800000> : vector<8x8xf32>
    %173 = vector.multi_reduction <maximumf>, %172, %cst_80 [2] : vector<8x8x8xf32> to vector<8x8xf32>
    %174 = vector.shape_cast %173 : vector<8x8xf32> to vector<8x8x1xf32>
    %175 = vector.broadcast %174 : vector<8x8x1xf32> to vector<8x8x8xf32>
    %176 = arith.subf %172, %175 : vector<8x8x8xf32>
    %177 = math.exp %176 : vector<8x8x8xf32>
    %cst_81 = arith.constant dense<0.000000e+00> : vector<8x8xf32>
    %178 = vector.multi_reduction <add>, %177, %cst_81 [2] : vector<8x8x8xf32> to vector<8x8xf32>
    %179 = vector.shape_cast %178 : vector<8x8xf32> to vector<8x8x1xf32>
    %180 = vector.broadcast %179 : vector<8x8x1xf32> to vector<8x8x8xf32>
    %181 = arith.divf %177, %180 : vector<8x8x8xf32>
    %cst_82 = arith.constant dense<0.000000e+00> : vector<8x8x8xf32>
    %182 = tpu.matmul %181, %169, %cst_82 {dimension_numbers = #tpu.dot_dimension_numbers<[2], [1], [1], [2], [0, 0, 0, 1, 1, 2], [0], [0]>} : vector<8x8x8xf32>, vector<8x8x8xf32>, vector<8x8x8xf32> -> vector<8x8x8xf32>
    %183 = vector.shape_cast %182 : vector<8x8x8xf32> to vector<64x8xf32>
    %184 = vector.extract_strided_slice %161 {offsets = [0, 8], sizes = [64, 8], strides = [1, 1]} : vector<64x32xf32> to vector<64x8xf32>
    %185 = vector.shape_cast %184 : vector<64x8xf32> to vector<8x8x8xf32>
    %186 = vector.extract_strided_slice %162 {offsets = [0, 8], sizes = [64, 8], strides = [1, 1]} : vector<64x32xf32> to vector<64x8xf32>
    %187 = vector.shape_cast %186 : vector<64x8xf32> to vector<8x8x8xf32>
    %188 = vector.extract_strided_slice %163 {offsets = [0, 8], sizes = [64, 8], strides = [1, 1]} : vector<64x32xf32> to vector<64x8xf32>
    %189 = vector.shape_cast %188 : vector<64x8xf32> to vector<8x8x8xf32>
    %cst_83 = arith.constant dense<0.000000e+00> : vector<8x8x8xf32>
    %190 = tpu.matmul %185, %187, %cst_83 {dimension_numbers = #tpu.dot_dimension_numbers<[2], [2], [1], [1], [0, 0, 0, 1, 1, 1], [0], [0]>} : vector<8x8x8xf32>, vector<8x8x8xf32>, vector<8x8x8xf32> -> vector<8x8x8xf32>
    %cst_84 = arith.constant 0.353553385 : f32
    %191 = vector.broadcast %cst_84 : f32 to vector<8x8x8xf32>
    %192 = arith.mulf %190, %191 : vector<8x8x8xf32>
    %cst_85 = arith.constant dense<0xFF800000> : vector<8x8xf32>
    %193 = vector.multi_reduction <maximumf>, %192, %cst_85 [2] : vector<8x8x8xf32> to vector<8x8xf32>
    %194 = vector.shape_cast %193 : vector<8x8xf32> to vector<8x8x1xf32>
    %195 = vector.broadcast %194 : vector<8x8x1xf32> to vector<8x8x8xf32>
    %196 = arith.subf %192, %195 : vector<8x8x8xf32>
    %197 = math.exp %196 : vector<8x8x8xf32>
    %cst_86 = arith.constant dense<0.000000e+00> : vector<8x8xf32>
    %198 = vector.multi_reduction <add>, %197, %cst_86 [2] : vector<8x8x8xf32> to vector<8x8xf32>
    %199 = vector.shape_cast %198 : vector<8x8xf32> to vector<8x8x1xf32>
    %200 = vector.broadcast %199 : vector<8x8x1xf32> to vector<8x8x8xf32>
    %201 = arith.divf %197, %200 : vector<8x8x8xf32>
    %cst_87 = arith.constant dense<0.000000e+00> : vector<8x8x8xf32>
    %202 = tpu.matmul %201, %189, %cst_87 {dimension_numbers = #tpu.dot_dimension_numbers<[2], [1], [1], [2], [0, 0, 0, 1, 1, 2], [0], [0]>} : vector<8x8x8xf32>, vector<8x8x8xf32>, vector<8x8x8xf32> -> vector<8x8x8xf32>
    %203 = vector.shape_cast %202 : vector<8x8x8xf32> to vector<64x8xf32>
    %204 = vector.extract_strided_slice %161 {offsets = [0, 16], sizes = [64, 8], strides = [1, 1]} : vector<64x32xf32> to vector<64x8xf32>
    %205 = vector.shape_cast %204 : vector<64x8xf32> to vector<8x8x8xf32>
    %206 = vector.extract_strided_slice %162 {offsets = [0, 16], sizes = [64, 8], strides = [1, 1]} : vector<64x32xf32> to vector<64x8xf32>
    %207 = vector.shape_cast %206 : vector<64x8xf32> to vector<8x8x8xf32>
    %208 = vector.extract_strided_slice %163 {offsets = [0, 16], sizes = [64, 8], strides = [1, 1]} : vector<64x32xf32> to vector<64x8xf32>
    %209 = vector.shape_cast %208 : vector<64x8xf32> to vector<8x8x8xf32>
    %cst_88 = arith.constant dense<0.000000e+00> : vector<8x8x8xf32>
    %210 = tpu.matmul %205, %207, %cst_88 {dimension_numbers = #tpu.dot_dimension_numbers<[2], [2], [1], [1], [0, 0, 0, 1, 1, 1], [0], [0]>} : vector<8x8x8xf32>, vector<8x8x8xf32>, vector<8x8x8xf32> -> vector<8x8x8xf32>
    %cst_89 = arith.constant 0.353553385 : f32
    %211 = vector.broadcast %cst_89 : f32 to vector<8x8x8xf32>
    %212 = arith.mulf %210, %211 : vector<8x8x8xf32>
    %cst_90 = arith.constant dense<0xFF800000> : vector<8x8xf32>
    %213 = vector.multi_reduction <maximumf>, %212, %cst_90 [2] : vector<8x8x8xf32> to vector<8x8xf32>
    %214 = vector.shape_cast %213 : vector<8x8xf32> to vector<8x8x1xf32>
    %215 = vector.broadcast %214 : vector<8x8x1xf32> to vector<8x8x8xf32>
    %216 = arith.subf %212, %215 : vector<8x8x8xf32>
    %217 = math.exp %216 : vector<8x8x8xf32>
    %cst_91 = arith.constant dense<0.000000e+00> : vector<8x8xf32>
    %218 = vector.multi_reduction <add>, %217, %cst_91 [2] : vector<8x8x8xf32> to vector<8x8xf32>
    %219 = vector.shape_cast %218 : vector<8x8xf32> to vector<8x8x1xf32>
    %220 = vector.broadcast %219 : vector<8x8x1xf32> to vector<8x8x8xf32>
    %221 = arith.divf %217, %220 : vector<8x8x8xf32>
    %cst_92 = arith.constant dense<0.000000e+00> : vector<8x8x8xf32>
    %222 = tpu.matmul %221, %209, %cst_92 {dimension_numbers = #tpu.dot_dimension_numbers<[2], [1], [1], [2], [0, 0, 0, 1, 1, 2], [0], [0]>} : vector<8x8x8xf32>, vector<8x8x8xf32>, vector<8x8x8xf32> -> vector<8x8x8xf32>
    %223 = vector.shape_cast %222 : vector<8x8x8xf32> to vector<64x8xf32>
    %224 = vector.extract_strided_slice %161 {offsets = [0, 24], sizes = [64, 8], strides = [1, 1]} : vector<64x32xf32> to vector<64x8xf32>
    %225 = vector.shape_cast %224 : vector<64x8xf32> to vector<8x8x8xf32>
    %226 = vector.extract_strided_slice %162 {offsets = [0, 24], sizes = [64, 8], strides = [1, 1]} : vector<64x32xf32> to vector<64x8xf32>
    %227 = vector.shape_cast %226 : vector<64x8xf32> to vector<8x8x8xf32>
    %228 = vector.extract_strided_slice %163 {offsets = [0, 24], sizes = [64, 8], strides = [1, 1]} : vector<64x32xf32> to vector<64x8xf32>
    %229 = vector.shape_cast %228 : vector<64x8xf32> to vector<8x8x8xf32>
    %cst_93 = arith.constant dense<0.000000e+00> : vector<8x8x8xf32>
    %230 = tpu.matmul %225, %227, %cst_93 {dimension_numbers = #tpu.dot_dimension_numbers<[2], [2], [1], [1], [0, 0, 0, 1, 1, 1], [0], [0]>} : vector<8x8x8xf32>, vector<8x8x8xf32>, vector<8x8x8xf32> -> vector<8x8x8xf32>
    %cst_94 = arith.constant 0.353553385 : f32
    %231 = vector.broadcast %cst_94 : f32 to vector<8x8x8xf32>
    %232 = arith.mulf %230, %231 : vector<8x8x8xf32>
    %cst_95 = arith.constant dense<0xFF800000> : vector<8x8xf32>
    %233 = vector.multi_reduction <maximumf>, %232, %cst_95 [2] : vector<8x8x8xf32> to vector<8x8xf32>
    %234 = vector.shape_cast %233 : vector<8x8xf32> to vector<8x8x1xf32>
    %235 = vector.broadcast %234 : vector<8x8x1xf32> to vector<8x8x8xf32>
    %236 = arith.subf %232, %235 : vector<8x8x8xf32>
    %237 = math.exp %236 : vector<8x8x8xf32>
    %cst_96 = arith.constant dense<0.000000e+00> : vector<8x8xf32>
    %238 = vector.multi_reduction <add>, %237, %cst_96 [2] : vector<8x8x8xf32> to vector<8x8xf32>
    %239 = vector.shape_cast %238 : vector<8x8xf32> to vector<8x8x1xf32>
    %240 = vector.broadcast %239 : vector<8x8x1xf32> to vector<8x8x8xf32>
    %241 = arith.divf %237, %240 : vector<8x8x8xf32>
    %cst_97 = arith.constant dense<0.000000e+00> : vector<8x8x8xf32>
    %242 = tpu.matmul %241, %229, %cst_97 {dimension_numbers = #tpu.dot_dimension_numbers<[2], [1], [1], [2], [0, 0, 0, 1, 1, 2], [0], [0]>} : vector<8x8x8xf32>, vector<8x8x8xf32>, vector<8x8x8xf32> -> vector<8x8x8xf32>
    %243 = vector.shape_cast %242 : vector<8x8x8xf32> to vector<64x8xf32>
    %244 = tpu.concatenate %183, %203, %223, %243 in 1 : vector<64x8xf32>, vector<64x8xf32>, vector<64x8xf32>, vector<64x8xf32> -> vector<64x32xf32>
    %cst_98 = arith.constant dense<0.000000e+00> : vector<64x32xf32>
    %245 = tpu.matmul %147, %155, %cst_98 {dimension_numbers = #tpu.dot_dimension_numbers<[1], [0], [0], [1], [0, 0, 1, 1], [], []>} : vector<64x32xf32>, vector<32x32xf32>, vector<64x32xf32> -> vector<64x32xf32>
    %cst_99 = arith.constant dense<0.000000e+00> : vector<64x32xf32>
    %246 = tpu.matmul %244, %157, %cst_99 {dimension_numbers = #tpu.dot_dimension_numbers<[1], [0], [0], [1], [0, 0, 1, 1], [], []>} : vector<64x32xf32>, vector<32x32xf32>, vector<64x32xf32> -> vector<64x32xf32>
    %247 = arith.addf %245, %246 : vector<64x32xf32>
    %248 = vector.broadcast %158 : vector<1x32xf32> to vector<64x32xf32>
    %249 = arith.addf %247, %248 : vector<64x32xf32>
    %250 = arith.addf %249, %147 : vector<64x32xf32>
    %cst_100 = arith.constant dense<0.000000e+00> : vector<64xf32>
    %251 = vector.multi_reduction <add>, %250, %cst_100 [1] : vector<64x32xf32> to vector<64xf32>
    %252 = vector.shape_cast %251 : vector<64xf32> to vector<64x1xf32>
    %cst_101 = arith.constant 3.200000e+01 : f32
    %253 = vector.broadcast %cst_101 : f32 to vector<64x1xf32>
    %254 = arith.divf %252, %253 : vector<64x1xf32>
    %255 = vector.broadcast %254 : vector<64x1xf32> to vector<64x32xf32>
    %256 = arith.subf %250, %255 : vector<64x32xf32>
    %257 = arith.mulf %256, %256 : vector<64x32xf32>
    %cst_102 = arith.constant dense<0.000000e+00> : vector<64xf32>
    %258 = vector.multi_reduction <add>, %257, %cst_102 [1] : vector<64x32xf32> to vector<64xf32>
    %259 = vector.shape_cast %258 : vector<64xf32> to vector<64x1xf32>
    %cst_103 = arith.constant 3.200000e+01 : f32
    %260 = vector.broadcast %cst_103 : f32 to vector<64x1xf32>
    %261 = arith.divf %259, %260 : vector<64x1xf32>
    %262 = vector.broadcast %254 : vector<64x1xf32> to vector<64x32xf32>
    %263 = arith.subf %250, %262 : vector<64x32xf32>
    %cst_104 = arith.constant 9.99999974E-6 : f32
    %264 = vector.broadcast %cst_104 : f32 to vector<64x1xf32>
    %265 = arith.addf %261, %264 : vector<64x1xf32>
    %266 = math.rsqrt %265 : vector<64x1xf32>
    %267 = vector.broadcast %266 : vector<64x1xf32> to vector<64x32xf32>
    %268 = arith.mulf %263, %267 : vector<64x32xf32>
    %269 = vector.broadcast %159 : vector<1x32xf32> to vector<64x32xf32>
    %270 = arith.mulf %268, %269 : vector<64x32xf32>
    %271 = vector.broadcast %160 : vector<1x32xf32> to vector<64x32xf32>
    %272 = arith.addf %270, %271 : vector<64x32xf32>
    %273 = vector.shape_cast %272 : vector<64x32xf32> to vector<8x8x32xf32>
    %cst_105 = arith.constant dense<0.000000e+00> : vector<8x32xf32>
    %274 = vector.multi_reduction <add>, %273, %cst_105 [1] : vector<8x8x32xf32> to vector<8x32xf32>
    %cst_106 = arith.constant 8.000000e+00 : f32
    %275 = vector.broadcast %cst_106 : f32 to vector<8x32xf32>
    %276 = arith.divf %274, %275 : vector<8x32xf32>
    %c10 = arith.constant 10 : index
    %c0_107 = arith.constant 0 : index
    %c0_108 = arith.constant 0 : index
    %277 = vector.load %arg3[%c10, %c0_107, %c0_108] : memref<13x32x32xf32, #tpu.memory_space<vmem>>, vector<1x32x32xf32>
    %278 = vector.shape_cast %277 : vector<1x32x32xf32> to vector<32x32xf32>
    %cst_109 = arith.constant dense<0.000000e+00> : vector<8x32xf32>
    %279 = tpu.matmul %276, %278, %cst_109 {dimension_numbers = #tpu.dot_dimension_numbers<[1], [0], [0], [1], [0, 0, 1, 1], [], []>} : vector<8x32xf32>, vector<32x32xf32>, vector<8x32xf32> -> vector<8x32xf32>
    %c10_110 = arith.constant 10 : index
    %c0_111 = arith.constant 0 : index
    %280 = vector.load %arg4[%c10_110, %c0_111] : memref<13x32xf32, #tpu.memory_space<vmem>>, vector<1x32xf32>
    %281 = vector.broadcast %280 : vector<1x32xf32> to vector<8x32xf32>
    %282 = arith.addf %279, %281 : vector<8x32xf32>
    %cst_112 = arith.constant 0.000000e+00 : f32
    %283 = vector.broadcast %cst_112 : f32 to vector<8x32xf32>
    %284 = arith.maximumf %282, %283 : vector<8x32xf32>
    %c11 = arith.constant 11 : index
    %c0_113 = arith.constant 0 : index
    %c0_114 = arith.constant 0 : index
    %285 = vector.load %arg3[%c11, %c0_113, %c0_114] : memref<13x32x32xf32, #tpu.memory_space<vmem>>, vector<1x32x32xf32>
    %286 = vector.shape_cast %285 : vector<1x32x32xf32> to vector<32x32xf32>
    %cst_115 = arith.constant dense<0.000000e+00> : vector<8x32xf32>
    %287 = tpu.matmul %284, %286, %cst_115 {dimension_numbers = #tpu.dot_dimension_numbers<[1], [0], [0], [1], [0, 0, 1, 1], [], []>} : vector<8x32xf32>, vector<32x32xf32>, vector<8x32xf32> -> vector<8x32xf32>
    %c11_116 = arith.constant 11 : index
    %c0_117 = arith.constant 0 : index
    %288 = vector.load %arg4[%c11_116, %c0_117] : memref<13x32xf32, #tpu.memory_space<vmem>>, vector<1x32xf32>
    %289 = vector.broadcast %288 : vector<1x32xf32> to vector<8x32xf32>
    %290 = arith.addf %287, %289 : vector<8x32xf32>
    %c12 = arith.constant 12 : index
    %c0_118 = arith.constant 0 : index
    %c0_119 = arith.constant 0 : index
    %291 = vector.load %arg3[%c12, %c0_118, %c0_119] : memref<13x32x32xf32, #tpu.memory_space<vmem>>, vector<1x32x32xf32>
    %292 = vector.shape_cast %291 : vector<1x32x32xf32> to vector<32x32xf32>
    %cst_120 = arith.constant dense<0.000000e+00> : vector<8x32xf32>
    %293 = tpu.matmul %284, %292, %cst_120 {dimension_numbers = #tpu.dot_dimension_numbers<[1], [0], [0], [1], [0, 0, 1, 1], [], []>} : vector<8x32xf32>, vector<32x32xf32>, vector<8x32xf32> -> vector<8x32xf32>
    %c12_121 = arith.constant 12 : index
    %c0_122 = arith.constant 0 : index
    %294 = vector.load %arg4[%c12_121, %c0_122] : memref<13x32xf32, #tpu.memory_space<vmem>>, vector<1x32xf32>
    %295 = vector.broadcast %294 : vector<1x32xf32> to vector<8x32xf32>
    %296 = arith.addf %293, %295 : vector<8x32xf32>
    %cst_123 = arith.constant 0.000000e+00 : f32
    %297 = vector.broadcast %cst_123 : f32 to vector<8x32xf32>
    %298 = arith.subf %297, %296 : vector<8x32xf32>
    %299 = math.exp %298 : vector<8x32xf32>
    %cst_124 = arith.constant 1.000000e+00 : f32
    %300 = vector.broadcast %cst_124 : f32 to vector<8x32xf32>
    %301 = arith.addf %300, %299 : vector<8x32xf32>
    %cst_125 = arith.constant 0.899999976 : f32
    %302 = vector.broadcast %cst_125 : f32 to vector<8x32xf32>
    %303 = arith.divf %302, %301 : vector<8x32xf32>
    %cst_126 = arith.constant 1.000000e-01 : f32
    %304 = vector.broadcast %cst_126 : f32 to vector<8x32xf32>
    %305 = arith.addf %304, %303 : vector<8x32xf32>
    %c0_127 = arith.constant 0 : index
    %c0_128 = arith.constant 0 : index
    %c0_129 = arith.constant 0 : index
    %306 = vector.load %arg5[%c0_127, %c0_128, %c0_129] : memref<1x8x32xf32, #tpu.memory_space<vmem>>, vector<1x8x32xf32>
    %307 = vector.shape_cast %306 : vector<1x8x32xf32> to vector<8x32xf32>
    %308 = vector.shape_cast %290 : vector<8x32xf32> to vector<1x8x32xf32>
    tpu.vector_store %arg5[%c0_127, %c0_128, %c0_129], %308 {strides = array<i32>} : memref<1x8x32xf32, #tpu.memory_space<vmem>>, vector<1x8x32xf32>,
    %c0_130 = arith.constant 0 : index
    %c0_131 = arith.constant 0 : index
    %c0_132 = arith.constant 0 : index
    %309 = vector.load %arg6[%c0_130, %c0_131, %c0_132] : memref<1x8x32xf32, #tpu.memory_space<vmem>>, vector<1x8x32xf32>
    %310 = vector.shape_cast %309 : vector<1x8x32xf32> to vector<8x32xf32>
    %311 = vector.shape_cast %305 : vector<8x32xf32> to vector<1x8x32xf32>
    tpu.vector_store %arg6[%c0_130, %c0_131, %c0_132], %311 {strides = array<i32>} : memref<1x8x32xf32, #tpu.memory_space<vmem>>, vector<1x8x32xf32>,
    return
  }
  func.func @transform_0(%arg0: i32) -> (i32, i32, i32) {
    %c0_i32 = arith.constant 0 : i32
    %c0_i32_0 = arith.constant 0 : i32
    %c0_i32_1 = arith.constant 0 : i32
    return %arg0, %c0_i32, %c0_i32_0 : i32, i32, i32
  }
  func.func @transform_1(%arg0: i32) -> (i32, i32, i32) {
    %c0_i32 = arith.constant 0 : i32
    %c0_i32_0 = arith.constant 0 : i32
    %c0_i32_1 = arith.constant 0 : i32
    return %arg0, %c0_i32, %c0_i32_0 : i32, i32, i32
  }
  func.func @transform_2(%arg0: i32) -> (i32, i32, i32) {
    %c0_i32 = arith.constant 0 : i32
    %c0_i32_0 = arith.constant 0 : i32
    %c0_i32_1 = arith.constant 0 : i32
    %c0_i32_2 = arith.constant 0 : i32
    return %c0_i32, %c0_i32_0, %c0_i32_1 : i32, i32, i32
  }
  func.func @transform_3(%arg0: i32) -> (i32, i32) {
    %c0_i32 = arith.constant 0 : i32
    %c0_i32_0 = arith.constant 0 : i32
    %c0_i32_1 = arith.constant 0 : i32
    return %c0_i32, %c0_i32_0 : i32, i32
  }
  func.func @transform_4(%arg0: i32) -> (i32, i32, i32) {
    %c0_i32 = arith.constant 0 : i32
    %c0_i32_0 = arith.constant 0 : i32
    %c0_i32_1 = arith.constant 0 : i32
    return %arg0, %c0_i32, %c0_i32_0 : i32, i32, i32
  }
  func.func @transform_5(%arg0: i32) -> (i32, i32, i32) {
    %c0_i32 = arith.constant 0 : i32
    %c0_i32_0 = arith.constant 0 : i32
    %c0_i32_1 = arith.constant 0 : i32
    return %arg0, %c0_i32, %c0_i32_0 : i32, i32, i32
  }
}

</mosaic_0001>

<llo_original>
// kernel: latent_encoder.1
$region0: #{latent_encoder.1}
  #allocation0 [shape = 'u32[]', space=smem, size = 0x4, offset = 0x4, fixed_abs, tag = 'smem constant byte address 0x4 - core index']
  #allocation1 [shape = 'u32[72,128]{1,0:T(1,128)}', space=vmem, size = 0x9000, scoped, tag = 'internal scratch']
  %s0 = inlined_call_operand.vmem [shape: f32[16,8,2], index: 0, kind: input, shape index: {}]
  %s1 = inlined_call_operand.vmem [shape: f32[16,8,1], index: 1, kind: input, shape index: {}]
  %s2 = inlined_call_operand.vmem [shape: f32[13,32,32], index: 2, kind: input, shape index: {}]
  %s3 = inlined_call_operand.vmem [shape: f32[13,32], index: 3, kind: input, shape index: {}]
  %s4 = inlined_call_operand.hbm [shape: f32[2,8,32], index: 4, kind: output, shape index: {0}]
  %s5 = inlined_call_operand.hbm [shape: f32[2,8,32], index: 5, kind: output, shape index: {1}]
  %6 = xla_tuple %s4, %s5
  %s7 = sld [smem:[#allocation0]]
  $region57: #{latent_encoder.1} parent=0
    _
  %s9 = ssub.s32 1, %s7
  %s10 = scalar_select 0, %s9, %s7
  $region1: #{latent_encoder.1} parent=0
    #allocation2 [shape = 'u8[8192]{0}', space=vmem, size = 0x2000, scoped, tag = 'output window, operand 0']
    #allocation3 [shape = 's32[2]{0}', space=sflag, size = 0x8, scoped, tag = 'scoped memory for latent_encoder.1']
    #allocation4 [shape = 'u8[8192]{0}', space=vmem, size = 0x2000, scoped, tag = 'output window, operand 1']
    #allocation5 [shape = 's32[2]{0}', space=sflag, size = 0x8, scoped, tag = 'scoped memory for latent_encoder.1']
    %11 = vsyncpa [#allocation3], 0
    %s12 = scalar_lea.sflag [#allocation3], 1
    %13 = vsyncpa %s12, 0
    %14 = vsyncpa [#allocation5], 0
    %s15 = scalar_lea.sflag [#allocation5], 1
    %16 = vsyncpa %s15, 0
    loop: start=0, step=1, limit=4
    $region2: #{latent_encoder.1} parent=1 // loop_pre_header
      _
    $region3: #{latent_encoder.1} parent=1 // loop_header
      %s18 = sphi 0, %s22
      %p19 = scmp.ge.s32.totalorder %s18, 4
      %s28 = sphi 0, %s30
      %s31 = sphi 0, %s28
      %s32 = sphi 0, %s31
      %s48 = sphi 0, %s32
      %s54 = sphi 0, %s56
      %s57 = sphi 0, %s54
      %s58 = sphi 0, %s57
      %s74 = sphi 0, %s58
      %s78 = sphi 0, %s78
      %s80 = sphi 0, %s78
      %s81 = sphi 0, %s80
      %s95 = sphi 0, %s81
      %s99 = sphi 0, %s99
      %s101 = sphi 0, %s99
      %s102 = sphi 0, %s101
      %s116 = sphi 0, %s102
      %s122 = sphi 0, %s124
      %s125 = sphi 0, %s122
      %s126 = sphi 0, %s125
      %s142 = sphi 0, %s126
      %s148 = sphi 0, %s150
      %s151 = sphi 0, %s148
      %s152 = sphi 0, %s151
      %s168 = sphi 0, %s152
    $region4: #{latent_encoder.1} parent=1 // loop_header_branch
      %21 = sbr.rel (%p19) target = $region8
    $region5: #{latent_encoder.1} parent=1 // loop_body
      %s23 = ssub.s32 %s18, 1
      %s24 = ssub.s32 %s18, 2
      %s25 = sadd.s32 %s18, 1
      %s26 = ssub.s32 %s18, %s25
      %p27 = scmp.eq.s32.totalorder %s26, 0
      %s29 = sadd.s32 %s28, 1
      %s30 = scalar_select %p27, %s28, %s29
      %p33 = pneg %p27
      %p34 = scmp.eq.s32.totalorder %s18, 1
      %p35 = por %p33, %p34
      %p36 = scmp.ne.s32.totalorder %s28, %s31
      %p37 = scmp.eq.s32.totalorder %s18, 0
      %p38 = por %p36, %p37
      %p39 = scmp.ne.s32.totalorder %s28, %s31
      %p40 = scmp.eq.s32.totalorder %s23, 1
      %p41 = por %p39, %p40
      %p42 = scmp.ne.s32.totalorder %s31, %s32
      %p43 = scmp.eq.s32.totalorder %s23, 0
      %p44 = por %p42, %p43
      %p45 = scmp.ne.s32.totalorder %s31, %s32
      %p46 = scmp.eq.s32.totalorder %s24, 1
      %p47 = por %p45, %p46
      %p49 = scmp.ne.s32.totalorder %s32, %s48
      %p50 = scmp.eq.s32.totalorder %s24, 0
      %p51 = por %p49, %p50
      %s52 = ssub.s32 %s18, %s25
      %p53 = scmp.eq.s32.totalorder %s52, 0
      %s55 = sadd.s32 %s54, 1
      %s56 = scalar_select %p53, %s54, %s55
      %p59 = pneg %p53
      %p60 = scmp.eq.s32.totalorder %s18, 1
      %p61 = por %p59, %p60
      %p62 = scmp.ne.s32.totalorder %s54, %s57
      %p63 = scmp.eq.s32.totalorder %s18, 0
      %p64 = por %p62, %p63
      %p65 = scmp.ne.s32.totalorder %s54, %s57
      %p66 = scmp.eq.s32.totalorder %s23, 1
      %p67 = por %p65, %p66
      %p68 = scmp.ne.s32.totalorder %s57, %s58
      %p69 = scmp.eq.s32.totalorder %s23, 0
      %p70 = por %p68, %p69
      %p71 = scmp.ne.s32.totalorder %s57, %s58
      %p72 = scmp.eq.s32.totalorder %s24, 1
      %p73 = por %p71, %p72
      %p75 = scmp.ne.s32.totalorder %s58, %s74
      %p76 = scmp.eq.s32.totalorder %s24, 0
      %p77 = por %p75, %p76
      %s79 = sadd.s32 %s78, 1
      %p82 = scmp.eq.s32.totalorder %s18, 1
      %p83 = scmp.ne.s32.totalorder %s78, %s80
      %p84 = scmp.eq.s32.totalorder %s18, 0
      %p85 = por %p83, %p84
      %p86 = scmp.ne.s32.totalorder %s78, %s80
      %p87 = scmp.eq.s32.totalorder %s23, 1
      %p88 = por %p86, %p87
      %p89 = scmp.ne.s32.totalorder %s80, %s81
      %p90 = scmp.eq.s32.totalorder %s23, 0
      %p91 = por %p89, %p90
      %p92 = scmp.ne.s32.totalorder %s80, %s81
      %p93 = scmp.eq.s32.totalorder %s24, 1
      %p94 = por %p92, %p93
      %p96 = scmp.ne.s32.totalorder %s81, %s95
      %p97 = scmp.eq.s32.totalorder %s24, 0
      %p98 = por %p96, %p97
      %s100 = sadd.s32 %s99, 1
      %p103 = scmp.eq.s32.totalorder %s18, 1
      %p104 = scmp.ne.s32.totalorder %s99, %s101
      %p105 = scmp.eq.s32.totalorder %s18, 0
      %p106 = por %p104, %p105
      %p107 = scmp.ne.s32.totalorder %s99, %s101
      %p108 = scmp.eq.s32.totalorder %s23, 1
      %p109 = por %p107, %p108
      %p110 = scmp.ne.s32.totalorder %s101, %s102
      %p111 = scmp.eq.s32.totalorder %s23, 0
      %p112 = por %p110, %p111
      %p113 = scmp.ne.s32.totalorder %s101, %s102
      %p114 = scmp.eq.s32.totalorder %s24, 1
      %p115 = por %p113, %p114
      %p117 = scmp.ne.s32.totalorder %s102, %s116
      %p118 = scmp.eq.s32.totalorder %s24, 0
      %p119 = por %p117, %p118
      %s120 = ssub.s32 %s18, %s25
      %p121 = scmp.eq.s32.totalorder %s120, 0
      %s123 = sadd.s32 %s122, 1
      %s124 = scalar_select %p121, %s122, %s123
      %p127 = pneg %p121
      %p128 = scmp.eq.s32.totalorder %s18, 1
      %p129 = por %p127, %p128
      %p130 = scmp.ne.s32.totalorder %s122, %s125
      %p131 = scmp.eq.s32.totalorder %s18, 0
      %p132 = por %p130, %p131
      %p133 = scmp.ne.s32.totalorder %s122, %s125
      %p134 = scmp.eq.s32.totalorder %s23, 1
      %p135 = por %p133, %p134
      %p136 = scmp.ne.s32.totalorder %s125, %s126
      %p137 = scmp.eq.s32.totalorder %s23, 0
      %p138 = por %p136, %p137
      %p139 = scmp.ne.s32.totalorder %s125, %s126
      %p140 = scmp.eq.s32.totalorder %s24, 1
      %p141 = por %p139, %p140
      %p143 = scmp.ne.s32.totalorder %s126, %s142
      %p144 = scmp.eq.s32.totalorder %s24, 0
      %p145 = por %p143, %p144
      %s146 = ssub.s32 %s18, %s25
      %p147 = scmp.eq.s32.totalorder %s146, 0
      %s149 = sadd.s32 %s148, 1
      %s150 = scalar_select %p147, %s148, %s149
      %p153 = pneg %p147
      %p154 = scmp.eq.s32.totalorder %s18, 1
      %p155 = por %p153, %p154
      %p156 = scmp.ne.s32.totalorder %s148, %s151
      %p157 = scmp.eq.s32.totalorder %s18, 0
      %p158 = por %p156, %p157
      %p159 = scmp.ne.s32.totalorder %s148, %s151
      %p160 = scmp.eq.s32.totalorder %s23, 1
      %p161 = por %p159, %p160
      %p162 = scmp.ne.s32.totalorder %s151, %s152
      %p163 = scmp.eq.s32.totalorder %s23, 0
      %p164 = por %p162, %p163
      %p165 = scmp.ne.s32.totalorder %s151, %s152
      %p166 = scmp.eq.s32.totalorder %s24, 1
      %p167 = por %p165, %p166
      %p169 = scmp.ne.s32.totalorder %s152, %s168
      %p170 = scmp.eq.s32.totalorder %s24, 0
      %p171 = por %p169, %p170
      %p172 = scmp.le.s32.totalorder 1, %s18
      %p173 = scmp.lt.s32.totalorder %s18, 3
      %p174 = pnand %p172, %p173
      %p175 = pneg %p174
      // Predicated region
      $region9: #{latent_encoder.1} parent=5 // pred_check
        _
      $region10: #{latent_encoder.1} parent=5 // pred_check_branch
        %177 = sbr.rel (%p174) target = $region12
      $region11: #{latent_encoder.1} parent=5 // pred_region
        %s178 = ssub.s32 %s18, 1
        // Predicated region
        $region13: #{latent_encoder.1} parent=11 // pred_check
          %p179 = pneg %p91
        $region14: #{latent_encoder.1} parent=11 // pred_check_branch
          %181 = sbr.rel (%p179) target = $region16
        $region15: #{latent_encoder.1} parent=11 // pred_region
          _
        $region16: #{latent_encoder.1} parent=11 // pred_fallthru
          _
        // Predicated region
        $region17: #{latent_encoder.1} parent=11 // pred_check
          %p182 = pneg %p112
        $region18: #{latent_encoder.1} parent=11 // pred_check_branch
          %184 = sbr.rel (%p182) target = $region20
        $region19: #{latent_encoder.1} parent=11 // pred_region
          _
        $region20: #{latent_encoder.1} parent=11 // pred_fallthru
          _
      $region12: #{latent_encoder.1} parent=5 // pred_fallthru
        _
      %p185 = scmp.lt.s32.totalorder %s18, 2
      // Predicated region
      $region21: #{latent_encoder.1} parent=5 // pred_check
        %p186 = pneg %p185
      $region22: #{latent_encoder.1} parent=5 // pred_check_branch
        %188 = sbr.rel (%p186) target = $region24
      $region23: #{latent_encoder.1} parent=5 // pred_region
        // Predicated region
        $region25: #{latent_encoder.1} parent=23 // pred_check
          %p189 = pneg %p38
        $region26: #{latent_encoder.1} parent=23 // pred_check_branch
          %191 = sbr.rel (%p189) target = $region28
        $region27: #{latent_encoder.1} parent=23 // pred_region
          %s192 = smul.u32 8, %s18
          %p193 = scmp.lt.s32.totalorder %s192, 15
          %s194 = scalar_select %p193, %s192, 15
          %s195 = smul.addr %s194, 8
          %s196 = scalar_lea.vmem %s0, %s195
          %s197 = smul.u32 8, %s18
        $region28: #{latent_encoder.1} parent=23 // pred_fallthru
          _
        // Predicated region
        $region29: #{latent_encoder.1} parent=23 // pred_check
          %p198 = pneg %p64
        $region30: #{latent_encoder.1} parent=23 // pred_check_branch
          %200 = sbr.rel (%p198) target = $region32
        $region31: #{latent_encoder.1} parent=23 // pred_region
          %s201 = smul.u32 8, %s18
          %p202 = scmp.lt.s32.totalorder %s201, 15
          %s203 = scalar_select %p202, %s201, 15
          %s204 = smul.addr %s203, 8
          %s205 = scalar_lea.vmem %s1, %s204
          %s206 = smul.u32 8, %s18
        $region32: #{latent_encoder.1} parent=23 // pred_fallthru
          _
      $region24: #{latent_encoder.1} parent=5 // pred_fallthru
        _
      %p207 = scmp.le.s32.totalorder 1, %s18
      %p208 = scmp.lt.s32.totalorder %s18, 3
      %p209 = pnand %p207, %p208
      %p210 = pneg %p209
      // Predicated region
      $region33: #{latent_encoder.1} parent=5 // pred_check
        _
      $region34: #{latent_encoder.1} parent=5 // pred_check_branch
        %212 = sbr.rel (%p209) target = $region36
      $region35: #{latent_encoder.1} parent=5 // pred_region
        %s213 = ssub.s32 %s18, 1
        %s214 = smul.u32 8, %s23
        %p215 = scmp.lt.s32.totalorder %s214, 15
        %s216 = scalar_select %p215, %s214, 15
        %s217 = smul.addr %s216, 8
        %s218 = scalar_lea.vmem %s0, %s217
        %p219 = pneg %p44
        %p220 = pneg %p41
        %s221 = smul.u32 8, %s23
        %p222 = scmp.lt.s32.totalorder %s221, 15
        %s223 = scalar_select %p222, %s221, 15
        %s224 = smul.addr %s223, 8
        %s225 = scalar_lea.vmem %s1, %s224
        %p226 = pneg %p70
        %p227 = pneg %p67
        %p228 = pneg %p91
        %p229 = pneg %p88
        %p230 = pneg %p112
        %p231 = pneg %p109
        %p232 = pneg %p138
        %p233 = pneg %p135
        %s234 = sand.u32 %s125, 1
        %s235 = scalar_lea.sflag [#allocation3], %s234
        %s236 = sand.u32 %s125, 1
        %s237 = smul.addr %s236, 8
        %s238 = scalar_lea.vmem [#allocation2], %s237
        %p239 = pneg %p164
        %p240 = pneg %p161
        %s241 = sand.u32 %s151, 1
        %s242 = scalar_lea.sflag [#allocation5], %s241
        %s243 = sand.u32 %s151, 1
        %s244 = smul.addr %s243, 8
        %s245 = scalar_lea.vmem [#allocation4], %s244
        %s246 = smul.u32 8, %s23
        %p247 = scmp.lt.s32.totalorder %s246, 15
        %s248 = scalar_select %p247, %s246, 15
        %s249 = smul.addr %s248, 8
        %s250 = scalar_lea.vmem %s0, %s249
        %s251 = smul.u32 8, %s23
        %s252 = smul.u32 8, %s23
        %p253 = scmp.lt.s32.totalorder %s252, 15
        %s254 = scalar_select %p253, %s252, 15
        %s255 = smul.addr %s254, 8
        %s256 = scalar_lea.vmem %s1, %s255
        %s257 = smul.u32 8, %s23
        %v258 = vld [vmem:[%s250] sm:$0xff]
        %v259 = vld [vmem:[%s250 + $0x8] sm:$0xff]
        %v260 = vld [vmem:[%s250 + $0x10] sm:$0xff]
        %v261 = vld [vmem:[%s250 + $0x18] sm:$0xff]
        %v262 = vld [vmem:[%s250 + $0x20] sm:$0xff]
        %v263 = vld [vmem:[%s250 + $0x28] sm:$0xff]
        %v264 = vld [vmem:[%s250 + $0x30] sm:$0xff]
        %v265 = vld [vmem:[%s250 + $0x38] sm:$0xff]
        %v266 = vld [vmem:[%s256] sm:$0xff]
        %v267 = vld [vmem:[%s256 + $0x8] sm:$0xff]
        %v268 = vld [vmem:[%s256 + $0x10] sm:$0xff]
        %v269 = vld [vmem:[%s256 + $0x18] sm:$0xff]
        %v270 = vld [vmem:[%s256 + $0x20] sm:$0xff]
        %v271 = vld [vmem:[%s256 + $0x28] sm:$0xff]
        %v272 = vld [vmem:[%s256 + $0x30] sm:$0xff]
        %v273 = vld [vmem:[%s256 + $0x38] sm:$0xff]
        %v274 = vld [vmem:[%s3] sm:$0x1]
        %276 = vset.pattern.permute.xlu0 0
        %277 = vperm.xlu0 %276, %v258
        %v278 = vpop.permute.xlu0 %277
        %281 = vset.pattern.permute.xlu0 0
        %282 = vperm.xlu0 %281, %v259
        %v283 = vpop.permute.xlu0 %282
        %286 = vset.pattern.permute.xlu0 0
        %287 = vperm.xlu0 %286, %v260
        %v288 = vpop.permute.xlu0 %287
        %291 = vset.pattern.permute.xlu0 0
        %292 = vperm.xlu0 %291, %v261
        %v293 = vpop.permute.xlu0 %292
        %296 = vset.pattern.permute.xlu0 0
        %297 = vperm.xlu0 %296, %v262
        %v298 = vpop.permute.xlu0 %297
        %301 = vset.pattern.permute.xlu0 0
        %302 = vperm.xlu0 %301, %v263
        %v303 = vpop.permute.xlu0 %302
        %306 = vset.pattern.permute.xlu0 0
        %307 = vperm.xlu0 %306, %v264
        %v308 = vpop.permute.xlu0 %307
        %311 = vset.pattern.permute.xlu0 0
        %312 = vperm.xlu0 %311, %v265
        %v313 = vpop.permute.xlu0 %312
        %v315 = vperm.slane %v274, 0
        %v316 = vmul.f32 %v278, %v315
        %v317 = vmul.f32 %v283, %v315
        %v318 = vmul.f32 %v288, %v315
        %v319 = vmul.f32 %v293, %v315
        %v320 = vmul.f32 %v298, %v315
        %v321 = vmul.f32 %v303, %v315
        %v322 = vmul.f32 %v308, %v315
        %v323 = vmul.f32 %v313, %v315
        %v324 = vld [vmem:[%s3 + $0x1] sm:$0x1]
        %325 = vset.pattern.permute.xlu0 1
        %326 = vperm.xlu0 %325, %v258
        %v327 = vpop.permute.xlu0 %326
        %329 = vset.pattern.permute.xlu0 1
        %330 = vperm.xlu0 %329, %v259
        %v331 = vpop.permute.xlu0 %330
        %333 = vset.pattern.permute.xlu0 1
        %334 = vperm.xlu0 %333, %v260
        %v335 = vpop.permute.xlu0 %334
        %337 = vset.pattern.permute.xlu0 1
        %338 = vperm.xlu0 %337, %v261
        %v339 = vpop.permute.xlu0 %338
        %341 = vset.pattern.permute.xlu0 1
        %342 = vperm.xlu0 %341, %v262
        %v343 = vpop.permute.xlu0 %342
        %345 = vset.pattern.permute.xlu0 1
        %346 = vperm.xlu0 %345, %v263
        %v347 = vpop.permute.xlu0 %346
        %349 = vset.pattern.permute.xlu0 1
        %350 = vperm.xlu0 %349, %v264
        %v351 = vpop.permute.xlu0 %350
        %353 = vset.pattern.permute.xlu0 1
        %354 = vperm.xlu0 %353, %v265
        %v355 = vpop.permute.xlu0 %354
        %v357 = vperm.slane %v324, 0
        %v358 = vmul.f32 %v327, %v357
        %v359 = vmul.f32 %v331, %v357
        %v360 = vmul.f32 %v335, %v357
        %v361 = vmul.f32 %v339, %v357
        %v362 = vmul.f32 %v343, %v357
        %v363 = vmul.f32 %v347, %v357
        %v364 = vmul.f32 %v351, %v357
        %v365 = vmul.f32 %v355, %v357
        %v366 = vadd.f32 %v316, %v358
        %v367 = vadd.f32 %v317, %v359
        %v368 = vadd.f32 %v318, %v360
        %v369 = vadd.f32 %v319, %v361
        %v370 = vadd.f32 %v320, %v362
        %v371 = vadd.f32 %v321, %v363
        %v372 = vadd.f32 %v322, %v364
        %v373 = vadd.f32 %v323, %v365
        %v374 = vld [vmem:[%s3 + $0x2] sm:$0x1]
        %376 = vset.pattern.permute.xlu0 0
        %377 = vperm.xlu0 %376, %v266
        %v378 = vpop.permute.xlu0 %377
        %381 = vset.pattern.permute.xlu0 0
        %382 = vperm.xlu0 %381, %v267
        %v383 = vpop.permute.xlu0 %382
        %386 = vset.pattern.permute.xlu0 0
        %387 = vperm.xlu0 %386, %v268
        %v388 = vpop.permute.xlu0 %387
        %391 = vset.pattern.permute.xlu0 0
        %392 = vperm.xlu0 %391, %v269
        %v393 = vpop.permute.xlu0 %392
        %396 = vset.pattern.permute.xlu0 0
        %397 = vperm.xlu0 %396, %v270
        %v398 = vpop.permute.xlu0 %397
        %401 = vset.pattern.permute.xlu0 0
        %402 = vperm.xlu0 %401, %v271
        %v403 = vpop.permute.xlu0 %402
        %406 = vset.pattern.permute.xlu0 0
        %407 = vperm.xlu0 %406, %v272
        %v408 = vpop.permute.xlu0 %407
        %411 = vset.pattern.permute.xlu0 0
        %412 = vperm.xlu0 %411, %v273
        %v413 = vpop.permute.xlu0 %412
        %v415 = vperm.slane %v374, 0
        %v416 = vmul.f32 %v378, %v415
        %v417 = vmul.f32 %v383, %v415
        %v418 = vmul.f32 %v388, %v415
        %v419 = vmul.f32 %v393, %v415
        %v420 = vmul.f32 %v398, %v415
        %v421 = vmul.f32 %v403, %v415
        %v422 = vmul.f32 %v408, %v415
        %v423 = vmul.f32 %v413, %v415
        %v424 = vadd.f32 %v366, %v416
        %v425 = vadd.f32 %v367, %v417
        %v426 = vadd.f32 %v368, %v418
        %v427 = vadd.f32 %v369, %v419
        %v428 = vadd.f32 %v370, %v420
        %v429 = vadd.f32 %v371, %v421
        %v430 = vadd.f32 %v372, %v422
        %v431 = vadd.f32 %v373, %v423
        %v432 = vld [vmem:[%s3 + $0x3] sm:$0x1]
        %v433 = vperm.slane %v432, 0
        %v434 = vadd.f32 %v424, %v433
        %v435 = vadd.f32 %v425, %v433
        %v436 = vadd.f32 %v426, %v433
        %v437 = vadd.f32 %v427, %v433
        %v438 = vadd.f32 %v428, %v433
        %v439 = vadd.f32 %v429, %v433
        %v440 = vadd.f32 %v430, %v433
        %v441 = vadd.f32 %v431, %v433
        %v442 = vld [vmem:[%s2] sm:$0xff]
        %v443 = vld [vmem:[%s2 + $0x8] sm:$0xff]
        %v444 = vld [vmem:[%s2 + $0x10] sm:$0xff]
        %v445 = vld [vmem:[%s2 + $0x18] sm:$0xff]
        %s446 = scalar_lea.vmem %s2, 32
        %v447 = vld [vmem:[%s446] sm:$0xff]
        %v448 = vld [vmem:[%s446 + $0x8] sm:$0xff]
        %v449 = vld [vmem:[%s446 + $0x10] sm:$0xff]
        %v450 = vld [vmem:[%s446 + $0x18] sm:$0xff]
        %s451 = scalar_lea.vmem %s2, 64
        %v452 = vld [vmem:[%s451] sm:$0xff]
        %v453 = vld [vmem:[%s451 + $0x8] sm:$0xff]
        %v454 = vld [vmem:[%s451 + $0x10] sm:$0xff]
        %v455 = vld [vmem:[%s451 + $0x18] sm:$0xff]
        %s456 = scalar_lea.vmem %s2, 96
        %v457 = vld [vmem:[%s456] sm:$0xff]
        %v458 = vld [vmem:[%s456 + $0x8] sm:$0xff]
        %v459 = vld [vmem:[%s456 + $0x10] sm:$0xff]
        %v460 = vld [vmem:[%s456 + $0x18] sm:$0xff]
        %s461 = scalar_lea.vmem %s2, 128
        %v462 = vld [vmem:[%s461] sm:$0xff]
        %v463 = vld [vmem:[%s461 + $0x8] sm:$0xff]
        %v464 = vld [vmem:[%s461 + $0x10] sm:$0xff]
        %v465 = vld [vmem:[%s461 + $0x18] sm:$0xff]
        %v466 = vld [vmem:[%s3 + $0x4] sm:$0x1]
        %v467 = vld [vmem:[%s3 + $0x5] sm:$0x1]
        %v468 = vld [vmem:[%s3 + $0x6] sm:$0x1]
        %vm469 = vcmask 261120
        %v471 = vsel %vm469, %v434, 0
        %v474 = vsel %vm469, %v435, 0
        %v477 = vsel %vm469, %v436, 0
        %v480 = vsel %vm469, %v437, 0
        %v483 = vsel %vm469, %v438, 0
        %v486 = vsel %vm469, %v439, 0
        %v489 = vsel %vm469, %v440, 0
        %v492 = vsel %vm469, %v441, 0
        %494 = vmatpush.msra.mxu0 0.0
        %495 = vmatpush.msra.mxu0 0.0
        %496 = vmatpush.msra.mxu0 0.0
        %497 = vmatpush.msra.mxu0 0.0
        %498 = vmatpush.msra.mxu0 0.0
        %499 = vmatpush.msra.mxu0 0.0
        %500 = vmatpush.msra.mxu0 0.0
        %501 = vmatpush.msra.mxu0 0.0
        %502 = vmatpush.msra.mxu0 0.0
        %503 = vmatpush.msra.mxu0 0.0
        %504 = vmatpush.msra.mxu0 0.0
        %505 = vmatpush.msra.mxu0 0.0
        %506 = vmatpush.msra.mxu0 %v445
        %507 = vmatpush.msra.mxu0 %v444
        %508 = vmatpush.msra.mxu0 %v443
        %509 = vmatpush.msra.mxu0 %v442
        %510 = vmatmul.f32.gmra.mxu0 %v471
        %v511 = vpop.f32.mrf.mxu0
        %v512 = vadd.f32 0.0, %v511
        %513 = vmatmul.f32.gmra.mxu0 %v474
        %v514 = vpop.f32.mrf.mxu0
        %v515 = vadd.f32 0.0, %v514
        %516 = vmatmul.f32.gmra.mxu0 %v477
        %v517 = vpop.f32.mrf.mxu0
        %v518 = vadd.f32 0.0, %v517
        %519 = vmatmul.f32.gmra.mxu0 %v480
        %v520 = vpop.f32.mrf.mxu0
        %v521 = vadd.f32 0.0, %v520
        %522 = vmatmul.f32.gmra.mxu0 %v483
        %v523 = vpop.f32.mrf.mxu0
        %v524 = vadd.f32 0.0, %v523
        %525 = vmatmul.f32.gmra.mxu0 %v486
        %v526 = vpop.f32.mrf.mxu0
        %v527 = vadd.f32 0.0, %v526
        %528 = vmatmul.f32.gmra.mxu0 %v489
        %v529 = vpop.f32.mrf.mxu0
        %v530 = vadd.f32 0.0, %v529
        %531 = vmatmul.f32.gmra.mxu0 %v492
        %v532 = vpop.f32.mrf.mxu0
        %v533 = vadd.f32 0.0, %v532
        %534 = vdwg.mxu0
        %535 = vmatpush.msra.mxu0 0.0
        %536 = vmatpush.msra.mxu0 0.0
        %537 = vmatpush.msra.mxu0 0.0
        %538 = vmatpush.msra.mxu0 0.0
        %539 = vmatpush.msra.mxu0 0.0
        %540 = vmatpush.msra.mxu0 0.0
        %541 = vmatpush.msra.mxu0 0.0
        %542 = vmatpush.msra.mxu0 0.0
        %543 = vmatpush.msra.mxu0 0.0
        %544 = vmatpush.msra.mxu0 0.0
        %545 = vmatpush.msra.mxu0 0.0
        %546 = vmatpush.msra.mxu0 0.0
        %547 = vmatpush.msra.mxu0 %v450
        %548 = vmatpush.msra.mxu0 %v449
        %549 = vmatpush.msra.mxu0 %v448
        %550 = vmatpush.msra.mxu0 %v447
        %551 = vmatmul.f32.gmra.mxu0 %v471
        %v552 = vpop.f32.mrf.mxu0
        %v553 = vadd.f32 0.0, %v552
        %554 = vmatmul.f32.gmra.mxu0 %v474
        %v555 = vpop.f32.mrf.mxu0
        %v556 = vadd.f32 0.0, %v555
        %557 = vmatmul.f32.gmra.mxu0 %v477
        %v558 = vpop.f32.mrf.mxu0
        %v559 = vadd.f32 0.0, %v558
        %560 = vmatmul.f32.gmra.mxu0 %v480
        %v561 = vpop.f32.mrf.mxu0
        %v562 = vadd.f32 0.0, %v561
        %563 = vmatmul.f32.gmra.mxu0 %v483
        %v564 = vpop.f32.mrf.mxu0
        %v565 = vadd.f32 0.0, %v564
        %566 = vmatmul.f32.gmra.mxu0 %v486
        %v567 = vpop.f32.mrf.mxu0
        %v568 = vadd.f32 0.0, %v567
        %569 = vmatmul.f32.gmra.mxu0 %v489
        %v570 = vpop.f32.mrf.mxu0
        %v571 = vadd.f32 0.0, %v570
        %572 = vmatmul.f32.gmra.mxu0 %v492
        %v573 = vpop.f32.mrf.mxu0
        %v574 = vadd.f32 0.0, %v573
        %575 = vdwg.mxu0
        %576 = vmatpush.msra.mxu0 0.0
        %577 = vmatpush.msra.mxu0 0.0
        %578 = vmatpush.msra.mxu0 0.0
        %579 = vmatpush.msra.mxu0 0.0
        %580 = vmatpush.msra.mxu0 0.0
        %581 = vmatpush.msra.mxu0 0.0
        %582 = vmatpush.msra.mxu0 0.0
        %583 = vmatpush.msra.mxu0 0.0
        %584 = vmatpush.msra.mxu0 0.0
        %585 = vmatpush.msra.mxu0 0.0
        %586 = vmatpush.msra.mxu0 0.0
        %587 = vmatpush.msra.mxu0 0.0
        %588 = vmatpush.msra.mxu0 %v455
        %589 = vmatpush.msra.mxu0 %v454
        %590 = vmatpush.msra.mxu0 %v453
        %591 = vmatpush.msra.mxu0 %v452
        %592 = vmatmul.f32.gmra.mxu0 %v471
        %v593 = vpop.f32.mrf.mxu0
        %v594 = vadd.f32 0.0, %v593
        %595 = vmatmul.f32.gmra.mxu0 %v474
        %v596 = vpop.f32.mrf.mxu0
        %v597 = vadd.f32 0.0, %v596
        %598 = vmatmul.f32.gmra.mxu0 %v477
        %v599 = vpop.f32.mrf.mxu0
        %v600 = vadd.f32 0.0, %v599
        %601 = vmatmul.f32.gmra.mxu0 %v480
        %v602 = vpop.f32.mrf.mxu0
        %v603 = vadd.f32 0.0, %v602
        %604 = vmatmul.f32.gmra.mxu0 %v483
        %v605 = vpop.f32.mrf.mxu0
        %v606 = vadd.f32 0.0, %v605
        %607 = vmatmul.f32.gmra.mxu0 %v486
        %v608 = vpop.f32.mrf.mxu0
        %v609 = vadd.f32 0.0, %v608
        %610 = vmatmul.f32.gmra.mxu0 %v489
        %v611 = vpop.f32.mrf.mxu0
        %v612 = vadd.f32 0.0, %v611
        %613 = vmatmul.f32.gmra.mxu0 %v492
        %v614 = vpop.f32.mrf.mxu0
        %v615 = vadd.f32 0.0, %v614
        %616 = vdwg.mxu0
        %vm617 = vcmask 64512
        %v619 = vsel %vm617, %v512, 0
        %v622 = vsel %vm617, %v553, 0
        %624 = vmatpush.xpose.msra.mxu0 0.0
        %625 = vmatpush.xpose.msra.mxu0 0.0
        %626 = vmatpush.xpose.msra.mxu0 0.0
        %627 = vmatpush.xpose.msra.mxu0 0.0
        %628 = vmatpush.xpose.msra.mxu0 0.0
        %629 = vmatpush.xpose.msra.mxu0 0.0
        %630 = vmatpush.xpose.msra.mxu0 0.0
        %631 = vmatpush.xpose.msra.mxu0 0.0
        %632 = vmatpush.xpose.msra.mxu0 0.0
        %633 = vmatpush.xpose.msra.mxu0 0.0
        %634 = vmatpush.xpose.msra.mxu0 0.0
        %635 = vmatpush.xpose.msra.mxu0 0.0
        %636 = vmatpush.xpose.msra.mxu0 0.0
        %637 = vmatpush.xpose.msra.mxu0 0.0
        %638 = vmatpush.xpose.msra.mxu0 0.0
        %639 = vmatpush.xpose.msra.mxu0 %v622
        %640 = vmatmul.f32.gmra.mxu0 %v619
        %v641 = vpop.f32.mrf.mxu0
        %v642 = vadd.f32 0.0, %v641
        %643 = vdwg.mxu0
        %v645 = vsel %vm617, %v515, 0
        %v648 = vsel %vm617, %v556, 0
        %650 = vmatpush.xpose.msra.mxu0 0.0
        %651 = vmatpush.xpose.msra.mxu0 0.0
        %652 = vmatpush.xpose.msra.mxu0 0.0
        %653 = vmatpush.xpose.msra.mxu0 0.0
        %654 = vmatpush.xpose.msra.mxu0 0.0
        %655 = vmatpush.xpose.msra.mxu0 0.0
        %656 = vmatpush.xpose.msra.mxu0 0.0
        %657 = vmatpush.xpose.msra.mxu0 0.0
        %658 = vmatpush.xpose.msra.mxu0 0.0
        %659 = vmatpush.xpose.msra.mxu0 0.0
        %660 = vmatpush.xpose.msra.mxu0 0.0
        %661 = vmatpush.xpose.msra.mxu0 0.0
        %662 = vmatpush.xpose.msra.mxu0 0.0
        %663 = vmatpush.xpose.msra.mxu0 0.0
        %664 = vmatpush.xpose.msra.mxu0 0.0
        %665 = vmatpush.xpose.msra.mxu0 %v648
        %666 = vmatmul.f32.gmra.mxu0 %v645
        %v667 = vpop.f32.mrf.mxu0
        %v668 = vadd.f32 0.0, %v667
        %669 = vdwg.mxu0
        %v671 = vsel %vm617, %v518, 0
        %v674 = vsel %vm617, %v559, 0
        %676 = vmatpush.xpose.msra.mxu0 0.0
        %677 = vmatpush.xpose.msra.mxu0 0.0
        %678 = vmatpush.xpose.msra.mxu0 0.0
        %679 = vmatpush.xpose.msra.mxu0 0.0
        %680 = vmatpush.xpose.msra.mxu0 0.0
        %681 = vmatpush.xpose.msra.mxu0 0.0
        %682 = vmatpush.xpose.msra.mxu0 0.0
        %683 = vmatpush.xpose.msra.mxu0 0.0
        %684 = vmatpush.xpose.msra.mxu0 0.0
        %685 = vmatpush.xpose.msra.mxu0 0.0
        %686 = vmatpush.xpose.msra.mxu0 0.0
        %687 = vmatpush.xpose.msra.mxu0 0.0
        %688 = vmatpush.xpose.msra.mxu0 0.0
        %689 = vmatpush.xpose.msra.mxu0 0.0
        %690 = vmatpush.xpose.msra.mxu0 0.0
        %691 = vmatpush.xpose.msra.mxu0 %v674
        %692 = vmatmul.f32.gmra.mxu0 %v671
        %v693 = vpop.f32.mrf.mxu0
        %v694 = vadd.f32 0.0, %v693
        %695 = vdwg.mxu0
        %v697 = vsel %vm617, %v521, 0
        %v700 = vsel %vm617, %v562, 0
        %702 = vmatpush.xpose.msra.mxu0 0.0
        %703 = vmatpush.xpose.msra.mxu0 0.0
        %704 = vmatpush.xpose.msra.mxu0 0.0
        %705 = vmatpush.xpose.msra.mxu0 0.0
        %706 = vmatpush.xpose.msra.mxu0 0.0
        %707 = vmatpush.xpose.msra.mxu0 0.0
        %708 = vmatpush.xpose.msra.mxu0 0.0
        %709 = vmatpush.xpose.msra.mxu0 0.0
        %710 = vmatpush.xpose.msra.mxu0 0.0
        %711 = vmatpush.xpose.msra.mxu0 0.0
        %712 = vmatpush.xpose.msra.mxu0 0.0
        %713 = vmatpush.xpose.msra.mxu0 0.0
        %714 = vmatpush.xpose.msra.mxu0 0.0
        %715 = vmatpush.xpose.msra.mxu0 0.0
        %716 = vmatpush.xpose.msra.mxu0 0.0
        %717 = vmatpush.xpose.msra.mxu0 %v700
        %718 = vmatmul.f32.gmra.mxu0 %v697
        %v719 = vpop.f32.mrf.mxu0
        %v720 = vadd.f32 0.0, %v719
        %721 = vdwg.mxu0
        %v723 = vsel %vm617, %v524, 0
        %v726 = vsel %vm617, %v565, 0
        %728 = vmatpush.xpose.msra.mxu0 0.0
        %729 = vmatpush.xpose.msra.mxu0 0.0
        %730 = vmatpush.xpose.msra.mxu0 0.0
        %731 = vmatpush.xpose.msra.mxu0 0.0
        %732 = vmatpush.xpose.msra.mxu0 0.0
        %733 = vmatpush.xpose.msra.mxu0 0.0
        %734 = vmatpush.xpose.msra.mxu0 0.0
        %735 = vmatpush.xpose.msra.mxu0 0.0
        %736 = vmatpush.xpose.msra.mxu0 0.0
        %737 = vmatpush.xpose.msra.mxu0 0.0
        %738 = vmatpush.xpose.msra.mxu0 0.0
        %739 = vmatpush.xpose.msra.mxu0 0.0
        %740 = vmatpush.xpose.msra.mxu0 0.0
        %741 = vmatpush.xpose.msra.mxu0 0.0
        %742 = vmatpush.xpose.msra.mxu0 0.0
        %743 = vmatpush.xpose.msra.mxu0 %v726
        %744 = vmatmul.f32.gmra.mxu0 %v723
        %v745 = vpop.f32.mrf.mxu0
        %v746 = vadd.f32 0.0, %v745
        %747 = vdwg.mxu0
        %v749 = vsel %vm617, %v527, 0
        %v752 = vsel %vm617, %v568, 0
        %754 = vmatpush.xpose.msra.mxu0 0.0
        %755 = vmatpush.xpose.msra.mxu0 0.0
        %756 = vmatpush.xpose.msra.mxu0 0.0
        %757 = vmatpush.xpose.msra.mxu0 0.0
        %758 = vmatpush.xpose.msra.mxu0 0.0
        %759 = vmatpush.xpose.msra.mxu0 0.0
        %760 = vmatpush.xpose.msra.mxu0 0.0
        %761 = vmatpush.xpose.msra.mxu0 0.0
        %762 = vmatpush.xpose.msra.mxu0 0.0
        %763 = vmatpush.xpose.msra.mxu0 0.0
        %764 = vmatpush.xpose.msra.mxu0 0.0
        %765 = vmatpush.xpose.msra.mxu0 0.0
        %766 = vmatpush.xpose.msra.mxu0 0.0
        %767 = vmatpush.xpose.msra.mxu0 0.0
        %768 = vmatpush.xpose.msra.mxu0 0.0
        %769 = vmatpush.xpose.msra.mxu0 %v752
        %770 = vmatmul.f32.gmra.mxu0 %v749
        %v771 = vpop.f32.mrf.mxu0
        %v772 = vadd.f32 0.0, %v771
        %773 = vdwg.mxu0
        %v775 = vsel %vm617, %v530, 0
        %v778 = vsel %vm617, %v571, 0
        %780 = vmatpush.xpose.msra.mxu0 0.0
        %781 = vmatpush.xpose.msra.mxu0 0.0
        %782 = vmatpush.xpose.msra.mxu0 0.0
        %783 = vmatpush.xpose.msra.mxu0 0.0
        %784 = vmatpush.xpose.msra.mxu0 0.0
        %785 = vmatpush.xpose.msra.mxu0 0.0
        %786 = vmatpush.xpose.msra.mxu0 0.0
        %787 = vmatpush.xpose.msra.mxu0 0.0
        %788 = vmatpush.xpose.msra.mxu0 0.0
        %789 = vmatpush.xpose.msra.mxu0 0.0
        %790 = vmatpush.xpose.msra.mxu0 0.0
        %791 = vmatpush.xpose.msra.mxu0 0.0
        %792 = vmatpush.xpose.msra.mxu0 0.0
        %793 = vmatpush.xpose.msra.mxu0 0.0
        %794 = vmatpush.xpose.msra.mxu0 0.0
        %795 = vmatpush.xpose.msra.mxu0 %v778
        %796 = vmatmul.f32.gmra.mxu0 %v775
        %v797 = vpop.f32.mrf.mxu0
        %v798 = vadd.f32 0.0, %v797
        %799 = vdwg.mxu0
        %v801 = vsel %vm617, %v533, 0
        %v804 = vsel %vm617, %v574, 0
        %806 = vmatpush.xpose.msra.mxu0 0.0
        %807 = vmatpush.xpose.msra.mxu0 0.0
        %808 = vmatpush.xpose.msra.mxu0 0.0
        %809 = vmatpush.xpose.msra.mxu0 0.0
        %810 = vmatpush.xpose.msra.mxu0 0.0
        %811 = vmatpush.xpose.msra.mxu0 0.0
        %812 = vmatpush.xpose.msra.mxu0 0.0
        %813 = vmatpush.xpose.msra.mxu0 0.0
        %814 = vmatpush.xpose.msra.mxu0 0.0
        %815 = vmatpush.xpose.msra.mxu0 0.0
        %816 = vmatpush.xpose.msra.mxu0 0.0
        %817 = vmatpush.xpose.msra.mxu0 0.0
        %818 = vmatpush.xpose.msra.mxu0 0.0
        %819 = vmatpush.xpose.msra.mxu0 0.0
        %820 = vmatpush.xpose.msra.mxu0 0.0
        %821 = vmatpush.xpose.msra.mxu0 %v804
        %822 = vmatmul.f32.gmra.mxu0 %v801
        %v823 = vpop.f32.mrf.mxu0
        %v824 = vadd.f32 0.0, %v823
        %825 = vdwg.mxu0
        %v826 = vmul.f32 %v642, 0.35355338
        %v827 = vmul.f32 %v668, 0.35355338
        %v828 = vmul.f32 %v694, 0.35355338
        %v829 = vmul.f32 %v720, 0.35355338
        %v830 = vmul.f32 %v746, 0.35355338
        %v831 = vmul.f32 %v772, 0.35355338
        %v832 = vmul.f32 %v798, 0.35355338
        %v833 = vmul.f32 %v824, 0.35355338
        %v834 = vsel %vm617, %v826, -inf
        %835 = vmax.xlane.f32.xlu0 %v834
        %v836 = vpop.xlane.xlu0 %835
        %v837 = vsel %vm617, %v827, -inf
        %838 = vmax.xlane.f32.xlu0 %v837
        %v839 = vpop.xlane.xlu0 %838
        %v840 = vsel %vm617, %v828, -inf
        %841 = vmax.xlane.f32.xlu0 %v840
        %v842 = vpop.xlane.xlu0 %841
        %v843 = vsel %vm617, %v829, -inf
        %844 = vmax.xlane.f32.xlu0 %v843
        %v845 = vpop.xlane.xlu0 %844
        %v846 = vsel %vm617, %v830, -inf
        %847 = vmax.xlane.f32.xlu0 %v846
        %v848 = vpop.xlane.xlu0 %847
        %v849 = vsel %vm617, %v831, -inf
        %850 = vmax.xlane.f32.xlu0 %v849
        %v851 = vpop.xlane.xlu0 %850
        %v852 = vsel %vm617, %v832, -inf
        %853 = vmax.xlane.f32.xlu0 %v852
        %v854 = vpop.xlane.xlu0 %853
        %v855 = vsel %vm617, %v833, -inf
        %856 = vmax.xlane.f32.xlu0 %v855
        %v857 = vpop.xlane.xlu0 %856
        %v858 = vsub.f32 %v826, %v836
        %v859 = vsub.f32 %v827, %v839
        %v860 = vsub.f32 %v828, %v842
        %v861 = vsub.f32 %v829, %v845
        %v862 = vsub.f32 %v830, %v848
        %v863 = vsub.f32 %v831, %v851
        %v864 = vsub.f32 %v832, %v854
        %v865 = vsub.f32 %v833, %v857
        %v866 = vmul.f32 %v858, 1.442695
        %v867 = vpow.pop %v866
        %v868 = vmul.f32 %v859, 1.442695
        %v869 = vpow.pop %v868
        %v870 = vmul.f32 %v860, 1.442695
        %v871 = vpow.pop %v870
        %v872 = vmul.f32 %v861, 1.442695
        %v873 = vpow.pop %v872
        %v874 = vmul.f32 %v862, 1.442695
        %v875 = vpow.pop %v874
        %v876 = vmul.f32 %v863, 1.442695
        %v877 = vpow.pop %v876
        %v878 = vmul.f32 %v864, 1.442695
        %v879 = vpow.pop %v878
        %v880 = vmul.f32 %v865, 1.442695
        %v881 = vpow.pop %v880
        %v882 = vsel %vm617, %v867, 0.0
        %883 = vadd.xlane.f32.xlu0 %v882
        %v884 = vpop.xlane.xlu0 %883
        %v885 = vsel %vm617, %v869, 0.0
        %886 = vadd.xlane.f32.xlu0 %v885
        %v887 = vpop.xlane.xlu0 %886
        %v888 = vsel %vm617, %v871, 0.0
        %889 = vadd.xlane.f32.xlu0 %v888
        %v890 = vpop.xlane.xlu0 %889
        %v891 = vsel %vm617, %v873, 0.0
        %892 = vadd.xlane.f32.xlu0 %v891
        %v893 = vpop.xlane.xlu0 %892
        %v894 = vsel %vm617, %v875, 0.0
        %895 = vadd.xlane.f32.xlu0 %v894
        %v896 = vpop.xlane.xlu0 %895
        %v897 = vsel %vm617, %v877, 0.0
        %898 = vadd.xlane.f32.xlu0 %v897
        %v899 = vpop.xlane.xlu0 %898
        %v900 = vsel %vm617, %v879, 0.0
        %901 = vadd.xlane.f32.xlu0 %v900
        %v902 = vpop.xlane.xlu0 %901
        %v903 = vsel %vm617, %v881, 0.0
        %904 = vadd.xlane.f32.xlu0 %v903
        %v905 = vpop.xlane.xlu0 %904
        %v906 = vrcp.pop %v884
        %v907 = vmul.f32 %v884, %v906
        %v908 = vsub.f32 1.0, %v907
        %v909 = vmul.f32 %v906, %v908
        %v910 = vadd.f32 %v906, %v909
        %vm911 = vweird.f32 %v884
        %vm912 = vweird.f32 %v906
        %vm913 = vmor %vm911, %vm912
        %v914 = vsel %vm913, %v906, %v910
        %v915 = vand.u32 2147483647, %v884
        %vm916 = vcmp.eq.f32.partialorder %v915, 8.507059e+37
        %v917 = vand.u32 %v884, 2147483648
        %v918 = vor.u32 1.1754944e-38, %v917
        %v919 = vsel %vm916, %v918, %v914
        %v920 = vmul.f32 %v867, %v919
        %v921 = vrcp.pop %v887
        %v922 = vmul.f32 %v887, %v921
        %v923 = vsub.f32 1.0, %v922
        %v924 = vmul.f32 %v921, %v923
        %v925 = vadd.f32 %v921, %v924
        %vm926 = vweird.f32 %v887
        %vm927 = vweird.f32 %v921
        %vm928 = vmor %vm926, %vm927
        %v929 = vsel %vm928, %v921, %v925
        %v930 = vand.u32 2147483647, %v887
        %vm931 = vcmp.eq.f32.partialorder %v930, 8.507059e+37
        %v932 = vand.u32 %v887, 2147483648
        %v933 = vor.u32 1.1754944e-38, %v932
        %v934 = vsel %vm931, %v933, %v929
        %v935 = vmul.f32 %v869, %v934
        %v936 = vrcp.pop %v890
        %v937 = vmul.f32 %v890, %v936
        %v938 = vsub.f32 1.0, %v937
        %v939 = vmul.f32 %v936, %v938
        %v940 = vadd.f32 %v936, %v939
        %vm941 = vweird.f32 %v890
        %vm942 = vweird.f32 %v936
        %vm943 = vmor %vm941, %vm942
        %v944 = vsel %vm943, %v936, %v940
        %v945 = vand.u32 2147483647, %v890
        %vm946 = vcmp.eq.f32.partialorder %v945, 8.507059e+37
        %v947 = vand.u32 %v890, 2147483648
        %v948 = vor.u32 1.1754944e-38, %v947
        %v949 = vsel %vm946, %v948, %v944
        %v950 = vmul.f32 %v871, %v949
        %v951 = vrcp.pop %v893
        %v952 = vmul.f32 %v893, %v951
        %v953 = vsub.f32 1.0, %v952
        %v954 = vmul.f32 %v951, %v953
        %v955 = vadd.f32 %v951, %v954
        %vm956 = vweird.f32 %v893
        %vm957 = vweird.f32 %v951
        %vm958 = vmor %vm956, %vm957
        %v959 = vsel %vm958, %v951, %v955
        %v960 = vand.u32 2147483647, %v893
        %vm961 = vcmp.eq.f32.partialorder %v960, 8.507059e+37
        %v962 = vand.u32 %v893, 2147483648
        %v963 = vor.u32 1.1754944e-38, %v962
        %v964 = vsel %vm961, %v963, %v959
        %v965 = vmul.f32 %v873, %v964
        %v966 = vrcp.pop %v896
        %v967 = vmul.f32 %v896, %v966
        %v968 = vsub.f32 1.0, %v967
        %v969 = vmul.f32 %v966, %v968
        %v970 = vadd.f32 %v966, %v969
        %vm971 = vweird.f32 %v896
        %vm972 = vweird.f32 %v966
        %vm973 = vmor %vm971, %vm972
        %v974 = vsel %vm973, %v966, %v970
        %v975 = vand.u32 2147483647, %v896
        %vm976 = vcmp.eq.f32.partialorder %v975, 8.507059e+37
        %v977 = vand.u32 %v896, 2147483648
        %v978 = vor.u32 1.1754944e-38, %v977
        %v979 = vsel %vm976, %v978, %v974
        %v980 = vmul.f32 %v875, %v979
        %v981 = vrcp.pop %v899
        %v982 = vmul.f32 %v899, %v981
        %v983 = vsub.f32 1.0, %v982
        %v984 = vmul.f32 %v981, %v983
        %v985 = vadd.f32 %v981, %v984
        %vm986 = vweird.f32 %v899
        %vm987 = vweird.f32 %v981
        %vm988 = vmor %vm986, %vm987
        %v989 = vsel %vm988, %v981, %v985
        %v990 = vand.u32 2147483647, %v899
        %vm991 = vcmp.eq.f32.partialorder %v990, 8.507059e+37
        %v992 = vand.u32 %v899, 2147483648
        %v993 = vor.u32 1.1754944e-38, %v992
        %v994 = vsel %vm991, %v993, %v989
        %v995 = vmul.f32 %v877, %v994
        %v996 = vrcp.pop %v902
        %v997 = vmul.f32 %v902, %v996
        %v998 = vsub.f32 1.0, %v997
        %v999 = vmul.f32 %v996, %v998
        %v1000 = vadd.f32 %v996, %v999
        %vm1001 = vweird.f32 %v902
        %vm1002 = vweird.f32 %v996
        %vm1003 = vmor %vm1001, %vm1002
        %v1004 = vsel %vm1003, %v996, %v1000
        %v1005 = vand.u32 2147483647, %v902
        %vm1006 = vcmp.eq.f32.partialorder %v1005, 8.507059e+37
        %v1007 = vand.u32 %v902, 2147483648
        %v1008 = vor.u32 1.1754944e-38, %v1007
        %v1009 = vsel %vm1006, %v1008, %v1004
        %v1010 = vmul.f32 %v879, %v1009
        %v1011 = vrcp.pop %v905
        %v1012 = vmul.f32 %v905, %v1011
        %v1013 = vsub.f32 1.0, %v1012
        %v1014 = vmul.f32 %v1011, %v1013
        %v1015 = vadd.f32 %v1011, %v1014
        %vm1016 = vweird.f32 %v905
        %vm1017 = vweird.f32 %v1011
        %vm1018 = vmor %vm1016, %vm1017
        %v1019 = vsel %vm1018, %v1011, %v1015
        %v1020 = vand.u32 2147483647, %v905
        %vm1021 = vcmp.eq.f32.partialorder %v1020, 8.507059e+37
        %v1022 = vand.u32 %v905, 2147483648
        %v1023 = vor.u32 1.1754944e-38, %v1022
        %v1024 = vsel %vm1021, %v1023, %v1019
        %v1025 = vmul.f32 %v881, %v1024
        %v1027 = vsel %vm617, %v920, 0
        %1029 = vmatpush.msra.mxu0 0.0
        %1030 = vmatpush.msra.mxu0 0.0
        %1031 = vmatpush.msra.mxu0 0.0
        %1032 = vmatpush.msra.mxu0 0.0
        %1033 = vmatpush.msra.mxu0 0.0
        %1034 = vmatpush.msra.mxu0 0.0
        %1035 = vmatpush.msra.mxu0 0.0
        %1036 = vmatpush.msra.mxu0 0.0
        %1037 = vmatpush.msra.mxu0 0.0
        %1038 = vmatpush.msra.mxu0 0.0
        %1039 = vmatpush.msra.mxu0 0.0
        %1040 = vmatpush.msra.mxu0 0.0
        %1041 = vmatpush.msra.mxu0 0.0
        %1042 = vmatpush.msra.mxu0 0.0
        %1043 = vmatpush.msra.mxu0 0.0
        %1044 = vmatpush.msra.mxu0 %v594
        %1045 = vmatmul.f32.gmra.mxu0 %v1027
        %v1046 = vpop.f32.mrf.mxu0
        %v1047 = vadd.f32 0.0, %v1046
        %1048 = vdwg.mxu0
        %v1050 = vsel %vm617, %v935, 0
        %1052 = vmatpush.msra.mxu0 0.0
        %1053 = vmatpush.msra.mxu0 0.0
        %1054 = vmatpush.msra.mxu0 0.0
        %1055 = vmatpush.msra.mxu0 0.0
        %1056 = vmatpush.msra.mxu0 0.0
        %1057 = vmatpush.msra.mxu0 0.0
        %1058 = vmatpush.msra.mxu0 0.0
        %1059 = vmatpush.msra.mxu0 0.0
        %1060 = vmatpush.msra.mxu0 0.0
        %1061 = vmatpush.msra.mxu0 0.0
        %1062 = vmatpush.msra.mxu0 0.0
        %1063 = vmatpush.msra.mxu0 0.0
        %1064 = vmatpush.msra.mxu0 0.0
        %1065 = vmatpush.msra.mxu0 0.0
        %1066 = vmatpush.msra.mxu0 0.0
        %1067 = vmatpush.msra.mxu0 %v597
        %1068 = vmatmul.f32.gmra.mxu0 %v1050
        %v1069 = vpop.f32.mrf.mxu0
        %v1070 = vadd.f32 0.0, %v1069
        %1071 = vdwg.mxu0
        %v1073 = vsel %vm617, %v950, 0
        %1075 = vmatpush.msra.mxu0 0.0
        %1076 = vmatpush.msra.mxu0 0.0
        %1077 = vmatpush.msra.mxu0 0.0
        %1078 = vmatpush.msra.mxu0 0.0
        %1079 = vmatpush.msra.mxu0 0.0
        %1080 = vmatpush.msra.mxu0 0.0
        %1081 = vmatpush.msra.mxu0 0.0
        %1082 = vmatpush.msra.mxu0 0.0
        %1083 = vmatpush.msra.mxu0 0.0
        %1084 = vmatpush.msra.mxu0 0.0
        %1085 = vmatpush.msra.mxu0 0.0
        %1086 = vmatpush.msra.mxu0 0.0
        %1087 = vmatpush.msra.mxu0 0.0
        %1088 = vmatpush.msra.mxu0 0.0
        %1089 = vmatpush.msra.mxu0 0.0
        %1090 = vmatpush.msra.mxu0 %v600
        %1091 = vmatmul.f32.gmra.mxu0 %v1073
        %v1092 = vpop.f32.mrf.mxu0
        %v1093 = vadd.f32 0.0, %v1092
        %1094 = vdwg.mxu0
        %v1096 = vsel %vm617, %v965, 0
        %1098 = vmatpush.msra.mxu0 0.0
        %1099 = vmatpush.msra.mxu0 0.0
        %1100 = vmatpush.msra.mxu0 0.0
        %1101 = vmatpush.msra.mxu0 0.0
        %1102 = vmatpush.msra.mxu0 0.0
        %1103 = vmatpush.msra.mxu0 0.0
        %1104 = vmatpush.msra.mxu0 0.0
        %1105 = vmatpush.msra.mxu0 0.0
        %1106 = vmatpush.msra.mxu0 0.0
        %1107 = vmatpush.msra.mxu0 0.0
        %1108 = vmatpush.msra.mxu0 0.0
        %1109 = vmatpush.msra.mxu0 0.0
        %1110 = vmatpush.msra.mxu0 0.0
        %1111 = vmatpush.msra.mxu0 0.0
        %1112 = vmatpush.msra.mxu0 0.0
        %1113 = vmatpush.msra.mxu0 %v603
        %1114 = vmatmul.f32.gmra.mxu0 %v1096
        %v1115 = vpop.f32.mrf.mxu0
        %v1116 = vadd.f32 0.0, %v1115
        %1117 = vdwg.mxu0
        %v1119 = vsel %vm617, %v980, 0
        %1121 = vmatpush.msra.mxu0 0.0
        %1122 = vmatpush.msra.mxu0 0.0
        %1123 = vmatpush.msra.mxu0 0.0
        %1124 = vmatpush.msra.mxu0 0.0
        %1125 = vmatpush.msra.mxu0 0.0
        %1126 = vmatpush.msra.mxu0 0.0
        %1127 = vmatpush.msra.mxu0 0.0
        %1128 = vmatpush.msra.mxu0 0.0
        %1129 = vmatpush.msra.mxu0 0.0
        %1130 = vmatpush.msra.mxu0 0.0
        %1131 = vmatpush.msra.mxu0 0.0
        %1132 = vmatpush.msra.mxu0 0.0
        %1133 = vmatpush.msra.mxu0 0.0
        %1134 = vmatpush.msra.mxu0 0.0
        %1135 = vmatpush.msra.mxu0 0.0
        %1136 = vmatpush.msra.mxu0 %v606
        %1137 = vmatmul.f32.gmra.mxu0 %v1119
        %v1138 = vpop.f32.mrf.mxu0
        %v1139 = vadd.f32 0.0, %v1138
        %1140 = vdwg.mxu0
        %v1142 = vsel %vm617, %v995, 0
        %1144 = vmatpush.msra.mxu0 0.0
        %1145 = vmatpush.msra.mxu0 0.0
        %1146 = vmatpush.msra.mxu0 0.0
        %1147 = vmatpush.msra.mxu0 0.0
        %1148 = vmatpush.msra.mxu0 0.0
        %1149 = vmatpush.msra.mxu0 0.0
        %1150 = vmatpush.msra.mxu0 0.0
        %1151 = vmatpush.msra.mxu0 0.0
        %1152 = vmatpush.msra.mxu0 0.0
        %1153 = vmatpush.msra.mxu0 0.0
        %1154 = vmatpush.msra.mxu0 0.0
        %1155 = vmatpush.msra.mxu0 0.0
        %1156 = vmatpush.msra.mxu0 0.0
        %1157 = vmatpush.msra.mxu0 0.0
        %1158 = vmatpush.msra.mxu0 0.0
        %1159 = vmatpush.msra.mxu0 %v609
        %1160 = vmatmul.f32.gmra.mxu0 %v1142
        %v1161 = vpop.f32.mrf.mxu0
        %v1162 = vadd.f32 0.0, %v1161
        %1163 = vdwg.mxu0
        %v1165 = vsel %vm617, %v1010, 0
        %1167 = vmatpush.msra.mxu0 0.0
        %1168 = vmatpush.msra.mxu0 0.0
        %1169 = vmatpush.msra.mxu0 0.0
        %1170 = vmatpush.msra.mxu0 0.0
        %1171 = vmatpush.msra.mxu0 0.0
        %1172 = vmatpush.msra.mxu0 0.0
        %1173 = vmatpush.msra.mxu0 0.0
        %1174 = vmatpush.msra.mxu0 0.0
        %1175 = vmatpush.msra.mxu0 0.0
        %1176 = vmatpush.msra.mxu0 0.0
        %1177 = vmatpush.msra.mxu0 0.0
        %1178 = vmatpush.msra.mxu0 0.0
        %1179 = vmatpush.msra.mxu0 0.0
        %1180 = vmatpush.msra.mxu0 0.0
        %1181 = vmatpush.msra.mxu0 0.0
        %1182 = vmatpush.msra.mxu0 %v612
        %1183 = vmatmul.f32.gmra.mxu0 %v1165
        %v1184 = vpop.f32.mrf.mxu0
        %v1185 = vadd.f32 0.0, %v1184
        %1186 = vdwg.mxu0
        %v1188 = vsel %vm617, %v1025, 0
        %1190 = vmatpush.msra.mxu0 0.0
        %1191 = vmatpush.msra.mxu0 0.0
        %1192 = vmatpush.msra.mxu0 0.0
        %1193 = vmatpush.msra.mxu0 0.0
        %1194 = vmatpush.msra.mxu0 0.0
        %1195 = vmatpush.msra.mxu0 0.0
        %1196 = vmatpush.msra.mxu0 0.0
        %1197 = vmatpush.msra.mxu0 0.0
        %1198 = vmatpush.msra.mxu0 0.0
        %1199 = vmatpush.msra.mxu0 0.0
        %1200 = vmatpush.msra.mxu0 0.0
        %1201 = vmatpush.msra.mxu0 0.0
        %1202 = vmatpush.msra.mxu0 0.0
        %1203 = vmatpush.msra.mxu0 0.0
        %1204 = vmatpush.msra.mxu0 0.0
        %1205 = vmatpush.msra.mxu0 %v615
        %1206 = vmatmul.f32.gmra.mxu0 %v1188
        %v1207 = vpop.f32.mrf.mxu0
        %v1208 = vadd.f32 0.0, %v1207
        %1209 = vdwg.mxu0
        %1210 = vrot.lane.b32.xlu0 %v512, 120
        %v1211 = vpop.permute.xlu0 %1210
        %1212 = vrot.lane.b32.xlu0 %v553, 120
        %v1213 = vpop.permute.xlu0 %1212
        %v1214 = vsel %vm617, %v1211, 0
        %v1216 = vsel %vm617, %v1213, 0
        %1218 = vmatpush.xpose.msra.mxu0 0.0
        %1219 = vmatpush.xpose.msra.mxu0 0.0
        %1220 = vmatpush.xpose.msra.mxu0 0.0
        %1221 = vmatpush.xpose.msra.mxu0 0.0
        %1222 = vmatpush.xpose.msra.mxu0 0.0
        %1223 = vmatpush.xpose.msra.mxu0 0.0
        %1224 = vmatpush.xpose.msra.mxu0 0.0
        %1225 = vmatpush.xpose.msra.mxu0 0.0
        %1226 = vmatpush.xpose.msra.mxu0 0.0
        %1227 = vmatpush.xpose.msra.mxu0 0.0
        %1228 = vmatpush.xpose.msra.mxu0 0.0
        %1229 = vmatpush.xpose.msra.mxu0 0.0
        %1230 = vmatpush.xpose.msra.mxu0 0.0
        %1231 = vmatpush.xpose.msra.mxu0 0.0
        %1232 = vmatpush.xpose.msra.mxu0 0.0
        %1233 = vmatpush.xpose.msra.mxu0 %v1216
        %1234 = vmatmul.f32.gmra.mxu0 %v1214
        %v1235 = vpop.f32.mrf.mxu0
        %v1236 = vadd.f32 0.0, %v1235
        %1237 = vdwg.mxu0
        %1238 = vrot.lane.b32.xlu0 %v515, 120
        %v1239 = vpop.permute.xlu0 %1238
        %1240 = vrot.lane.b32.xlu0 %v556, 120
        %v1241 = vpop.permute.xlu0 %1240
        %v1242 = vsel %vm617, %v1239, 0
        %v1244 = vsel %vm617, %v1241, 0
        %1246 = vmatpush.xpose.msra.mxu0 0.0
        %1247 = vmatpush.xpose.msra.mxu0 0.0
        %1248 = vmatpush.xpose.msra.mxu0 0.0
        %1249 = vmatpush.xpose.msra.mxu0 0.0
        %1250 = vmatpush.xpose.msra.mxu0 0.0
        %1251 = vmatpush.xpose.msra.mxu0 0.0
        %1252 = vmatpush.xpose.msra.mxu0 0.0
        %1253 = vmatpush.xpose.msra.mxu0 0.0
        %1254 = vmatpush.xpose.msra.mxu0 0.0
        %1255 = vmatpush.xpose.msra.mxu0 0.0
        %1256 = vmatpush.xpose.msra.mxu0 0.0
        %1257 = vmatpush.xpose.msra.mxu0 0.0
        %1258 = vmatpush.xpose.msra.mxu0 0.0
        %1259 = vmatpush.xpose.msra.mxu0 0.0
        %1260 = vmatpush.xpose.msra.mxu0 0.0
        %1261 = vmatpush.xpose.msra.mxu0 %v1244
        %1262 = vmatmul.f32.gmra.mxu0 %v1242
        %v1263 = vpop.f32.mrf.mxu0
        %v1264 = vadd.f32 0.0, %v1263
        %1265 = vdwg.mxu0
        %1266 = vrot.lane.b32.xlu0 %v518, 120
        %v1267 = vpop.permute.xlu0 %1266
        %1268 = vrot.lane.b32.xlu0 %v559, 120
        %v1269 = vpop.permute.xlu0 %1268
        %v1270 = vsel %vm617, %v1267, 0
        %v1272 = vsel %vm617, %v1269, 0
        %1274 = vmatpush.xpose.msra.mxu0 0.0
        %1275 = vmatpush.xpose.msra.mxu0 0.0
        %1276 = vmatpush.xpose.msra.mxu0 0.0
        %1277 = vmatpush.xpose.msra.mxu0 0.0
        %1278 = vmatpush.xpose.msra.mxu0 0.0
        %1279 = vmatpush.xpose.msra.mxu0 0.0
        %1280 = vmatpush.xpose.msra.mxu0 0.0
        %1281 = vmatpush.xpose.msra.mxu0 0.0
        %1282 = vmatpush.xpose.msra.mxu0 0.0
        %1283 = vmatpush.xpose.msra.mxu0 0.0
        %1284 = vmatpush.xpose.msra.mxu0 0.0
        %1285 = vmatpush.xpose.msra.mxu0 0.0
        %1286 = vmatpush.xpose.msra.mxu0 0.0
        %1287 = vmatpush.xpose.msra.mxu0 0.0
        %1288 = vmatpush.xpose.msra.mxu0 0.0
        %1289 = vmatpush.xpose.msra.mxu0 %v1272
        %1290 = vmatmul.f32.gmra.mxu0 %v1270
        %v1291 = vpop.f32.mrf.mxu0
        %v1292 = vadd.f32 0.0, %v1291
        %1293 = vdwg.mxu0
        %1294 = vrot.lane.b32.xlu0 %v521, 120
        %v1295 = vpop.permute.xlu0 %1294
        %1296 = vrot.lane.b32.xlu0 %v562, 120
        %v1297 = vpop.permute.xlu0 %1296
        %v1298 = vsel %vm617, %v1295, 0
        %v1300 = vsel %vm617, %v1297, 0
        %1302 = vmatpush.xpose.msra.mxu0 0.0
        %1303 = vmatpush.xpose.msra.mxu0 0.0
        %1304 = vmatpush.xpose.msra.mxu0 0.0
        %1305 = vmatpush.xpose.msra.mxu0 0.0
        %1306 = vmatpush.xpose.msra.mxu0 0.0
        %1307 = vmatpush.xpose.msra.mxu0 0.0
        %1308 = vmatpush.xpose.msra.mxu0 0.0
        %1309 = vmatpush.xpose.msra.mxu0 0.0
        %1310 = vmatpush.xpose.msra.mxu0 0.0
        %1311 = vmatpush.xpose.msra.mxu0 0.0
        %1312 = vmatpush.xpose.msra.mxu0 0.0
        %1313 = vmatpush.xpose.msra.mxu0 0.0
        %1314 = vmatpush.xpose.msra.mxu0 0.0
        %1315 = vmatpush.xpose.msra.mxu0 0.0
        %1316 = vmatpush.xpose.msra.mxu0 0.0
        %1317 = vmatpush.xpose.msra.mxu0 %v1300
        %1318 = vmatmul.f32.gmra.mxu0 %v1298
        %v1319 = vpop.f32.mrf.mxu0
        %v1320 = vadd.f32 0.0, %v1319
        %1321 = vdwg.mxu0
        %1322 = vrot.lane.b32.xlu0 %v524, 120
        %v1323 = vpop.permute.xlu0 %1322
        %1324 = vrot.lane.b32.xlu0 %v565, 120
        %v1325 = vpop.permute.xlu0 %1324
        %v1326 = vsel %vm617, %v1323, 0
        %v1328 = vsel %vm617, %v1325, 0
        %1330 = vmatpush.xpose.msra.mxu0 0.0
        %1331 = vmatpush.xpose.msra.mxu0 0.0
        %1332 = vmatpush.xpose.msra.mxu0 0.0
        %1333 = vmatpush.xpose.msra.mxu0 0.0
        %1334 = vmatpush.xpose.msra.mxu0 0.0
        %1335 = vmatpush.xpose.msra.mxu0 0.0
        %1336 = vmatpush.xpose.msra.mxu0 0.0
        %1337 = vmatpush.xpose.msra.mxu0 0.0
        %1338 = vmatpush.xpose.msra.mxu0 0.0
        %1339 = vmatpush.xpose.msra.mxu0 0.0
        %1340 = vmatpush.xpose.msra.mxu0 0.0
        %1341 = vmatpush.xpose.msra.mxu0 0.0
        %1342 = vmatpush.xpose.msra.mxu0 0.0
        %1343 = vmatpush.xpose.msra.mxu0 0.0
        %1344 = vmatpush.xpose.msra.mxu0 0.0
        %1345 = vmatpush.xpose.msra.mxu0 %v1328
        %1346 = vmatmul.f32.gmra.mxu0 %v1326
        %v1347 = vpop.f32.mrf.mxu0
        %v1348 = vadd.f32 0.0, %v1347
        %1349 = vdwg.mxu0
        %1350 = vrot.lane.b32.xlu0 %v527, 120
        %v1351 = vpop.permute.xlu0 %1350
        %1352 = vrot.lane.b32.xlu0 %v568, 120
        %v1353 = vpop.permute.xlu0 %1352
        %v1354 = vsel %vm617, %v1351, 0
        %v1356 = vsel %vm617, %v1353, 0
        %1358 = vmatpush.xpose.msra.mxu0 0.0
        %1359 = vmatpush.xpose.msra.mxu0 0.0
        %1360 = vmatpush.xpose.msra.mxu0 0.0
        %1361 = vmatpush.xpose.msra.mxu0 0.0
        %1362 = vmatpush.xpose.msra.mxu0 0.0
        %1363 = vmatpush.xpose.msra.mxu0 0.0
        %1364 = vmatpush.xpose.msra.mxu0 0.0
        %1365 = vmatpush.xpose.msra.mxu0 0.0
        %1366 = vmatpush.xpose.msra.mxu0 0.0
        %1367 = vmatpush.xpose.msra.mxu0 0.0
        %1368 = vmatpush.xpose.msra.mxu0 0.0
        %1369 = vmatpush.xpose.msra.mxu0 0.0
        %1370 = vmatpush.xpose.msra.mxu0 0.0
        %1371 = vmatpush.xpose.msra.mxu0 0.0
        %1372 = vmatpush.xpose.msra.mxu0 0.0
        %1373 = vmatpush.xpose.msra.mxu0 %v1356
        %1374 = vmatmul.f32.gmra.mxu0 %v1354
        %v1375 = vpop.f32.mrf.mxu0
        %v1376 = vadd.f32 0.0, %v1375
        %1377 = vdwg.mxu0
        %1378 = vrot.lane.b32.xlu0 %v530, 120
        %v1379 = vpop.permute.xlu0 %1378
        %1380 = vrot.lane.b32.xlu0 %v571, 120
        %v1381 = vpop.permute.xlu0 %1380
        %v1382 = vsel %vm617, %v1379, 0
        %v1384 = vsel %vm617, %v1381, 0
        %1386 = vmatpush.xpose.msra.mxu0 0.0
        %1387 = vmatpush.xpose.msra.mxu0 0.0
        %1388 = vmatpush.xpose.msra.mxu0 0.0
        %1389 = vmatpush.xpose.msra.mxu0 0.0
        %1390 = vmatpush.xpose.msra.mxu0 0.0
        %1391 = vmatpush.xpose.msra.mxu0 0.0
        %1392 = vmatpush.xpose.msra.mxu0 0.0
        %1393 = vmatpush.xpose.msra.mxu0 0.0
        %1394 = vmatpush.xpose.msra.mxu0 0.0
        %1395 = vmatpush.xpose.msra.mxu0 0.0
        %1396 = vmatpush.xpose.msra.mxu0 0.0
        %1397 = vmatpush.xpose.msra.mxu0 0.0
        %1398 = vmatpush.xpose.msra.mxu0 0.0
        %1399 = vmatpush.xpose.msra.mxu0 0.0
        %1400 = vmatpush.xpose.msra.mxu0 0.0
        %1401 = vmatpush.xpose.msra.mxu0 %v1384
        %1402 = vmatmul.f32.gmra.mxu0 %v1382
        %v1403 = vpop.f32.mrf.mxu0
        %v1404 = vadd.f32 0.0, %v1403
        %1405 = vdwg.mxu0
        %1406 = vrot.lane.b32.xlu0 %v533, 120
        %v1407 = vpop.permute.xlu0 %1406
        %1408 = vrot.lane.b32.xlu0 %v574, 120
        %v1409 = vpop.permute.xlu0 %1408
        %v1410 = vsel %vm617, %v1407, 0
        %v1412 = vsel %vm617, %v1409, 0
        %1414 = vmatpush.xpose.msra.mxu0 0.0
        %1415 = vmatpush.xpose.msra.mxu0 0.0
        %1416 = vmatpush.xpose.msra.mxu0 0.0
        %1417 = vmatpush.xpose.msra.mxu0 0.0
        %1418 = vmatpush.xpose.msra.mxu0 0.0
        %1419 = vmatpush.xpose.msra.mxu0 0.0
        %1420 = vmatpush.xpose.msra.mxu0 0.0
        %1421 = vmatpush.xpose.msra.mxu0 0.0
        %1422 = vmatpush.xpose.msra.mxu0 0.0
        %1423 = vmatpush.xpose.msra.mxu0 0.0
        %1424 = vmatpush.xpose.msra.mxu0 0.0
        %1425 = vmatpush.xpose.msra.mxu0 0.0
        %1426 = vmatpush.xpose.msra.mxu0 0.0
        %1427 = vmatpush.xpose.msra.mxu0 0.0
        %1428 = vmatpush.xpose.msra.mxu0 0.0
        %1429 = vmatpush.xpose.msra.mxu0 %v1412
        %1430 = vmatmul.f32.gmra.mxu0 %v1410
        %v1431 = vpop.f32.mrf.mxu0
        %v1432 = vadd.f32 0.0, %v1431
        %1433 = vdwg.mxu0
        %v1434 = vmul.f32 %v1236, 0.35355338
        %v1435 = vmul.f32 %v1264, 0.35355338
        %v1436 = vmul.f32 %v1292, 0.35355338
        %v1437 = vmul.f32 %v1320, 0.35355338
        %v1438 = vmul.f32 %v1348, 0.35355338
        %v1439 = vmul.f32 %v1376, 0.35355338
        %v1440 = vmul.f32 %v1404, 0.35355338
        %v1441 = vmul.f32 %v1432, 0.35355338
        %v1442 = vsel %vm617, %v1434, -inf
        %1443 = vmax.xlane.f32.xlu0 %v1442
        %v1444 = vpop.xlane.xlu0 %1443
        %v1445 = vsel %vm617, %v1435, -inf
        %1446 = vmax.xlane.f32.xlu0 %v1445
        %v1447 = vpop.xlane.xlu0 %1446
        %v1448 = vsel %vm617, %v1436, -inf
        %1449 = vmax.xlane.f32.xlu0 %v1448
        %v1450 = vpop.xlane.xlu0 %1449
        %v1451 = vsel %vm617, %v1437, -inf
        %1452 = vmax.xlane.f32.xlu0 %v1451
        %v1453 = vpop.xlane.xlu0 %1452
        %v1454 = vsel %vm617, %v1438, -inf
        %1455 = vmax.xlane.f32.xlu0 %v1454
        %v1456 = vpop.xlane.xlu0 %1455
        %v1457 = vsel %vm617, %v1439, -inf
        %1458 = vmax.xlane.f32.xlu0 %v1457
        %v1459 = vpop.xlane.xlu0 %1458
        %v1460 = vsel %vm617, %v1440, -inf
        %1461 = vmax.xlane.f32.xlu0 %v1460
        %v1462 = vpop.xlane.xlu0 %1461
        %v1463 = vsel %vm617, %v1441, -inf
        %1464 = vmax.xlane.f32.xlu0 %v1463
        %v1465 = vpop.xlane.xlu0 %1464
        %v1466 = vsub.f32 %v1434, %v1444
        %v1467 = vsub.f32 %v1435, %v1447
        %v1468 = vsub.f32 %v1436, %v1450
        %v1469 = vsub.f32 %v1437, %v1453
        %v1470 = vsub.f32 %v1438, %v1456
        %v1471 = vsub.f32 %v1439, %v1459
        %v1472 = vsub.f32 %v1440, %v1462
        %v1473 = vsub.f32 %v1441, %v1465
        %v1474 = vmul.f32 %v1466, 1.442695
        %v1475 = vpow.pop %v1474
        %v1476 = vmul.f32 %v1467, 1.442695
        %v1477 = vpow.pop %v1476
        %v1478 = vmul.f32 %v1468, 1.442695
        %v1479 = vpow.pop %v1478
        %v1480 = vmul.f32 %v1469, 1.442695
        %v1481 = vpow.pop %v1480
        %v1482 = vmul.f32 %v1470, 1.442695
        %v1483 = vpow.pop %v1482
        %v1484 = vmul.f32 %v1471, 1.442695
        %v1485 = vpow.pop %v1484
        %v1486 = vmul.f32 %v1472, 1.442695
        %v1487 = vpow.pop %v1486
        %v1488 = vmul.f32 %v1473, 1.442695
        %v1489 = vpow.pop %v1488
        %v1490 = vsel %vm617, %v1475, 0.0
        %1491 = vadd.xlane.f32.xlu0 %v1490
        %v1492 = vpop.xlane.xlu0 %1491
        %v1493 = vsel %vm617, %v1477, 0.0
        %1494 = vadd.xlane.f32.xlu0 %v1493
        %v1495 = vpop.xlane.xlu0 %1494
        %v1496 = vsel %vm617, %v1479, 0.0
        %1497 = vadd.xlane.f32.xlu0 %v1496
        %v1498 = vpop.xlane.xlu0 %1497
        %v1499 = vsel %vm617, %v1481, 0.0
        %1500 = vadd.xlane.f32.xlu0 %v1499
        %v1501 = vpop.xlane.xlu0 %1500
        %v1502 = vsel %vm617, %v1483, 0.0
        %1503 = vadd.xlane.f32.xlu0 %v1502
        %v1504 = vpop.xlane.xlu0 %1503
        %v1505 = vsel %vm617, %v1485, 0.0
        %1506 = vadd.xlane.f32.xlu0 %v1505
        %v1507 = vpop.xlane.xlu0 %1506
        %v1508 = vsel %vm617, %v1487, 0.0
        %1509 = vadd.xlane.f32.xlu0 %v1508
        %v1510 = vpop.xlane.xlu0 %1509
        %v1511 = vsel %vm617, %v1489, 0.0
        %1512 = vadd.xlane.f32.xlu0 %v1511
        %v1513 = vpop.xlane.xlu0 %1512
        %v1514 = vrcp.pop %v1492
        %v1515 = vmul.f32 %v1492, %v1514
        %v1516 = vsub.f32 1.0, %v1515
        %v1517 = vmul.f32 %v1514, %v1516
        %v1518 = vadd.f32 %v1514, %v1517
        %vm1519 = vweird.f32 %v1492
        %vm1520 = vweird.f32 %v1514
        %vm1521 = vmor %vm1519, %vm1520
        %v1522 = vsel %vm1521, %v1514, %v1518
        %v1523 = vand.u32 2147483647, %v1492
        %vm1524 = vcmp.eq.f32.partialorder %v1523, 8.507059e+37
        %v1525 = vand.u32 %v1492, 2147483648
        %v1526 = vor.u32 1.1754944e-38, %v1525
        %v1527 = vsel %vm1524, %v1526, %v1522
        %v1528 = vmul.f32 %v1475, %v1527
        %v1529 = vrcp.pop %v1495
        %v1530 = vmul.f32 %v1495, %v1529
        %v1531 = vsub.f32 1.0, %v1530
        %v1532 = vmul.f32 %v1529, %v1531
        %v1533 = vadd.f32 %v1529, %v1532
        %vm1534 = vweird.f32 %v1495
        %vm1535 = vweird.f32 %v1529
        %vm1536 = vmor %vm1534, %vm1535
        %v1537 = vsel %vm1536, %v1529, %v1533
        %v1538 = vand.u32 2147483647, %v1495
        %vm1539 = vcmp.eq.f32.partialorder %v1538, 8.507059e+37
        %v1540 = vand.u32 %v1495, 2147483648
        %v1541 = vor.u32 1.1754944e-38, %v1540
        %v1542 = vsel %vm1539, %v1541, %v1537
        %v1543 = vmul.f32 %v1477, %v1542
        %v1544 = vrcp.pop %v1498
        %v1545 = vmul.f32 %v1498, %v1544
        %v1546 = vsub.f32 1.0, %v1545
        %v1547 = vmul.f32 %v1544, %v1546
        %v1548 = vadd.f32 %v1544, %v1547
        %vm1549 = vweird.f32 %v1498
        %vm1550 = vweird.f32 %v1544
        %vm1551 = vmor %vm1549, %vm1550
        %v1552 = vsel %vm1551, %v1544, %v1548
        %v1553 = vand.u32 2147483647, %v1498
        %vm1554 = vcmp.eq.f32.partialorder %v1553, 8.507059e+37
        %v1555 = vand.u32 %v1498, 2147483648
        %v1556 = vor.u32 1.1754944e-38, %v1555
        %v1557 = vsel %vm1554, %v1556, %v1552
        %v1558 = vmul.f32 %v1479, %v1557
        %v1559 = vrcp.pop %v1501
        %v1560 = vmul.f32 %v1501, %v1559
        %v1561 = vsub.f32 1.0, %v1560
        %v1562 = vmul.f32 %v1559, %v1561
        %v1563 = vadd.f32 %v1559, %v1562
        %vm1564 = vweird.f32 %v1501
        %vm1565 = vweird.f32 %v1559
        %vm1566 = vmor %vm1564, %vm1565
        %v1567 = vsel %vm1566, %v1559, %v1563
        %v1568 = vand.u32 2147483647, %v1501
        %vm1569 = vcmp.eq.f32.partialorder %v1568, 8.507059e+37
        %v1570 = vand.u32 %v1501, 2147483648
        %v1571 = vor.u32 1.1754944e-38, %v1570
        %v1572 = vsel %vm1569, %v1571, %v1567
        %v1573 = vmul.f32 %v1481, %v1572
        %v1574 = vrcp.pop %v1504
        %v1575 = vmul.f32 %v1504, %v1574
        %v1576 = vsub.f32 1.0, %v1575
        %v1577 = vmul.f32 %v1574, %v1576
        %v1578 = vadd.f32 %v1574, %v1577
        %vm1579 = vweird.f32 %v1504
        %vm1580 = vweird.f32 %v1574
        %vm1581 = vmor %vm1579, %vm1580
        %v1582 = vsel %vm1581, %v1574, %v1578
        %v1583 = vand.u32 2147483647, %v1504
        %vm1584 = vcmp.eq.f32.partialorder %v1583, 8.507059e+37
        %v1585 = vand.u32 %v1504, 2147483648
        %v1586 = vor.u32 1.1754944e-38, %v1585
        %v1587 = vsel %vm1584, %v1586, %v1582
        %v1588 = vmul.f32 %v1483, %v1587
        %v1589 = vrcp.pop %v1507
        %v1590 = vmul.f32 %v1507, %v1589
        %v1591 = vsub.f32 1.0, %v1590
        %v1592 = vmul.f32 %v1589, %v1591
        %v1593 = vadd.f32 %v1589, %v1592
        %vm1594 = vweird.f32 %v1507
        %vm1595 = vweird.f32 %v1589
        %vm1596 = vmor %vm1594, %vm1595
        %v1597 = vsel %vm1596, %v1589, %v1593
        %v1598 = vand.u32 2147483647, %v1507
        %vm1599 = vcmp.eq.f32.partialorder %v1598, 8.507059e+37
        %v1600 = vand.u32 %v1507, 2147483648
        %v1601 = vor.u32 1.1754944e-38, %v1600
        %v1602 = vsel %vm1599, %v1601, %v1597
        %v1603 = vmul.f32 %v1485, %v1602
        %v1604 = vrcp.pop %v1510
        %v1605 = vmul.f32 %v1510, %v1604
        %v1606 = vsub.f32 1.0, %v1605
        %v1607 = vmul.f32 %v1604, %v1606
        %v1608 = vadd.f32 %v1604, %v1607
        %vm1609 = vweird.f32 %v1510
        %vm1610 = vweird.f32 %v1604
        %vm1611 = vmor %vm1609, %vm1610
        %v1612 = vsel %vm1611, %v1604, %v1608
        %v1613 = vand.u32 2147483647, %v1510
        %vm1614 = vcmp.eq.f32.partialorder %v1613, 8.507059e+37
        %v1615 = vand.u32 %v1510, 2147483648
        %v1616 = vor.u32 1.1754944e-38, %v1615
        %v1617 = vsel %vm1614, %v1616, %v1612
        %v1618 = vmul.f32 %v1487, %v1617
        %v1619 = vrcp.pop %v1513
        %v1620 = vmul.f32 %v1513, %v1619
        %v1621 = vsub.f32 1.0, %v1620
        %v1622 = vmul.f32 %v1619, %v1621
        %v1623 = vadd.f32 %v1619, %v1622
        %vm1624 = vweird.f32 %v1513
        %vm1625 = vweird.f32 %v1619
        %vm1626 = vmor %vm1624, %vm1625
        %v1627 = vsel %vm1626, %v1619, %v1623
        %v1628 = vand.u32 2147483647, %v1513
        %vm1629 = vcmp.eq.f32.partialorder %v1628, 8.507059e+37
        %v1630 = vand.u32 %v1513, 2147483648
        %v1631 = vor.u32 1.1754944e-38, %v1630
        %v1632 = vsel %vm1629, %v1631, %v1627
        %v1633 = vmul.f32 %v1489, %v1632
        %1635 = vrot.lane.b32.xlu0 %v594, 120
        %v1636 = vpop.permute.xlu0 %1635
        %v1639 = vsel %vm617, %v1528, 0
        %1641 = vmatpush.msra.mxu0 0.0
        %1642 = vmatpush.msra.mxu0 0.0
        %1643 = vmatpush.msra.mxu0 0.0
        %1644 = vmatpush.msra.mxu0 0.0
        %1645 = vmatpush.msra.mxu0 0.0
        %1646 = vmatpush.msra.mxu0 0.0
        %1647 = vmatpush.msra.mxu0 0.0
        %1648 = vmatpush.msra.mxu0 0.0
        %1649 = vmatpush.msra.mxu0 0.0
        %1650 = vmatpush.msra.mxu0 0.0
        %1651 = vmatpush.msra.mxu0 0.0
        %1652 = vmatpush.msra.mxu0 0.0
        %1653 = vmatpush.msra.mxu0 0.0
        %1654 = vmatpush.msra.mxu0 0.0
        %1655 = vmatpush.msra.mxu0 0.0
        %1656 = vmatpush.msra.mxu0 %v1636
        %1657 = vmatmul.f32.gmra.mxu0 %v1639
        %v1658 = vpop.f32.mrf.mxu0
        %v1659 = vadd.f32 0.0, %v1658
        %1660 = vdwg.mxu0
        %1662 = vrot.lane.b32.xlu0 %v597, 120
        %v1663 = vpop.permute.xlu0 %1662
        %v1666 = vsel %vm617, %v1543, 0
        %1668 = vmatpush.msra.mxu0 0.0
        %1669 = vmatpush.msra.mxu0 0.0
        %1670 = vmatpush.msra.mxu0 0.0
        %1671 = vmatpush.msra.mxu0 0.0
        %1672 = vmatpush.msra.mxu0 0.0
        %1673 = vmatpush.msra.mxu0 0.0
        %1674 = vmatpush.msra.mxu0 0.0
        %1675 = vmatpush.msra.mxu0 0.0
        %1676 = vmatpush.msra.mxu0 0.0
        %1677 = vmatpush.msra.mxu0 0.0
        %1678 = vmatpush.msra.mxu0 0.0
        %1679 = vmatpush.msra.mxu0 0.0
        %1680 = vmatpush.msra.mxu0 0.0
        %1681 = vmatpush.msra.mxu0 0.0
        %1682 = vmatpush.msra.mxu0 0.0
        %1683 = vmatpush.msra.mxu0 %v1663
        %1684 = vmatmul.f32.gmra.mxu0 %v1666
        %v1685 = vpop.f32.mrf.mxu0
        %v1686 = vadd.f32 0.0, %v1685
        %1687 = vdwg.mxu0
        %1689 = vrot.lane.b32.xlu0 %v600, 120
        %v1690 = vpop.permute.xlu0 %1689
        %v1693 = vsel %vm617, %v1558, 0
        %1695 = vmatpush.msra.mxu0 0.0
        %1696 = vmatpush.msra.mxu0 0.0
        %1697 = vmatpush.msra.mxu0 0.0
        %1698 = vmatpush.msra.mxu0 0.0
        %1699 = vmatpush.msra.mxu0 0.0
        %1700 = vmatpush.msra.mxu0 0.0
        %1701 = vmatpush.msra.mxu0 0.0
        %1702 = vmatpush.msra.mxu0 0.0
        %1703 = vmatpush.msra.mxu0 0.0
        %1704 = vmatpush.msra.mxu0 0.0
        %1705 = vmatpush.msra.mxu0 0.0
        %1706 = vmatpush.msra.mxu0 0.0
        %1707 = vmatpush.msra.mxu0 0.0
        %1708 = vmatpush.msra.mxu0 0.0
        %1709 = vmatpush.msra.mxu0 0.0
        %1710 = vmatpush.msra.mxu0 %v1690
        %1711 = vmatmul.f32.gmra.mxu0 %v1693
        %v1712 = vpop.f32.mrf.mxu0
        %v1713 = vadd.f32 0.0, %v1712
        %1714 = vdwg.mxu0
        %1716 = vrot.lane.b32.xlu0 %v603, 120
        %v1717 = vpop.permute.xlu0 %1716
        %v1720 = vsel %vm617, %v1573, 0
        %1722 = vmatpush.msra.mxu0 0.0
        %1723 = vmatpush.msra.mxu0 0.0
        %1724 = vmatpush.msra.mxu0 0.0
        %1725 = vmatpush.msra.mxu0 0.0
        %1726 = vmatpush.msra.mxu0 0.0
        %1727 = vmatpush.msra.mxu0 0.0
        %1728 = vmatpush.msra.mxu0 0.0
        %1729 = vmatpush.msra.mxu0 0.0
        %1730 = vmatpush.msra.mxu0 0.0
        %1731 = vmatpush.msra.mxu0 0.0
        %1732 = vmatpush.msra.mxu0 0.0
        %1733 = vmatpush.msra.mxu0 0.0
        %1734 = vmatpush.msra.mxu0 0.0
        %1735 = vmatpush.msra.mxu0 0.0
        %1736 = vmatpush.msra.mxu0 0.0
        %1737 = vmatpush.msra.mxu0 %v1717
        %1738 = vmatmul.f32.gmra.mxu0 %v1720
        %v1739 = vpop.f32.mrf.mxu0
        %v1740 = vadd.f32 0.0, %v1739
        %1741 = vdwg.mxu0
        %1743 = vrot.lane.b32.xlu0 %v606, 120
        %v1744 = vpop.permute.xlu0 %1743
        %v1747 = vsel %vm617, %v1588, 0
        %1749 = vmatpush.msra.mxu0 0.0
        %1750 = vmatpush.msra.mxu0 0.0
        %1751 = vmatpush.msra.mxu0 0.0
        %1752 = vmatpush.msra.mxu0 0.0
        %1753 = vmatpush.msra.mxu0 0.0
        %1754 = vmatpush.msra.mxu0 0.0
        %1755 = vmatpush.msra.mxu0 0.0
        %1756 = vmatpush.msra.mxu0 0.0
        %1757 = vmatpush.msra.mxu0 0.0
        %1758 = vmatpush.msra.mxu0 0.0
        %1759 = vmatpush.msra.mxu0 0.0
        %1760 = vmatpush.msra.mxu0 0.0
        %1761 = vmatpush.msra.mxu0 0.0
        %1762 = vmatpush.msra.mxu0 0.0
        %1763 = vmatpush.msra.mxu0 0.0
        %1764 = vmatpush.msra.mxu0 %v1744
        %1765 = vmatmul.f32.gmra.mxu0 %v1747
        %v1766 = vpop.f32.mrf.mxu0
        %v1767 = vadd.f32 0.0, %v1766
        %1768 = vdwg.mxu0
        %1770 = vrot.lane.b32.xlu0 %v609, 120
        %v1771 = vpop.permute.xlu0 %1770
        %v1774 = vsel %vm617, %v1603, 0
        %1776 = vmatpush.msra.mxu0 0.0
        %1777 = vmatpush.msra.mxu0 0.0
        %1778 = vmatpush.msra.mxu0 0.0
        %1779 = vmatpush.msra.mxu0 0.0
        %1780 = vmatpush.msra.mxu0 0.0
        %1781 = vmatpush.msra.mxu0 0.0
        %1782 = vmatpush.msra.mxu0 0.0
        %1783 = vmatpush.msra.mxu0 0.0
        %1784 = vmatpush.msra.mxu0 0.0
        %1785 = vmatpush.msra.mxu0 0.0
        %1786 = vmatpush.msra.mxu0 0.0
        %1787 = vmatpush.msra.mxu0 0.0
        %1788 = vmatpush.msra.mxu0 0.0
        %1789 = vmatpush.msra.mxu0 0.0
        %1790 = vmatpush.msra.mxu0 0.0
        %1791 = vmatpush.msra.mxu0 %v1771
        %1792 = vmatmul.f32.gmra.mxu0 %v1774
        %v1793 = vpop.f32.mrf.mxu0
        %v1794 = vadd.f32 0.0, %v1793
        %1795 = vdwg.mxu0
        %1797 = vrot.lane.b32.xlu0 %v612, 120
        %v1798 = vpop.permute.xlu0 %1797
        %v1801 = vsel %vm617, %v1618, 0
        %1803 = vmatpush.msra.mxu0 0.0
        %1804 = vmatpush.msra.mxu0 0.0
        %1805 = vmatpush.msra.mxu0 0.0
        %1806 = vmatpush.msra.mxu0 0.0
        %1807 = vmatpush.msra.mxu0 0.0
        %1808 = vmatpush.msra.mxu0 0.0
        %1809 = vmatpush.msra.mxu0 0.0
        %1810 = vmatpush.msra.mxu0 0.0
        %1811 = vmatpush.msra.mxu0 0.0
        %1812 = vmatpush.msra.mxu0 0.0
        %1813 = vmatpush.msra.mxu0 0.0
        %1814 = vmatpush.msra.mxu0 0.0
        %1815 = vmatpush.msra.mxu0 0.0
        %1816 = vmatpush.msra.mxu0 0.0
        %1817 = vmatpush.msra.mxu0 0.0
        %1818 = vmatpush.msra.mxu0 %v1798
        %1819 = vmatmul.f32.gmra.mxu0 %v1801
        %v1820 = vpop.f32.mrf.mxu0
        %v1821 = vadd.f32 0.0, %v1820
        %1822 = vdwg.mxu0
        %1824 = vrot.lane.b32.xlu0 %v615, 120
        %v1825 = vpop.permute.xlu0 %1824
        %v1828 = vsel %vm617, %v1633, 0
        %1830 = vmatpush.msra.mxu0 0.0
        %1831 = vmatpush.msra.mxu0 0.0
        %1832 = vmatpush.msra.mxu0 0.0
        %1833 = vmatpush.msra.mxu0 0.0
        %1834 = vmatpush.msra.mxu0 0.0
        %1835 = vmatpush.msra.mxu0 0.0
        %1836 = vmatpush.msra.mxu0 0.0
        %1837 = vmatpush.msra.mxu0 0.0
        %1838 = vmatpush.msra.mxu0 0.0
        %1839 = vmatpush.msra.mxu0 0.0
        %1840 = vmatpush.msra.mxu0 0.0
        %1841 = vmatpush.msra.mxu0 0.0
        %1842 = vmatpush.msra.mxu0 0.0
        %1843 = vmatpush.msra.mxu0 0.0
        %1844 = vmatpush.msra.mxu0 0.0
        %1845 = vmatpush.msra.mxu0 %v1825
        %1846 = vmatmul.f32.gmra.mxu0 %v1828
        %v1847 = vpop.f32.mrf.mxu0
        %v1848 = vadd.f32 0.0, %v1847
        %1849 = vdwg.mxu0
        %1850 = vrot.lane.b32.xlu0 %v512, 112
        %v1851 = vpop.permute.xlu0 %1850
        %1852 = vrot.lane.b32.xlu0 %v553, 112
        %v1853 = vpop.permute.xlu0 %1852
        %v1854 = vsel %vm617, %v1851, 0
        %v1856 = vsel %vm617, %v1853, 0
        %1858 = vmatpush.xpose.msra.mxu0 0.0
        %1859 = vmatpush.xpose.msra.mxu0 0.0
        %1860 = vmatpush.xpose.msra.mxu0 0.0
        %1861 = vmatpush.xpose.msra.mxu0 0.0
        %1862 = vmatpush.xpose.msra.mxu0 0.0
        %1863 = vmatpush.xpose.msra.mxu0 0.0
        %1864 = vmatpush.xpose.msra.mxu0 0.0
        %1865 = vmatpush.xpose.msra.mxu0 0.0
        %1866 = vmatpush.xpose.msra.mxu0 0.0
        %1867 = vmatpush.xpose.msra.mxu0 0.0
        %1868 = vmatpush.xpose.msra.mxu0 0.0
        %1869 = vmatpush.xpose.msra.mxu0 0.0
        %1870 = vmatpush.xpose.msra.mxu0 0.0
        %1871 = vmatpush.xpose.msra.mxu0 0.0
        %1872 = vmatpush.xpose.msra.mxu0 0.0
        %1873 = vmatpush.xpose.msra.mxu0 %v1856
        %1874 = vmatmul.f32.gmra.mxu0 %v1854
        %v1875 = vpop.f32.mrf.mxu0
        %v1876 = vadd.f32 0.0, %v1875
        %1877 = vdwg.mxu0
        %1878 = vrot.lane.b32.xlu0 %v515, 112
        %v1879 = vpop.permute.xlu0 %1878
        %1880 = vrot.lane.b32.xlu0 %v556, 112
        %v1881 = vpop.permute.xlu0 %1880
        %v1882 = vsel %vm617, %v1879, 0
        %v1884 = vsel %vm617, %v1881, 0
        %1886 = vmatpush.xpose.msra.mxu0 0.0
        %1887 = vmatpush.xpose.msra.mxu0 0.0
        %1888 = vmatpush.xpose.msra.mxu0 0.0
        %1889 = vmatpush.xpose.msra.mxu0 0.0
        %1890 = vmatpush.xpose.msra.mxu0 0.0
        %1891 = vmatpush.xpose.msra.mxu0 0.0
        %1892 = vmatpush.xpose.msra.mxu0 0.0
        %1893 = vmatpush.xpose.msra.mxu0 0.0
        %1894 = vmatpush.xpose.msra.mxu0 0.0
        %1895 = vmatpush.xpose.msra.mxu0 0.0
        %1896 = vmatpush.xpose.msra.mxu0 0.0
        %1897 = vmatpush.xpose.msra.mxu0 0.0
        %1898 = vmatpush.xpose.msra.mxu0 0.0
        %1899 = vmatpush.xpose.msra.mxu0 0.0
        %1900 = vmatpush.xpose.msra.mxu0 0.0
        %1901 = vmatpush.xpose.msra.mxu0 %v1884
        %1902 = vmatmul.f32.gmra.mxu0 %v1882
        %v1903 = vpop.f32.mrf.mxu0
        %v1904 = vadd.f32 0.0, %v1903
        %1905 = vdwg.mxu0
        %1906 = vrot.lane.b32.xlu0 %v518, 112
        %v1907 = vpop.permute.xlu0 %1906
        %1908 = vrot.lane.b32.xlu0 %v559, 112
        %v1909 = vpop.permute.xlu0 %1908
        %v1910 = vsel %vm617, %v1907, 0
        %v1912 = vsel %vm617, %v1909, 0
        %1914 = vmatpush.xpose.msra.mxu0 0.0
        %1915 = vmatpush.xpose.msra.mxu0 0.0
        %1916 = vmatpush.xpose.msra.mxu0 0.0
        %1917 = vmatpush.xpose.msra.mxu0 0.0
        %1918 = vmatpush.xpose.msra.mxu0 0.0
        %1919 = vmatpush.xpose.msra.mxu0 0.0
        %1920 = vmatpush.xpose.msra.mxu0 0.0
        %1921 = vmatpush.xpose.msra.mxu0 0.0
        %1922 = vmatpush.xpose.msra.mxu0 0.0
        %1923 = vmatpush.xpose.msra.mxu0 0.0
        %1924 = vmatpush.xpose.msra.mxu0 0.0
        %1925 = vmatpush.xpose.msra.mxu0 0.0
        %1926 = vmatpush.xpose.msra.mxu0 0.0
        %1927 = vmatpush.xpose.msra.mxu0 0.0
        %1928 = vmatpush.xpose.msra.mxu0 0.0
        %1929 = vmatpush.xpose.msra.mxu0 %v1912
        %1930 = vmatmul.f32.gmra.mxu0 %v1910
        %v1931 = vpop.f32.mrf.mxu0
        %v1932 = vadd.f32 0.0, %v1931
        %1933 = vdwg.mxu0
        %1934 = vrot.lane.b32.xlu0 %v521, 112
        %v1935 = vpop.permute.xlu0 %1934
        %1936 = vrot.lane.b32.xlu0 %v562, 112
        %v1937 = vpop.permute.xlu0 %1936
        %v1938 = vsel %vm617, %v1935, 0
        %v1940 = vsel %vm617, %v1937, 0
        %1942 = vmatpush.xpose.msra.mxu0 0.0
        %1943 = vmatpush.xpose.msra.mxu0 0.0
        %1944 = vmatpush.xpose.msra.mxu0 0.0
        %1945 = vmatpush.xpose.msra.mxu0 0.0
        %1946 = vmatpush.xpose.msra.mxu0 0.0
        %1947 = vmatpush.xpose.msra.mxu0 0.0
        %1948 = vmatpush.xpose.msra.mxu0 0.0
        %1949 = vmatpush.xpose.msra.mxu0 0.0
        %1950 = vmatpush.xpose.msra.mxu0 0.0
        %1951 = vmatpush.xpose.msra.mxu0 0.0
        %1952 = vmatpush.xpose.msra.mxu0 0.0
        %1953 = vmatpush.xpose.msra.mxu0 0.0
        %1954 = vmatpush.xpose.msra.mxu0 0.0
        %1955 = vmatpush.xpose.msra.mxu0 0.0
        %1956 = vmatpush.xpose.msra.mxu0 0.0
        %1957 = vmatpush.xpose.msra.mxu0 %v1940
        %1958 = vmatmul.f32.gmra.mxu0 %v1938
        %v1959 = vpop.f32.mrf.mxu0
        %v1960 = vadd.f32 0.0, %v1959
        %1961 = vdwg.mxu0
        %1962 = vrot.lane.b32.xlu0 %v524, 112
        %v1963 = vpop.permute.xlu0 %1962
        %1964 = vrot.lane.b32.xlu0 %v565, 112
        %v1965 = vpop.permute.xlu0 %1964
        %v1966 = vsel %vm617, %v1963, 0
        %v1968 = vsel %vm617, %v1965, 0
        %1970 = vmatpush.xpose.msra.mxu0 0.0
        %1971 = vmatpush.xpose.msra.mxu0 0.0
        %1972 = vmatpush.xpose.msra.mxu0 0.0
        %1973 = vmatpush.xpose.msra.mxu0 0.0
        %1974 = vmatpush.xpose.msra.mxu0 0.0
        %1975 = vmatpush.xpose.msra.mxu0 0.0
        %1976 = vmatpush.xpose.msra.mxu0 0.0
        %1977 = vmatpush.xpose.msra.mxu0 0.0
        %1978 = vmatpush.xpose.msra.mxu0 0.0
        %1979 = vmatpush.xpose.msra.mxu0 0.0
        %1980 = vmatpush.xpose.msra.mxu0 0.0
        %1981 = vmatpush.xpose.msra.mxu0 0.0
        %1982 = vmatpush.xpose.msra.mxu0 0.0
        %1983 = vmatpush.xpose.msra.mxu0 0.0
        %1984 = vmatpush.xpose.msra.mxu0 0.0
        %1985 = vmatpush.xpose.msra.mxu0 %v1968
        %1986 = vmatmul.f32.gmra.mxu0 %v1966
        %v1987 = vpop.f32.mrf.mxu0
        %v1988 = vadd.f32 0.0, %v1987
        %1989 = vdwg.mxu0
        %1990 = vrot.lane.b32.xlu0 %v527, 112
        %v1991 = vpop.permute.xlu0 %1990
        %1992 = vrot.lane.b32.xlu0 %v568, 112
        %v1993 = vpop.permute.xlu0 %1992
        %v1994 = vsel %vm617, %v1991, 0
        %v1996 = vsel %vm617, %v1993, 0
        %1998 = vmatpush.xpose.msra.mxu0 0.0
        %1999 = vmatpush.xpose.msra.mxu0 0.0
        %2000 = vmatpush.xpose.msra.mxu0 0.0
        %2001 = vmatpush.xpose.msra.mxu0 0.0
        %2002 = vmatpush.xpose.msra.mxu0 0.0
        %2003 = vmatpush.xpose.msra.mxu0 0.0
        %2004 = vmatpush.xpose.msra.mxu0 0.0
        %2005 = vmatpush.xpose.msra.mxu0 0.0
        %2006 = vmatpush.xpose.msra.mxu0 0.0
        %2007 = vmatpush.xpose.msra.mxu0 0.0
        %2008 = vmatpush.xpose.msra.mxu0 0.0
        %2009 = vmatpush.xpose.msra.mxu0 0.0
        %2010 = vmatpush.xpose.msra.mxu0 0.0
        %2011 = vmatpush.xpose.msra.mxu0 0.0
        %2012 = vmatpush.xpose.msra.mxu0 0.0
        %2013 = vmatpush.xpose.msra.mxu0 %v1996
        %2014 = vmatmul.f32.gmra.mxu0 %v1994
        %v2015 = vpop.f32.mrf.mxu0
        %v2016 = vadd.f32 0.0, %v2015
        %2017 = vdwg.mxu0
        %2018 = vrot.lane.b32.xlu0 %v530, 112
        %v2019 = vpop.permute.xlu0 %2018
        %2020 = vrot.lane.b32.xlu0 %v571, 112
        %v2021 = vpop.permute.xlu0 %2020
        %v2022 = vsel %vm617, %v2019, 0
        %v2024 = vsel %vm617, %v2021, 0
        %2026 = vmatpush.xpose.msra.mxu0 0.0
        %2027 = vmatpush.xpose.msra.mxu0 0.0
        %2028 = vmatpush.xpose.msra.mxu0 0.0
        %2029 = vmatpush.xpose.msra.mxu0 0.0
        %2030 = vmatpush.xpose.msra.mxu0 0.0
        %2031 = vmatpush.xpose.msra.mxu0 0.0
        %2032 = vmatpush.xpose.msra.mxu0 0.0
        %2033 = vmatpush.xpose.msra.mxu0 0.0
        %2034 = vmatpush.xpose.msra.mxu0 0.0
        %2035 = vmatpush.xpose.msra.mxu0 0.0
        %2036 = vmatpush.xpose.msra.mxu0 0.0
        %2037 = vmatpush.xpose.msra.mxu0 0.0
        %2038 = vmatpush.xpose.msra.mxu0 0.0
        %2039 = vmatpush.xpose.msra.mxu0 0.0
        %2040 = vmatpush.xpose.msra.mxu0 0.0
        %2041 = vmatpush.xpose.msra.mxu0 %v2024
        %2042 = vmatmul.f32.gmra.mxu0 %v2022
        %v2043 = vpop.f32.mrf.mxu0
        %v2044 = vadd.f32 0.0, %v2043
        %2045 = vdwg.mxu0
        %2046 = vrot.lane.b32.xlu0 %v533, 112
        %v2047 = vpop.permute.xlu0 %2046
        %2048 = vrot.lane.b32.xlu0 %v574, 112
        %v2049 = vpop.permute.xlu0 %2048
        %v2050 = vsel %vm617, %v2047, 0
        %v2052 = vsel %vm617, %v2049, 0
        %2054 = vmatpush.xpose.msra.mxu0 0.0
        %2055 = vmatpush.xpose.msra.mxu0 0.0
        %2056 = vmatpush.xpose.msra.mxu0 0.0
        %2057 = vmatpush.xpose.msra.mxu0 0.0
        %2058 = vmatpush.xpose.msra.mxu0 0.0
        %2059 = vmatpush.xpose.msra.mxu0 0.0
        %2060 = vmatpush.xpose.msra.mxu0 0.0
        %2061 = vmatpush.xpose.msra.mxu0 0.0
        %2062 = vmatpush.xpose.msra.mxu0 0.0
        %2063 = vmatpush.xpose.msra.mxu0 0.0
        %2064 = vmatpush.xpose.msra.mxu0 0.0
        %2065 = vmatpush.xpose.msra.mxu0 0.0
        %2066 = vmatpush.xpose.msra.mxu0 0.0
        %2067 = vmatpush.xpose.msra.mxu0 0.0
        %2068 = vmatpush.xpose.msra.mxu0 0.0
        %2069 = vmatpush.xpose.msra.mxu0 %v2052
        %2070 = vmatmul.f32.gmra.mxu0 %v2050
        %v2071 = vpop.f32.mrf.mxu0
        %v2072 = vadd.f32 0.0, %v2071
        %2073 = vdwg.mxu0
        %v2074 = vmul.f32 %v1876, 0.35355338
        %v2075 = vmul.f32 %v1904, 0.35355338
        %v2076 = vmul.f32 %v1932, 0.35355338
        %v2077 = vmul.f32 %v1960, 0.35355338
        %v2078 = vmul.f32 %v1988, 0.35355338
        %v2079 = vmul.f32 %v2016, 0.35355338
        %v2080 = vmul.f32 %v2044, 0.35355338
        %v2081 = vmul.f32 %v2072, 0.35355338
        %v2082 = vsel %vm617, %v2074, -inf
        %2083 = vmax.xlane.f32.xlu0 %v2082
        %v2084 = vpop.xlane.xlu0 %2083
        %v2085 = vsel %vm617, %v2075, -inf
        %2086 = vmax.xlane.f32.xlu0 %v2085
        %v2087 = vpop.xlane.xlu0 %2086
        %v2088 = vsel %vm617, %v2076, -inf
        %2089 = vmax.xlane.f32.xlu0 %v2088
        %v2090 = vpop.xlane.xlu0 %2089
        %v2091 = vsel %vm617, %v2077, -inf
        %2092 = vmax.xlane.f32.xlu0 %v2091
        %v2093 = vpop.xlane.xlu0 %2092
        %v2094 = vsel %vm617, %v2078, -inf
        %2095 = vmax.xlane.f32.xlu0 %v2094
        %v2096 = vpop.xlane.xlu0 %2095
        %v2097 = vsel %vm617, %v2079, -inf
        %2098 = vmax.xlane.f32.xlu0 %v2097
        %v2099 = vpop.xlane.xlu0 %2098
        %v2100 = vsel %vm617, %v2080, -inf
        %2101 = vmax.xlane.f32.xlu0 %v2100
        %v2102 = vpop.xlane.xlu0 %2101
        %v2103 = vsel %vm617, %v2081, -inf
        %2104 = vmax.xlane.f32.xlu0 %v2103
        %v2105 = vpop.xlane.xlu0 %2104
        %v2106 = vsub.f32 %v2074, %v2084
        %v2107 = vsub.f32 %v2075, %v2087
        %v2108 = vsub.f32 %v2076, %v2090
        %v2109 = vsub.f32 %v2077, %v2093
        %v2110 = vsub.f32 %v2078, %v2096
        %v2111 = vsub.f32 %v2079, %v2099
        %v2112 = vsub.f32 %v2080, %v2102
        %v2113 = vsub.f32 %v2081, %v2105
        %v2114 = vmul.f32 %v2106, 1.442695
        %v2115 = vpow.pop %v2114
        %v2116 = vmul.f32 %v2107, 1.442695
        %v2117 = vpow.pop %v2116
        %v2118 = vmul.f32 %v2108, 1.442695
        %v2119 = vpow.pop %v2118
        %v2120 = vmul.f32 %v2109, 1.442695
        %v2121 = vpow.pop %v2120
        %v2122 = vmul.f32 %v2110, 1.442695
        %v2123 = vpow.pop %v2122
        %v2124 = vmul.f32 %v2111, 1.442695
        %v2125 = vpow.pop %v2124
        %v2126 = vmul.f32 %v2112, 1.442695
        %v2127 = vpow.pop %v2126
        %v2128 = vmul.f32 %v2113, 1.442695
        %v2129 = vpow.pop %v2128
        %v2130 = vsel %vm617, %v2115, 0.0
        %2131 = vadd.xlane.f32.xlu0 %v2130
        %v2132 = vpop.xlane.xlu0 %2131
        %v2133 = vsel %vm617, %v2117, 0.0
        %2134 = vadd.xlane.f32.xlu0 %v2133
        %v2135 = vpop.xlane.xlu0 %2134
        %v2136 = vsel %vm617, %v2119, 0.0
        %2137 = vadd.xlane.f32.xlu0 %v2136
        %v2138 = vpop.xlane.xlu0 %2137
        %v2139 = vsel %vm617, %v2121, 0.0
        %2140 = vadd.xlane.f32.xlu0 %v2139
        %v2141 = vpop.xlane.xlu0 %2140
        %v2142 = vsel %vm617, %v2123, 0.0
        %2143 = vadd.xlane.f32.xlu0 %v2142
        %v2144 = vpop.xlane.xlu0 %2143
        %v2145 = vsel %vm617, %v2125, 0.0
        %2146 = vadd.xlane.f32.xlu0 %v2145
        %v2147 = vpop.xlane.xlu0 %2146
        %v2148 = vsel %vm617, %v2127, 0.0
        %2149 = vadd.xlane.f32.xlu0 %v2148
        %v2150 = vpop.xlane.xlu0 %2149
        %v2151 = vsel %vm617, %v2129, 0.0
        %2152 = vadd.xlane.f32.xlu0 %v2151
        %v2153 = vpop.xlane.xlu0 %2152
        %v2154 = vrcp.pop %v2132
        %v2155 = vmul.f32 %v2132, %v2154
        %v2156 = vsub.f32 1.0, %v2155
        %v2157 = vmul.f32 %v2154, %v2156
        %v2158 = vadd.f32 %v2154, %v2157
        %vm2159 = vweird.f32 %v2132
        %vm2160 = vweird.f32 %v2154
        %vm2161 = vmor %vm2159, %vm2160
        %v2162 = vsel %vm2161, %v2154, %v2158
        %v2163 = vand.u32 2147483647, %v2132
        %vm2164 = vcmp.eq.f32.partialorder %v2163, 8.507059e+37
        %v2165 = vand.u32 %v2132, 2147483648
        %v2166 = vor.u32 1.1754944e-38, %v2165
        %v2167 = vsel %vm2164, %v2166, %v2162
        %v2168 = vmul.f32 %v2115, %v2167
        %v2169 = vrcp.pop %v2135
        %v2170 = vmul.f32 %v2135, %v2169
        %v2171 = vsub.f32 1.0, %v2170
        %v2172 = vmul.f32 %v2169, %v2171
        %v2173 = vadd.f32 %v2169, %v2172
        %vm2174 = vweird.f32 %v2135
        %vm2175 = vweird.f32 %v2169
        %vm2176 = vmor %vm2174, %vm2175
        %v2177 = vsel %vm2176, %v2169, %v2173
        %v2178 = vand.u32 2147483647, %v2135
        %vm2179 = vcmp.eq.f32.partialorder %v2178, 8.507059e+37
        %v2180 = vand.u32 %v2135, 2147483648
        %v2181 = vor.u32 1.1754944e-38, %v2180
        %v2182 = vsel %vm2179, %v2181, %v2177
        %v2183 = vmul.f32 %v2117, %v2182
        %v2184 = vrcp.pop %v2138
        %v2185 = vmul.f32 %v2138, %v2184
        %v2186 = vsub.f32 1.0, %v2185
        %v2187 = vmul.f32 %v2184, %v2186
        %v2188 = vadd.f32 %v2184, %v2187
        %vm2189 = vweird.f32 %v2138
        %vm2190 = vweird.f32 %v2184
        %vm2191 = vmor %vm2189, %vm2190
        %v2192 = vsel %vm2191, %v2184, %v2188
        %v2193 = vand.u32 2147483647, %v2138
        %vm2194 = vcmp.eq.f32.partialorder %v2193, 8.507059e+37
        %v2195 = vand.u32 %v2138, 2147483648
        %v2196 = vor.u32 1.1754944e-38, %v2195
        %v2197 = vsel %vm2194, %v2196, %v2192
        %v2198 = vmul.f32 %v2119, %v2197
        %v2199 = vrcp.pop %v2141
        %v2200 = vmul.f32 %v2141, %v2199
        %v2201 = vsub.f32 1.0, %v2200
        %v2202 = vmul.f32 %v2199, %v2201
        %v2203 = vadd.f32 %v2199, %v2202
        %vm2204 = vweird.f32 %v2141
        %vm2205 = vweird.f32 %v2199
        %vm2206 = vmor %vm2204, %vm2205
        %v2207 = vsel %vm2206, %v2199, %v2203
        %v2208 = vand.u32 2147483647, %v2141
        %vm2209 = vcmp.eq.f32.partialorder %v2208, 8.507059e+37
        %v2210 = vand.u32 %v2141, 2147483648
        %v2211 = vor.u32 1.1754944e-38, %v2210
        %v2212 = vsel %vm2209, %v2211, %v2207
        %v2213 = vmul.f32 %v2121, %v2212
        %v2214 = vrcp.pop %v2144
        %v2215 = vmul.f32 %v2144, %v2214
        %v2216 = vsub.f32 1.0, %v2215
        %v2217 = vmul.f32 %v2214, %v2216
        %v2218 = vadd.f32 %v2214, %v2217
        %vm2219 = vweird.f32 %v2144
        %vm2220 = vweird.f32 %v2214
        %vm2221 = vmor %vm2219, %vm2220
        %v2222 = vsel %vm2221, %v2214, %v2218
        %v2223 = vand.u32 2147483647, %v2144
        %vm2224 = vcmp.eq.f32.partialorder %v2223, 8.507059e+37
        %v2225 = vand.u32 %v2144, 2147483648
        %v2226 = vor.u32 1.1754944e-38, %v2225
        %v2227 = vsel %vm2224, %v2226, %v2222
        %v2228 = vmul.f32 %v2123, %v2227
        %v2229 = vrcp.pop %v2147
        %v2230 = vmul.f32 %v2147, %v2229
        %v2231 = vsub.f32 1.0, %v2230
        %v2232 = vmul.f32 %v2229, %v2231
        %v2233 = vadd.f32 %v2229, %v2232
        %vm2234 = vweird.f32 %v2147
        %vm2235 = vweird.f32 %v2229
        %vm2236 = vmor %vm2234, %vm2235
        %v2237 = vsel %vm2236, %v2229, %v2233
        %v2238 = vand.u32 2147483647, %v2147
        %vm2239 = vcmp.eq.f32.partialorder %v2238, 8.507059e+37
        %v2240 = vand.u32 %v2147, 2147483648
        %v2241 = vor.u32 1.1754944e-38, %v2240
        %v2242 = vsel %vm2239, %v2241, %v2237
        %v2243 = vmul.f32 %v2125, %v2242
        %v2244 = vrcp.pop %v2150
        %v2245 = vmul.f32 %v2150, %v2244
        %v2246 = vsub.f32 1.0, %v2245
        %v2247 = vmul.f32 %v2244, %v2246
        %v2248 = vadd.f32 %v2244, %v2247
        %vm2249 = vweird.f32 %v2150
        %vm2250 = vweird.f32 %v2244
        %vm2251 = vmor %vm2249, %vm2250
        %v2252 = vsel %vm2251, %v2244, %v2248
        %v2253 = vand.u32 2147483647, %v2150
        %vm2254 = vcmp.eq.f32.partialorder %v2253, 8.507059e+37
        %v2255 = vand.u32 %v2150, 2147483648
        %v2256 = vor.u32 1.1754944e-38, %v2255
        %v2257 = vsel %vm2254, %v2256, %v2252
        %v2258 = vmul.f32 %v2127, %v2257
        %v2259 = vrcp.pop %v2153
        %v2260 = vmul.f32 %v2153, %v2259
        %v2261 = vsub.f32 1.0, %v2260
        %v2262 = vmul.f32 %v2259, %v2261
        %v2263 = vadd.f32 %v2259, %v2262
        %vm2264 = vweird.f32 %v2153
        %vm2265 = vweird.f32 %v2259
        %vm2266 = vmor %vm2264, %vm2265
        %v2267 = vsel %vm2266, %v2259, %v2263
        %v2268 = vand.u32 2147483647, %v2153
        %vm2269 = vcmp.eq.f32.partialorder %v2268, 8.507059e+37
        %v2270 = vand.u32 %v2153, 2147483648
        %v2271 = vor.u32 1.1754944e-38, %v2270
        %v2272 = vsel %vm2269, %v2271, %v2267
        %v2273 = vmul.f32 %v2129, %v2272
        %2274 = vrot.lane.b32.xlu0 %v594, 112
        %v2275 = vpop.permute.xlu0 %2274
        %v2278 = vsel %vm617, %v2168, 0
        %2280 = vmatpush.msra.mxu0 0.0
        %2281 = vmatpush.msra.mxu0 0.0
        %2282 = vmatpush.msra.mxu0 0.0
        %2283 = vmatpush.msra.mxu0 0.0
        %2284 = vmatpush.msra.mxu0 0.0
        %2285 = vmatpush.msra.mxu0 0.0
        %2286 = vmatpush.msra.mxu0 0.0
        %2287 = vmatpush.msra.mxu0 0.0
        %2288 = vmatpush.msra.mxu0 0.0
        %2289 = vmatpush.msra.mxu0 0.0
        %2290 = vmatpush.msra.mxu0 0.0
        %2291 = vmatpush.msra.mxu0 0.0
        %2292 = vmatpush.msra.mxu0 0.0
        %2293 = vmatpush.msra.mxu0 0.0
        %2294 = vmatpush.msra.mxu0 0.0
        %2295 = vmatpush.msra.mxu0 %v2275
        %2296 = vmatmul.f32.gmra.mxu0 %v2278
        %v2297 = vpop.f32.mrf.mxu0
        %v2298 = vadd.f32 0.0, %v2297
        %2299 = vdwg.mxu0
        %2300 = vrot.lane.b32.xlu0 %v597, 112
        %v2301 = vpop.permute.xlu0 %2300
        %v2304 = vsel %vm617, %v2183, 0
        %2306 = vmatpush.msra.mxu0 0.0
        %2307 = vmatpush.msra.mxu0 0.0
        %2308 = vmatpush.msra.mxu0 0.0
        %2309 = vmatpush.msra.mxu0 0.0
        %2310 = vmatpush.msra.mxu0 0.0
        %2311 = vmatpush.msra.mxu0 0.0
        %2312 = vmatpush.msra.mxu0 0.0
        %2313 = vmatpush.msra.mxu0 0.0
        %2314 = vmatpush.msra.mxu0 0.0
        %2315 = vmatpush.msra.mxu0 0.0
        %2316 = vmatpush.msra.mxu0 0.0
        %2317 = vmatpush.msra.mxu0 0.0
        %2318 = vmatpush.msra.mxu0 0.0
        %2319 = vmatpush.msra.mxu0 0.0
        %2320 = vmatpush.msra.mxu0 0.0
        %2321 = vmatpush.msra.mxu0 %v2301
        %2322 = vmatmul.f32.gmra.mxu0 %v2304
        %v2323 = vpop.f32.mrf.mxu0
        %v2324 = vadd.f32 0.0, %v2323
        %2325 = vdwg.mxu0
        %2326 = vrot.lane.b32.xlu0 %v600, 112
        %v2327 = vpop.permute.xlu0 %2326
        %v2330 = vsel %vm617, %v2198, 0
        %2332 = vmatpush.msra.mxu0 0.0
        %2333 = vmatpush.msra.mxu0 0.0
        %2334 = vmatpush.msra.mxu0 0.0
        %2335 = vmatpush.msra.mxu0 0.0
        %2336 = vmatpush.msra.mxu0 0.0
        %2337 = vmatpush.msra.mxu0 0.0
        %2338 = vmatpush.msra.mxu0 0.0
        %2339 = vmatpush.msra.mxu0 0.0
        %2340 = vmatpush.msra.mxu0 0.0
        %2341 = vmatpush.msra.mxu0 0.0
        %2342 = vmatpush.msra.mxu0 0.0
        %2343 = vmatpush.msra.mxu0 0.0
        %2344 = vmatpush.msra.mxu0 0.0
        %2345 = vmatpush.msra.mxu0 0.0
        %2346 = vmatpush.msra.mxu0 0.0
        %2347 = vmatpush.msra.mxu0 %v2327
        %2348 = vmatmul.f32.gmra.mxu0 %v2330
        %v2349 = vpop.f32.mrf.mxu0
        %v2350 = vadd.f32 0.0, %v2349
        %2351 = vdwg.mxu0
        %2352 = vrot.lane.b32.xlu0 %v603, 112
        %v2353 = vpop.permute.xlu0 %2352
        %v2356 = vsel %vm617, %v2213, 0
        %2358 = vmatpush.msra.mxu0 0.0
        %2359 = vmatpush.msra.mxu0 0.0
        %2360 = vmatpush.msra.mxu0 0.0
        %2361 = vmatpush.msra.mxu0 0.0
        %2362 = vmatpush.msra.mxu0 0.0
        %2363 = vmatpush.msra.mxu0 0.0
        %2364 = vmatpush.msra.mxu0 0.0
        %2365 = vmatpush.msra.mxu0 0.0
        %2366 = vmatpush.msra.mxu0 0.0
        %2367 = vmatpush.msra.mxu0 0.0
        %2368 = vmatpush.msra.mxu0 0.0
        %2369 = vmatpush.msra.mxu0 0.0
        %2370 = vmatpush.msra.mxu0 0.0
        %2371 = vmatpush.msra.mxu0 0.0
        %2372 = vmatpush.msra.mxu0 0.0
        %2373 = vmatpush.msra.mxu0 %v2353
        %2374 = vmatmul.f32.gmra.mxu0 %v2356
        %v2375 = vpop.f32.mrf.mxu0
        %v2376 = vadd.f32 0.0, %v2375
        %2377 = vdwg.mxu0
        %2378 = vrot.lane.b32.xlu0 %v606, 112
        %v2379 = vpop.permute.xlu0 %2378
        %v2382 = vsel %vm617, %v2228, 0
        %2384 = vmatpush.msra.mxu0 0.0
        %2385 = vmatpush.msra.mxu0 0.0
        %2386 = vmatpush.msra.mxu0 0.0
        %2387 = vmatpush.msra.mxu0 0.0
        %2388 = vmatpush.msra.mxu0 0.0
        %2389 = vmatpush.msra.mxu0 0.0
        %2390 = vmatpush.msra.mxu0 0.0
        %2391 = vmatpush.msra.mxu0 0.0
        %2392 = vmatpush.msra.mxu0 0.0
        %2393 = vmatpush.msra.mxu0 0.0
        %2394 = vmatpush.msra.mxu0 0.0
        %2395 = vmatpush.msra.mxu0 0.0
        %2396 = vmatpush.msra.mxu0 0.0
        %2397 = vmatpush.msra.mxu0 0.0
        %2398 = vmatpush.msra.mxu0 0.0
        %2399 = vmatpush.msra.mxu0 %v2379
        %2400 = vmatmul.f32.gmra.mxu0 %v2382
        %v2401 = vpop.f32.mrf.mxu0
        %v2402 = vadd.f32 0.0, %v2401
        %2403 = vdwg.mxu0
        %2404 = vrot.lane.b32.xlu0 %v609, 112
        %v2405 = vpop.permute.xlu0 %2404
        %v2408 = vsel %vm617, %v2243, 0
        %2410 = vmatpush.msra.mxu0 0.0
        %2411 = vmatpush.msra.mxu0 0.0
        %2412 = vmatpush.msra.mxu0 0.0
        %2413 = vmatpush.msra.mxu0 0.0
        %2414 = vmatpush.msra.mxu0 0.0
        %2415 = vmatpush.msra.mxu0 0.0
        %2416 = vmatpush.msra.mxu0 0.0
        %2417 = vmatpush.msra.mxu0 0.0
        %2418 = vmatpush.msra.mxu0 0.0
        %2419 = vmatpush.msra.mxu0 0.0
        %2420 = vmatpush.msra.mxu0 0.0
        %2421 = vmatpush.msra.mxu0 0.0
        %2422 = vmatpush.msra.mxu0 0.0
        %2423 = vmatpush.msra.mxu0 0.0
        %2424 = vmatpush.msra.mxu0 0.0
        %2425 = vmatpush.msra.mxu0 %v2405
        %2426 = vmatmul.f32.gmra.mxu0 %v2408
        %v2427 = vpop.f32.mrf.mxu0
        %v2428 = vadd.f32 0.0, %v2427
        %2429 = vdwg.mxu0
        %2430 = vrot.lane.b32.xlu0 %v612, 112
        %v2431 = vpop.permute.xlu0 %2430
        %v2434 = vsel %vm617, %v2258, 0
        %2436 = vmatpush.msra.mxu0 0.0
        %2437 = vmatpush.msra.mxu0 0.0
        %2438 = vmatpush.msra.mxu0 0.0
        %2439 = vmatpush.msra.mxu0 0.0
        %2440 = vmatpush.msra.mxu0 0.0
        %2441 = vmatpush.msra.mxu0 0.0
        %2442 = vmatpush.msra.mxu0 0.0
        %2443 = vmatpush.msra.mxu0 0.0
        %2444 = vmatpush.msra.mxu0 0.0
        %2445 = vmatpush.msra.mxu0 0.0
        %2446 = vmatpush.msra.mxu0 0.0
        %2447 = vmatpush.msra.mxu0 0.0
        %2448 = vmatpush.msra.mxu0 0.0
        %2449 = vmatpush.msra.mxu0 0.0
        %2450 = vmatpush.msra.mxu0 0.0
        %2451 = vmatpush.msra.mxu0 %v2431
        %2452 = vmatmul.f32.gmra.mxu0 %v2434
        %v2453 = vpop.f32.mrf.mxu0
        %v2454 = vadd.f32 0.0, %v2453
        %2455 = vdwg.mxu0
        %2456 = vrot.lane.b32.xlu0 %v615, 112
        %v2457 = vpop.permute.xlu0 %2456
        %v2460 = vsel %vm617, %v2273, 0
        %2462 = vmatpush.msra.mxu0 0.0
        %2463 = vmatpush.msra.mxu0 0.0
        %2464 = vmatpush.msra.mxu0 0.0
        %2465 = vmatpush.msra.mxu0 0.0
        %2466 = vmatpush.msra.mxu0 0.0
        %2467 = vmatpush.msra.mxu0 0.0
        %2468 = vmatpush.msra.mxu0 0.0
        %2469 = vmatpush.msra.mxu0 0.0
        %2470 = vmatpush.msra.mxu0 0.0
        %2471 = vmatpush.msra.mxu0 0.0
        %2472 = vmatpush.msra.mxu0 0.0
        %2473 = vmatpush.msra.mxu0 0.0
        %2474 = vmatpush.msra.mxu0 0.0
        %2475 = vmatpush.msra.mxu0 0.0
        %2476 = vmatpush.msra.mxu0 0.0
        %2477 = vmatpush.msra.mxu0 %v2457
        %2478 = vmatmul.f32.gmra.mxu0 %v2460
        %v2479 = vpop.f32.mrf.mxu0
        %v2480 = vadd.f32 0.0, %v2479
        %2481 = vdwg.mxu0
        %2482 = vrot.lane.b32.xlu0 %v512, 104
        %v2483 = vpop.permute.xlu0 %2482
        %2484 = vrot.lane.b32.xlu0 %v553, 104
        %v2485 = vpop.permute.xlu0 %2484
        %v2486 = vsel %vm617, %v2483, 0
        %v2488 = vsel %vm617, %v2485, 0
        %2490 = vmatpush.xpose.msra.mxu0 0.0
        %2491 = vmatpush.xpose.msra.mxu0 0.0
        %2492 = vmatpush.xpose.msra.mxu0 0.0
        %2493 = vmatpush.xpose.msra.mxu0 0.0
        %2494 = vmatpush.xpose.msra.mxu0 0.0
        %2495 = vmatpush.xpose.msra.mxu0 0.0
        %2496 = vmatpush.xpose.msra.mxu0 0.0
        %2497 = vmatpush.xpose.msra.mxu0 0.0
        %2498 = vmatpush.xpose.msra.mxu0 0.0
        %2499 = vmatpush.xpose.msra.mxu0 0.0
        %2500 = vmatpush.xpose.msra.mxu0 0.0
        %2501 = vmatpush.xpose.msra.mxu0 0.0
        %2502 = vmatpush.xpose.msra.mxu0 0.0
        %2503 = vmatpush.xpose.msra.mxu0 0.0
        %2504 = vmatpush.xpose.msra.mxu0 0.0
        %2505 = vmatpush.xpose.msra.mxu0 %v2488
        %2506 = vmatmul.f32.gmra.mxu0 %v2486
        %v2507 = vpop.f32.mrf.mxu0
        %v2508 = vadd.f32 0.0, %v2507
        %2509 = vdwg.mxu0
        %2510 = vrot.lane.b32.xlu0 %v515, 104
        %v2511 = vpop.permute.xlu0 %2510
        %2512 = vrot.lane.b32.xlu0 %v556, 104
        %v2513 = vpop.permute.xlu0 %2512
        %v2514 = vsel %vm617, %v2511, 0
        %v2516 = vsel %vm617, %v2513, 0
        %2518 = vmatpush.xpose.msra.mxu0 0.0
        %2519 = vmatpush.xpose.msra.mxu0 0.0
        %2520 = vmatpush.xpose.msra.mxu0 0.0
        %2521 = vmatpush.xpose.msra.mxu0 0.0
        %2522 = vmatpush.xpose.msra.mxu0 0.0
        %2523 = vmatpush.xpose.msra.mxu0 0.0
        %2524 = vmatpush.xpose.msra.mxu0 0.0
        %2525 = vmatpush.xpose.msra.mxu0 0.0
        %2526 = vmatpush.xpose.msra.mxu0 0.0
        %2527 = vmatpush.xpose.msra.mxu0 0.0
        %2528 = vmatpush.xpose.msra.mxu0 0.0
        %2529 = vmatpush.xpose.msra.mxu0 0.0
        %2530 = vmatpush.xpose.msra.mxu0 0.0
        %2531 = vmatpush.xpose.msra.mxu0 0.0
        %2532 = vmatpush.xpose.msra.mxu0 0.0
        %2533 = vmatpush.xpose.msra.mxu0 %v2516
        %2534 = vmatmul.f32.gmra.mxu0 %v2514
        %v2535 = vpop.f32.mrf.mxu0
        %v2536 = vadd.f32 0.0, %v2535
        %2537 = vdwg.mxu0
        %2538 = vrot.lane.b32.xlu0 %v518, 104
        %v2539 = vpop.permute.xlu0 %2538
        %2540 = vrot.lane.b32.xlu0 %v559, 104
        %v2541 = vpop.permute.xlu0 %2540
        %v2542 = vsel %vm617, %v2539, 0
        %v2544 = vsel %vm617, %v2541, 0
        %2546 = vmatpush.xpose.msra.mxu0 0.0
        %2547 = vmatpush.xpose.msra.mxu0 0.0
        %2548 = vmatpush.xpose.msra.mxu0 0.0
        %2549 = vmatpush.xpose.msra.mxu0 0.0
        %2550 = vmatpush.xpose.msra.mxu0 0.0
        %2551 = vmatpush.xpose.msra.mxu0 0.0
        %2552 = vmatpush.xpose.msra.mxu0 0.0
        %2553 = vmatpush.xpose.msra.mxu0 0.0
        %2554 = vmatpush.xpose.msra.mxu0 0.0
        %2555 = vmatpush.xpose.msra.mxu0 0.0
        %2556 = vmatpush.xpose.msra.mxu0 0.0
        %2557 = vmatpush.xpose.msra.mxu0 0.0
        %2558 = vmatpush.xpose.msra.mxu0 0.0
        %2559 = vmatpush.xpose.msra.mxu0 0.0
        %2560 = vmatpush.xpose.msra.mxu0 0.0
        %2561 = vmatpush.xpose.msra.mxu0 %v2544
        %2562 = vmatmul.f32.gmra.mxu0 %v2542
        %v2563 = vpop.f32.mrf.mxu0
        %v2564 = vadd.f32 0.0, %v2563
        %2565 = vdwg.mxu0
        %2566 = vrot.lane.b32.xlu0 %v521, 104
        %v2567 = vpop.permute.xlu0 %2566
        %2568 = vrot.lane.b32.xlu0 %v562, 104
        %v2569 = vpop.permute.xlu0 %2568
        %v2570 = vsel %vm617, %v2567, 0
        %v2572 = vsel %vm617, %v2569, 0
        %2574 = vmatpush.xpose.msra.mxu0 0.0
        %2575 = vmatpush.xpose.msra.mxu0 0.0
        %2576 = vmatpush.xpose.msra.mxu0 0.0
        %2577 = vmatpush.xpose.msra.mxu0 0.0
        %2578 = vmatpush.xpose.msra.mxu0 0.0
        %2579 = vmatpush.xpose.msra.mxu0 0.0
        %2580 = vmatpush.xpose.msra.mxu0 0.0
        %2581 = vmatpush.xpose.msra.mxu0 0.0
        %2582 = vmatpush.xpose.msra.mxu0 0.0
        %2583 = vmatpush.xpose.msra.mxu0 0.0
        %2584 = vmatpush.xpose.msra.mxu0 0.0
        %2585 = vmatpush.xpose.msra.mxu0 0.0
        %2586 = vmatpush.xpose.msra.mxu0 0.0
        %2587 = vmatpush.xpose.msra.mxu0 0.0
        %2588 = vmatpush.xpose.msra.mxu0 0.0
        %2589 = vmatpush.xpose.msra.mxu0 %v2572
        %2590 = vmatmul.f32.gmra.mxu0 %v2570
        %v2591 = vpop.f32.mrf.mxu0
        %v2592 = vadd.f32 0.0, %v2591
        %2593 = vdwg.mxu0
        %2594 = vrot.lane.b32.xlu0 %v524, 104
        %v2595 = vpop.permute.xlu0 %2594
        %2596 = vrot.lane.b32.xlu0 %v565, 104
        %v2597 = vpop.permute.xlu0 %2596
        %v2598 = vsel %vm617, %v2595, 0
        %v2600 = vsel %vm617, %v2597, 0
        %2602 = vmatpush.xpose.msra.mxu0 0.0
        %2603 = vmatpush.xpose.msra.mxu0 0.0
        %2604 = vmatpush.xpose.msra.mxu0 0.0
        %2605 = vmatpush.xpose.msra.mxu0 0.0
        %2606 = vmatpush.xpose.msra.mxu0 0.0
        %2607 = vmatpush.xpose.msra.mxu0 0.0
        %2608 = vmatpush.xpose.msra.mxu0 0.0
        %2609 = vmatpush.xpose.msra.mxu0 0.0
        %2610 = vmatpush.xpose.msra.mxu0 0.0
        %2611 = vmatpush.xpose.msra.mxu0 0.0
        %2612 = vmatpush.xpose.msra.mxu0 0.0
        %2613 = vmatpush.xpose.msra.mxu0 0.0
        %2614 = vmatpush.xpose.msra.mxu0 0.0
        %2615 = vmatpush.xpose.msra.mxu0 0.0
        %2616 = vmatpush.xpose.msra.mxu0 0.0
        %2617 = vmatpush.xpose.msra.mxu0 %v2600
        %2618 = vmatmul.f32.gmra.mxu0 %v2598
        %v2619 = vpop.f32.mrf.mxu0
        %v2620 = vadd.f32 0.0, %v2619
        %2621 = vdwg.mxu0
        %2622 = vrot.lane.b32.xlu0 %v527, 104
        %v2623 = vpop.permute.xlu0 %2622
        %2624 = vrot.lane.b32.xlu0 %v568, 104
        %v2625 = vpop.permute.xlu0 %2624
        %v2626 = vsel %vm617, %v2623, 0
        %v2628 = vsel %vm617, %v2625, 0
        %2630 = vmatpush.xpose.msra.mxu0 0.0
        %2631 = vmatpush.xpose.msra.mxu0 0.0
        %2632 = vmatpush.xpose.msra.mxu0 0.0
        %2633 = vmatpush.xpose.msra.mxu0 0.0
        %2634 = vmatpush.xpose.msra.mxu0 0.0
        %2635 = vmatpush.xpose.msra.mxu0 0.0
        %2636 = vmatpush.xpose.msra.mxu0 0.0
        %2637 = vmatpush.xpose.msra.mxu0 0.0
        %2638 = vmatpush.xpose.msra.mxu0 0.0
        %2639 = vmatpush.xpose.msra.mxu0 0.0
        %2640 = vmatpush.xpose.msra.mxu0 0.0
        %2641 = vmatpush.xpose.msra.mxu0 0.0
        %2642 = vmatpush.xpose.msra.mxu0 0.0
        %2643 = vmatpush.xpose.msra.mxu0 0.0
        %2644 = vmatpush.xpose.msra.mxu0 0.0
        %2645 = vmatpush.xpose.msra.mxu0 %v2628
        %2646 = vmatmul.f32.gmra.mxu0 %v2626
        %v2647 = vpop.f32.mrf.mxu0
        %v2648 = vadd.f32 0.0, %v2647
        %2649 = vdwg.mxu0
        %2650 = vrot.lane.b32.xlu0 %v530, 104
        %v2651 = vpop.permute.xlu0 %2650
        %2652 = vrot.lane.b32.xlu0 %v571, 104
        %v2653 = vpop.permute.xlu0 %2652
        %v2654 = vsel %vm617, %v2651, 0
        %v2656 = vsel %vm617, %v2653, 0
        %2658 = vmatpush.xpose.msra.mxu0 0.0
        %2659 = vmatpush.xpose.msra.mxu0 0.0
        %2660 = vmatpush.xpose.msra.mxu0 0.0
        %2661 = vmatpush.xpose.msra.mxu0 0.0
        %2662 = vmatpush.xpose.msra.mxu0 0.0
        %2663 = vmatpush.xpose.msra.mxu0 0.0
        %2664 = vmatpush.xpose.msra.mxu0 0.0
        %2665 = vmatpush.xpose.msra.mxu0 0.0
        %2666 = vmatpush.xpose.msra.mxu0 0.0
        %2667 = vmatpush.xpose.msra.mxu0 0.0
        %2668 = vmatpush.xpose.msra.mxu0 0.0
        %2669 = vmatpush.xpose.msra.mxu0 0.0
        %2670 = vmatpush.xpose.msra.mxu0 0.0
        %2671 = vmatpush.xpose.msra.mxu0 0.0
        %2672 = vmatpush.xpose.msra.mxu0 0.0
        %2673 = vmatpush.xpose.msra.mxu0 %v2656
        %2674 = vmatmul.f32.gmra.mxu0 %v2654
        %v2675 = vpop.f32.mrf.mxu0
        %v2676 = vadd.f32 0.0, %v2675
        %2677 = vdwg.mxu0
        %2678 = vrot.lane.b32.xlu0 %v533, 104
        %v2679 = vpop.permute.xlu0 %2678
        %2680 = vrot.lane.b32.xlu0 %v574, 104
        %v2681 = vpop.permute.xlu0 %2680
        %v2682 = vsel %vm617, %v2679, 0
        %v2684 = vsel %vm617, %v2681, 0
        %2686 = vmatpush.xpose.msra.mxu0 0.0
        %2687 = vmatpush.xpose.msra.mxu0 0.0
        %2688 = vmatpush.xpose.msra.mxu0 0.0
        %2689 = vmatpush.xpose.msra.mxu0 0.0
        %2690 = vmatpush.xpose.msra.mxu0 0.0
        %2691 = vmatpush.xpose.msra.mxu0 0.0
        %2692 = vmatpush.xpose.msra.mxu0 0.0
        %2693 = vmatpush.xpose.msra.mxu0 0.0
        %2694 = vmatpush.xpose.msra.mxu0 0.0
        %2695 = vmatpush.xpose.msra.mxu0 0.0
        %2696 = vmatpush.xpose.msra.mxu0 0.0
        %2697 = vmatpush.xpose.msra.mxu0 0.0
        %2698 = vmatpush.xpose.msra.mxu0 0.0
        %2699 = vmatpush.xpose.msra.mxu0 0.0
        %2700 = vmatpush.xpose.msra.mxu0 0.0
        %2701 = vmatpush.xpose.msra.mxu0 %v2684
        %2702 = vmatmul.f32.gmra.mxu0 %v2682
        %v2703 = vpop.f32.mrf.mxu0
        %v2704 = vadd.f32 0.0, %v2703
        %2705 = vdwg.mxu0
        %v2706 = vmul.f32 %v2508, 0.35355338
        %v2707 = vmul.f32 %v2536, 0.35355338
        %v2708 = vmul.f32 %v2564, 0.35355338
        %v2709 = vmul.f32 %v2592, 0.35355338
        %v2710 = vmul.f32 %v2620, 0.35355338
        %v2711 = vmul.f32 %v2648, 0.35355338
        %v2712 = vmul.f32 %v2676, 0.35355338
        %v2713 = vmul.f32 %v2704, 0.35355338
        %v2714 = vsel %vm617, %v2706, -inf
        %2715 = vmax.xlane.f32.xlu0 %v2714
        %v2716 = vpop.xlane.xlu0 %2715
        %v2717 = vsel %vm617, %v2707, -inf
        %2718 = vmax.xlane.f32.xlu0 %v2717
        %v2719 = vpop.xlane.xlu0 %2718
        %v2720 = vsel %vm617, %v2708, -inf
        %2721 = vmax.xlane.f32.xlu0 %v2720
        %v2722 = vpop.xlane.xlu0 %2721
        %v2723 = vsel %vm617, %v2709, -inf
        %2724 = vmax.xlane.f32.xlu0 %v2723
        %v2725 = vpop.xlane.xlu0 %2724
        %v2726 = vsel %vm617, %v2710, -inf
        %2727 = vmax.xlane.f32.xlu0 %v2726
        %v2728 = vpop.xlane.xlu0 %2727
        %v2729 = vsel %vm617, %v2711, -inf
        %2730 = vmax.xlane.f32.xlu0 %v2729
        %v2731 = vpop.xlane.xlu0 %2730
        %v2732 = vsel %vm617, %v2712, -inf
        %2733 = vmax.xlane.f32.xlu0 %v2732
        %v2734 = vpop.xlane.xlu0 %2733
        %v2735 = vsel %vm617, %v2713, -inf
        %2736 = vmax.xlane.f32.xlu0 %v2735
        %v2737 = vpop.xlane.xlu0 %2736
        %v2738 = vsub.f32 %v2706, %v2716
        %v2739 = vsub.f32 %v2707, %v2719
        %v2740 = vsub.f32 %v2708, %v2722
        %v2741 = vsub.f32 %v2709, %v2725
        %v2742 = vsub.f32 %v2710, %v2728
        %v2743 = vsub.f32 %v2711, %v2731
        %v2744 = vsub.f32 %v2712, %v2734
        %v2745 = vsub.f32 %v2713, %v2737
        %v2746 = vmul.f32 %v2738, 1.442695
        %v2747 = vpow.pop %v2746
        %v2748 = vmul.f32 %v2739, 1.442695
        %v2749 = vpow.pop %v2748
        %v2750 = vmul.f32 %v2740, 1.442695
        %v2751 = vpow.pop %v2750
        %v2752 = vmul.f32 %v2741, 1.442695
        %v2753 = vpow.pop %v2752
        %v2754 = vmul.f32 %v2742, 1.442695
        %v2755 = vpow.pop %v2754
        %v2756 = vmul.f32 %v2743, 1.442695
        %v2757 = vpow.pop %v2756
        %v2758 = vmul.f32 %v2744, 1.442695
        %v2759 = vpow.pop %v2758
        %v2760 = vmul.f32 %v2745, 1.442695
        %v2761 = vpow.pop %v2760
        %v2762 = vsel %vm617, %v2747, 0.0
        %2763 = vadd.xlane.f32.xlu0 %v2762
        %v2764 = vpop.xlane.xlu0 %2763
        %v2765 = vsel %vm617, %v2749, 0.0
        %2766 = vadd.xlane.f32.xlu0 %v2765
        %v2767 = vpop.xlane.xlu0 %2766
        %v2768 = vsel %vm617, %v2751, 0.0
        %2769 = vadd.xlane.f32.xlu0 %v2768
        %v2770 = vpop.xlane.xlu0 %2769
        %v2771 = vsel %vm617, %v2753, 0.0
        %2772 = vadd.xlane.f32.xlu0 %v2771
        %v2773 = vpop.xlane.xlu0 %2772
        %v2774 = vsel %vm617, %v2755, 0.0
        %2775 = vadd.xlane.f32.xlu0 %v2774
        %v2776 = vpop.xlane.xlu0 %2775
        %v2777 = vsel %vm617, %v2757, 0.0
        %2778 = vadd.xlane.f32.xlu0 %v2777
        %v2779 = vpop.xlane.xlu0 %2778
        %v2780 = vsel %vm617, %v2759, 0.0
        %2781 = vadd.xlane.f32.xlu0 %v2780
        %v2782 = vpop.xlane.xlu0 %2781
        %v2783 = vsel %vm617, %v2761, 0.0
        %2784 = vadd.xlane.f32.xlu0 %v2783
        %v2785 = vpop.xlane.xlu0 %2784
        %v2786 = vrcp.pop %v2764
        %v2787 = vmul.f32 %v2764, %v2786
        %v2788 = vsub.f32 1.0, %v2787
        %v2789 = vmul.f32 %v2786, %v2788
        %v2790 = vadd.f32 %v2786, %v2789
        %vm2791 = vweird.f32 %v2764
        %vm2792 = vweird.f32 %v2786
        %vm2793 = vmor %vm2791, %vm2792
        %v2794 = vsel %vm2793, %v2786, %v2790
        %v2795 = vand.u32 2147483647, %v2764
        %vm2796 = vcmp.eq.f32.partialorder %v2795, 8.507059e+37
        %v2797 = vand.u32 %v2764, 2147483648
        %v2798 = vor.u32 1.1754944e-38, %v2797
        %v2799 = vsel %vm2796, %v2798, %v2794
        %v2800 = vmul.f32 %v2747, %v2799
        %v2801 = vrcp.pop %v2767
        %v2802 = vmul.f32 %v2767, %v2801
        %v2803 = vsub.f32 1.0, %v2802
        %v2804 = vmul.f32 %v2801, %v2803
        %v2805 = vadd.f32 %v2801, %v2804
        %vm2806 = vweird.f32 %v2767
        %vm2807 = vweird.f32 %v2801
        %vm2808 = vmor %vm2806, %vm2807
        %v2809 = vsel %vm2808, %v2801, %v2805
        %v2810 = vand.u32 2147483647, %v2767
        %vm2811 = vcmp.eq.f32.partialorder %v2810, 8.507059e+37
        %v2812 = vand.u32 %v2767, 2147483648
        %v2813 = vor.u32 1.1754944e-38, %v2812
        %v2814 = vsel %vm2811, %v2813, %v2809
        %v2815 = vmul.f32 %v2749, %v2814
        %v2816 = vrcp.pop %v2770
        %v2817 = vmul.f32 %v2770, %v2816
        %v2818 = vsub.f32 1.0, %v2817
        %v2819 = vmul.f32 %v2816, %v2818
        %v2820 = vadd.f32 %v2816, %v2819
        %vm2821 = vweird.f32 %v2770
        %vm2822 = vweird.f32 %v2816
        %vm2823 = vmor %vm2821, %vm2822
        %v2824 = vsel %vm2823, %v2816, %v2820
        %v2825 = vand.u32 2147483647, %v2770
        %vm2826 = vcmp.eq.f32.partialorder %v2825, 8.507059e+37
        %v2827 = vand.u32 %v2770, 2147483648
        %v2828 = vor.u32 1.1754944e-38, %v2827
        %v2829 = vsel %vm2826, %v2828, %v2824
        %v2830 = vmul.f32 %v2751, %v2829
        %v2831 = vrcp.pop %v2773
        %v2832 = vmul.f32 %v2773, %v2831
        %v2833 = vsub.f32 1.0, %v2832
        %v2834 = vmul.f32 %v2831, %v2833
        %v2835 = vadd.f32 %v2831, %v2834
        %vm2836 = vweird.f32 %v2773
        %vm2837 = vweird.f32 %v2831
        %vm2838 = vmor %vm2836, %vm2837
        %v2839 = vsel %vm2838, %v2831, %v2835
        %v2840 = vand.u32 2147483647, %v2773
        %vm2841 = vcmp.eq.f32.partialorder %v2840, 8.507059e+37
        %v2842 = vand.u32 %v2773, 2147483648
        %v2843 = vor.u32 1.1754944e-38, %v2842
        %v2844 = vsel %vm2841, %v2843, %v2839
        %v2845 = vmul.f32 %v2753, %v2844
        %v2846 = vrcp.pop %v2776
        %v2847 = vmul.f32 %v2776, %v2846
        %v2848 = vsub.f32 1.0, %v2847
        %v2849 = vmul.f32 %v2846, %v2848
        %v2850 = vadd.f32 %v2846, %v2849
        %vm2851 = vweird.f32 %v2776
        %vm2852 = vweird.f32 %v2846
        %vm2853 = vmor %vm2851, %vm2852
        %v2854 = vsel %vm2853, %v2846, %v2850
        %v2855 = vand.u32 2147483647, %v2776
        %vm2856 = vcmp.eq.f32.partialorder %v2855, 8.507059e+37
        %v2857 = vand.u32 %v2776, 2147483648
        %v2858 = vor.u32 1.1754944e-38, %v2857
        %v2859 = vsel %vm2856, %v2858, %v2854
        %v2860 = vmul.f32 %v2755, %v2859
        %v2861 = vrcp.pop %v2779
        %v2862 = vmul.f32 %v2779, %v2861
        %v2863 = vsub.f32 1.0, %v2862
        %v2864 = vmul.f32 %v2861, %v2863
        %v2865 = vadd.f32 %v2861, %v2864
        %vm2866 = vweird.f32 %v2779
        %vm2867 = vweird.f32 %v2861
        %vm2868 = vmor %vm2866, %vm2867
        %v2869 = vsel %vm2868, %v2861, %v2865
        %v2870 = vand.u32 2147483647, %v2779
        %vm2871 = vcmp.eq.f32.partialorder %v2870, 8.507059e+37
        %v2872 = vand.u32 %v2779, 2147483648
        %v2873 = vor.u32 1.1754944e-38, %v2872
        %v2874 = vsel %vm2871, %v2873, %v2869
        %v2875 = vmul.f32 %v2757, %v2874
        %v2876 = vrcp.pop %v2782
        %v2877 = vmul.f32 %v2782, %v2876
        %v2878 = vsub.f32 1.0, %v2877
        %v2879 = vmul.f32 %v2876, %v2878
        %v2880 = vadd.f32 %v2876, %v2879
        %vm2881 = vweird.f32 %v2782
        %vm2882 = vweird.f32 %v2876
        %vm2883 = vmor %vm2881, %vm2882
        %v2884 = vsel %vm2883, %v2876, %v2880
        %v2885 = vand.u32 2147483647, %v2782
        %vm2886 = vcmp.eq.f32.partialorder %v2885, 8.507059e+37
        %v2887 = vand.u32 %v2782, 2147483648
        %v2888 = vor.u32 1.1754944e-38, %v2887
        %v2889 = vsel %vm2886, %v2888, %v2884
        %v2890 = vmul.f32 %v2759, %v2889
        %v2891 = vrcp.pop %v2785
        %v2892 = vmul.f32 %v2785, %v2891
        %v2893 = vsub.f32 1.0, %v2892
        %v2894 = vmul.f32 %v2891, %v2893
        %v2895 = vadd.f32 %v2891, %v2894
        %vm2896 = vweird.f32 %v2785
        %vm2897 = vweird.f32 %v2891
        %vm2898 = vmor %vm2896, %vm2897
        %v2899 = vsel %vm2898, %v2891, %v2895
        %v2900 = vand.u32 2147483647, %v2785
        %vm2901 = vcmp.eq.f32.partialorder %v2900, 8.507059e+37
        %v2902 = vand.u32 %v2785, 2147483648
        %v2903 = vor.u32 1.1754944e-38, %v2902
        %v2904 = vsel %vm2901, %v2903, %v2899
        %v2905 = vmul.f32 %v2761, %v2904
        %2906 = vrot.lane.b32.xlu0 %v594, 104
        %v2907 = vpop.permute.xlu0 %2906
        %v2910 = vsel %vm617, %v2800, 0
        %2912 = vmatpush.msra.mxu0 0.0
        %2913 = vmatpush.msra.mxu0 0.0
        %2914 = vmatpush.msra.mxu0 0.0
        %2915 = vmatpush.msra.mxu0 0.0
        %2916 = vmatpush.msra.mxu0 0.0
        %2917 = vmatpush.msra.mxu0 0.0
        %2918 = vmatpush.msra.mxu0 0.0
        %2919 = vmatpush.msra.mxu0 0.0
        %2920 = vmatpush.msra.mxu0 0.0
        %2921 = vmatpush.msra.mxu0 0.0
        %2922 = vmatpush.msra.mxu0 0.0
        %2923 = vmatpush.msra.mxu0 0.0
        %2924 = vmatpush.msra.mxu0 0.0
        %2925 = vmatpush.msra.mxu0 0.0
        %2926 = vmatpush.msra.mxu0 0.0
        %2927 = vmatpush.msra.mxu0 %v2907
        %2928 = vmatmul.f32.gmra.mxu0 %v2910
        %v2929 = vpop.f32.mrf.mxu0
        %v2930 = vadd.f32 0.0, %v2929
        %2931 = vdwg.mxu0
        %2932 = vrot.lane.b32.xlu0 %v597, 104
        %v2933 = vpop.permute.xlu0 %2932
        %v2936 = vsel %vm617, %v2815, 0
        %2938 = vmatpush.msra.mxu0 0.0
        %2939 = vmatpush.msra.mxu0 0.0
        %2940 = vmatpush.msra.mxu0 0.0
        %2941 = vmatpush.msra.mxu0 0.0
        %2942 = vmatpush.msra.mxu0 0.0
        %2943 = vmatpush.msra.mxu0 0.0
        %2944 = vmatpush.msra.mxu0 0.0
        %2945 = vmatpush.msra.mxu0 0.0
        %2946 = vmatpush.msra.mxu0 0.0
        %2947 = vmatpush.msra.mxu0 0.0
        %2948 = vmatpush.msra.mxu0 0.0
        %2949 = vmatpush.msra.mxu0 0.0
        %2950 = vmatpush.msra.mxu0 0.0
        %2951 = vmatpush.msra.mxu0 0.0
        %2952 = vmatpush.msra.mxu0 0.0
        %2953 = vmatpush.msra.mxu0 %v2933
        %2954 = vmatmul.f32.gmra.mxu0 %v2936
        %v2955 = vpop.f32.mrf.mxu0
        %v2956 = vadd.f32 0.0, %v2955
        %2957 = vdwg.mxu0
        %2958 = vrot.lane.b32.xlu0 %v600, 104
        %v2959 = vpop.permute.xlu0 %2958
        %v2962 = vsel %vm617, %v2830, 0
        %2964 = vmatpush.msra.mxu0 0.0
        %2965 = vmatpush.msra.mxu0 0.0
        %2966 = vmatpush.msra.mxu0 0.0
        %2967 = vmatpush.msra.mxu0 0.0
        %2968 = vmatpush.msra.mxu0 0.0
        %2969 = vmatpush.msra.mxu0 0.0
        %2970 = vmatpush.msra.mxu0 0.0
        %2971 = vmatpush.msra.mxu0 0.0
        %2972 = vmatpush.msra.mxu0 0.0
        %2973 = vmatpush.msra.mxu0 0.0
        %2974 = vmatpush.msra.mxu0 0.0
        %2975 = vmatpush.msra.mxu0 0.0
        %2976 = vmatpush.msra.mxu0 0.0
        %2977 = vmatpush.msra.mxu0 0.0
        %2978 = vmatpush.msra.mxu0 0.0
        %2979 = vmatpush.msra.mxu0 %v2959
        %2980 = vmatmul.f32.gmra.mxu0 %v2962
        %v2981 = vpop.f32.mrf.mxu0
        %v2982 = vadd.f32 0.0, %v2981
        %2983 = vdwg.mxu0
        %2984 = vrot.lane.b32.xlu0 %v603, 104
        %v2985 = vpop.permute.xlu0 %2984
        %v2988 = vsel %vm617, %v2845, 0
        %2990 = vmatpush.msra.mxu0 0.0
        %2991 = vmatpush.msra.mxu0 0.0
        %2992 = vmatpush.msra.mxu0 0.0
        %2993 = vmatpush.msra.mxu0 0.0
        %2994 = vmatpush.msra.mxu0 0.0
        %2995 = vmatpush.msra.mxu0 0.0
        %2996 = vmatpush.msra.mxu0 0.0
        %2997 = vmatpush.msra.mxu0 0.0
        %2998 = vmatpush.msra.mxu0 0.0
        %2999 = vmatpush.msra.mxu0 0.0
        %3000 = vmatpush.msra.mxu0 0.0
        %3001 = vmatpush.msra.mxu0 0.0
        %3002 = vmatpush.msra.mxu0 0.0
        %3003 = vmatpush.msra.mxu0 0.0
        %3004 = vmatpush.msra.mxu0 0.0
        %3005 = vmatpush.msra.mxu0 %v2985
        %3006 = vmatmul.f32.gmra.mxu0 %v2988
        %v3007 = vpop.f32.mrf.mxu0
        %v3008 = vadd.f32 0.0, %v3007
        %3009 = vdwg.mxu0
        %3010 = vrot.lane.b32.xlu0 %v606, 104
        %v3011 = vpop.permute.xlu0 %3010
        %v3014 = vsel %vm617, %v2860, 0
        %3016 = vmatpush.msra.mxu0 0.0
        %3017 = vmatpush.msra.mxu0 0.0
        %3018 = vmatpush.msra.mxu0 0.0
        %3019 = vmatpush.msra.mxu0 0.0
        %3020 = vmatpush.msra.mxu0 0.0
        %3021 = vmatpush.msra.mxu0 0.0
        %3022 = vmatpush.msra.mxu0 0.0
        %3023 = vmatpush.msra.mxu0 0.0
        %3024 = vmatpush.msra.mxu0 0.0
        %3025 = vmatpush.msra.mxu0 0.0
        %3026 = vmatpush.msra.mxu0 0.0
        %3027 = vmatpush.msra.mxu0 0.0
        %3028 = vmatpush.msra.mxu0 0.0
        %3029 = vmatpush.msra.mxu0 0.0
        %3030 = vmatpush.msra.mxu0 0.0
        %3031 = vmatpush.msra.mxu0 %v3011
        %3032 = vmatmul.f32.gmra.mxu0 %v3014
        %v3033 = vpop.f32.mrf.mxu0
        %v3034 = vadd.f32 0.0, %v3033
        %3035 = vdwg.mxu0
        %3036 = vrot.lane.b32.xlu0 %v609, 104
        %v3037 = vpop.permute.xlu0 %3036
        %v3040 = vsel %vm617, %v2875, 0
        %3042 = vmatpush.msra.mxu0 0.0
        %3043 = vmatpush.msra.mxu0 0.0
        %3044 = vmatpush.msra.mxu0 0.0
        %3045 = vmatpush.msra.mxu0 0.0
        %3046 = vmatpush.msra.mxu0 0.0
        %3047 = vmatpush.msra.mxu0 0.0
        %3048 = vmatpush.msra.mxu0 0.0
        %3049 = vmatpush.msra.mxu0 0.0
        %3050 = vmatpush.msra.mxu0 0.0
        %3051 = vmatpush.msra.mxu0 0.0
        %3052 = vmatpush.msra.mxu0 0.0
        %3053 = vmatpush.msra.mxu0 0.0
        %3054 = vmatpush.msra.mxu0 0.0
        %3055 = vmatpush.msra.mxu0 0.0
        %3056 = vmatpush.msra.mxu0 0.0
        %3057 = vmatpush.msra.mxu0 %v3037
        %3058 = vmatmul.f32.gmra.mxu0 %v3040
        %v3059 = vpop.f32.mrf.mxu0
        %v3060 = vadd.f32 0.0, %v3059
        %3061 = vdwg.mxu0
        %3062 = vrot.lane.b32.xlu0 %v612, 104
        %v3063 = vpop.permute.xlu0 %3062
        %v3066 = vsel %vm617, %v2890, 0
        %3068 = vmatpush.msra.mxu0 0.0
        %3069 = vmatpush.msra.mxu0 0.0
        %3070 = vmatpush.msra.mxu0 0.0
        %3071 = vmatpush.msra.mxu0 0.0
        %3072 = vmatpush.msra.mxu0 0.0
        %3073 = vmatpush.msra.mxu0 0.0
        %3074 = vmatpush.msra.mxu0 0.0
        %3075 = vmatpush.msra.mxu0 0.0
        %3076 = vmatpush.msra.mxu0 0.0
        %3077 = vmatpush.msra.mxu0 0.0
        %3078 = vmatpush.msra.mxu0 0.0
        %3079 = vmatpush.msra.mxu0 0.0
        %3080 = vmatpush.msra.mxu0 0.0
        %3081 = vmatpush.msra.mxu0 0.0
        %3082 = vmatpush.msra.mxu0 0.0
        %3083 = vmatpush.msra.mxu0 %v3063
        %3084 = vmatmul.f32.gmra.mxu0 %v3066
        %v3085 = vpop.f32.mrf.mxu0
        %v3086 = vadd.f32 0.0, %v3085
        %3087 = vdwg.mxu0
        %3088 = vrot.lane.b32.xlu0 %v615, 104
        %v3089 = vpop.permute.xlu0 %3088
        %v3092 = vsel %vm617, %v2905, 0
        %3094 = vmatpush.msra.mxu0 0.0
        %3095 = vmatpush.msra.mxu0 0.0
        %3096 = vmatpush.msra.mxu0 0.0
        %3097 = vmatpush.msra.mxu0 0.0
        %3098 = vmatpush.msra.mxu0 0.0
        %3099 = vmatpush.msra.mxu0 0.0
        %3100 = vmatpush.msra.mxu0 0.0
        %3101 = vmatpush.msra.mxu0 0.0
        %3102 = vmatpush.msra.mxu0 0.0
        %3103 = vmatpush.msra.mxu0 0.0
        %3104 = vmatpush.msra.mxu0 0.0
        %3105 = vmatpush.msra.mxu0 0.0
        %3106 = vmatpush.msra.mxu0 0.0
        %3107 = vmatpush.msra.mxu0 0.0
        %3108 = vmatpush.msra.mxu0 0.0
        %3109 = vmatpush.msra.mxu0 %v3089
        %3110 = vmatmul.f32.gmra.mxu0 %v3092
        %v3111 = vpop.f32.mrf.mxu0
        %v3112 = vadd.f32 0.0, %v3111
        %3113 = vdwg.mxu0
        %3122 = vrot.lane.b32.xlu0 %v1659, 8
        %v3123 = vpop.permute.xlu0 %3122
        %3124 = vrot.lane.b32.xlu0 %v1686, 8
        %v3125 = vpop.permute.xlu0 %3124
        %3126 = vrot.lane.b32.xlu0 %v1713, 8
        %v3127 = vpop.permute.xlu0 %3126
        %3128 = vrot.lane.b32.xlu0 %v1740, 8
        %v3129 = vpop.permute.xlu0 %3128
        %3130 = vrot.lane.b32.xlu0 %v1767, 8
        %v3131 = vpop.permute.xlu0 %3130
        %3132 = vrot.lane.b32.xlu0 %v1794, 8
        %v3133 = vpop.permute.xlu0 %3132
        %3134 = vrot.lane.b32.xlu0 %v1821, 8
        %v3135 = vpop.permute.xlu0 %3134
        %3136 = vrot.lane.b32.xlu0 %v1848, 8
        %v3137 = vpop.permute.xlu0 %3136
        %3154 = vrot.lane.b32.xlu0 %v2298, 16
        %v3155 = vpop.permute.xlu0 %3154
        %3156 = vrot.lane.b32.xlu0 %v2324, 16
        %v3157 = vpop.permute.xlu0 %3156
        %3158 = vrot.lane.b32.xlu0 %v2350, 16
        %v3159 = vpop.permute.xlu0 %3158
        %3160 = vrot.lane.b32.xlu0 %v2376, 16
        %v3161 = vpop.permute.xlu0 %3160
        %3162 = vrot.lane.b32.xlu0 %v2402, 16
        %v3163 = vpop.permute.xlu0 %3162
        %3164 = vrot.lane.b32.xlu0 %v2428, 16
        %v3165 = vpop.permute.xlu0 %3164
        %3166 = vrot.lane.b32.xlu0 %v2454, 16
        %v3167 = vpop.permute.xlu0 %3166
        %3168 = vrot.lane.b32.xlu0 %v2480, 16
        %v3169 = vpop.permute.xlu0 %3168
        %3186 = vrot.lane.b32.xlu0 %v2930, 24
        %v3187 = vpop.permute.xlu0 %3186
        %3188 = vrot.lane.b32.xlu0 %v2956, 24
        %v3189 = vpop.permute.xlu0 %3188
        %3190 = vrot.lane.b32.xlu0 %v2982, 24
        %v3191 = vpop.permute.xlu0 %3190
        %3192 = vrot.lane.b32.xlu0 %v3008, 24
        %v3193 = vpop.permute.xlu0 %3192
        %3194 = vrot.lane.b32.xlu0 %v3034, 24
        %v3195 = vpop.permute.xlu0 %3194
        %3196 = vrot.lane.b32.xlu0 %v3060, 24
        %v3197 = vpop.permute.xlu0 %3196
        %3198 = vrot.lane.b32.xlu0 %v3086, 24
        %v3199 = vpop.permute.xlu0 %3198
        %3200 = vrot.lane.b32.xlu0 %v3112, 24
        %v3201 = vpop.permute.xlu0 %3200
        %v3210 = vsel %vm617, %v1047, %v3123
        %v3211 = vsel %vm617, %v1070, %v3125
        %v3212 = vsel %vm617, %v1093, %v3127
        %v3213 = vsel %vm617, %v1116, %v3129
        %v3214 = vsel %vm617, %v1139, %v3131
        %v3215 = vsel %vm617, %v1162, %v3133
        %v3216 = vsel %vm617, %v1185, %v3135
        %v3217 = vsel %vm617, %v1208, %v3137
        %vm3218 = vcmask 130048
        %v3219 = vsel %vm3218, %v3210, %v3155
        %v3220 = vsel %vm3218, %v3211, %v3157
        %v3221 = vsel %vm3218, %v3212, %v3159
        %v3222 = vsel %vm3218, %v3213, %v3161
        %v3223 = vsel %vm3218, %v3214, %v3163
        %v3224 = vsel %vm3218, %v3215, %v3165
        %v3225 = vsel %vm3218, %v3216, %v3167
        %v3226 = vsel %vm3218, %v3217, %v3169
        %vm3227 = vcmask 195584
        %v3228 = vsel %vm3227, %v3219, %v3187
        %v3229 = vsel %vm3227, %v3220, %v3189
        %v3230 = vsel %vm3227, %v3221, %v3191
        %v3231 = vsel %vm3227, %v3222, %v3193
        %v3232 = vsel %vm3227, %v3223, %v3195
        %v3233 = vsel %vm3227, %v3224, %v3197
        %v3234 = vsel %vm3227, %v3225, %v3199
        %v3235 = vsel %vm3227, %v3226, %v3201
        %v3237 = vsel %vm469, %v3228, 0
        %v3240 = vsel %vm469, %v3229, 0
        %v3243 = vsel %vm469, %v3230, 0
        %v3246 = vsel %vm469, %v3231, 0
        %v3249 = vsel %vm469, %v3232, 0
        %v3252 = vsel %vm469, %v3233, 0
        %v3255 = vsel %vm469, %v3234, 0
        %v3258 = vsel %vm469, %v3235, 0
        %3260 = vmatpush.msra.mxu0 0.0
        %3261 = vmatpush.msra.mxu0 0.0
        %3262 = vmatpush.msra.mxu0 0.0
        %3263 = vmatpush.msra.mxu0 0.0
        %3264 = vmatpush.msra.mxu0 0.0
        %3265 = vmatpush.msra.mxu0 0.0
        %3266 = vmatpush.msra.mxu0 0.0
        %3267 = vmatpush.msra.mxu0 0.0
        %3268 = vmatpush.msra.mxu0 0.0
        %3269 = vmatpush.msra.mxu0 0.0
        %3270 = vmatpush.msra.mxu0 0.0
        %3271 = vmatpush.msra.mxu0 0.0
        %3272 = vmatpush.msra.mxu0 %v465
        %3273 = vmatpush.msra.mxu0 %v464
        %3274 = vmatpush.msra.mxu0 %v463
        %3275 = vmatpush.msra.mxu0 %v462
        %3276 = vmatmul.f32.gmra.mxu0 %v3237
        %v3277 = vpop.f32.mrf.mxu0
        %v3278 = vadd.f32 0.0, %v3277
        %3279 = vmatmul.f32.gmra.mxu0 %v3240
        %v3280 = vpop.f32.mrf.mxu0
        %v3281 = vadd.f32 0.0, %v3280
        %3282 = vmatmul.f32.gmra.mxu0 %v3243
        %v3283 = vpop.f32.mrf.mxu0
        %v3284 = vadd.f32 0.0, %v3283
        %3285 = vmatmul.f32.gmra.mxu0 %v3246
        %v3286 = vpop.f32.mrf.mxu0
        %v3287 = vadd.f32 0.0, %v3286
        %3288 = vmatmul.f32.gmra.mxu0 %v3249
        %v3289 = vpop.f32.mrf.mxu0
        %v3290 = vadd.f32 0.0, %v3289
        %3291 = vmatmul.f32.gmra.mxu0 %v3252
        %v3292 = vpop.f32.mrf.mxu0
        %v3293 = vadd.f32 0.0, %v3292
        %3294 = vmatmul.f32.gmra.mxu0 %v3255
        %v3295 = vpop.f32.mrf.mxu0
        %v3296 = vadd.f32 0.0, %v3295
        %3297 = vmatmul.f32.gmra.mxu0 %v3258
        %v3298 = vpop.f32.mrf.mxu0
        %v3299 = vadd.f32 0.0, %v3298
        %3300 = vdwg.mxu0
        %3301 = vmatpush.msra.mxu0 0.0
        %3302 = vmatpush.msra.mxu0 0.0
        %3303 = vmatpush.msra.mxu0 0.0
        %3304 = vmatpush.msra.mxu0 0.0
        %3305 = vmatpush.msra.mxu0 0.0
        %3306 = vmatpush.msra.mxu0 0.0
        %3307 = vmatpush.msra.mxu0 0.0
        %3308 = vmatpush.msra.mxu0 0.0
        %3309 = vmatpush.msra.mxu0 0.0
        %3310 = vmatpush.msra.mxu0 0.0
        %3311 = vmatpush.msra.mxu0 0.0
        %3312 = vmatpush.msra.mxu0 0.0
        %3313 = vmatpush.msra.mxu0 %v460
        %3314 = vmatpush.msra.mxu0 %v459
        %3315 = vmatpush.msra.mxu0 %v458
        %3316 = vmatpush.msra.mxu0 %v457
        %3317 = vmatmul.f32.gmra.mxu0 %v471
        %v3318 = vpop.f32.mrf.mxu0
        %v3319 = vadd.f32 %v3278, %v3318
        %3320 = vmatmul.f32.gmra.mxu0 %v474
        %v3321 = vpop.f32.mrf.mxu0
        %v3322 = vadd.f32 %v3281, %v3321
        %3323 = vmatmul.f32.gmra.mxu0 %v477
        %v3324 = vpop.f32.mrf.mxu0
        %v3325 = vadd.f32 %v3284, %v3324
        %3326 = vmatmul.f32.gmra.mxu0 %v480
        %v3327 = vpop.f32.mrf.mxu0
        %v3328 = vadd.f32 %v3287, %v3327
        %3329 = vmatmul.f32.gmra.mxu0 %v483
        %v3330 = vpop.f32.mrf.mxu0
        %v3331 = vadd.f32 %v3290, %v3330
        %3332 = vmatmul.f32.gmra.mxu0 %v486
        %v3333 = vpop.f32.mrf.mxu0
        %v3334 = vadd.f32 %v3293, %v3333
        %3335 = vmatmul.f32.gmra.mxu0 %v489
        %v3336 = vpop.f32.mrf.mxu0
        %v3337 = vadd.f32 %v3296, %v3336
        %3338 = vmatmul.f32.gmra.mxu0 %v492
        %v3339 = vpop.f32.mrf.mxu0
        %v3340 = vadd.f32 %v3299, %v3339
        %3341 = vdwg.mxu0
        %v3342 = vperm.slane %v466, 0
        %v3343 = vadd.f32 %v3319, %v3342
        %v3344 = vadd.f32 %v3322, %v3342
        %v3345 = vadd.f32 %v3325, %v3342
        %v3346 = vadd.f32 %v3328, %v3342
        %v3347 = vadd.f32 %v3331, %v3342
        %v3348 = vadd.f32 %v3334, %v3342
        %v3349 = vadd.f32 %v3337, %v3342
        %v3350 = vadd.f32 %v3340, %v3342
        %v3351 = vadd.f32 %v3343, %v434
        %v3352 = vadd.f32 %v3344, %v435
        %v3353 = vadd.f32 %v3345, %v436
        %v3354 = vadd.f32 %v3346, %v437
        %v3355 = vadd.f32 %v3347, %v438
        %v3356 = vadd.f32 %v3348, %v439
        %v3357 = vadd.f32 %v3349, %v440
        %v3358 = vadd.f32 %v3350, %v441
        %v3359 = vsel %vm469, %v3351, 0.0
        %3360 = vadd.xlane.f32.xlu0 %v3359
        %v3361 = vpop.xlane.xlu0 %3360
        %v3362 = vsel %vm469, %v3352, 0.0
        %3363 = vadd.xlane.f32.xlu0 %v3362
        %v3364 = vpop.xlane.xlu0 %3363
        %v3365 = vsel %vm469, %v3353, 0.0
        %3366 = vadd.xlane.f32.xlu0 %v3365
        %v3367 = vpop.xlane.xlu0 %3366
        %v3368 = vsel %vm469, %v3354, 0.0
        %3369 = vadd.xlane.f32.xlu0 %v3368
        %v3370 = vpop.xlane.xlu0 %3369
        %v3371 = vsel %vm469, %v3355, 0.0
        %3372 = vadd.xlane.f32.xlu0 %v3371
        %v3373 = vpop.xlane.xlu0 %3372
        %v3374 = vsel %vm469, %v3356, 0.0
        %3375 = vadd.xlane.f32.xlu0 %v3374
        %v3376 = vpop.xlane.xlu0 %3375
        %v3377 = vsel %vm469, %v3357, 0.0
        %3378 = vadd.xlane.f32.xlu0 %v3377
        %v3379 = vpop.xlane.xlu0 %3378
        %v3380 = vsel %vm469, %v3358, 0.0
        %3381 = vadd.xlane.f32.xlu0 %v3380
        %v3382 = vpop.xlane.xlu0 %3381
        %v3383 = vrcp.pop 32.0
        %v3384 = vmul.f32 32.0, %v3383
        %v3385 = vsub.f32 1.0, %v3384
        %v3386 = vmul.f32 %v3383, %v3385
        %v3387 = vadd.f32 %v3383, %v3386
        %vm3388 = vweird.f32 %v3383
        %v3389 = vsel %vm3388, %v3383, %v3387
        %v3390 = vmul.f32 %v3361, %v3389
        %v3391 = vmul.f32 %v3364, %v3389
        %v3392 = vmul.f32 %v3367, %v3389
        %v3393 = vmul.f32 %v3370, %v3389
        %v3394 = vmul.f32 %v3373, %v3389
        %v3395 = vmul.f32 %v3376, %v3389
        %v3396 = vmul.f32 %v3379, %v3389
        %v3397 = vmul.f32 %v3382, %v3389
        %v3398 = vsub.f32 %v3351, %v3390
        %v3399 = vsub.f32 %v3352, %v3391
        %v3400 = vsub.f32 %v3353, %v3392
        %v3401 = vsub.f32 %v3354, %v3393
        %v3402 = vsub.f32 %v3355, %v3394
        %v3403 = vsub.f32 %v3356, %v3395
        %v3404 = vsub.f32 %v3357, %v3396
        %v3405 = vsub.f32 %v3358, %v3397
        %v3406 = vmul.f32 %v3398, %v3398
        %v3407 = vmul.f32 %v3399, %v3399
        %v3408 = vmul.f32 %v3400, %v3400
        %v3409 = vmul.f32 %v3401, %v3401
        %v3410 = vmul.f32 %v3402, %v3402
        %v3411 = vmul.f32 %v3403, %v3403
        %v3412 = vmul.f32 %v3404, %v3404
        %v3413 = vmul.f32 %v3405, %v3405
        %v3414 = vsel %vm469, %v3406, 0.0
        %3415 = vadd.xlane.f32.xlu0 %v3414
        %v3416 = vpop.xlane.xlu0 %3415
        %v3417 = vsel %vm469, %v3407, 0.0
        %3418 = vadd.xlane.f32.xlu0 %v3417
        %v3419 = vpop.xlane.xlu0 %3418
        %v3420 = vsel %vm469, %v3408, 0.0
        %3421 = vadd.xlane.f32.xlu0 %v3420
        %v3422 = vpop.xlane.xlu0 %3421
        %v3423 = vsel %vm469, %v3409, 0.0
        %3424 = vadd.xlane.f32.xlu0 %v3423
        %v3425 = vpop.xlane.xlu0 %3424
        %v3426 = vsel %vm469, %v3410, 0.0
        %3427 = vadd.xlane.f32.xlu0 %v3426
        %v3428 = vpop.xlane.xlu0 %3427
        %v3429 = vsel %vm469, %v3411, 0.0
        %3430 = vadd.xlane.f32.xlu0 %v3429
        %v3431 = vpop.xlane.xlu0 %3430
        %v3432 = vsel %vm469, %v3412, 0.0
        %3433 = vadd.xlane.f32.xlu0 %v3432
        %v3434 = vpop.xlane.xlu0 %3433
        %v3435 = vsel %vm469, %v3413, 0.0
        %3436 = vadd.xlane.f32.xlu0 %v3435
        %v3437 = vpop.xlane.xlu0 %3436
        %v3438 = vmul.f32 %v3416, %v3389
        %v3439 = vmul.f32 %v3419, %v3389
        %v3440 = vmul.f32 %v3422, %v3389
        %v3441 = vmul.f32 %v3425, %v3389
        %v3442 = vmul.f32 %v3428, %v3389
        %v3443 = vmul.f32 %v3431, %v3389
        %v3444 = vmul.f32 %v3434, %v3389
        %v3445 = vmul.f32 %v3437, %v3389
        %v3446 = vadd.f32 %v3438, 1e-05
        %v3447 = vadd.f32 %v3439, 1e-05
        %v3448 = vadd.f32 %v3440, 1e-05
        %v3449 = vadd.f32 %v3441, 1e-05
        %v3450 = vadd.f32 %v3442, 1e-05
        %v3451 = vadd.f32 %v3443, 1e-05
        %v3452 = vadd.f32 %v3444, 1e-05
        %v3453 = vadd.f32 %v3445, 1e-05
        %v3454 = vrsqrt.pop %v3446
        %v3455 = vmul.f32 %v3454, %v3446
        %v3456 = vmul.f32 %v3455, %v3454
        %v3457 = vmul.f32 0.5, %v3456
        %v3458 = vsub.f32 1.5, %v3457
        %v3459 = vmul.f32 %v3454, %v3458
        %vm3460 = vweird.f32 %v3446
        %vm3461 = vweird.f32 %v3454
        %vm3462 = vmor %vm3460, %vm3461
        %v3463 = vsel %vm3462, %v3454, %v3459
        %v3464 = vrsqrt.pop %v3447
        %v3465 = vmul.f32 %v3464, %v3447
        %v3466 = vmul.f32 %v3465, %v3464
        %v3467 = vmul.f32 0.5, %v3466
        %v3468 = vsub.f32 1.5, %v3467
        %v3469 = vmul.f32 %v3464, %v3468
        %vm3470 = vweird.f32 %v3447
        %vm3471 = vweird.f32 %v3464
        %vm3472 = vmor %vm3470, %vm3471
        %v3473 = vsel %vm3472, %v3464, %v3469
        %v3474 = vrsqrt.pop %v3448
        %v3475 = vmul.f32 %v3474, %v3448
        %v3476 = vmul.f32 %v3475, %v3474
        %v3477 = vmul.f32 0.5, %v3476
        %v3478 = vsub.f32 1.5, %v3477
        %v3479 = vmul.f32 %v3474, %v3478
        %vm3480 = vweird.f32 %v3448
        %vm3481 = vweird.f32 %v3474
        %vm3482 = vmor %vm3480, %vm3481
        %v3483 = vsel %vm3482, %v3474, %v3479
        %v3484 = vrsqrt.pop %v3449
        %v3485 = vmul.f32 %v3484, %v3449
        %v3486 = vmul.f32 %v3485, %v3484
        %v3487 = vmul.f32 0.5, %v3486
        %v3488 = vsub.f32 1.5, %v3487
        %v3489 = vmul.f32 %v3484, %v3488
        %vm3490 = vweird.f32 %v3449
        %vm3491 = vweird.f32 %v3484
        %vm3492 = vmor %vm3490, %vm3491
        %v3493 = vsel %vm3492, %v3484, %v3489
        %v3494 = vrsqrt.pop %v3450
        %v3495 = vmul.f32 %v3494, %v3450
        %v3496 = vmul.f32 %v3495, %v3494
        %v3497 = vmul.f32 0.5, %v3496
        %v3498 = vsub.f32 1.5, %v3497
        %v3499 = vmul.f32 %v3494, %v3498
        %vm3500 = vweird.f32 %v3450
        %vm3501 = vweird.f32 %v3494
        %vm3502 = vmor %vm3500, %vm3501
        %v3503 = vsel %vm3502, %v3494, %v3499
        %v3504 = vrsqrt.pop %v3451
        %v3505 = vmul.f32 %v3504, %v3451
        %v3506 = vmul.f32 %v3505, %v3504
        %v3507 = vmul.f32 0.5, %v3506
        %v3508 = vsub.f32 1.5, %v3507
        %v3509 = vmul.f32 %v3504, %v3508
        %vm3510 = vweird.f32 %v3451
        %vm3511 = vweird.f32 %v3504
        %vm3512 = vmor %vm3510, %vm3511
        %v3513 = vsel %vm3512, %v3504, %v3509
        %v3514 = vrsqrt.pop %v3452
        %v3515 = vmul.f32 %v3514, %v3452
        %v3516 = vmul.f32 %v3515, %v3514
        %v3517 = vmul.f32 0.5, %v3516
        %v3518 = vsub.f32 1.5, %v3517
        %v3519 = vmul.f32 %v3514, %v3518
        %vm3520 = vweird.f32 %v3452
        %vm3521 = vweird.f32 %v3514
        %vm3522 = vmor %vm3520, %vm3521
        %v3523 = vsel %vm3522, %v3514, %v3519
        %v3524 = vrsqrt.pop %v3453
        %v3525 = vmul.f32 %v3524, %v3453
        %v3526 = vmul.f32 %v3525, %v3524
        %v3527 = vmul.f32 0.5, %v3526
        %v3528 = vsub.f32 1.5, %v3527
        %v3529 = vmul.f32 %v3524, %v3528
        %vm3530 = vweird.f32 %v3453
        %vm3531 = vweird.f32 %v3524
        %vm3532 = vmor %vm3530, %vm3531
        %v3533 = vsel %vm3532, %v3524, %v3529
        %v3534 = vmul.f32 %v3398, %v3463
        %v3535 = vmul.f32 %v3399, %v3473
        %v3536 = vmul.f32 %v3400, %v3483
        %v3537 = vmul.f32 %v3401, %v3493
        %v3538 = vmul.f32 %v3402, %v3503
        %v3539 = vmul.f32 %v3403, %v3513
        %v3540 = vmul.f32 %v3404, %v3523
        %v3541 = vmul.f32 %v3405, %v3533
        %v3542 = vperm.slane %v467, 0
        %v3543 = vmul.f32 %v3534, %v3542
        %v3544 = vmul.f32 %v3535, %v3542
        %v3545 = vmul.f32 %v3536, %v3542
        %v3546 = vmul.f32 %v3537, %v3542
        %v3547 = vmul.f32 %v3538, %v3542
        %v3548 = vmul.f32 %v3539, %v3542
        %v3549 = vmul.f32 %v3540, %v3542
        %v3550 = vmul.f32 %v3541, %v3542
        %v3551 = vperm.slane %v468, 0
        %v3552 = vadd.f32 %v3543, %v3551
        %v3553 = vadd.f32 %v3544, %v3551
        %v3554 = vadd.f32 %v3545, %v3551
        %v3555 = vadd.f32 %v3546, %v3551
        %v3556 = vadd.f32 %v3547, %v3551
        %v3557 = vadd.f32 %v3548, %v3551
        %v3558 = vadd.f32 %v3549, %v3551
        %v3559 = vadd.f32 %v3550, %v3551
        %s3560 = scalar_lea.vmem %s2, 160
        %v3561 = vld [vmem:[%s3560] sm:$0xff]
        %v3562 = vld [vmem:[%s3560 + $0x8] sm:$0xff]
        %v3563 = vld [vmem:[%s3560 + $0x10] sm:$0xff]
        %v3564 = vld [vmem:[%s3560 + $0x18] sm:$0xff]
        %s3565 = scalar_lea.vmem %s2, 192
        %v3566 = vld [vmem:[%s3565] sm:$0xff]
        %v3567 = vld [vmem:[%s3565 + $0x8] sm:$0xff]
        %v3568 = vld [vmem:[%s3565 + $0x10] sm:$0xff]
        %v3569 = vld [vmem:[%s3565 + $0x18] sm:$0xff]
        %s3570 = scalar_lea.vmem %s2, 224
        %v3571 = vld [vmem:[%s3570] sm:$0xff]
        %v3572 = vld [vmem:[%s3570 + $0x8] sm:$0xff]
        %v3573 = vld [vmem:[%s3570 + $0x10] sm:$0xff]
        %v3574 = vld [vmem:[%s3570 + $0x18] sm:$0xff]
        %s3575 = scalar_lea.vmem %s2, 256
        %v3576 = vld [vmem:[%s3575] sm:$0xff]
        %v3577 = vld [vmem:[%s3575 + $0x8] sm:$0xff]
        %v3578 = vld [vmem:[%s3575 + $0x10] sm:$0xff]
        %v3579 = vld [vmem:[%s3575 + $0x18] sm:$0xff]
        %s3580 = scalar_lea.vmem %s2, 288
        %v3581 = vld [vmem:[%s3580] sm:$0xff]
        %v3582 = vld [vmem:[%s3580 + $0x8] sm:$0xff]
        %v3583 = vld [vmem:[%s3580 + $0x10] sm:$0xff]
        %v3584 = vld [vmem:[%s3580 + $0x18] sm:$0xff]
        %v3585 = vld [vmem:[%s3 + $0x7] sm:$0x1]
        %v3586 = vld [vmem:[%s3 + $0x8] sm:$0x1]
        %v3587 = vld [vmem:[%s3 + $0x9] sm:$0x1]
        %v3589 = vsel %vm469, %v3552, 0
        %v3592 = vsel %vm469, %v3553, 0
        %v3595 = vsel %vm469, %v3554, 0
        %v3598 = vsel %vm469, %v3555, 0
        %v3601 = vsel %vm469, %v3556, 0
        %v3604 = vsel %vm469, %v3557, 0
        %v3607 = vsel %vm469, %v3558, 0
        %v3610 = vsel %vm469, %v3559, 0
        %3612 = vmatpush.msra.mxu0 0.0
        %3613 = vmatpush.msra.mxu0 0.0
        %3614 = vmatpush.msra.mxu0 0.0
        %3615 = vmatpush.msra.mxu0 0.0
        %3616 = vmatpush.msra.mxu0 0.0
        %3617 = vmatpush.msra.mxu0 0.0
        %3618 = vmatpush.msra.mxu0 0.0
        %3619 = vmatpush.msra.mxu0 0.0
        %3620 = vmatpush.msra.mxu0 0.0
        %3621 = vmatpush.msra.mxu0 0.0
        %3622 = vmatpush.msra.mxu0 0.0
        %3623 = vmatpush.msra.mxu0 0.0
        %3624 = vmatpush.msra.mxu0 %v3564
        %3625 = vmatpush.msra.mxu0 %v3563
        %3626 = vmatpush.msra.mxu0 %v3562
        %3627 = vmatpush.msra.mxu0 %v3561
        %3628 = vmatmul.f32.gmra.mxu0 %v3589
        %v3629 = vpop.f32.mrf.mxu0
        %v3630 = vadd.f32 0.0, %v3629
        %3631 = vmatmul.f32.gmra.mxu0 %v3592
        %v3632 = vpop.f32.mrf.mxu0
        %v3633 = vadd.f32 0.0, %v3632
        %3634 = vmatmul.f32.gmra.mxu0 %v3595
        %v3635 = vpop.f32.mrf.mxu0
        %v3636 = vadd.f32 0.0, %v3635
        %3637 = vmatmul.f32.gmra.mxu0 %v3598
        %v3638 = vpop.f32.mrf.mxu0
        %v3639 = vadd.f32 0.0, %v3638
        %3640 = vmatmul.f32.gmra.mxu0 %v3601
        %v3641 = vpop.f32.mrf.mxu0
        %v3642 = vadd.f32 0.0, %v3641
        %3643 = vmatmul.f32.gmra.mxu0 %v3604
        %v3644 = vpop.f32.mrf.mxu0
        %v3645 = vadd.f32 0.0, %v3644
        %3646 = vmatmul.f32.gmra.mxu0 %v3607
        %v3647 = vpop.f32.mrf.mxu0
        %v3648 = vadd.f32 0.0, %v3647
        %3649 = vmatmul.f32.gmra.mxu0 %v3610
        %v3650 = vpop.f32.mrf.mxu0
        %v3651 = vadd.f32 0.0, %v3650
        %3652 = vdwg.mxu0
        %3653 = vmatpush.msra.mxu0 0.0
        %3654 = vmatpush.msra.mxu0 0.0
        %3655 = vmatpush.msra.mxu0 0.0
        %3656 = vmatpush.msra.mxu0 0.0
        %3657 = vmatpush.msra.mxu0 0.0
        %3658 = vmatpush.msra.mxu0 0.0
        %3659 = vmatpush.msra.mxu0 0.0
        %3660 = vmatpush.msra.mxu0 0.0
        %3661 = vmatpush.msra.mxu0 0.0
        %3662 = vmatpush.msra.mxu0 0.0
        %3663 = vmatpush.msra.mxu0 0.0
        %3664 = vmatpush.msra.mxu0 0.0
        %3665 = vmatpush.msra.mxu0 %v3569
        %3666 = vmatpush.msra.mxu0 %v3568
        %3667 = vmatpush.msra.mxu0 %v3567
        %3668 = vmatpush.msra.mxu0 %v3566
        %3669 = vmatmul.f32.gmra.mxu0 %v3589
        %v3670 = vpop.f32.mrf.mxu0
        %v3671 = vadd.f32 0.0, %v3670
        %3672 = vmatmul.f32.gmra.mxu0 %v3592
        %v3673 = vpop.f32.mrf.mxu0
        %v3674 = vadd.f32 0.0, %v3673
        %3675 = vmatmul.f32.gmra.mxu0 %v3595
        %v3676 = vpop.f32.mrf.mxu0
        %v3677 = vadd.f32 0.0, %v3676
        %3678 = vmatmul.f32.gmra.mxu0 %v3598
        %v3679 = vpop.f32.mrf.mxu0
        %v3680 = vadd.f32 0.0, %v3679
        %3681 = vmatmul.f32.gmra.mxu0 %v3601
        %v3682 = vpop.f32.mrf.mxu0
        %v3683 = vadd.f32 0.0, %v3682
        %3684 = vmatmul.f32.gmra.mxu0 %v3604
        %v3685 = vpop.f32.mrf.mxu0
        %v3686 = vadd.f32 0.0, %v3685
        %3687 = vmatmul.f32.gmra.mxu0 %v3607
        %v3688 = vpop.f32.mrf.mxu0
        %v3689 = vadd.f32 0.0, %v3688
        %3690 = vmatmul.f32.gmra.mxu0 %v3610
        %v3691 = vpop.f32.mrf.mxu0
        %v3692 = vadd.f32 0.0, %v3691
        %3693 = vdwg.mxu0
        %3694 = vmatpush.msra.mxu0 0.0
        %3695 = vmatpush.msra.mxu0 0.0
        %3696 = vmatpush.msra.mxu0 0.0
        %3697 = vmatpush.msra.mxu0 0.0
        %3698 = vmatpush.msra.mxu0 0.0
        %3699 = vmatpush.msra.mxu0 0.0
        %3700 = vmatpush.msra.mxu0 0.0
        %3701 = vmatpush.msra.mxu0 0.0
        %3702 = vmatpush.msra.mxu0 0.0
        %3703 = vmatpush.msra.mxu0 0.0
        %3704 = vmatpush.msra.mxu0 0.0
        %3705 = vmatpush.msra.mxu0 0.0
        %3706 = vmatpush.msra.mxu0 %v3574
        %3707 = vmatpush.msra.mxu0 %v3573
        %3708 = vmatpush.msra.mxu0 %v3572
        %3709 = vmatpush.msra.mxu0 %v3571
        %3710 = vmatmul.f32.gmra.mxu0 %v3589
        %v3711 = vpop.f32.mrf.mxu0
        %v3712 = vadd.f32 0.0, %v3711
        %3713 = vmatmul.f32.gmra.mxu0 %v3592
        %v3714 = vpop.f32.mrf.mxu0
        %v3715 = vadd.f32 0.0, %v3714
        %3716 = vmatmul.f32.gmra.mxu0 %v3595
        %v3717 = vpop.f32.mrf.mxu0
        %v3718 = vadd.f32 0.0, %v3717
        %3719 = vmatmul.f32.gmra.mxu0 %v3598
        %v3720 = vpop.f32.mrf.mxu0
        %v3721 = vadd.f32 0.0, %v3720
        %3722 = vmatmul.f32.gmra.mxu0 %v3601
        %v3723 = vpop.f32.mrf.mxu0
        %v3724 = vadd.f32 0.0, %v3723
        %3725 = vmatmul.f32.gmra.mxu0 %v3604
        %v3726 = vpop.f32.mrf.mxu0
        %v3727 = vadd.f32 0.0, %v3726
        %3728 = vmatmul.f32.gmra.mxu0 %v3607
        %v3729 = vpop.f32.mrf.mxu0
        %v3730 = vadd.f32 0.0, %v3729
        %3731 = vmatmul.f32.gmra.mxu0 %v3610
        %v3732 = vpop.f32.mrf.mxu0
        %v3733 = vadd.f32 0.0, %v3732
        %3734 = vdwg.mxu0
        %v3736 = vsel %vm617, %v3630, 0
        %v3739 = vsel %vm617, %v3671, 0
        %3741 = vmatpush.xpose.msra.mxu0 0.0
        %3742 = vmatpush.xpose.msra.mxu0 0.0
        %3743 = vmatpush.xpose.msra.mxu0 0.0
        %3744 = vmatpush.xpose.msra.mxu0 0.0
        %3745 = vmatpush.xpose.msra.mxu0 0.0
        %3746 = vmatpush.xpose.msra.mxu0 0.0
        %3747 = vmatpush.xpose.msra.mxu0 0.0
        %3748 = vmatpush.xpose.msra.mxu0 0.0
        %3749 = vmatpush.xpose.msra.mxu0 0.0
        %3750 = vmatpush.xpose.msra.mxu0 0.0
        %3751 = vmatpush.xpose.msra.mxu0 0.0
        %3752 = vmatpush.xpose.msra.mxu0 0.0
        %3753 = vmatpush.xpose.msra.mxu0 0.0
        %3754 = vmatpush.xpose.msra.mxu0 0.0
        %3755 = vmatpush.xpose.msra.mxu0 0.0
        %3756 = vmatpush.xpose.msra.mxu0 %v3739
        %3757 = vmatmul.f32.gmra.mxu0 %v3736
        %v3758 = vpop.f32.mrf.mxu0
        %v3759 = vadd.f32 0.0, %v3758
        %3760 = vdwg.mxu0
        %v3762 = vsel %vm617, %v3633, 0
        %v3765 = vsel %vm617, %v3674, 0
        %3767 = vmatpush.xpose.msra.mxu0 0.0
        %3768 = vmatpush.xpose.msra.mxu0 0.0
        %3769 = vmatpush.xpose.msra.mxu0 0.0
        %3770 = vmatpush.xpose.msra.mxu0 0.0
        %3771 = vmatpush.xpose.msra.mxu0 0.0
        %3772 = vmatpush.xpose.msra.mxu0 0.0
        %3773 = vmatpush.xpose.msra.mxu0 0.0
        %3774 = vmatpush.xpose.msra.mxu0 0.0
        %3775 = vmatpush.xpose.msra.mxu0 0.0
        %3776 = vmatpush.xpose.msra.mxu0 0.0
        %3777 = vmatpush.xpose.msra.mxu0 0.0
        %3778 = vmatpush.xpose.msra.mxu0 0.0
        %3779 = vmatpush.xpose.msra.mxu0 0.0
        %3780 = vmatpush.xpose.msra.mxu0 0.0
        %3781 = vmatpush.xpose.msra.mxu0 0.0
        %3782 = vmatpush.xpose.msra.mxu0 %v3765
        %3783 = vmatmul.f32.gmra.mxu0 %v3762
        %v3784 = vpop.f32.mrf.mxu0
        %v3785 = vadd.f32 0.0, %v3784
        %3786 = vdwg.mxu0
        %v3788 = vsel %vm617, %v3636, 0
        %v3791 = vsel %vm617, %v3677, 0
        %3793 = vmatpush.xpose.msra.mxu0 0.0
        %3794 = vmatpush.xpose.msra.mxu0 0.0
        %3795 = vmatpush.xpose.msra.mxu0 0.0
        %3796 = vmatpush.xpose.msra.mxu0 0.0
        %3797 = vmatpush.xpose.msra.mxu0 0.0
        %3798 = vmatpush.xpose.msra.mxu0 0.0
        %3799 = vmatpush.xpose.msra.mxu0 0.0
        %3800 = vmatpush.xpose.msra.mxu0 0.0
        %3801 = vmatpush.xpose.msra.mxu0 0.0
        %3802 = vmatpush.xpose.msra.mxu0 0.0
        %3803 = vmatpush.xpose.msra.mxu0 0.0
        %3804 = vmatpush.xpose.msra.mxu0 0.0
        %3805 = vmatpush.xpose.msra.mxu0 0.0
        %3806 = vmatpush.xpose.msra.mxu0 0.0
        %3807 = vmatpush.xpose.msra.mxu0 0.0
        %3808 = vmatpush.xpose.msra.mxu0 %v3791
        %3809 = vmatmul.f32.gmra.mxu0 %v3788
        %v3810 = vpop.f32.mrf.mxu0
        %v3811 = vadd.f32 0.0, %v3810
        %3812 = vdwg.mxu0
        %v3814 = vsel %vm617, %v3639, 0
        %v3817 = vsel %vm617, %v3680, 0
        %3819 = vmatpush.xpose.msra.mxu0 0.0
        %3820 = vmatpush.xpose.msra.mxu0 0.0
        %3821 = vmatpush.xpose.msra.mxu0 0.0
        %3822 = vmatpush.xpose.msra.mxu0 0.0
        %3823 = vmatpush.xpose.msra.mxu0 0.0
        %3824 = vmatpush.xpose.msra.mxu0 0.0
        %3825 = vmatpush.xpose.msra.mxu0 0.0
        %3826 = vmatpush.xpose.msra.mxu0 0.0
        %3827 = vmatpush.xpose.msra.mxu0 0.0
        %3828 = vmatpush.xpose.msra.mxu0 0.0
        %3829 = vmatpush.xpose.msra.mxu0 0.0
        %3830 = vmatpush.xpose.msra.mxu0 0.0
        %3831 = vmatpush.xpose.msra.mxu0 0.0
        %3832 = vmatpush.xpose.msra.mxu0 0.0
        %3833 = vmatpush.xpose.msra.mxu0 0.0
        %3834 = vmatpush.xpose.msra.mxu0 %v3817
        %3835 = vmatmul.f32.gmra.mxu0 %v3814
        %v3836 = vpop.f32.mrf.mxu0
        %v3837 = vadd.f32 0.0, %v3836
        %3838 = vdwg.mxu0
        %v3840 = vsel %vm617, %v3642, 0
        %v3843 = vsel %vm617, %v3683, 0
        %3845 = vmatpush.xpose.msra.mxu0 0.0
        %3846 = vmatpush.xpose.msra.mxu0 0.0
        %3847 = vmatpush.xpose.msra.mxu0 0.0
        %3848 = vmatpush.xpose.msra.mxu0 0.0
        %3849 = vmatpush.xpose.msra.mxu0 0.0
        %3850 = vmatpush.xpose.msra.mxu0 0.0
        %3851 = vmatpush.xpose.msra.mxu0 0.0
        %3852 = vmatpush.xpose.msra.mxu0 0.0
        %3853 = vmatpush.xpose.msra.mxu0 0.0
        %3854 = vmatpush.xpose.msra.mxu0 0.0
        %3855 = vmatpush.xpose.msra.mxu0 0.0
        %3856 = vmatpush.xpose.msra.mxu0 0.0
        %3857 = vmatpush.xpose.msra.mxu0 0.0
        %3858 = vmatpush.xpose.msra.mxu0 0.0
        %3859 = vmatpush.xpose.msra.mxu0 0.0
        %3860 = vmatpush.xpose.msra.mxu0 %v3843
        %3861 = vmatmul.f32.gmra.mxu0 %v3840
        %v3862 = vpop.f32.mrf.mxu0
        %v3863 = vadd.f32 0.0, %v3862
        %3864 = vdwg.mxu0
        %v3866 = vsel %vm617, %v3645, 0
        %v3869 = vsel %vm617, %v3686, 0
        %3871 = vmatpush.xpose.msra.mxu0 0.0
        %3872 = vmatpush.xpose.msra.mxu0 0.0
        %3873 = vmatpush.xpose.msra.mxu0 0.0
        %3874 = vmatpush.xpose.msra.mxu0 0.0
        %3875 = vmatpush.xpose.msra.mxu0 0.0
        %3876 = vmatpush.xpose.msra.mxu0 0.0
        %3877 = vmatpush.xpose.msra.mxu0 0.0
        %3878 = vmatpush.xpose.msra.mxu0 0.0
        %3879 = vmatpush.xpose.msra.mxu0 0.0
        %3880 = vmatpush.xpose.msra.mxu0 0.0
        %3881 = vmatpush.xpose.msra.mxu0 0.0
        %3882 = vmatpush.xpose.msra.mxu0 0.0
        %3883 = vmatpush.xpose.msra.mxu0 0.0
        %3884 = vmatpush.xpose.msra.mxu0 0.0
        %3885 = vmatpush.xpose.msra.mxu0 0.0
        %3886 = vmatpush.xpose.msra.mxu0 %v3869
        %3887 = vmatmul.f32.gmra.mxu0 %v3866
        %v3888 = vpop.f32.mrf.mxu0
        %v3889 = vadd.f32 0.0, %v3888
        %3890 = vdwg.mxu0
        %v3892 = vsel %vm617, %v3648, 0
        %v3895 = vsel %vm617, %v3689, 0
        %3897 = vmatpush.xpose.msra.mxu0 0.0
        %3898 = vmatpush.xpose.msra.mxu0 0.0
        %3899 = vmatpush.xpose.msra.mxu0 0.0
        %3900 = vmatpush.xpose.msra.mxu0 0.0
        %3901 = vmatpush.xpose.msra.mxu0 0.0
        %3902 = vmatpush.xpose.msra.mxu0 0.0
        %3903 = vmatpush.xpose.msra.mxu0 0.0
        %3904 = vmatpush.xpose.msra.mxu0 0.0
        %3905 = vmatpush.xpose.msra.mxu0 0.0
        %3906 = vmatpush.xpose.msra.mxu0 0.0
        %3907 = vmatpush.xpose.msra.mxu0 0.0
        %3908 = vmatpush.xpose.msra.mxu0 0.0
        %3909 = vmatpush.xpose.msra.mxu0 0.0
        %3910 = vmatpush.xpose.msra.mxu0 0.0
        %3911 = vmatpush.xpose.msra.mxu0 0.0
        %3912 = vmatpush.xpose.msra.mxu0 %v3895
        %3913 = vmatmul.f32.gmra.mxu0 %v3892
        %v3914 = vpop.f32.mrf.mxu0
        %v3915 = vadd.f32 0.0, %v3914
        %3916 = vdwg.mxu0
        %v3918 = vsel %vm617, %v3651, 0
        %v3921 = vsel %vm617, %v3692, 0
        %3923 = vmatpush.xpose.msra.mxu0 0.0
        %3924 = vmatpush.xpose.msra.mxu0 0.0
        %3925 = vmatpush.xpose.msra.mxu0 0.0
        %3926 = vmatpush.xpose.msra.mxu0 0.0
        %3927 = vmatpush.xpose.msra.mxu0 0.0
        %3928 = vmatpush.xpose.msra.mxu0 0.0
        %3929 = vmatpush.xpose.msra.mxu0 0.0
        %3930 = vmatpush.xpose.msra.mxu0 0.0
        %3931 = vmatpush.xpose.msra.mxu0 0.0
        %3932 = vmatpush.xpose.msra.mxu0 0.0
        %3933 = vmatpush.xpose.msra.mxu0 0.0
        %3934 = vmatpush.xpose.msra.mxu0 0.0
        %3935 = vmatpush.xpose.msra.mxu0 0.0
        %3936 = vmatpush.xpose.msra.mxu0 0.0
        %3937 = vmatpush.xpose.msra.mxu0 0.0
        %3938 = vmatpush.xpose.msra.mxu0 %v3921
        %3939 = vmatmul.f32.gmra.mxu0 %v3918
        %v3940 = vpop.f32.mrf.mxu0
        %v3941 = vadd.f32 0.0, %v3940
        %3942 = vdwg.mxu0
        %v3943 = vmul.f32 %v3759, 0.35355338
        %v3944 = vmul.f32 %v3785, 0.35355338
        %v3945 = vmul.f32 %v3811, 0.35355338
        %v3946 = vmul.f32 %v3837, 0.35355338
        %v3947 = vmul.f32 %v3863, 0.35355338
        %v3948 = vmul.f32 %v3889, 0.35355338
        %v3949 = vmul.f32 %v3915, 0.35355338
        %v3950 = vmul.f32 %v3941, 0.35355338
        %v3951 = vsel %vm617, %v3943, -inf
        %3952 = vmax.xlane.f32.xlu0 %v3951
        %v3953 = vpop.xlane.xlu0 %3952
        %v3954 = vsel %vm617, %v3944, -inf
        %3955 = vmax.xlane.f32.xlu0 %v3954
        %v3956 = vpop.xlane.xlu0 %3955
        %v3957 = vsel %vm617, %v3945, -inf
        %3958 = vmax.xlane.f32.xlu0 %v3957
        %v3959 = vpop.xlane.xlu0 %3958
        %v3960 = vsel %vm617, %v3946, -inf
        %3961 = vmax.xlane.f32.xlu0 %v3960
        %v3962 = vpop.xlane.xlu0 %3961
        %v3963 = vsel %vm617, %v3947, -inf
        %3964 = vmax.xlane.f32.xlu0 %v3963
        %v3965 = vpop.xlane.xlu0 %3964
        %v3966 = vsel %vm617, %v3948, -inf
        %3967 = vmax.xlane.f32.xlu0 %v3966
        %v3968 = vpop.xlane.xlu0 %3967
        %v3969 = vsel %vm617, %v3949, -inf
        %3970 = vmax.xlane.f32.xlu0 %v3969
        %v3971 = vpop.xlane.xlu0 %3970
        %v3972 = vsel %vm617, %v3950, -inf
        %3973 = vmax.xlane.f32.xlu0 %v3972
        %v3974 = vpop.xlane.xlu0 %3973
        %v3975 = vsub.f32 %v3943, %v3953
        %v3976 = vsub.f32 %v3944, %v3956
        %v3977 = vsub.f32 %v3945, %v3959
        %v3978 = vsub.f32 %v3946, %v3962
        %v3979 = vsub.f32 %v3947, %v3965
        %v3980 = vsub.f32 %v3948, %v3968
        %v3981 = vsub.f32 %v3949, %v3971
        %v3982 = vsub.f32 %v3950, %v3974
        %v3983 = vmul.f32 %v3975, 1.442695
        %v3984 = vpow.pop %v3983
        %v3985 = vmul.f32 %v3976, 1.442695
        %v3986 = vpow.pop %v3985
        %v3987 = vmul.f32 %v3977, 1.442695
        %v3988 = vpow.pop %v3987
        %v3989 = vmul.f32 %v3978, 1.442695
        %v3990 = vpow.pop %v3989
        %v3991 = vmul.f32 %v3979, 1.442695
        %v3992 = vpow.pop %v3991
        %v3993 = vmul.f32 %v3980, 1.442695
        %v3994 = vpow.pop %v3993
        %v3995 = vmul.f32 %v3981, 1.442695
        %v3996 = vpow.pop %v3995
        %v3997 = vmul.f32 %v3982, 1.442695
        %v3998 = vpow.pop %v3997
        %v3999 = vsel %vm617, %v3984, 0.0
        %4000 = vadd.xlane.f32.xlu0 %v3999
        %v4001 = vpop.xlane.xlu0 %4000
        %v4002 = vsel %vm617, %v3986, 0.0
        %4003 = vadd.xlane.f32.xlu0 %v4002
        %v4004 = vpop.xlane.xlu0 %4003
        %v4005 = vsel %vm617, %v3988, 0.0
        %4006 = vadd.xlane.f32.xlu0 %v4005
        %v4007 = vpop.xlane.xlu0 %4006
        %v4008 = vsel %vm617, %v3990, 0.0
        %4009 = vadd.xlane.f32.xlu0 %v4008
        %v4010 = vpop.xlane.xlu0 %4009
        %v4011 = vsel %vm617, %v3992, 0.0
        %4012 = vadd.xlane.f32.xlu0 %v4011
        %v4013 = vpop.xlane.xlu0 %4012
        %v4014 = vsel %vm617, %v3994, 0.0
        %4015 = vadd.xlane.f32.xlu0 %v4014
        %v4016 = vpop.xlane.xlu0 %4015
        %v4017 = vsel %vm617, %v3996, 0.0
        %4018 = vadd.xlane.f32.xlu0 %v4017
        %v4019 = vpop.xlane.xlu0 %4018
        %v4020 = vsel %vm617, %v3998, 0.0
        %4021 = vadd.xlane.f32.xlu0 %v4020
        %v4022 = vpop.xlane.xlu0 %4021
        %v4023 = vrcp.pop %v4001
        %v4024 = vmul.f32 %v4001, %v4023
        %v4025 = vsub.f32 1.0, %v4024
        %v4026 = vmul.f32 %v4023, %v4025
        %v4027 = vadd.f32 %v4023, %v4026
        %vm4028 = vweird.f32 %v4001
        %vm4029 = vweird.f32 %v4023
        %vm4030 = vmor %vm4028, %vm4029
        %v4031 = vsel %vm4030, %v4023, %v4027
        %v4032 = vand.u32 2147483647, %v4001
        %vm4033 = vcmp.eq.f32.partialorder %v4032, 8.507059e+37
        %v4034 = vand.u32 %v4001, 2147483648
        %v4035 = vor.u32 1.1754944e-38, %v4034
        %v4036 = vsel %vm4033, %v4035, %v4031
        %v4037 = vmul.f32 %v3984, %v4036
        %v4038 = vrcp.pop %v4004
        %v4039 = vmul.f32 %v4004, %v4038
        %v4040 = vsub.f32 1.0, %v4039
        %v4041 = vmul.f32 %v4038, %v4040
        %v4042 = vadd.f32 %v4038, %v4041
        %vm4043 = vweird.f32 %v4004
        %vm4044 = vweird.f32 %v4038
        %vm4045 = vmor %vm4043, %vm4044
        %v4046 = vsel %vm4045, %v4038, %v4042
        %v4047 = vand.u32 2147483647, %v4004
        %vm4048 = vcmp.eq.f32.partialorder %v4047, 8.507059e+37
        %v4049 = vand.u32 %v4004, 2147483648
        %v4050 = vor.u32 1.1754944e-38, %v4049
        %v4051 = vsel %vm4048, %v4050, %v4046
        %v4052 = vmul.f32 %v3986, %v4051
        %v4053 = vrcp.pop %v4007
        %v4054 = vmul.f32 %v4007, %v4053
        %v4055 = vsub.f32 1.0, %v4054
        %v4056 = vmul.f32 %v4053, %v4055
        %v4057 = vadd.f32 %v4053, %v4056
        %vm4058 = vweird.f32 %v4007
        %vm4059 = vweird.f32 %v4053
        %vm4060 = vmor %vm4058, %vm4059
        %v4061 = vsel %vm4060, %v4053, %v4057
        %v4062 = vand.u32 2147483647, %v4007
        %vm4063 = vcmp.eq.f32.partialorder %v4062, 8.507059e+37
        %v4064 = vand.u32 %v4007, 2147483648
        %v4065 = vor.u32 1.1754944e-38, %v4064
        %v4066 = vsel %vm4063, %v4065, %v4061
        %v4067 = vmul.f32 %v3988, %v4066
        %v4068 = vrcp.pop %v4010
        %v4069 = vmul.f32 %v4010, %v4068
        %v4070 = vsub.f32 1.0, %v4069
        %v4071 = vmul.f32 %v4068, %v4070
        %v4072 = vadd.f32 %v4068, %v4071
        %vm4073 = vweird.f32 %v4010
        %vm4074 = vweird.f32 %v4068
        %vm4075 = vmor %vm4073, %vm4074
        %v4076 = vsel %vm4075, %v4068, %v4072
        %v4077 = vand.u32 2147483647, %v4010
        %vm4078 = vcmp.eq.f32.partialorder %v4077, 8.507059e+37
        %v4079 = vand.u32 %v4010, 2147483648
        %v4080 = vor.u32 1.1754944e-38, %v4079
        %v4081 = vsel %vm4078, %v4080, %v4076
        %v4082 = vmul.f32 %v3990, %v4081
        %v4083 = vrcp.pop %v4013
        %v4084 = vmul.f32 %v4013, %v4083
        %v4085 = vsub.f32 1.0, %v4084
        %v4086 = vmul.f32 %v4083, %v4085
        %v4087 = vadd.f32 %v4083, %v4086
        %vm4088 = vweird.f32 %v4013
        %vm4089 = vweird.f32 %v4083
        %vm4090 = vmor %vm4088, %vm4089
        %v4091 = vsel %vm4090, %v4083, %v4087
        %v4092 = vand.u32 2147483647, %v4013
        %vm4093 = vcmp.eq.f32.partialorder %v4092, 8.507059e+37
        %v4094 = vand.u32 %v4013, 2147483648
        %v4095 = vor.u32 1.1754944e-38, %v4094
        %v4096 = vsel %vm4093, %v4095, %v4091
        %v4097 = vmul.f32 %v3992, %v4096
        %v4098 = vrcp.pop %v4016
        %v4099 = vmul.f32 %v4016, %v4098
        %v4100 = vsub.f32 1.0, %v4099
        %v4101 = vmul.f32 %v4098, %v4100
        %v4102 = vadd.f32 %v4098, %v4101
        %vm4103 = vweird.f32 %v4016
        %vm4104 = vweird.f32 %v4098
        %vm4105 = vmor %vm4103, %vm4104
        %v4106 = vsel %vm4105, %v4098, %v4102
        %v4107 = vand.u32 2147483647, %v4016
        %vm4108 = vcmp.eq.f32.partialorder %v4107, 8.507059e+37
        %v4109 = vand.u32 %v4016, 2147483648
        %v4110 = vor.u32 1.1754944e-38, %v4109
        %v4111 = vsel %vm4108, %v4110, %v4106
        %v4112 = vmul.f32 %v3994, %v4111
        %v4113 = vrcp.pop %v4019
        %v4114 = vmul.f32 %v4019, %v4113
        %v4115 = vsub.f32 1.0, %v4114
        %v4116 = vmul.f32 %v4113, %v4115
        %v4117 = vadd.f32 %v4113, %v4116
        %vm4118 = vweird.f32 %v4019
        %vm4119 = vweird.f32 %v4113
        %vm4120 = vmor %vm4118, %vm4119
        %v4121 = vsel %vm4120, %v4113, %v4117
        %v4122 = vand.u32 2147483647, %v4019
        %vm4123 = vcmp.eq.f32.partialorder %v4122, 8.507059e+37
        %v4124 = vand.u32 %v4019, 2147483648
        %v4125 = vor.u32 1.1754944e-38, %v4124
        %v4126 = vsel %vm4123, %v4125, %v4121
        %v4127 = vmul.f32 %v3996, %v4126
        %v4128 = vrcp.pop %v4022
        %v4129 = vmul.f32 %v4022, %v4128
        %v4130 = vsub.f32 1.0, %v4129
        %v4131 = vmul.f32 %v4128, %v4130
        %v4132 = vadd.f32 %v4128, %v4131
        %vm4133 = vweird.f32 %v4022
        %vm4134 = vweird.f32 %v4128
        %vm4135 = vmor %vm4133, %vm4134
        %v4136 = vsel %vm4135, %v4128, %v4132
        %v4137 = vand.u32 2147483647, %v4022
        %vm4138 = vcmp.eq.f32.partialorder %v4137, 8.507059e+37
        %v4139 = vand.u32 %v4022, 2147483648
        %v4140 = vor.u32 1.1754944e-38, %v4139
        %v4141 = vsel %vm4138, %v4140, %v4136
        %v4142 = vmul.f32 %v3998, %v4141
        %v4144 = vsel %vm617, %v4037, 0
        %4146 = vmatpush.msra.mxu0 0.0
        %4147 = vmatpush.msra.mxu0 0.0
        %4148 = vmatpush.msra.mxu0 0.0
        %4149 = vmatpush.msra.mxu0 0.0
        %4150 = vmatpush.msra.mxu0 0.0
        %4151 = vmatpush.msra.mxu0 0.0
        %4152 = vmatpush.msra.mxu0 0.0
        %4153 = vmatpush.msra.mxu0 0.0
        %4154 = vmatpush.msra.mxu0 0.0
        %4155 = vmatpush.msra.mxu0 0.0
        %4156 = vmatpush.msra.mxu0 0.0
        %4157 = vmatpush.msra.mxu0 0.0
        %4158 = vmatpush.msra.mxu0 0.0
        %4159 = vmatpush.msra.mxu0 0.0
        %4160 = vmatpush.msra.mxu0 0.0
        %4161 = vmatpush.msra.mxu0 %v3712
        %4162 = vmatmul.f32.gmra.mxu0 %v4144
        %v4163 = vpop.f32.mrf.mxu0
        %v4164 = vadd.f32 0.0, %v4163
        %4165 = vdwg.mxu0
        %v4167 = vsel %vm617, %v4052, 0
        %4169 = vmatpush.msra.mxu0 0.0
        %4170 = vmatpush.msra.mxu0 0.0
        %4171 = vmatpush.msra.mxu0 0.0
        %4172 = vmatpush.msra.mxu0 0.0
        %4173 = vmatpush.msra.mxu0 0.0
        %4174 = vmatpush.msra.mxu0 0.0
        %4175 = vmatpush.msra.mxu0 0.0
        %4176 = vmatpush.msra.mxu0 0.0
        %4177 = vmatpush.msra.mxu0 0.0
        %4178 = vmatpush.msra.mxu0 0.0
        %4179 = vmatpush.msra.mxu0 0.0
        %4180 = vmatpush.msra.mxu0 0.0
        %4181 = vmatpush.msra.mxu0 0.0
        %4182 = vmatpush.msra.mxu0 0.0
        %4183 = vmatpush.msra.mxu0 0.0
        %4184 = vmatpush.msra.mxu0 %v3715
        %4185 = vmatmul.f32.gmra.mxu0 %v4167
        %v4186 = vpop.f32.mrf.mxu0
        %v4187 = vadd.f32 0.0, %v4186
        %4188 = vdwg.mxu0
        %v4190 = vsel %vm617, %v4067, 0
        %4192 = vmatpush.msra.mxu0 0.0
        %4193 = vmatpush.msra.mxu0 0.0
        %4194 = vmatpush.msra.mxu0 0.0
        %4195 = vmatpush.msra.mxu0 0.0
        %4196 = vmatpush.msra.mxu0 0.0
        %4197 = vmatpush.msra.mxu0 0.0
        %4198 = vmatpush.msra.mxu0 0.0
        %4199 = vmatpush.msra.mxu0 0.0
        %4200 = vmatpush.msra.mxu0 0.0
        %4201 = vmatpush.msra.mxu0 0.0
        %4202 = vmatpush.msra.mxu0 0.0
        %4203 = vmatpush.msra.mxu0 0.0
        %4204 = vmatpush.msra.mxu0 0.0
        %4205 = vmatpush.msra.mxu0 0.0
        %4206 = vmatpush.msra.mxu0 0.0
        %4207 = vmatpush.msra.mxu0 %v3718
        %4208 = vmatmul.f32.gmra.mxu0 %v4190
        %v4209 = vpop.f32.mrf.mxu0
        %v4210 = vadd.f32 0.0, %v4209
        %4211 = vdwg.mxu0
        %v4213 = vsel %vm617, %v4082, 0
        %4215 = vmatpush.msra.mxu0 0.0
        %4216 = vmatpush.msra.mxu0 0.0
        %4217 = vmatpush.msra.mxu0 0.0
        %4218 = vmatpush.msra.mxu0 0.0
        %4219 = vmatpush.msra.mxu0 0.0
        %4220 = vmatpush.msra.mxu0 0.0
        %4221 = vmatpush.msra.mxu0 0.0
        %4222 = vmatpush.msra.mxu0 0.0
        %4223 = vmatpush.msra.mxu0 0.0
        %4224 = vmatpush.msra.mxu0 0.0
        %4225 = vmatpush.msra.mxu0 0.0
        %4226 = vmatpush.msra.mxu0 0.0
        %4227 = vmatpush.msra.mxu0 0.0
        %4228 = vmatpush.msra.mxu0 0.0
        %4229 = vmatpush.msra.mxu0 0.0
        %4230 = vmatpush.msra.mxu0 %v3721
        %4231 = vmatmul.f32.gmra.mxu0 %v4213
        %v4232 = vpop.f32.mrf.mxu0
        %v4233 = vadd.f32 0.0, %v4232
        %4234 = vdwg.mxu0
        %v4236 = vsel %vm617, %v4097, 0
        %4238 = vmatpush.msra.mxu0 0.0
        %4239 = vmatpush.msra.mxu0 0.0
        %4240 = vmatpush.msra.mxu0 0.0
        %4241 = vmatpush.msra.mxu0 0.0
        %4242 = vmatpush.msra.mxu0 0.0
        %4243 = vmatpush.msra.mxu0 0.0
        %4244 = vmatpush.msra.mxu0 0.0
        %4245 = vmatpush.msra.mxu0 0.0
        %4246 = vmatpush.msra.mxu0 0.0
        %4247 = vmatpush.msra.mxu0 0.0
        %4248 = vmatpush.msra.mxu0 0.0
        %4249 = vmatpush.msra.mxu0 0.0
        %4250 = vmatpush.msra.mxu0 0.0
        %4251 = vmatpush.msra.mxu0 0.0
        %4252 = vmatpush.msra.mxu0 0.0
        %4253 = vmatpush.msra.mxu0 %v3724
        %4254 = vmatmul.f32.gmra.mxu0 %v4236
        %v4255 = vpop.f32.mrf.mxu0
        %v4256 = vadd.f32 0.0, %v4255
        %4257 = vdwg.mxu0
        %v4259 = vsel %vm617, %v4112, 0
        %4261 = vmatpush.msra.mxu0 0.0
        %4262 = vmatpush.msra.mxu0 0.0
        %4263 = vmatpush.msra.mxu0 0.0
        %4264 = vmatpush.msra.mxu0 0.0
        %4265 = vmatpush.msra.mxu0 0.0
        %4266 = vmatpush.msra.mxu0 0.0
        %4267 = vmatpush.msra.mxu0 0.0
        %4268 = vmatpush.msra.mxu0 0.0
        %4269 = vmatpush.msra.mxu0 0.0
        %4270 = vmatpush.msra.mxu0 0.0
        %4271 = vmatpush.msra.mxu0 0.0
        %4272 = vmatpush.msra.mxu0 0.0
        %4273 = vmatpush.msra.mxu0 0.0
        %4274 = vmatpush.msra.mxu0 0.0
        %4275 = vmatpush.msra.mxu0 0.0
        %4276 = vmatpush.msra.mxu0 %v3727
        %4277 = vmatmul.f32.gmra.mxu0 %v4259
        %v4278 = vpop.f32.mrf.mxu0
        %v4279 = vadd.f32 0.0, %v4278
        %4280 = vdwg.mxu0
        %v4282 = vsel %vm617, %v4127, 0
        %4284 = vmatpush.msra.mxu0 0.0
        %4285 = vmatpush.msra.mxu0 0.0
        %4286 = vmatpush.msra.mxu0 0.0
        %4287 = vmatpush.msra.mxu0 0.0
        %4288 = vmatpush.msra.mxu0 0.0
        %4289 = vmatpush.msra.mxu0 0.0
        %4290 = vmatpush.msra.mxu0 0.0
        %4291 = vmatpush.msra.mxu0 0.0
        %4292 = vmatpush.msra.mxu0 0.0
        %4293 = vmatpush.msra.mxu0 0.0
        %4294 = vmatpush.msra.mxu0 0.0
        %4295 = vmatpush.msra.mxu0 0.0
        %4296 = vmatpush.msra.mxu0 0.0
        %4297 = vmatpush.msra.mxu0 0.0
        %4298 = vmatpush.msra.mxu0 0.0
        %4299 = vmatpush.msra.mxu0 %v3730
        %4300 = vmatmul.f32.gmra.mxu0 %v4282
        %v4301 = vpop.f32.mrf.mxu0
        %v4302 = vadd.f32 0.0, %v4301
        %4303 = vdwg.mxu0
        %v4305 = vsel %vm617, %v4142, 0
        %4307 = vmatpush.msra.mxu0 0.0
        %4308 = vmatpush.msra.mxu0 0.0
        %4309 = vmatpush.msra.mxu0 0.0
        %4310 = vmatpush.msra.mxu0 0.0
        %4311 = vmatpush.msra.mxu0 0.0
        %4312 = vmatpush.msra.mxu0 0.0
        %4313 = vmatpush.msra.mxu0 0.0
        %4314 = vmatpush.msra.mxu0 0.0
        %4315 = vmatpush.msra.mxu0 0.0
        %4316 = vmatpush.msra.mxu0 0.0
        %4317 = vmatpush.msra.mxu0 0.0
        %4318 = vmatpush.msra.mxu0 0.0
        %4319 = vmatpush.msra.mxu0 0.0
        %4320 = vmatpush.msra.mxu0 0.0
        %4321 = vmatpush.msra.mxu0 0.0
        %4322 = vmatpush.msra.mxu0 %v3733
        %4323 = vmatmul.f32.gmra.mxu0 %v4305
        %v4324 = vpop.f32.mrf.mxu0
        %v4325 = vadd.f32 0.0, %v4324
        %4326 = vdwg.mxu0
        %4327 = vrot.lane.b32.xlu0 %v3630, 120
        %v4328 = vpop.permute.xlu0 %4327
        %4329 = vrot.lane.b32.xlu0 %v3671, 120
        %v4330 = vpop.permute.xlu0 %4329
        %v4331 = vsel %vm617, %v4328, 0
        %v4333 = vsel %vm617, %v4330, 0
        %4335 = vmatpush.xpose.msra.mxu0 0.0
        %4336 = vmatpush.xpose.msra.mxu0 0.0
        %4337 = vmatpush.xpose.msra.mxu0 0.0
        %4338 = vmatpush.xpose.msra.mxu0 0.0
        %4339 = vmatpush.xpose.msra.mxu0 0.0
        %4340 = vmatpush.xpose.msra.mxu0 0.0
        %4341 = vmatpush.xpose.msra.mxu0 0.0
        %4342 = vmatpush.xpose.msra.mxu0 0.0
        %4343 = vmatpush.xpose.msra.mxu0 0.0
        %4344 = vmatpush.xpose.msra.mxu0 0.0
        %4345 = vmatpush.xpose.msra.mxu0 0.0
        %4346 = vmatpush.xpose.msra.mxu0 0.0
        %4347 = vmatpush.xpose.msra.mxu0 0.0
        %4348 = vmatpush.xpose.msra.mxu0 0.0
        %4349 = vmatpush.xpose.msra.mxu0 0.0
        %4350 = vmatpush.xpose.msra.mxu0 %v4333
        %4351 = vmatmul.f32.gmra.mxu0 %v4331
        %v4352 = vpop.f32.mrf.mxu0
        %v4353 = vadd.f32 0.0, %v4352
        %4354 = vdwg.mxu0
        %4355 = vrot.lane.b32.xlu0 %v3633, 120
        %v4356 = vpop.permute.xlu0 %4355
        %4357 = vrot.lane.b32.xlu0 %v3674, 120
        %v4358 = vpop.permute.xlu0 %4357
        %v4359 = vsel %vm617, %v4356, 0
        %v4361 = vsel %vm617, %v4358, 0
        %4363 = vmatpush.xpose.msra.mxu0 0.0
        %4364 = vmatpush.xpose.msra.mxu0 0.0
        %4365 = vmatpush.xpose.msra.mxu0 0.0
        %4366 = vmatpush.xpose.msra.mxu0 0.0
        %4367 = vmatpush.xpose.msra.mxu0 0.0
        %4368 = vmatpush.xpose.msra.mxu0 0.0
        %4369 = vmatpush.xpose.msra.mxu0 0.0
        %4370 = vmatpush.xpose.msra.mxu0 0.0
        %4371 = vmatpush.xpose.msra.mxu0 0.0
        %4372 = vmatpush.xpose.msra.mxu0 0.0
        %4373 = vmatpush.xpose.msra.mxu0 0.0
        %4374 = vmatpush.xpose.msra.mxu0 0.0
        %4375 = vmatpush.xpose.msra.mxu0 0.0
        %4376 = vmatpush.xpose.msra.mxu0 0.0
        %4377 = vmatpush.xpose.msra.mxu0 0.0
        %4378 = vmatpush.xpose.msra.mxu0 %v4361
        %4379 = vmatmul.f32.gmra.mxu0 %v4359
        %v4380 = vpop.f32.mrf.mxu0
        %v4381 = vadd.f32 0.0, %v4380
        %4382 = vdwg.mxu0
        %4383 = vrot.lane.b32.xlu0 %v3636, 120
        %v4384 = vpop.permute.xlu0 %4383
        %4385 = vrot.lane.b32.xlu0 %v3677, 120
        %v4386 = vpop.permute.xlu0 %4385
        %v4387 = vsel %vm617, %v4384, 0
        %v4389 = vsel %vm617, %v4386, 0
        %4391 = vmatpush.xpose.msra.mxu0 0.0
        %4392 = vmatpush.xpose.msra.mxu0 0.0
        %4393 = vmatpush.xpose.msra.mxu0 0.0
        %4394 = vmatpush.xpose.msra.mxu0 0.0
        %4395 = vmatpush.xpose.msra.mxu0 0.0
        %4396 = vmatpush.xpose.msra.mxu0 0.0
        %4397 = vmatpush.xpose.msra.mxu0 0.0
        %4398 = vmatpush.xpose.msra.mxu0 0.0
        %4399 = vmatpush.xpose.msra.mxu0 0.0
        %4400 = vmatpush.xpose.msra.mxu0 0.0
        %4401 = vmatpush.xpose.msra.mxu0 0.0
        %4402 = vmatpush.xpose.msra.mxu0 0.0
        %4403 = vmatpush.xpose.msra.mxu0 0.0
        %4404 = vmatpush.xpose.msra.mxu0 0.0
        %4405 = vmatpush.xpose.msra.mxu0 0.0
        %4406 = vmatpush.xpose.msra.mxu0 %v4389
        %4407 = vmatmul.f32.gmra.mxu0 %v4387
        %v4408 = vpop.f32.mrf.mxu0
        %v4409 = vadd.f32 0.0, %v4408
        %4410 = vdwg.mxu0
        %4411 = vrot.lane.b32.xlu0 %v3639, 120
        %v4412 = vpop.permute.xlu0 %4411
        %4413 = vrot.lane.b32.xlu0 %v3680, 120
        %v4414 = vpop.permute.xlu0 %4413
        %v4415 = vsel %vm617, %v4412, 0
        %v4417 = vsel %vm617, %v4414, 0
        %4419 = vmatpush.xpose.msra.mxu0 0.0
        %4420 = vmatpush.xpose.msra.mxu0 0.0
        %4421 = vmatpush.xpose.msra.mxu0 0.0
        %4422 = vmatpush.xpose.msra.mxu0 0.0
        %4423 = vmatpush.xpose.msra.mxu0 0.0
        %4424 = vmatpush.xpose.msra.mxu0 0.0
        %4425 = vmatpush.xpose.msra.mxu0 0.0
        %4426 = vmatpush.xpose.msra.mxu0 0.0
        %4427 = vmatpush.xpose.msra.mxu0 0.0
        %4428 = vmatpush.xpose.msra.mxu0 0.0
        %4429 = vmatpush.xpose.msra.mxu0 0.0
        %4430 = vmatpush.xpose.msra.mxu0 0.0
        %4431 = vmatpush.xpose.msra.mxu0 0.0
        %4432 = vmatpush.xpose.msra.mxu0 0.0
        %4433 = vmatpush.xpose.msra.mxu0 0.0
        %4434 = vmatpush.xpose.msra.mxu0 %v4417
        %4435 = vmatmul.f32.gmra.mxu0 %v4415
        %v4436 = vpop.f32.mrf.mxu0
        %v4437 = vadd.f32 0.0, %v4436
        %4438 = vdwg.mxu0
        %4439 = vrot.lane.b32.xlu0 %v3642, 120
        %v4440 = vpop.permute.xlu0 %4439
        %4441 = vrot.lane.b32.xlu0 %v3683, 120
        %v4442 = vpop.permute.xlu0 %4441
        %v4443 = vsel %vm617, %v4440, 0
        %v4445 = vsel %vm617, %v4442, 0
        %4447 = vmatpush.xpose.msra.mxu0 0.0
        %4448 = vmatpush.xpose.msra.mxu0 0.0
        %4449 = vmatpush.xpose.msra.mxu0 0.0
        %4450 = vmatpush.xpose.msra.mxu0 0.0
        %4451 = vmatpush.xpose.msra.mxu0 0.0
        %4452 = vmatpush.xpose.msra.mxu0 0.0
        %4453 = vmatpush.xpose.msra.mxu0 0.0
        %4454 = vmatpush.xpose.msra.mxu0 0.0
        %4455 = vmatpush.xpose.msra.mxu0 0.0
        %4456 = vmatpush.xpose.msra.mxu0 0.0
        %4457 = vmatpush.xpose.msra.mxu0 0.0
        %4458 = vmatpush.xpose.msra.mxu0 0.0
        %4459 = vmatpush.xpose.msra.mxu0 0.0
        %4460 = vmatpush.xpose.msra.mxu0 0.0
        %4461 = vmatpush.xpose.msra.mxu0 0.0
        %4462 = vmatpush.xpose.msra.mxu0 %v4445
        %4463 = vmatmul.f32.gmra.mxu0 %v4443
        %v4464 = vpop.f32.mrf.mxu0
        %v4465 = vadd.f32 0.0, %v4464
        %4466 = vdwg.mxu0
        %4467 = vrot.lane.b32.xlu0 %v3645, 120
        %v4468 = vpop.permute.xlu0 %4467
        %4469 = vrot.lane.b32.xlu0 %v3686, 120
        %v4470 = vpop.permute.xlu0 %4469
        %v4471 = vsel %vm617, %v4468, 0
        %v4473 = vsel %vm617, %v4470, 0
        %4475 = vmatpush.xpose.msra.mxu0 0.0
        %4476 = vmatpush.xpose.msra.mxu0 0.0
        %4477 = vmatpush.xpose.msra.mxu0 0.0
        %4478 = vmatpush.xpose.msra.mxu0 0.0
        %4479 = vmatpush.xpose.msra.mxu0 0.0
        %4480 = vmatpush.xpose.msra.mxu0 0.0
        %4481 = vmatpush.xpose.msra.mxu0 0.0
        %4482 = vmatpush.xpose.msra.mxu0 0.0
        %4483 = vmatpush.xpose.msra.mxu0 0.0
        %4484 = vmatpush.xpose.msra.mxu0 0.0
        %4485 = vmatpush.xpose.msra.mxu0 0.0
        %4486 = vmatpush.xpose.msra.mxu0 0.0
        %4487 = vmatpush.xpose.msra.mxu0 0.0
        %4488 = vmatpush.xpose.msra.mxu0 0.0
        %4489 = vmatpush.xpose.msra.mxu0 0.0
        %4490 = vmatpush.xpose.msra.mxu0 %v4473
        %4491 = vmatmul.f32.gmra.mxu0 %v4471
        %v4492 = vpop.f32.mrf.mxu0
        %v4493 = vadd.f32 0.0, %v4492
        %4494 = vdwg.mxu0
        %4495 = vrot.lane.b32.xlu0 %v3648, 120
        %v4496 = vpop.permute.xlu0 %4495
        %4497 = vrot.lane.b32.xlu0 %v3689, 120
        %v4498 = vpop.permute.xlu0 %4497
        %v4499 = vsel %vm617, %v4496, 0
        %v4501 = vsel %vm617, %v4498, 0
        %4503 = vmatpush.xpose.msra.mxu0 0.0
        %4504 = vmatpush.xpose.msra.mxu0 0.0
        %4505 = vmatpush.xpose.msra.mxu0 0.0
        %4506 = vmatpush.xpose.msra.mxu0 0.0
        %4507 = vmatpush.xpose.msra.mxu0 0.0
        %4508 = vmatpush.xpose.msra.mxu0 0.0
        %4509 = vmatpush.xpose.msra.mxu0 0.0
        %4510 = vmatpush.xpose.msra.mxu0 0.0
        %4511 = vmatpush.xpose.msra.mxu0 0.0
        %4512 = vmatpush.xpose.msra.mxu0 0.0
        %4513 = vmatpush.xpose.msra.mxu0 0.0
        %4514 = vmatpush.xpose.msra.mxu0 0.0
        %4515 = vmatpush.xpose.msra.mxu0 0.0
        %4516 = vmatpush.xpose.msra.mxu0 0.0
        %4517 = vmatpush.xpose.msra.mxu0 0.0
        %4518 = vmatpush.xpose.msra.mxu0 %v4501
        %4519 = vmatmul.f32.gmra.mxu0 %v4499
        %v4520 = vpop.f32.mrf.mxu0
        %v4521 = vadd.f32 0.0, %v4520
        %4522 = vdwg.mxu0
        %4523 = vrot.lane.b32.xlu0 %v3651, 120
        %v4524 = vpop.permute.xlu0 %4523
        %4525 = vrot.lane.b32.xlu0 %v3692, 120
        %v4526 = vpop.permute.xlu0 %4525
        %v4527 = vsel %vm617, %v4524, 0
        %v4529 = vsel %vm617, %v4526, 0
        %4531 = vmatpush.xpose.msra.mxu0 0.0
        %4532 = vmatpush.xpose.msra.mxu0 0.0
        %4533 = vmatpush.xpose.msra.mxu0 0.0
        %4534 = vmatpush.xpose.msra.mxu0 0.0
        %4535 = vmatpush.xpose.msra.mxu0 0.0
        %4536 = vmatpush.xpose.msra.mxu0 0.0
        %4537 = vmatpush.xpose.msra.mxu0 0.0
        %4538 = vmatpush.xpose.msra.mxu0 0.0
        %4539 = vmatpush.xpose.msra.mxu0 0.0
        %4540 = vmatpush.xpose.msra.mxu0 0.0
        %4541 = vmatpush.xpose.msra.mxu0 0.0
        %4542 = vmatpush.xpose.msra.mxu0 0.0
        %4543 = vmatpush.xpose.msra.mxu0 0.0
        %4544 = vmatpush.xpose.msra.mxu0 0.0
        %4545 = vmatpush.xpose.msra.mxu0 0.0
        %4546 = vmatpush.xpose.msra.mxu0 %v4529
        %4547 = vmatmul.f32.gmra.mxu0 %v4527
        %v4548 = vpop.f32.mrf.mxu0
        %v4549 = vadd.f32 0.0, %v4548
        %4550 = vdwg.mxu0
        %v4551 = vmul.f32 %v4353, 0.35355338
        %v4552 = vmul.f32 %v4381, 0.35355338
        %v4553 = vmul.f32 %v4409, 0.35355338
        %v4554 = vmul.f32 %v4437, 0.35355338
        %v4555 = vmul.f32 %v4465, 0.35355338
        %v4556 = vmul.f32 %v4493, 0.35355338
        %v4557 = vmul.f32 %v4521, 0.35355338
        %v4558 = vmul.f32 %v4549, 0.35355338
        %v4559 = vsel %vm617, %v4551, -inf
        %4560 = vmax.xlane.f32.xlu0 %v4559
        %v4561 = vpop.xlane.xlu0 %4560
        %v4562 = vsel %vm617, %v4552, -inf
        %4563 = vmax.xlane.f32.xlu0 %v4562
        %v4564 = vpop.xlane.xlu0 %4563
        %v4565 = vsel %vm617, %v4553, -inf
        %4566 = vmax.xlane.f32.xlu0 %v4565
        %v4567 = vpop.xlane.xlu0 %4566
        %v4568 = vsel %vm617, %v4554, -inf
        %4569 = vmax.xlane.f32.xlu0 %v4568
        %v4570 = vpop.xlane.xlu0 %4569
        %v4571 = vsel %vm617, %v4555, -inf
        %4572 = vmax.xlane.f32.xlu0 %v4571
        %v4573 = vpop.xlane.xlu0 %4572
        %v4574 = vsel %vm617, %v4556, -inf
        %4575 = vmax.xlane.f32.xlu0 %v4574
        %v4576 = vpop.xlane.xlu0 %4575
        %v4577 = vsel %vm617, %v4557, -inf
        %4578 = vmax.xlane.f32.xlu0 %v4577
        %v4579 = vpop.xlane.xlu0 %4578
        %v4580 = vsel %vm617, %v4558, -inf
        %4581 = vmax.xlane.f32.xlu0 %v4580
        %v4582 = vpop.xlane.xlu0 %4581
        %v4583 = vsub.f32 %v4551, %v4561
        %v4584 = vsub.f32 %v4552, %v4564
        %v4585 = vsub.f32 %v4553, %v4567
        %v4586 = vsub.f32 %v4554, %v4570
        %v4587 = vsub.f32 %v4555, %v4573
        %v4588 = vsub.f32 %v4556, %v4576
        %v4589 = vsub.f32 %v4557, %v4579
        %v4590 = vsub.f32 %v4558, %v4582
        %v4591 = vmul.f32 %v4583, 1.442695
        %v4592 = vpow.pop %v4591
        %v4593 = vmul.f32 %v4584, 1.442695
        %v4594 = vpow.pop %v4593
        %v4595 = vmul.f32 %v4585, 1.442695
        %v4596 = vpow.pop %v4595
        %v4597 = vmul.f32 %v4586, 1.442695
        %v4598 = vpow.pop %v4597
        %v4599 = vmul.f32 %v4587, 1.442695
        %v4600 = vpow.pop %v4599
        %v4601 = vmul.f32 %v4588, 1.442695
        %v4602 = vpow.pop %v4601
        %v4603 = vmul.f32 %v4589, 1.442695
        %v4604 = vpow.pop %v4603
        %v4605 = vmul.f32 %v4590, 1.442695
        %v4606 = vpow.pop %v4605
        %v4607 = vsel %vm617, %v4592, 0.0
        %4608 = vadd.xlane.f32.xlu0 %v4607
        %v4609 = vpop.xlane.xlu0 %4608
        %v4610 = vsel %vm617, %v4594, 0.0
        %4611 = vadd.xlane.f32.xlu0 %v4610
        %v4612 = vpop.xlane.xlu0 %4611
        %v4613 = vsel %vm617, %v4596, 0.0
        %4614 = vadd.xlane.f32.xlu0 %v4613
        %v4615 = vpop.xlane.xlu0 %4614
        %v4616 = vsel %vm617, %v4598, 0.0
        %4617 = vadd.xlane.f32.xlu0 %v4616
        %v4618 = vpop.xlane.xlu0 %4617
        %v4619 = vsel %vm617, %v4600, 0.0
        %4620 = vadd.xlane.f32.xlu0 %v4619
        %v4621 = vpop.xlane.xlu0 %4620
        %v4622 = vsel %vm617, %v4602, 0.0
        %4623 = vadd.xlane.f32.xlu0 %v4622
        %v4624 = vpop.xlane.xlu0 %4623
        %v4625 = vsel %vm617, %v4604, 0.0
        %4626 = vadd.xlane.f32.xlu0 %v4625
        %v4627 = vpop.xlane.xlu0 %4626
        %v4628 = vsel %vm617, %v4606, 0.0
        %4629 = vadd.xlane.f32.xlu0 %v4628
        %v4630 = vpop.xlane.xlu0 %4629
        %v4631 = vrcp.pop %v4609
        %v4632 = vmul.f32 %v4609, %v4631
        %v4633 = vsub.f32 1.0, %v4632
        %v4634 = vmul.f32 %v4631, %v4633
        %v4635 = vadd.f32 %v4631, %v4634
        %vm4636 = vweird.f32 %v4609
        %vm4637 = vweird.f32 %v4631
        %vm4638 = vmor %vm4636, %vm4637
        %v4639 = vsel %vm4638, %v4631, %v4635
        %v4640 = vand.u32 2147483647, %v4609
        %vm4641 = vcmp.eq.f32.partialorder %v4640, 8.507059e+37
        %v4642 = vand.u32 %v4609, 2147483648
        %v4643 = vor.u32 1.1754944e-38, %v4642
        %v4644 = vsel %vm4641, %v4643, %v4639
        %v4645 = vmul.f32 %v4592, %v4644
        %v4646 = vrcp.pop %v4612
        %v4647 = vmul.f32 %v4612, %v4646
        %v4648 = vsub.f32 1.0, %v4647
        %v4649 = vmul.f32 %v4646, %v4648
        %v4650 = vadd.f32 %v4646, %v4649
        %vm4651 = vweird.f32 %v4612
        %vm4652 = vweird.f32 %v4646
        %vm4653 = vmor %vm4651, %vm4652
        %v4654 = vsel %vm4653, %v4646, %v4650
        %v4655 = vand.u32 2147483647, %v4612
        %vm4656 = vcmp.eq.f32.partialorder %v4655, 8.507059e+37
        %v4657 = vand.u32 %v4612, 2147483648
        %v4658 = vor.u32 1.1754944e-38, %v4657
        %v4659 = vsel %vm4656, %v4658, %v4654
        %v4660 = vmul.f32 %v4594, %v4659
        %v4661 = vrcp.pop %v4615
        %v4662 = vmul.f32 %v4615, %v4661
        %v4663 = vsub.f32 1.0, %v4662
        %v4664 = vmul.f32 %v4661, %v4663
        %v4665 = vadd.f32 %v4661, %v4664
        %vm4666 = vweird.f32 %v4615
        %vm4667 = vweird.f32 %v4661
        %vm4668 = vmor %vm4666, %vm4667
        %v4669 = vsel %vm4668, %v4661, %v4665
        %v4670 = vand.u32 2147483647, %v4615
        %vm4671 = vcmp.eq.f32.partialorder %v4670, 8.507059e+37
        %v4672 = vand.u32 %v4615, 2147483648
        %v4673 = vor.u32 1.1754944e-38, %v4672
        %v4674 = vsel %vm4671, %v4673, %v4669
        %v4675 = vmul.f32 %v4596, %v4674
        %v4676 = vrcp.pop %v4618
        %v4677 = vmul.f32 %v4618, %v4676
        %v4678 = vsub.f32 1.0, %v4677
        %v4679 = vmul.f32 %v4676, %v4678
        %v4680 = vadd.f32 %v4676, %v4679
        %vm4681 = vweird.f32 %v4618
        %vm4682 = vweird.f32 %v4676
        %vm4683 = vmor %vm4681, %vm4682
        %v4684 = vsel %vm4683, %v4676, %v4680
        %v4685 = vand.u32 2147483647, %v4618
        %vm4686 = vcmp.eq.f32.partialorder %v4685, 8.507059e+37
        %v4687 = vand.u32 %v4618, 2147483648
        %v4688 = vor.u32 1.1754944e-38, %v4687
        %v4689 = vsel %vm4686, %v4688, %v4684
        %v4690 = vmul.f32 %v4598, %v4689
        %v4691 = vrcp.pop %v4621
        %v4692 = vmul.f32 %v4621, %v4691
        %v4693 = vsub.f32 1.0, %v4692
        %v4694 = vmul.f32 %v4691, %v4693
        %v4695 = vadd.f32 %v4691, %v4694
        %vm4696 = vweird.f32 %v4621
        %vm4697 = vweird.f32 %v4691
        %vm4698 = vmor %vm4696, %vm4697
        %v4699 = vsel %vm4698, %v4691, %v4695
        %v4700 = vand.u32 2147483647, %v4621
        %vm4701 = vcmp.eq.f32.partialorder %v4700, 8.507059e+37
        %v4702 = vand.u32 %v4621, 2147483648
        %v4703 = vor.u32 1.1754944e-38, %v4702
        %v4704 = vsel %vm4701, %v4703, %v4699
        %v4705 = vmul.f32 %v4600, %v4704
        %v4706 = vrcp.pop %v4624
        %v4707 = vmul.f32 %v4624, %v4706
        %v4708 = vsub.f32 1.0, %v4707
        %v4709 = vmul.f32 %v4706, %v4708
        %v4710 = vadd.f32 %v4706, %v4709
        %vm4711 = vweird.f32 %v4624
        %vm4712 = vweird.f32 %v4706
        %vm4713 = vmor %vm4711, %vm4712
        %v4714 = vsel %vm4713, %v4706, %v4710
        %v4715 = vand.u32 2147483647, %v4624
        %vm4716 = vcmp.eq.f32.partialorder %v4715, 8.507059e+37
        %v4717 = vand.u32 %v4624, 2147483648
        %v4718 = vor.u32 1.1754944e-38, %v4717
        %v4719 = vsel %vm4716, %v4718, %v4714
        %v4720 = vmul.f32 %v4602, %v4719
        %v4721 = vrcp.pop %v4627
        %v4722 = vmul.f32 %v4627, %v4721
        %v4723 = vsub.f32 1.0, %v4722
        %v4724 = vmul.f32 %v4721, %v4723
        %v4725 = vadd.f32 %v4721, %v4724
        %vm4726 = vweird.f32 %v4627
        %vm4727 = vweird.f32 %v4721
        %vm4728 = vmor %vm4726, %vm4727
        %v4729 = vsel %vm4728, %v4721, %v4725
        %v4730 = vand.u32 2147483647, %v4627
        %vm4731 = vcmp.eq.f32.partialorder %v4730, 8.507059e+37
        %v4732 = vand.u32 %v4627, 2147483648
        %v4733 = vor.u32 1.1754944e-38, %v4732
        %v4734 = vsel %vm4731, %v4733, %v4729
        %v4735 = vmul.f32 %v4604, %v4734
        %v4736 = vrcp.pop %v4630
        %v4737 = vmul.f32 %v4630, %v4736
        %v4738 = vsub.f32 1.0, %v4737
        %v4739 = vmul.f32 %v4736, %v4738
        %v4740 = vadd.f32 %v4736, %v4739
        %vm4741 = vweird.f32 %v4630
        %vm4742 = vweird.f32 %v4736
        %vm4743 = vmor %vm4741, %vm4742
        %v4744 = vsel %vm4743, %v4736, %v4740
        %v4745 = vand.u32 2147483647, %v4630
        %vm4746 = vcmp.eq.f32.partialorder %v4745, 8.507059e+37
        %v4747 = vand.u32 %v4630, 2147483648
        %v4748 = vor.u32 1.1754944e-38, %v4747
        %v4749 = vsel %vm4746, %v4748, %v4744
        %v4750 = vmul.f32 %v4606, %v4749
        %4752 = vrot.lane.b32.xlu0 %v3712, 120
        %v4753 = vpop.permute.xlu0 %4752
        %v4756 = vsel %vm617, %v4645, 0
        %4758 = vmatpush.msra.mxu0 0.0
        %4759 = vmatpush.msra.mxu0 0.0
        %4760 = vmatpush.msra.mxu0 0.0
        %4761 = vmatpush.msra.mxu0 0.0
        %4762 = vmatpush.msra.mxu0 0.0
        %4763 = vmatpush.msra.mxu0 0.0
        %4764 = vmatpush.msra.mxu0 0.0
        %4765 = vmatpush.msra.mxu0 0.0
        %4766 = vmatpush.msra.mxu0 0.0
        %4767 = vmatpush.msra.mxu0 0.0
        %4768 = vmatpush.msra.mxu0 0.0
        %4769 = vmatpush.msra.mxu0 0.0
        %4770 = vmatpush.msra.mxu0 0.0
        %4771 = vmatpush.msra.mxu0 0.0
        %4772 = vmatpush.msra.mxu0 0.0
        %4773 = vmatpush.msra.mxu0 %v4753
        %4774 = vmatmul.f32.gmra.mxu0 %v4756
        %v4775 = vpop.f32.mrf.mxu0
        %v4776 = vadd.f32 0.0, %v4775
        %4777 = vdwg.mxu0
        %4779 = vrot.lane.b32.xlu0 %v3715, 120
        %v4780 = vpop.permute.xlu0 %4779
        %v4783 = vsel %vm617, %v4660, 0
        %4785 = vmatpush.msra.mxu0 0.0
        %4786 = vmatpush.msra.mxu0 0.0
        %4787 = vmatpush.msra.mxu0 0.0
        %4788 = vmatpush.msra.mxu0 0.0
        %4789 = vmatpush.msra.mxu0 0.0
        %4790 = vmatpush.msra.mxu0 0.0
        %4791 = vmatpush.msra.mxu0 0.0
        %4792 = vmatpush.msra.mxu0 0.0
        %4793 = vmatpush.msra.mxu0 0.0
        %4794 = vmatpush.msra.mxu0 0.0
        %4795 = vmatpush.msra.mxu0 0.0
        %4796 = vmatpush.msra.mxu0 0.0
        %4797 = vmatpush.msra.mxu0 0.0
        %4798 = vmatpush.msra.mxu0 0.0
        %4799 = vmatpush.msra.mxu0 0.0
        %4800 = vmatpush.msra.mxu0 %v4780
        %4801 = vmatmul.f32.gmra.mxu0 %v4783
        %v4802 = vpop.f32.mrf.mxu0
        %v4803 = vadd.f32 0.0, %v4802
        %4804 = vdwg.mxu0
        %4806 = vrot.lane.b32.xlu0 %v3718, 120
        %v4807 = vpop.permute.xlu0 %4806
        %v4810 = vsel %vm617, %v4675, 0
        %4812 = vmatpush.msra.mxu0 0.0
        %4813 = vmatpush.msra.mxu0 0.0
        %4814 = vmatpush.msra.mxu0 0.0
        %4815 = vmatpush.msra.mxu0 0.0
        %4816 = vmatpush.msra.mxu0 0.0
        %4817 = vmatpush.msra.mxu0 0.0
        %4818 = vmatpush.msra.mxu0 0.0
        %4819 = vmatpush.msra.mxu0 0.0
        %4820 = vmatpush.msra.mxu0 0.0
        %4821 = vmatpush.msra.mxu0 0.0
        %4822 = vmatpush.msra.mxu0 0.0
        %4823 = vmatpush.msra.mxu0 0.0
        %4824 = vmatpush.msra.mxu0 0.0
        %4825 = vmatpush.msra.mxu0 0.0
        %4826 = vmatpush.msra.mxu0 0.0
        %4827 = vmatpush.msra.mxu0 %v4807
        %4828 = vmatmul.f32.gmra.mxu0 %v4810
        %v4829 = vpop.f32.mrf.mxu0
        %v4830 = vadd.f32 0.0, %v4829
        %4831 = vdwg.mxu0
        %4833 = vrot.lane.b32.xlu0 %v3721, 120
        %v4834 = vpop.permute.xlu0 %4833
        %v4837 = vsel %vm617, %v4690, 0
        %4839 = vmatpush.msra.mxu0 0.0
        %4840 = vmatpush.msra.mxu0 0.0
        %4841 = vmatpush.msra.mxu0 0.0
        %4842 = vmatpush.msra.mxu0 0.0
        %4843 = vmatpush.msra.mxu0 0.0
        %4844 = vmatpush.msra.mxu0 0.0
        %4845 = vmatpush.msra.mxu0 0.0
        %4846 = vmatpush.msra.mxu0 0.0
        %4847 = vmatpush.msra.mxu0 0.0
        %4848 = vmatpush.msra.mxu0 0.0
        %4849 = vmatpush.msra.mxu0 0.0
        %4850 = vmatpush.msra.mxu0 0.0
        %4851 = vmatpush.msra.mxu0 0.0
        %4852 = vmatpush.msra.mxu0 0.0
        %4853 = vmatpush.msra.mxu0 0.0
        %4854 = vmatpush.msra.mxu0 %v4834
        %4855 = vmatmul.f32.gmra.mxu0 %v4837
        %v4856 = vpop.f32.mrf.mxu0
        %v4857 = vadd.f32 0.0, %v4856
        %4858 = vdwg.mxu0
        %4860 = vrot.lane.b32.xlu0 %v3724, 120
        %v4861 = vpop.permute.xlu0 %4860
        %v4864 = vsel %vm617, %v4705, 0
        %4866 = vmatpush.msra.mxu0 0.0
        %4867 = vmatpush.msra.mxu0 0.0
        %4868 = vmatpush.msra.mxu0 0.0
        %4869 = vmatpush.msra.mxu0 0.0
        %4870 = vmatpush.msra.mxu0 0.0
        %4871 = vmatpush.msra.mxu0 0.0
        %4872 = vmatpush.msra.mxu0 0.0
        %4873 = vmatpush.msra.mxu0 0.0
        %4874 = vmatpush.msra.mxu0 0.0
        %4875 = vmatpush.msra.mxu0 0.0
        %4876 = vmatpush.msra.mxu0 0.0
        %4877 = vmatpush.msra.mxu0 0.0
        %4878 = vmatpush.msra.mxu0 0.0
        %4879 = vmatpush.msra.mxu0 0.0
        %4880 = vmatpush.msra.mxu0 0.0
        %4881 = vmatpush.msra.mxu0 %v4861
        %4882 = vmatmul.f32.gmra.mxu0 %v4864
        %v4883 = vpop.f32.mrf.mxu0
        %v4884 = vadd.f32 0.0, %v4883
        %4885 = vdwg.mxu0
        %4887 = vrot.lane.b32.xlu0 %v3727, 120
        %v4888 = vpop.permute.xlu0 %4887
        %v4891 = vsel %vm617, %v4720, 0
        %4893 = vmatpush.msra.mxu0 0.0
        %4894 = vmatpush.msra.mxu0 0.0
        %4895 = vmatpush.msra.mxu0 0.0
        %4896 = vmatpush.msra.mxu0 0.0
        %4897 = vmatpush.msra.mxu0 0.0
        %4898 = vmatpush.msra.mxu0 0.0
        %4899 = vmatpush.msra.mxu0 0.0
        %4900 = vmatpush.msra.mxu0 0.0
        %4901 = vmatpush.msra.mxu0 0.0
        %4902 = vmatpush.msra.mxu0 0.0
        %4903 = vmatpush.msra.mxu0 0.0
        %4904 = vmatpush.msra.mxu0 0.0
        %4905 = vmatpush.msra.mxu0 0.0
        %4906 = vmatpush.msra.mxu0 0.0
        %4907 = vmatpush.msra.mxu0 0.0
        %4908 = vmatpush.msra.mxu0 %v4888
        %4909 = vmatmul.f32.gmra.mxu0 %v4891
        %v4910 = vpop.f32.mrf.mxu0
        %v4911 = vadd.f32 0.0, %v4910
        %4912 = vdwg.mxu0
        %4914 = vrot.lane.b32.xlu0 %v3730, 120
        %v4915 = vpop.permute.xlu0 %4914
        %v4918 = vsel %vm617, %v4735, 0
        %4920 = vmatpush.msra.mxu0 0.0
        %4921 = vmatpush.msra.mxu0 0.0
        %4922 = vmatpush.msra.mxu0 0.0
        %4923 = vmatpush.msra.mxu0 0.0
        %4924 = vmatpush.msra.mxu0 0.0
        %4925 = vmatpush.msra.mxu0 0.0
        %4926 = vmatpush.msra.mxu0 0.0
        %4927 = vmatpush.msra.mxu0 0.0
        %4928 = vmatpush.msra.mxu0 0.0
        %4929 = vmatpush.msra.mxu0 0.0
        %4930 = vmatpush.msra.mxu0 0.0
        %4931 = vmatpush.msra.mxu0 0.0
        %4932 = vmatpush.msra.mxu0 0.0
        %4933 = vmatpush.msra.mxu0 0.0
        %4934 = vmatpush.msra.mxu0 0.0
        %4935 = vmatpush.msra.mxu0 %v4915
        %4936 = vmatmul.f32.gmra.mxu0 %v4918
        %v4937 = vpop.f32.mrf.mxu0
        %v4938 = vadd.f32 0.0, %v4937
        %4939 = vdwg.mxu0
        %4941 = vrot.lane.b32.xlu0 %v3733, 120
        %v4942 = vpop.permute.xlu0 %4941
        %v4945 = vsel %vm617, %v4750, 0
        %4947 = vmatpush.msra.mxu0 0.0
        %4948 = vmatpush.msra.mxu0 0.0
        %4949 = vmatpush.msra.mxu0 0.0
        %4950 = vmatpush.msra.mxu0 0.0
        %4951 = vmatpush.msra.mxu0 0.0
        %4952 = vmatpush.msra.mxu0 0.0
        %4953 = vmatpush.msra.mxu0 0.0
        %4954 = vmatpush.msra.mxu0 0.0
        %4955 = vmatpush.msra.mxu0 0.0
        %4956 = vmatpush.msra.mxu0 0.0
        %4957 = vmatpush.msra.mxu0 0.0
        %4958 = vmatpush.msra.mxu0 0.0
        %4959 = vmatpush.msra.mxu0 0.0
        %4960 = vmatpush.msra.mxu0 0.0
        %4961 = vmatpush.msra.mxu0 0.0
        %4962 = vmatpush.msra.mxu0 %v4942
        %4963 = vmatmul.f32.gmra.mxu0 %v4945
        %v4964 = vpop.f32.mrf.mxu0
        %v4965 = vadd.f32 0.0, %v4964
        %4966 = vdwg.mxu0
        %4967 = vrot.lane.b32.xlu0 %v3630, 112
        %v4968 = vpop.permute.xlu0 %4967
        %4969 = vrot.lane.b32.xlu0 %v3671, 112
        %v4970 = vpop.permute.xlu0 %4969
        %v4971 = vsel %vm617, %v4968, 0
        %v4973 = vsel %vm617, %v4970, 0
        %4975 = vmatpush.xpose.msra.mxu0 0.0
        %4976 = vmatpush.xpose.msra.mxu0 0.0
        %4977 = vmatpush.xpose.msra.mxu0 0.0
        %4978 = vmatpush.xpose.msra.mxu0 0.0
        %4979 = vmatpush.xpose.msra.mxu0 0.0
        %4980 = vmatpush.xpose.msra.mxu0 0.0
        %4981 = vmatpush.xpose.msra.mxu0 0.0
        %4982 = vmatpush.xpose.msra.mxu0 0.0
        %4983 = vmatpush.xpose.msra.mxu0 0.0
        %4984 = vmatpush.xpose.msra.mxu0 0.0
        %4985 = vmatpush.xpose.msra.mxu0 0.0
        %4986 = vmatpush.xpose.msra.mxu0 0.0
        %4987 = vmatpush.xpose.msra.mxu0 0.0
        %4988 = vmatpush.xpose.msra.mxu0 0.0
        %4989 = vmatpush.xpose.msra.mxu0 0.0
        %4990 = vmatpush.xpose.msra.mxu0 %v4973
        %4991 = vmatmul.f32.gmra.mxu0 %v4971
        %v4992 = vpop.f32.mrf.mxu0
        %v4993 = vadd.f32 0.0, %v4992
        %4994 = vdwg.mxu0
        %4995 = vrot.lane.b32.xlu0 %v3633, 112
        %v4996 = vpop.permute.xlu0 %4995
        %4997 = vrot.lane.b32.xlu0 %v3674, 112
        %v4998 = vpop.permute.xlu0 %4997
        %v4999 = vsel %vm617, %v4996, 0
        %v5001 = vsel %vm617, %v4998, 0
        %5003 = vmatpush.xpose.msra.mxu0 0.0
        %5004 = vmatpush.xpose.msra.mxu0 0.0
        %5005 = vmatpush.xpose.msra.mxu0 0.0
        %5006 = vmatpush.xpose.msra.mxu0 0.0
        %5007 = vmatpush.xpose.msra.mxu0 0.0
        %5008 = vmatpush.xpose.msra.mxu0 0.0
        %5009 = vmatpush.xpose.msra.mxu0 0.0
        %5010 = vmatpush.xpose.msra.mxu0 0.0
        %5011 = vmatpush.xpose.msra.mxu0 0.0
        %5012 = vmatpush.xpose.msra.mxu0 0.0
        %5013 = vmatpush.xpose.msra.mxu0 0.0
        %5014 = vmatpush.xpose.msra.mxu0 0.0
        %5015 = vmatpush.xpose.msra.mxu0 0.0
        %5016 = vmatpush.xpose.msra.mxu0 0.0
        %5017 = vmatpush.xpose.msra.mxu0 0.0
        %5018 = vmatpush.xpose.msra.mxu0 %v5001
        %5019 = vmatmul.f32.gmra.mxu0 %v4999
        %v5020 = vpop.f32.mrf.mxu0
        %v5021 = vadd.f32 0.0, %v5020
        %5022 = vdwg.mxu0
        %5023 = vrot.lane.b32.xlu0 %v3636, 112
        %v5024 = vpop.permute.xlu0 %5023
        %5025 = vrot.lane.b32.xlu0 %v3677, 112
        %v5026 = vpop.permute.xlu0 %5025
        %v5027 = vsel %vm617, %v5024, 0
        %v5029 = vsel %vm617, %v5026, 0
        %5031 = vmatpush.xpose.msra.mxu0 0.0
        %5032 = vmatpush.xpose.msra.mxu0 0.0
        %5033 = vmatpush.xpose.msra.mxu0 0.0
        %5034 = vmatpush.xpose.msra.mxu0 0.0
        %5035 = vmatpush.xpose.msra.mxu0 0.0
        %5036 = vmatpush.xpose.msra.mxu0 0.0
        %5037 = vmatpush.xpose.msra.mxu0 0.0
        %5038 = vmatpush.xpose.msra.mxu0 0.0
        %5039 = vmatpush.xpose.msra.mxu0 0.0
        %5040 = vmatpush.xpose.msra.mxu0 0.0
        %5041 = vmatpush.xpose.msra.mxu0 0.0
        %5042 = vmatpush.xpose.msra.mxu0 0.0
        %5043 = vmatpush.xpose.msra.mxu0 0.0
        %5044 = vmatpush.xpose.msra.mxu0 0.0
        %5045 = vmatpush.xpose.msra.mxu0 0.0
        %5046 = vmatpush.xpose.msra.mxu0 %v5029
        %5047 = vmatmul.f32.gmra.mxu0 %v5027
        %v5048 = vpop.f32.mrf.mxu0
        %v5049 = vadd.f32 0.0, %v5048
        %5050 = vdwg.mxu0
        %5051 = vrot.lane.b32.xlu0 %v3639, 112
        %v5052 = vpop.permute.xlu0 %5051
        %5053 = vrot.lane.b32.xlu0 %v3680, 112
        %v5054 = vpop.permute.xlu0 %5053
        %v5055 = vsel %vm617, %v5052, 0
        %v5057 = vsel %vm617, %v5054, 0
        %5059 = vmatpush.xpose.msra.mxu0 0.0
        %5060 = vmatpush.xpose.msra.mxu0 0.0
        %5061 = vmatpush.xpose.msra.mxu0 0.0
        %5062 = vmatpush.xpose.msra.mxu0 0.0
        %5063 = vmatpush.xpose.msra.mxu0 0.0
        %5064 = vmatpush.xpose.msra.mxu0 0.0
        %5065 = vmatpush.xpose.msra.mxu0 0.0
        %5066 = vmatpush.xpose.msra.mxu0 0.0
        %5067 = vmatpush.xpose.msra.mxu0 0.0
        %5068 = vmatpush.xpose.msra.mxu0 0.0
        %5069 = vmatpush.xpose.msra.mxu0 0.0
        %5070 = vmatpush.xpose.msra.mxu0 0.0
        %5071 = vmatpush.xpose.msra.mxu0 0.0
        %5072 = vmatpush.xpose.msra.mxu0 0.0
        %5073 = vmatpush.xpose.msra.mxu0 0.0
        %5074 = vmatpush.xpose.msra.mxu0 %v5057
        %5075 = vmatmul.f32.gmra.mxu0 %v5055
        %v5076 = vpop.f32.mrf.mxu0
        %v5077 = vadd.f32 0.0, %v5076
        %5078 = vdwg.mxu0
        %5079 = vrot.lane.b32.xlu0 %v3642, 112
        %v5080 = vpop.permute.xlu0 %5079
        %5081 = vrot.lane.b32.xlu0 %v3683, 112
        %v5082 = vpop.permute.xlu0 %5081
        %v5083 = vsel %vm617, %v5080, 0
        %v5085 = vsel %vm617, %v5082, 0
        %5087 = vmatpush.xpose.msra.mxu0 0.0
        %5088 = vmatpush.xpose.msra.mxu0 0.0
        %5089 = vmatpush.xpose.msra.mxu0 0.0
        %5090 = vmatpush.xpose.msra.mxu0 0.0
        %5091 = vmatpush.xpose.msra.mxu0 0.0
        %5092 = vmatpush.xpose.msra.mxu0 0.0
        %5093 = vmatpush.xpose.msra.mxu0 0.0
        %5094 = vmatpush.xpose.msra.mxu0 0.0
        %5095 = vmatpush.xpose.msra.mxu0 0.0
        %5096 = vmatpush.xpose.msra.mxu0 0.0
        %5097 = vmatpush.xpose.msra.mxu0 0.0
        %5098 = vmatpush.xpose.msra.mxu0 0.0
        %5099 = vmatpush.xpose.msra.mxu0 0.0
        %5100 = vmatpush.xpose.msra.mxu0 0.0
        %5101 = vmatpush.xpose.msra.mxu0 0.0
        %5102 = vmatpush.xpose.msra.mxu0 %v5085
        %5103 = vmatmul.f32.gmra.mxu0 %v5083
        %v5104 = vpop.f32.mrf.mxu0
        %v5105 = vadd.f32 0.0, %v5104
        %5106 = vdwg.mxu0
        %5107 = vrot.lane.b32.xlu0 %v3645, 112
        %v5108 = vpop.permute.xlu0 %5107
        %5109 = vrot.lane.b32.xlu0 %v3686, 112
        %v5110 = vpop.permute.xlu0 %5109
        %v5111 = vsel %vm617, %v5108, 0
        %v5113 = vsel %vm617, %v5110, 0
        %5115 = vmatpush.xpose.msra.mxu0 0.0
        %5116 = vmatpush.xpose.msra.mxu0 0.0
        %5117 = vmatpush.xpose.msra.mxu0 0.0
        %5118 = vmatpush.xpose.msra.mxu0 0.0
        %5119 = vmatpush.xpose.msra.mxu0 0.0
        %5120 = vmatpush.xpose.msra.mxu0 0.0
        %5121 = vmatpush.xpose.msra.mxu0 0.0
        %5122 = vmatpush.xpose.msra.mxu0 0.0
        %5123 = vmatpush.xpose.msra.mxu0 0.0
        %5124 = vmatpush.xpose.msra.mxu0 0.0
        %5125 = vmatpush.xpose.msra.mxu0 0.0
        %5126 = vmatpush.xpose.msra.mxu0 0.0
        %5127 = vmatpush.xpose.msra.mxu0 0.0
        %5128 = vmatpush.xpose.msra.mxu0 0.0
        %5129 = vmatpush.xpose.msra.mxu0 0.0
        %5130 = vmatpush.xpose.msra.mxu0 %v5113
        %5131 = vmatmul.f32.gmra.mxu0 %v5111
        %v5132 = vpop.f32.mrf.mxu0
        %v5133 = vadd.f32 0.0, %v5132
        %5134 = vdwg.mxu0
        %5135 = vrot.lane.b32.xlu0 %v3648, 112
        %v5136 = vpop.permute.xlu0 %5135
        %5137 = vrot.lane.b32.xlu0 %v3689, 112
        %v5138 = vpop.permute.xlu0 %5137
        %v5139 = vsel %vm617, %v5136, 0
        %v5141 = vsel %vm617, %v5138, 0
        %5143 = vmatpush.xpose.msra.mxu0 0.0
        %5144 = vmatpush.xpose.msra.mxu0 0.0
        %5145 = vmatpush.xpose.msra.mxu0 0.0
        %5146 = vmatpush.xpose.msra.mxu0 0.0
        %5147 = vmatpush.xpose.msra.mxu0 0.0
        %5148 = vmatpush.xpose.msra.mxu0 0.0
        %5149 = vmatpush.xpose.msra.mxu0 0.0
        %5150 = vmatpush.xpose.msra.mxu0 0.0
        %5151 = vmatpush.xpose.msra.mxu0 0.0
        %5152 = vmatpush.xpose.msra.mxu0 0.0
        %5153 = vmatpush.xpose.msra.mxu0 0.0
        %5154 = vmatpush.xpose.msra.mxu0 0.0
        %5155 = vmatpush.xpose.msra.mxu0 0.0
        %5156 = vmatpush.xpose.msra.mxu0 0.0
        %5157 = vmatpush.xpose.msra.mxu0 0.0
        %5158 = vmatpush.xpose.msra.mxu0 %v5141
        %5159 = vmatmul.f32.gmra.mxu0 %v5139
        %v5160 = vpop.f32.mrf.mxu0
        %v5161 = vadd.f32 0.0, %v5160
        %5162 = vdwg.mxu0
        %5163 = vrot.lane.b32.xlu0 %v3651, 112
        %v5164 = vpop.permute.xlu0 %5163
        %5165 = vrot.lane.b32.xlu0 %v3692, 112
        %v5166 = vpop.permute.xlu0 %5165
        %v5167 = vsel %vm617, %v5164, 0
        %v5169 = vsel %vm617, %v5166, 0
        %5171 = vmatpush.xpose.msra.mxu0 0.0
        %5172 = vmatpush.xpose.msra.mxu0 0.0
        %5173 = vmatpush.xpose.msra.mxu0 0.0
        %5174 = vmatpush.xpose.msra.mxu0 0.0
        %5175 = vmatpush.xpose.msra.mxu0 0.0
        %5176 = vmatpush.xpose.msra.mxu0 0.0
        %5177 = vmatpush.xpose.msra.mxu0 0.0
        %5178 = vmatpush.xpose.msra.mxu0 0.0
        %5179 = vmatpush.xpose.msra.mxu0 0.0
        %5180 = vmatpush.xpose.msra.mxu0 0.0
        %5181 = vmatpush.xpose.msra.mxu0 0.0
        %5182 = vmatpush.xpose.msra.mxu0 0.0
        %5183 = vmatpush.xpose.msra.mxu0 0.0
        %5184 = vmatpush.xpose.msra.mxu0 0.0
        %5185 = vmatpush.xpose.msra.mxu0 0.0
        %5186 = vmatpush.xpose.msra.mxu0 %v5169
        %5187 = vmatmul.f32.gmra.mxu0 %v5167
        %v5188 = vpop.f32.mrf.mxu0
        %v5189 = vadd.f32 0.0, %v5188
        %5190 = vdwg.mxu0
        %v5191 = vmul.f32 %v4993, 0.35355338
        %v5192 = vmul.f32 %v5021, 0.35355338
        %v5193 = vmul.f32 %v5049, 0.35355338
        %v5194 = vmul.f32 %v5077, 0.35355338
        %v5195 = vmul.f32 %v5105, 0.35355338
        %v5196 = vmul.f32 %v5133, 0.35355338
        %v5197 = vmul.f32 %v5161, 0.35355338
        %v5198 = vmul.f32 %v5189, 0.35355338
        %v5199 = vsel %vm617, %v5191, -inf
        %5200 = vmax.xlane.f32.xlu0 %v5199
        %v5201 = vpop.xlane.xlu0 %5200
        %v5202 = vsel %vm617, %v5192, -inf
        %5203 = vmax.xlane.f32.xlu0 %v5202
        %v5204 = vpop.xlane.xlu0 %5203
        %v5205 = vsel %vm617, %v5193, -inf
        %5206 = vmax.xlane.f32.xlu0 %v5205
        %v5207 = vpop.xlane.xlu0 %5206
        %v5208 = vsel %vm617, %v5194, -inf
        %5209 = vmax.xlane.f32.xlu0 %v5208
        %v5210 = vpop.xlane.xlu0 %5209
        %v5211 = vsel %vm617, %v5195, -inf
        %5212 = vmax.xlane.f32.xlu0 %v5211
        %v5213 = vpop.xlane.xlu0 %5212
        %v5214 = vsel %vm617, %v5196, -inf
        %5215 = vmax.xlane.f32.xlu0 %v5214
        %v5216 = vpop.xlane.xlu0 %5215
        %v5217 = vsel %vm617, %v5197, -inf
        %5218 = vmax.xlane.f32.xlu0 %v5217
        %v5219 = vpop.xlane.xlu0 %5218
        %v5220 = vsel %vm617, %v5198, -inf
        %5221 = vmax.xlane.f32.xlu0 %v5220
        %v5222 = vpop.xlane.xlu0 %5221
        %v5223 = vsub.f32 %v5191, %v5201
        %v5224 = vsub.f32 %v5192, %v5204
        %v5225 = vsub.f32 %v5193, %v5207
        %v5226 = vsub.f32 %v5194, %v5210
        %v5227 = vsub.f32 %v5195, %v5213
        %v5228 = vsub.f32 %v5196, %v5216
        %v5229 = vsub.f32 %v5197, %v5219
        %v5230 = vsub.f32 %v5198, %v5222
        %v5231 = vmul.f32 %v5223, 1.442695
        %v5232 = vpow.pop %v5231
        %v5233 = vmul.f32 %v5224, 1.442695
        %v5234 = vpow.pop %v5233
        %v5235 = vmul.f32 %v5225, 1.442695
        %v5236 = vpow.pop %v5235
        %v5237 = vmul.f32 %v5226, 1.442695
        %v5238 = vpow.pop %v5237
        %v5239 = vmul.f32 %v5227, 1.442695
        %v5240 = vpow.pop %v5239
        %v5241 = vmul.f32 %v5228, 1.442695
        %v5242 = vpow.pop %v5241
        %v5243 = vmul.f32 %v5229, 1.442695
        %v5244 = vpow.pop %v5243
        %v5245 = vmul.f32 %v5230, 1.442695
        %v5246 = vpow.pop %v5245
        %v5247 = vsel %vm617, %v5232, 0.0
        %5248 = vadd.xlane.f32.xlu0 %v5247
        %v5249 = vpop.xlane.xlu0 %5248
        %v5250 = vsel %vm617, %v5234, 0.0
        %5251 = vadd.xlane.f32.xlu0 %v5250
        %v5252 = vpop.xlane.xlu0 %5251
        %v5253 = vsel %vm617, %v5236, 0.0
        %5254 = vadd.xlane.f32.xlu0 %v5253
        %v5255 = vpop.xlane.xlu0 %5254
        %v5256 = vsel %vm617, %v5238, 0.0
        %5257 = vadd.xlane.f32.xlu0 %v5256
        %v5258 = vpop.xlane.xlu0 %5257
        %v5259 = vsel %vm617, %v5240, 0.0
        %5260 = vadd.xlane.f32.xlu0 %v5259
        %v5261 = vpop.xlane.xlu0 %5260
        %v5262 = vsel %vm617, %v5242, 0.0
        %5263 = vadd.xlane.f32.xlu0 %v5262
        %v5264 = vpop.xlane.xlu0 %5263
        %v5265 = vsel %vm617, %v5244, 0.0
        %5266 = vadd.xlane.f32.xlu0 %v5265
        %v5267 = vpop.xlane.xlu0 %5266
        %v5268 = vsel %vm617, %v5246, 0.0
        %5269 = vadd.xlane.f32.xlu0 %v5268
        %v5270 = vpop.xlane.xlu0 %5269
        %v5271 = vrcp.pop %v5249
        %v5272 = vmul.f32 %v5249, %v5271
        %v5273 = vsub.f32 1.0, %v5272
        %v5274 = vmul.f32 %v5271, %v5273
        %v5275 = vadd.f32 %v5271, %v5274
        %vm5276 = vweird.f32 %v5249
        %vm5277 = vweird.f32 %v5271
        %vm5278 = vmor %vm5276, %vm5277
        %v5279 = vsel %vm5278, %v5271, %v5275
        %v5280 = vand.u32 2147483647, %v5249
        %vm5281 = vcmp.eq.f32.partialorder %v5280, 8.507059e+37
        %v5282 = vand.u32 %v5249, 2147483648
        %v5283 = vor.u32 1.1754944e-38, %v5282
        %v5284 = vsel %vm5281, %v5283, %v5279
        %v5285 = vmul.f32 %v5232, %v5284
        %v5286 = vrcp.pop %v5252
        %v5287 = vmul.f32 %v5252, %v5286
        %v5288 = vsub.f32 1.0, %v5287
        %v5289 = vmul.f32 %v5286, %v5288
        %v5290 = vadd.f32 %v5286, %v5289
        %vm5291 = vweird.f32 %v5252
        %vm5292 = vweird.f32 %v5286
        %vm5293 = vmor %vm5291, %vm5292
        %v5294 = vsel %vm5293, %v5286, %v5290
        %v5295 = vand.u32 2147483647, %v5252
        %vm5296 = vcmp.eq.f32.partialorder %v5295, 8.507059e+37
        %v5297 = vand.u32 %v5252, 2147483648
        %v5298 = vor.u32 1.1754944e-38, %v5297
        %v5299 = vsel %vm5296, %v5298, %v5294
        %v5300 = vmul.f32 %v5234, %v5299
        %v5301 = vrcp.pop %v5255
        %v5302 = vmul.f32 %v5255, %v5301
        %v5303 = vsub.f32 1.0, %v5302
        %v5304 = vmul.f32 %v5301, %v5303
        %v5305 = vadd.f32 %v5301, %v5304
        %vm5306 = vweird.f32 %v5255
        %vm5307 = vweird.f32 %v5301
        %vm5308 = vmor %vm5306, %vm5307
        %v5309 = vsel %vm5308, %v5301, %v5305
        %v5310 = vand.u32 2147483647, %v5255
        %vm5311 = vcmp.eq.f32.partialorder %v5310, 8.507059e+37
        %v5312 = vand.u32 %v5255, 2147483648
        %v5313 = vor.u32 1.1754944e-38, %v5312
        %v5314 = vsel %vm5311, %v5313, %v5309
        %v5315 = vmul.f32 %v5236, %v5314
        %v5316 = vrcp.pop %v5258
        %v5317 = vmul.f32 %v5258, %v5316
        %v5318 = vsub.f32 1.0, %v5317
        %v5319 = vmul.f32 %v5316, %v5318
        %v5320 = vadd.f32 %v5316, %v5319
        %vm5321 = vweird.f32 %v5258
        %vm5322 = vweird.f32 %v5316
        %vm5323 = vmor %vm5321, %vm5322
        %v5324 = vsel %vm5323, %v5316, %v5320
        %v5325 = vand.u32 2147483647, %v5258
        %vm5326 = vcmp.eq.f32.partialorder %v5325, 8.507059e+37
        %v5327 = vand.u32 %v5258, 2147483648
        %v5328 = vor.u32 1.1754944e-38, %v5327
        %v5329 = vsel %vm5326, %v5328, %v5324
        %v5330 = vmul.f32 %v5238, %v5329
        %v5331 = vrcp.pop %v5261
        %v5332 = vmul.f32 %v5261, %v5331
        %v5333 = vsub.f32 1.0, %v5332
        %v5334 = vmul.f32 %v5331, %v5333
        %v5335 = vadd.f32 %v5331, %v5334
        %vm5336 = vweird.f32 %v5261
        %vm5337 = vweird.f32 %v5331
        %vm5338 = vmor %vm5336, %vm5337
        %v5339 = vsel %vm5338, %v5331, %v5335
        %v5340 = vand.u32 2147483647, %v5261
        %vm5341 = vcmp.eq.f32.partialorder %v5340, 8.507059e+37
        %v5342 = vand.u32 %v5261, 2147483648
        %v5343 = vor.u32 1.1754944e-38, %v5342
        %v5344 = vsel %vm5341, %v5343, %v5339
        %v5345 = vmul.f32 %v5240, %v5344
        %v5346 = vrcp.pop %v5264
        %v5347 = vmul.f32 %v5264, %v5346
        %v5348 = vsub.f32 1.0, %v5347
        %v5349 = vmul.f32 %v5346, %v5348
        %v5350 = vadd.f32 %v5346, %v5349
        %vm5351 = vweird.f32 %v5264
        %vm5352 = vweird.f32 %v5346
        %vm5353 = vmor %vm5351, %vm5352
        %v5354 = vsel %vm5353, %v5346, %v5350
        %v5355 = vand.u32 2147483647, %v5264
        %vm5356 = vcmp.eq.f32.partialorder %v5355, 8.507059e+37
        %v5357 = vand.u32 %v5264, 2147483648
        %v5358 = vor.u32 1.1754944e-38, %v5357
        %v5359 = vsel %vm5356, %v5358, %v5354
        %v5360 = vmul.f32 %v5242, %v5359
        %v5361 = vrcp.pop %v5267
        %v5362 = vmul.f32 %v5267, %v5361
        %v5363 = vsub.f32 1.0, %v5362
        %v5364 = vmul.f32 %v5361, %v5363
        %v5365 = vadd.f32 %v5361, %v5364
        %vm5366 = vweird.f32 %v5267
        %vm5367 = vweird.f32 %v5361
        %vm5368 = vmor %vm5366, %vm5367
        %v5369 = vsel %vm5368, %v5361, %v5365
        %v5370 = vand.u32 2147483647, %v5267
        %vm5371 = vcmp.eq.f32.partialorder %v5370, 8.507059e+37
        %v5372 = vand.u32 %v5267, 2147483648
        %v5373 = vor.u32 1.1754944e-38, %v5372
        %v5374 = vsel %vm5371, %v5373, %v5369
        %v5375 = vmul.f32 %v5244, %v5374
        %v5376 = vrcp.pop %v5270
        %v5377 = vmul.f32 %v5270, %v5376
        %v5378 = vsub.f32 1.0, %v5377
        %v5379 = vmul.f32 %v5376, %v5378
        %v5380 = vadd.f32 %v5376, %v5379
        %vm5381 = vweird.f32 %v5270
        %vm5382 = vweird.f32 %v5376
        %vm5383 = vmor %vm5381, %vm5382
        %v5384 = vsel %vm5383, %v5376, %v5380
        %v5385 = vand.u32 2147483647, %v5270
        %vm5386 = vcmp.eq.f32.partialorder %v5385, 8.507059e+37
        %v5387 = vand.u32 %v5270, 2147483648
        %v5388 = vor.u32 1.1754944e-38, %v5387
        %v5389 = vsel %vm5386, %v5388, %v5384
        %v5390 = vmul.f32 %v5246, %v5389
        %5391 = vrot.lane.b32.xlu0 %v3712, 112
        %v5392 = vpop.permute.xlu0 %5391
        %v5395 = vsel %vm617, %v5285, 0
        %5397 = vmatpush.msra.mxu0 0.0
        %5398 = vmatpush.msra.mxu0 0.0
        %5399 = vmatpush.msra.mxu0 0.0
        %5400 = vmatpush.msra.mxu0 0.0
        %5401 = vmatpush.msra.mxu0 0.0
        %5402 = vmatpush.msra.mxu0 0.0
        %5403 = vmatpush.msra.mxu0 0.0
        %5404 = vmatpush.msra.mxu0 0.0
        %5405 = vmatpush.msra.mxu0 0.0
        %5406 = vmatpush.msra.mxu0 0.0
        %5407 = vmatpush.msra.mxu0 0.0
        %5408 = vmatpush.msra.mxu0 0.0
        %5409 = vmatpush.msra.mxu0 0.0
        %5410 = vmatpush.msra.mxu0 0.0
        %5411 = vmatpush.msra.mxu0 0.0
        %5412 = vmatpush.msra.mxu0 %v5392
        %5413 = vmatmul.f32.gmra.mxu0 %v5395
        %v5414 = vpop.f32.mrf.mxu0
        %v5415 = vadd.f32 0.0, %v5414
        %5416 = vdwg.mxu0
        %5417 = vrot.lane.b32.xlu0 %v3715, 112
        %v5418 = vpop.permute.xlu0 %5417
        %v5421 = vsel %vm617, %v5300, 0
        %5423 = vmatpush.msra.mxu0 0.0
        %5424 = vmatpush.msra.mxu0 0.0
        %5425 = vmatpush.msra.mxu0 0.0
        %5426 = vmatpush.msra.mxu0 0.0
        %5427 = vmatpush.msra.mxu0 0.0
        %5428 = vmatpush.msra.mxu0 0.0
        %5429 = vmatpush.msra.mxu0 0.0
        %5430 = vmatpush.msra.mxu0 0.0
        %5431 = vmatpush.msra.mxu0 0.0
        %5432 = vmatpush.msra.mxu0 0.0
        %5433 = vmatpush.msra.mxu0 0.0
        %5434 = vmatpush.msra.mxu0 0.0
        %5435 = vmatpush.msra.mxu0 0.0
        %5436 = vmatpush.msra.mxu0 0.0
        %5437 = vmatpush.msra.mxu0 0.0
        %5438 = vmatpush.msra.mxu0 %v5418
        %5439 = vmatmul.f32.gmra.mxu0 %v5421
        %v5440 = vpop.f32.mrf.mxu0
        %v5441 = vadd.f32 0.0, %v5440
        %5442 = vdwg.mxu0
        %5443 = vrot.lane.b32.xlu0 %v3718, 112
        %v5444 = vpop.permute.xlu0 %5443
        %v5447 = vsel %vm617, %v5315, 0
        %5449 = vmatpush.msra.mxu0 0.0
        %5450 = vmatpush.msra.mxu0 0.0
        %5451 = vmatpush.msra.mxu0 0.0
        %5452 = vmatpush.msra.mxu0 0.0
        %5453 = vmatpush.msra.mxu0 0.0
        %5454 = vmatpush.msra.mxu0 0.0
        %5455 = vmatpush.msra.mxu0 0.0
        %5456 = vmatpush.msra.mxu0 0.0
        %5457 = vmatpush.msra.mxu0 0.0
        %5458 = vmatpush.msra.mxu0 0.0
        %5459 = vmatpush.msra.mxu0 0.0
        %5460 = vmatpush.msra.mxu0 0.0
        %5461 = vmatpush.msra.mxu0 0.0
        %5462 = vmatpush.msra.mxu0 0.0
        %5463 = vmatpush.msra.mxu0 0.0
        %5464 = vmatpush.msra.mxu0 %v5444
        %5465 = vmatmul.f32.gmra.mxu0 %v5447
        %v5466 = vpop.f32.mrf.mxu0
        %v5467 = vadd.f32 0.0, %v5466
        %5468 = vdwg.mxu0
        %5469 = vrot.lane.b32.xlu0 %v3721, 112
        %v5470 = vpop.permute.xlu0 %5469
        %v5473 = vsel %vm617, %v5330, 0
        %5475 = vmatpush.msra.mxu0 0.0
        %5476 = vmatpush.msra.mxu0 0.0
        %5477 = vmatpush.msra.mxu0 0.0
        %5478 = vmatpush.msra.mxu0 0.0
        %5479 = vmatpush.msra.mxu0 0.0
        %5480 = vmatpush.msra.mxu0 0.0
        %5481 = vmatpush.msra.mxu0 0.0
        %5482 = vmatpush.msra.mxu0 0.0
        %5483 = vmatpush.msra.mxu0 0.0
        %5484 = vmatpush.msra.mxu0 0.0
        %5485 = vmatpush.msra.mxu0 0.0
        %5486 = vmatpush.msra.mxu0 0.0
        %5487 = vmatpush.msra.mxu0 0.0
        %5488 = vmatpush.msra.mxu0 0.0
        %5489 = vmatpush.msra.mxu0 0.0
        %5490 = vmatpush.msra.mxu0 %v5470
        %5491 = vmatmul.f32.gmra.mxu0 %v5473
        %v5492 = vpop.f32.mrf.mxu0
        %v5493 = vadd.f32 0.0, %v5492
        %5494 = vdwg.mxu0
        %5495 = vrot.lane.b32.xlu0 %v3724, 112
        %v5496 = vpop.permute.xlu0 %5495
        %v5499 = vsel %vm617, %v5345, 0
        %5501 = vmatpush.msra.mxu0 0.0
        %5502 = vmatpush.msra.mxu0 0.0
        %5503 = vmatpush.msra.mxu0 0.0
        %5504 = vmatpush.msra.mxu0 0.0
        %5505 = vmatpush.msra.mxu0 0.0
        %5506 = vmatpush.msra.mxu0 0.0
        %5507 = vmatpush.msra.mxu0 0.0
        %5508 = vmatpush.msra.mxu0 0.0
        %5509 = vmatpush.msra.mxu0 0.0
        %5510 = vmatpush.msra.mxu0 0.0
        %5511 = vmatpush.msra.mxu0 0.0
        %5512 = vmatpush.msra.mxu0 0.0
        %5513 = vmatpush.msra.mxu0 0.0
        %5514 = vmatpush.msra.mxu0 0.0
        %5515 = vmatpush.msra.mxu0 0.0
        %5516 = vmatpush.msra.mxu0 %v5496
        %5517 = vmatmul.f32.gmra.mxu0 %v5499
        %v5518 = vpop.f32.mrf.mxu0
        %v5519 = vadd.f32 0.0, %v5518
        %5520 = vdwg.mxu0
        %5521 = vrot.lane.b32.xlu0 %v3727, 112
        %v5522 = vpop.permute.xlu0 %5521
        %v5525 = vsel %vm617, %v5360, 0
        %5527 = vmatpush.msra.mxu0 0.0
        %5528 = vmatpush.msra.mxu0 0.0
        %5529 = vmatpush.msra.mxu0 0.0
        %5530 = vmatpush.msra.mxu0 0.0
        %5531 = vmatpush.msra.mxu0 0.0
        %5532 = vmatpush.msra.mxu0 0.0
        %5533 = vmatpush.msra.mxu0 0.0
        %5534 = vmatpush.msra.mxu0 0.0
        %5535 = vmatpush.msra.mxu0 0.0
        %5536 = vmatpush.msra.mxu0 0.0
        %5537 = vmatpush.msra.mxu0 0.0
        %5538 = vmatpush.msra.mxu0 0.0
        %5539 = vmatpush.msra.mxu0 0.0
        %5540 = vmatpush.msra.mxu0 0.0
        %5541 = vmatpush.msra.mxu0 0.0
        %5542 = vmatpush.msra.mxu0 %v5522
        %5543 = vmatmul.f32.gmra.mxu0 %v5525
        %v5544 = vpop.f32.mrf.mxu0
        %v5545 = vadd.f32 0.0, %v5544
        %5546 = vdwg.mxu0
        %5547 = vrot.lane.b32.xlu0 %v3730, 112
        %v5548 = vpop.permute.xlu0 %5547
        %v5551 = vsel %vm617, %v5375, 0
        %5553 = vmatpush.msra.mxu0 0.0
        %5554 = vmatpush.msra.mxu0 0.0
        %5555 = vmatpush.msra.mxu0 0.0
        %5556 = vmatpush.msra.mxu0 0.0
        %5557 = vmatpush.msra.mxu0 0.0
        %5558 = vmatpush.msra.mxu0 0.0
        %5559 = vmatpush.msra.mxu0 0.0
        %5560 = vmatpush.msra.mxu0 0.0
        %5561 = vmatpush.msra.mxu0 0.0
        %5562 = vmatpush.msra.mxu0 0.0
        %5563 = vmatpush.msra.mxu0 0.0
        %5564 = vmatpush.msra.mxu0 0.0
        %5565 = vmatpush.msra.mxu0 0.0
        %5566 = vmatpush.msra.mxu0 0.0
        %5567 = vmatpush.msra.mxu0 0.0
        %5568 = vmatpush.msra.mxu0 %v5548
        %5569 = vmatmul.f32.gmra.mxu0 %v5551
        %v5570 = vpop.f32.mrf.mxu0
        %v5571 = vadd.f32 0.0, %v5570
        %5572 = vdwg.mxu0
        %5573 = vrot.lane.b32.xlu0 %v3733, 112
        %v5574 = vpop.permute.xlu0 %5573
        %v5577 = vsel %vm617, %v5390, 0
        %5579 = vmatpush.msra.mxu0 0.0
        %5580 = vmatpush.msra.mxu0 0.0
        %5581 = vmatpush.msra.mxu0 0.0
        %5582 = vmatpush.msra.mxu0 0.0
        %5583 = vmatpush.msra.mxu0 0.0
        %5584 = vmatpush.msra.mxu0 0.0
        %5585 = vmatpush.msra.mxu0 0.0
        %5586 = vmatpush.msra.mxu0 0.0
        %5587 = vmatpush.msra.mxu0 0.0
        %5588 = vmatpush.msra.mxu0 0.0
        %5589 = vmatpush.msra.mxu0 0.0
        %5590 = vmatpush.msra.mxu0 0.0
        %5591 = vmatpush.msra.mxu0 0.0
        %5592 = vmatpush.msra.mxu0 0.0
        %5593 = vmatpush.msra.mxu0 0.0
        %5594 = vmatpush.msra.mxu0 %v5574
        %5595 = vmatmul.f32.gmra.mxu0 %v5577
        %v5596 = vpop.f32.mrf.mxu0
        %v5597 = vadd.f32 0.0, %v5596
        %5598 = vdwg.mxu0
        %5599 = vrot.lane.b32.xlu0 %v3630, 104
        %v5600 = vpop.permute.xlu0 %5599
        %5601 = vrot.lane.b32.xlu0 %v3671, 104
        %v5602 = vpop.permute.xlu0 %5601
        %v5603 = vsel %vm617, %v5600, 0
        %v5605 = vsel %vm617, %v5602, 0
        %5607 = vmatpush.xpose.msra.mxu0 0.0
        %5608 = vmatpush.xpose.msra.mxu0 0.0
        %5609 = vmatpush.xpose.msra.mxu0 0.0
        %5610 = vmatpush.xpose.msra.mxu0 0.0
        %5611 = vmatpush.xpose.msra.mxu0 0.0
        %5612 = vmatpush.xpose.msra.mxu0 0.0
        %5613 = vmatpush.xpose.msra.mxu0 0.0
        %5614 = vmatpush.xpose.msra.mxu0 0.0
        %5615 = vmatpush.xpose.msra.mxu0 0.0
        %5616 = vmatpush.xpose.msra.mxu0 0.0
        %5617 = vmatpush.xpose.msra.mxu0 0.0
        %5618 = vmatpush.xpose.msra.mxu0 0.0
        %5619 = vmatpush.xpose.msra.mxu0 0.0
        %5620 = vmatpush.xpose.msra.mxu0 0.0
        %5621 = vmatpush.xpose.msra.mxu0 0.0
        %5622 = vmatpush.xpose.msra.mxu0 %v5605
        %5623 = vmatmul.f32.gmra.mxu0 %v5603
        %v5624 = vpop.f32.mrf.mxu0
        %v5625 = vadd.f32 0.0, %v5624
        %5626 = vdwg.mxu0
        %5627 = vrot.lane.b32.xlu0 %v3633, 104
        %v5628 = vpop.permute.xlu0 %5627
        %5629 = vrot.lane.b32.xlu0 %v3674, 104
        %v5630 = vpop.permute.xlu0 %5629
        %v5631 = vsel %vm617, %v5628, 0
        %v5633 = vsel %vm617, %v5630, 0
        %5635 = vmatpush.xpose.msra.mxu0 0.0
        %5636 = vmatpush.xpose.msra.mxu0 0.0
        %5637 = vmatpush.xpose.msra.mxu0 0.0
        %5638 = vmatpush.xpose.msra.mxu0 0.0
        %5639 = vmatpush.xpose.msra.mxu0 0.0
        %5640 = vmatpush.xpose.msra.mxu0 0.0
        %5641 = vmatpush.xpose.msra.mxu0 0.0
        %5642 = vmatpush.xpose.msra.mxu0 0.0
        %5643 = vmatpush.xpose.msra.mxu0 0.0
        %5644 = vmatpush.xpose.msra.mxu0 0.0
        %5645 = vmatpush.xpose.msra.mxu0 0.0
        %5646 = vmatpush.xpose.msra.mxu0 0.0
        %5647 = vmatpush.xpose.msra.mxu0 0.0
        %5648 = vmatpush.xpose.msra.mxu0 0.0
        %5649 = vmatpush.xpose.msra.mxu0 0.0
        %5650 = vmatpush.xpose.msra.mxu0 %v5633
        %5651 = vmatmul.f32.gmra.mxu0 %v5631
        %v5652 = vpop.f32.mrf.mxu0
        %v5653 = vadd.f32 0.0, %v5652
        %5654 = vdwg.mxu0
        %5655 = vrot.lane.b32.xlu0 %v3636, 104
        %v5656 = vpop.permute.xlu0 %5655
        %5657 = vrot.lane.b32.xlu0 %v3677, 104
        %v5658 = vpop.permute.xlu0 %5657
        %v5659 = vsel %vm617, %v5656, 0
        %v5661 = vsel %vm617, %v5658, 0
        %5663 = vmatpush.xpose.msra.mxu0 0.0
        %5664 = vmatpush.xpose.msra.mxu0 0.0
        %5665 = vmatpush.xpose.msra.mxu0 0.0
        %5666 = vmatpush.xpose.msra.mxu0 0.0
        %5667 = vmatpush.xpose.msra.mxu0 0.0
        %5668 = vmatpush.xpose.msra.mxu0 0.0
        %5669 = vmatpush.xpose.msra.mxu0 0.0
        %5670 = vmatpush.xpose.msra.mxu0 0.0
        %5671 = vmatpush.xpose.msra.mxu0 0.0
        %5672 = vmatpush.xpose.msra.mxu0 0.0
        %5673 = vmatpush.xpose.msra.mxu0 0.0
        %5674 = vmatpush.xpose.msra.mxu0 0.0
        %5675 = vmatpush.xpose.msra.mxu0 0.0
        %5676 = vmatpush.xpose.msra.mxu0 0.0
        %5677 = vmatpush.xpose.msra.mxu0 0.0
        %5678 = vmatpush.xpose.msra.mxu0 %v5661
        %5679 = vmatmul.f32.gmra.mxu0 %v5659
        %v5680 = vpop.f32.mrf.mxu0
        %v5681 = vadd.f32 0.0, %v5680
        %5682 = vdwg.mxu0
        %5683 = vrot.lane.b32.xlu0 %v3639, 104
        %v5684 = vpop.permute.xlu0 %5683
        %5685 = vrot.lane.b32.xlu0 %v3680, 104
        %v5686 = vpop.permute.xlu0 %5685
        %v5687 = vsel %vm617, %v5684, 0
        %v5689 = vsel %vm617, %v5686, 0
        %5691 = vmatpush.xpose.msra.mxu0 0.0
        %5692 = vmatpush.xpose.msra.mxu0 0.0
        %5693 = vmatpush.xpose.msra.mxu0 0.0
        %5694 = vmatpush.xpose.msra.mxu0 0.0
        %5695 = vmatpush.xpose.msra.mxu0 0.0
        %5696 = vmatpush.xpose.msra.mxu0 0.0
        %5697 = vmatpush.xpose.msra.mxu0 0.0
        %5698 = vmatpush.xpose.msra.mxu0 0.0
        %5699 = vmatpush.xpose.msra.mxu0 0.0
        %5700 = vmatpush.xpose.msra.mxu0 0.0
        %5701 = vmatpush.xpose.msra.mxu0 0.0
        %5702 = vmatpush.xpose.msra.mxu0 0.0
        %5703 = vmatpush.xpose.msra.mxu0 0.0
        %5704 = vmatpush.xpose.msra.mxu0 0.0
        %5705 = vmatpush.xpose.msra.mxu0 0.0
        %5706 = vmatpush.xpose.msra.mxu0 %v5689
        %5707 = vmatmul.f32.gmra.mxu0 %v5687
        %v5708 = vpop.f32.mrf.mxu0
        %v5709 = vadd.f32 0.0, %v5708
        %5710 = vdwg.mxu0
        %5711 = vrot.lane.b32.xlu0 %v3642, 104
        %v5712 = vpop.permute.xlu0 %5711
        %5713 = vrot.lane.b32.xlu0 %v3683, 104
        %v5714 = vpop.permute.xlu0 %5713
        %v5715 = vsel %vm617, %v5712, 0
        %v5717 = vsel %vm617, %v5714, 0
        %5719 = vmatpush.xpose.msra.mxu0 0.0
        %5720 = vmatpush.xpose.msra.mxu0 0.0
        %5721 = vmatpush.xpose.msra.mxu0 0.0
        %5722 = vmatpush.xpose.msra.mxu0 0.0
        %5723 = vmatpush.xpose.msra.mxu0 0.0
        %5724 = vmatpush.xpose.msra.mxu0 0.0
        %5725 = vmatpush.xpose.msra.mxu0 0.0
        %5726 = vmatpush.xpose.msra.mxu0 0.0
        %5727 = vmatpush.xpose.msra.mxu0 0.0
        %5728 = vmatpush.xpose.msra.mxu0 0.0
        %5729 = vmatpush.xpose.msra.mxu0 0.0
        %5730 = vmatpush.xpose.msra.mxu0 0.0
        %5731 = vmatpush.xpose.msra.mxu0 0.0
        %5732 = vmatpush.xpose.msra.mxu0 0.0
        %5733 = vmatpush.xpose.msra.mxu0 0.0
        %5734 = vmatpush.xpose.msra.mxu0 %v5717
        %5735 = vmatmul.f32.gmra.mxu0 %v5715
        %v5736 = vpop.f32.mrf.mxu0
        %v5737 = vadd.f32 0.0, %v5736
        %5738 = vdwg.mxu0
        %5739 = vrot.lane.b32.xlu0 %v3645, 104
        %v5740 = vpop.permute.xlu0 %5739
        %5741 = vrot.lane.b32.xlu0 %v3686, 104
        %v5742 = vpop.permute.xlu0 %5741
        %v5743 = vsel %vm617, %v5740, 0
        %v5745 = vsel %vm617, %v5742, 0
        %5747 = vmatpush.xpose.msra.mxu0 0.0
        %5748 = vmatpush.xpose.msra.mxu0 0.0
        %5749 = vmatpush.xpose.msra.mxu0 0.0
        %5750 = vmatpush.xpose.msra.mxu0 0.0
        %5751 = vmatpush.xpose.msra.mxu0 0.0
        %5752 = vmatpush.xpose.msra.mxu0 0.0
        %5753 = vmatpush.xpose.msra.mxu0 0.0
        %5754 = vmatpush.xpose.msra.mxu0 0.0
        %5755 = vmatpush.xpose.msra.mxu0 0.0
        %5756 = vmatpush.xpose.msra.mxu0 0.0
        %5757 = vmatpush.xpose.msra.mxu0 0.0
        %5758 = vmatpush.xpose.msra.mxu0 0.0
        %5759 = vmatpush.xpose.msra.mxu0 0.0
        %5760 = vmatpush.xpose.msra.mxu0 0.0
        %5761 = vmatpush.xpose.msra.mxu0 0.0
        %5762 = vmatpush.xpose.msra.mxu0 %v5745
        %5763 = vmatmul.f32.gmra.mxu0 %v5743
        %v5764 = vpop.f32.mrf.mxu0
        %v5765 = vadd.f32 0.0, %v5764
        %5766 = vdwg.mxu0
        %5767 = vrot.lane.b32.xlu0 %v3648, 104
        %v5768 = vpop.permute.xlu0 %5767
        %5769 = vrot.lane.b32.xlu0 %v3689, 104
        %v5770 = vpop.permute.xlu0 %5769
        %v5771 = vsel %vm617, %v5768, 0
        %v5773 = vsel %vm617, %v5770, 0
        %5775 = vmatpush.xpose.msra.mxu0 0.0
        %5776 = vmatpush.xpose.msra.mxu0 0.0
        %5777 = vmatpush.xpose.msra.mxu0 0.0
        %5778 = vmatpush.xpose.msra.mxu0 0.0
        %5779 = vmatpush.xpose.msra.mxu0 0.0
        %5780 = vmatpush.xpose.msra.mxu0 0.0
        %5781 = vmatpush.xpose.msra.mxu0 0.0
        %5782 = vmatpush.xpose.msra.mxu0 0.0
        %5783 = vmatpush.xpose.msra.mxu0 0.0
        %5784 = vmatpush.xpose.msra.mxu0 0.0
        %5785 = vmatpush.xpose.msra.mxu0 0.0
        %5786 = vmatpush.xpose.msra.mxu0 0.0
        %5787 = vmatpush.xpose.msra.mxu0 0.0
        %5788 = vmatpush.xpose.msra.mxu0 0.0
        %5789 = vmatpush.xpose.msra.mxu0 0.0
        %5790 = vmatpush.xpose.msra.mxu0 %v5773
        %5791 = vmatmul.f32.gmra.mxu0 %v5771
        %v5792 = vpop.f32.mrf.mxu0
        %v5793 = vadd.f32 0.0, %v5792
        %5794 = vdwg.mxu0
        %5795 = vrot.lane.b32.xlu0 %v3651, 104
        %v5796 = vpop.permute.xlu0 %5795
        %5797 = vrot.lane.b32.xlu0 %v3692, 104
        %v5798 = vpop.permute.xlu0 %5797
        %v5799 = vsel %vm617, %v5796, 0
        %v5801 = vsel %vm617, %v5798, 0
        %5803 = vmatpush.xpose.msra.mxu0 0.0
        %5804 = vmatpush.xpose.msra.mxu0 0.0
        %5805 = vmatpush.xpose.msra.mxu0 0.0
        %5806 = vmatpush.xpose.msra.mxu0 0.0
        %5807 = vmatpush.xpose.msra.mxu0 0.0
        %5808 = vmatpush.xpose.msra.mxu0 0.0
        %5809 = vmatpush.xpose.msra.mxu0 0.0
        %5810 = vmatpush.xpose.msra.mxu0 0.0
        %5811 = vmatpush.xpose.msra.mxu0 0.0
        %5812 = vmatpush.xpose.msra.mxu0 0.0
        %5813 = vmatpush.xpose.msra.mxu0 0.0
        %5814 = vmatpush.xpose.msra.mxu0 0.0
        %5815 = vmatpush.xpose.msra.mxu0 0.0
        %5816 = vmatpush.xpose.msra.mxu0 0.0
        %5817 = vmatpush.xpose.msra.mxu0 0.0
        %5818 = vmatpush.xpose.msra.mxu0 %v5801
        %5819 = vmatmul.f32.gmra.mxu0 %v5799
        %v5820 = vpop.f32.mrf.mxu0
        %v5821 = vadd.f32 0.0, %v5820
        %5822 = vdwg.mxu0
        %v5823 = vmul.f32 %v5625, 0.35355338
        %v5824 = vmul.f32 %v5653, 0.35355338
        %v5825 = vmul.f32 %v5681, 0.35355338
        %v5826 = vmul.f32 %v5709, 0.35355338
        %v5827 = vmul.f32 %v5737, 0.35355338
        %v5828 = vmul.f32 %v5765, 0.35355338
        %v5829 = vmul.f32 %v5793, 0.35355338
        %v5830 = vmul.f32 %v5821, 0.35355338
        %v5831 = vsel %vm617, %v5823, -inf
        %5832 = vmax.xlane.f32.xlu0 %v5831
        %v5833 = vpop.xlane.xlu0 %5832
        %v5834 = vsel %vm617, %v5824, -inf
        %5835 = vmax.xlane.f32.xlu0 %v5834
        %v5836 = vpop.xlane.xlu0 %5835
        %v5837 = vsel %vm617, %v5825, -inf
        %5838 = vmax.xlane.f32.xlu0 %v5837
        %v5839 = vpop.xlane.xlu0 %5838
        %v5840 = vsel %vm617, %v5826, -inf
        %5841 = vmax.xlane.f32.xlu0 %v5840
        %v5842 = vpop.xlane.xlu0 %5841
        %v5843 = vsel %vm617, %v5827, -inf
        %5844 = vmax.xlane.f32.xlu0 %v5843
        %v5845 = vpop.xlane.xlu0 %5844
        %v5846 = vsel %vm617, %v5828, -inf
        %5847 = vmax.xlane.f32.xlu0 %v5846
        %v5848 = vpop.xlane.xlu0 %5847
        %v5849 = vsel %vm617, %v5829, -inf
        %5850 = vmax.xlane.f32.xlu0 %v5849
        %v5851 = vpop.xlane.xlu0 %5850
        %v5852 = vsel %vm617, %v5830, -inf
        %5853 = vmax.xlane.f32.xlu0 %v5852
        %v5854 = vpop.xlane.xlu0 %5853
        %v5855 = vsub.f32 %v5823, %v5833
        %v5856 = vsub.f32 %v5824, %v5836
        %v5857 = vsub.f32 %v5825, %v5839
        %v5858 = vsub.f32 %v5826, %v5842
        %v5859 = vsub.f32 %v5827, %v5845
        %v5860 = vsub.f32 %v5828, %v5848
        %v5861 = vsub.f32 %v5829, %v5851
        %v5862 = vsub.f32 %v5830, %v5854
        %v5863 = vmul.f32 %v5855, 1.442695
        %v5864 = vpow.pop %v5863
        %v5865 = vmul.f32 %v5856, 1.442695
        %v5866 = vpow.pop %v5865
        %v5867 = vmul.f32 %v5857, 1.442695
        %v5868 = vpow.pop %v5867
        %v5869 = vmul.f32 %v5858, 1.442695
        %v5870 = vpow.pop %v5869
        %v5871 = vmul.f32 %v5859, 1.442695
        %v5872 = vpow.pop %v5871
        %v5873 = vmul.f32 %v5860, 1.442695
        %v5874 = vpow.pop %v5873
        %v5875 = vmul.f32 %v5861, 1.442695
        %v5876 = vpow.pop %v5875
        %v5877 = vmul.f32 %v5862, 1.442695
        %v5878 = vpow.pop %v5877
        %v5879 = vsel %vm617, %v5864, 0.0
        %5880 = vadd.xlane.f32.xlu0 %v5879
        %v5881 = vpop.xlane.xlu0 %5880
        %v5882 = vsel %vm617, %v5866, 0.0
        %5883 = vadd.xlane.f32.xlu0 %v5882
        %v5884 = vpop.xlane.xlu0 %5883
        %v5885 = vsel %vm617, %v5868, 0.0
        %5886 = vadd.xlane.f32.xlu0 %v5885
        %v5887 = vpop.xlane.xlu0 %5886
        %v5888 = vsel %vm617, %v5870, 0.0
        %5889 = vadd.xlane.f32.xlu0 %v5888
        %v5890 = vpop.xlane.xlu0 %5889
        %v5891 = vsel %vm617, %v5872, 0.0
        %5892 = vadd.xlane.f32.xlu0 %v5891
        %v5893 = vpop.xlane.xlu0 %5892
        %v5894 = vsel %vm617, %v5874, 0.0
        %5895 = vadd.xlane.f32.xlu0 %v5894
        %v5896 = vpop.xlane.xlu0 %5895
        %v5897 = vsel %vm617, %v5876, 0.0
        %5898 = vadd.xlane.f32.xlu0 %v5897
        %v5899 = vpop.xlane.xlu0 %5898
        %v5900 = vsel %vm617, %v5878, 0.0
        %5901 = vadd.xlane.f32.xlu0 %v5900
        %v5902 = vpop.xlane.xlu0 %5901
        %v5903 = vrcp.pop %v5881
        %v5904 = vmul.f32 %v5881, %v5903
        %v5905 = vsub.f32 1.0, %v5904
        %v5906 = vmul.f32 %v5903, %v5905
        %v5907 = vadd.f32 %v5903, %v5906
        %vm5908 = vweird.f32 %v5881
        %vm5909 = vweird.f32 %v5903
        %vm5910 = vmor %vm5908, %vm5909
        %v5911 = vsel %vm5910, %v5903, %v5907
        %v5912 = vand.u32 2147483647, %v5881
        %vm5913 = vcmp.eq.f32.partialorder %v5912, 8.507059e+37
        %v5914 = vand.u32 %v5881, 2147483648
        %v5915 = vor.u32 1.1754944e-38, %v5914
        %v5916 = vsel %vm5913, %v5915, %v5911
        %v5917 = vmul.f32 %v5864, %v5916
        %v5918 = vrcp.pop %v5884
        %v5919 = vmul.f32 %v5884, %v5918
        %v5920 = vsub.f32 1.0, %v5919
        %v5921 = vmul.f32 %v5918, %v5920
        %v5922 = vadd.f32 %v5918, %v5921
        %vm5923 = vweird.f32 %v5884
        %vm5924 = vweird.f32 %v5918
        %vm5925 = vmor %vm5923, %vm5924
        %v5926 = vsel %vm5925, %v5918, %v5922
        %v5927 = vand.u32 2147483647, %v5884
        %vm5928 = vcmp.eq.f32.partialorder %v5927, 8.507059e+37
        %v5929 = vand.u32 %v5884, 2147483648
        %v5930 = vor.u32 1.1754944e-38, %v5929
        %v5931 = vsel %vm5928, %v5930, %v5926
        %v5932 = vmul.f32 %v5866, %v5931
        %v5933 = vrcp.pop %v5887
        %v5934 = vmul.f32 %v5887, %v5933
        %v5935 = vsub.f32 1.0, %v5934
        %v5936 = vmul.f32 %v5933, %v5935
        %v5937 = vadd.f32 %v5933, %v5936
        %vm5938 = vweird.f32 %v5887
        %vm5939 = vweird.f32 %v5933
        %vm5940 = vmor %vm5938, %vm5939
        %v5941 = vsel %vm5940, %v5933, %v5937
        %v5942 = vand.u32 2147483647, %v5887
        %vm5943 = vcmp.eq.f32.partialorder %v5942, 8.507059e+37
        %v5944 = vand.u32 %v5887, 2147483648
        %v5945 = vor.u32 1.1754944e-38, %v5944
        %v5946 = vsel %vm5943, %v5945, %v5941
        %v5947 = vmul.f32 %v5868, %v5946
        %v5948 = vrcp.pop %v5890
        %v5949 = vmul.f32 %v5890, %v5948
        %v5950 = vsub.f32 1.0, %v5949
        %v5951 = vmul.f32 %v5948, %v5950
        %v5952 = vadd.f32 %v5948, %v5951
        %vm5953 = vweird.f32 %v5890
        %vm5954 = vweird.f32 %v5948
        %vm5955 = vmor %vm5953, %vm5954
        %v5956 = vsel %vm5955, %v5948, %v5952
        %v5957 = vand.u32 2147483647, %v5890
        %vm5958 = vcmp.eq.f32.partialorder %v5957, 8.507059e+37
        %v5959 = vand.u32 %v5890, 2147483648
        %v5960 = vor.u32 1.1754944e-38, %v5959
        %v5961 = vsel %vm5958, %v5960, %v5956
        %v5962 = vmul.f32 %v5870, %v5961
        %v5963 = vrcp.pop %v5893
        %v5964 = vmul.f32 %v5893, %v5963
        %v5965 = vsub.f32 1.0, %v5964
        %v5966 = vmul.f32 %v5963, %v5965
        %v5967 = vadd.f32 %v5963, %v5966
        %vm5968 = vweird.f32 %v5893
        %vm5969 = vweird.f32 %v5963
        %vm5970 = vmor %vm5968, %vm5969
        %v5971 = vsel %vm5970, %v5963, %v5967
        %v5972 = vand.u32 2147483647, %v5893
        %vm5973 = vcmp.eq.f32.partialorder %v5972, 8.507059e+37
        %v5974 = vand.u32 %v5893, 2147483648
        %v5975 = vor.u32 1.1754944e-38, %v5974
        %v5976 = vsel %vm5973, %v5975, %v5971
        %v5977 = vmul.f32 %v5872, %v5976
        %v5978 = vrcp.pop %v5896
        %v5979 = vmul.f32 %v5896, %v5978
        %v5980 = vsub.f32 1.0, %v5979
        %v5981 = vmul.f32 %v5978, %v5980
        %v5982 = vadd.f32 %v5978, %v5981
        %vm5983 = vweird.f32 %v5896
        %vm5984 = vweird.f32 %v5978
        %vm5985 = vmor %vm5983, %vm5984
        %v5986 = vsel %vm5985, %v5978, %v5982
        %v5987 = vand.u32 2147483647, %v5896
        %vm5988 = vcmp.eq.f32.partialorder %v5987, 8.507059e+37
        %v5989 = vand.u32 %v5896, 2147483648
        %v5990 = vor.u32 1.1754944e-38, %v5989
        %v5991 = vsel %vm5988, %v5990, %v5986
        %v5992 = vmul.f32 %v5874, %v5991
        %v5993 = vrcp.pop %v5899
        %v5994 = vmul.f32 %v5899, %v5993
        %v5995 = vsub.f32 1.0, %v5994
        %v5996 = vmul.f32 %v5993, %v5995
        %v5997 = vadd.f32 %v5993, %v5996
        %vm5998 = vweird.f32 %v5899
        %vm5999 = vweird.f32 %v5993
        %vm6000 = vmor %vm5998, %vm5999
        %v6001 = vsel %vm6000, %v5993, %v5997
        %v6002 = vand.u32 2147483647, %v5899
        %vm6003 = vcmp.eq.f32.partialorder %v6002, 8.507059e+37
        %v6004 = vand.u32 %v5899, 2147483648
        %v6005 = vor.u32 1.1754944e-38, %v6004
        %v6006 = vsel %vm6003, %v6005, %v6001
        %v6007 = vmul.f32 %v5876, %v6006
        %v6008 = vrcp.pop %v5902
        %v6009 = vmul.f32 %v5902, %v6008
        %v6010 = vsub.f32 1.0, %v6009
        %v6011 = vmul.f32 %v6008, %v6010
        %v6012 = vadd.f32 %v6008, %v6011
        %vm6013 = vweird.f32 %v5902
        %vm6014 = vweird.f32 %v6008
        %vm6015 = vmor %vm6013, %vm6014
        %v6016 = vsel %vm6015, %v6008, %v6012
        %v6017 = vand.u32 2147483647, %v5902
        %vm6018 = vcmp.eq.f32.partialorder %v6017, 8.507059e+37
        %v6019 = vand.u32 %v5902, 2147483648
        %v6020 = vor.u32 1.1754944e-38, %v6019
        %v6021 = vsel %vm6018, %v6020, %v6016
        %v6022 = vmul.f32 %v5878, %v6021
        %6023 = vrot.lane.b32.xlu0 %v3712, 104
        %v6024 = vpop.permute.xlu0 %6023
        %v6027 = vsel %vm617, %v5917, 0
        %6029 = vmatpush.msra.mxu0 0.0
        %6030 = vmatpush.msra.mxu0 0.0
        %6031 = vmatpush.msra.mxu0 0.0
        %6032 = vmatpush.msra.mxu0 0.0
        %6033 = vmatpush.msra.mxu0 0.0
        %6034 = vmatpush.msra.mxu0 0.0
        %6035 = vmatpush.msra.mxu0 0.0
        %6036 = vmatpush.msra.mxu0 0.0
        %6037 = vmatpush.msra.mxu0 0.0
        %6038 = vmatpush.msra.mxu0 0.0
        %6039 = vmatpush.msra.mxu0 0.0
        %6040 = vmatpush.msra.mxu0 0.0
        %6041 = vmatpush.msra.mxu0 0.0
        %6042 = vmatpush.msra.mxu0 0.0
        %6043 = vmatpush.msra.mxu0 0.0
        %6044 = vmatpush.msra.mxu0 %v6024
        %6045 = vmatmul.f32.gmra.mxu0 %v6027
        %v6046 = vpop.f32.mrf.mxu0
        %v6047 = vadd.f32 0.0, %v6046
        %6048 = vdwg.mxu0
        %6049 = vrot.lane.b32.xlu0 %v3715, 104
        %v6050 = vpop.permute.xlu0 %6049
        %v6053 = vsel %vm617, %v5932, 0
        %6055 = vmatpush.msra.mxu0 0.0
        %6056 = vmatpush.msra.mxu0 0.0
        %6057 = vmatpush.msra.mxu0 0.0
        %6058 = vmatpush.msra.mxu0 0.0
        %6059 = vmatpush.msra.mxu0 0.0
        %6060 = vmatpush.msra.mxu0 0.0
        %6061 = vmatpush.msra.mxu0 0.0
        %6062 = vmatpush.msra.mxu0 0.0
        %6063 = vmatpush.msra.mxu0 0.0
        %6064 = vmatpush.msra.mxu0 0.0
        %6065 = vmatpush.msra.mxu0 0.0
        %6066 = vmatpush.msra.mxu0 0.0
        %6067 = vmatpush.msra.mxu0 0.0
        %6068 = vmatpush.msra.mxu0 0.0
        %6069 = vmatpush.msra.mxu0 0.0
        %6070 = vmatpush.msra.mxu0 %v6050
        %6071 = vmatmul.f32.gmra.mxu0 %v6053
        %v6072 = vpop.f32.mrf.mxu0
        %v6073 = vadd.f32 0.0, %v6072
        %6074 = vdwg.mxu0
        %6075 = vrot.lane.b32.xlu0 %v3718, 104
        %v6076 = vpop.permute.xlu0 %6075
        %v6079 = vsel %vm617, %v5947, 0
        %6081 = vmatpush.msra.mxu0 0.0
        %6082 = vmatpush.msra.mxu0 0.0
        %6083 = vmatpush.msra.mxu0 0.0
        %6084 = vmatpush.msra.mxu0 0.0
        %6085 = vmatpush.msra.mxu0 0.0
        %6086 = vmatpush.msra.mxu0 0.0
        %6087 = vmatpush.msra.mxu0 0.0
        %6088 = vmatpush.msra.mxu0 0.0
        %6089 = vmatpush.msra.mxu0 0.0
        %6090 = vmatpush.msra.mxu0 0.0
        %6091 = vmatpush.msra.mxu0 0.0
        %6092 = vmatpush.msra.mxu0 0.0
        %6093 = vmatpush.msra.mxu0 0.0
        %6094 = vmatpush.msra.mxu0 0.0
        %6095 = vmatpush.msra.mxu0 0.0
        %6096 = vmatpush.msra.mxu0 %v6076
        %6097 = vmatmul.f32.gmra.mxu0 %v6079
        %v6098 = vpop.f32.mrf.mxu0
        %v6099 = vadd.f32 0.0, %v6098
        %6100 = vdwg.mxu0
        %6101 = vrot.lane.b32.xlu0 %v3721, 104
        %v6102 = vpop.permute.xlu0 %6101
        %v6105 = vsel %vm617, %v5962, 0
        %6107 = vmatpush.msra.mxu0 0.0
        %6108 = vmatpush.msra.mxu0 0.0
        %6109 = vmatpush.msra.mxu0 0.0
        %6110 = vmatpush.msra.mxu0 0.0
        %6111 = vmatpush.msra.mxu0 0.0
        %6112 = vmatpush.msra.mxu0 0.0
        %6113 = vmatpush.msra.mxu0 0.0
        %6114 = vmatpush.msra.mxu0 0.0
        %6115 = vmatpush.msra.mxu0 0.0
        %6116 = vmatpush.msra.mxu0 0.0
        %6117 = vmatpush.msra.mxu0 0.0
        %6118 = vmatpush.msra.mxu0 0.0
        %6119 = vmatpush.msra.mxu0 0.0
        %6120 = vmatpush.msra.mxu0 0.0
        %6121 = vmatpush.msra.mxu0 0.0
        %6122 = vmatpush.msra.mxu0 %v6102
        %6123 = vmatmul.f32.gmra.mxu0 %v6105
        %v6124 = vpop.f32.mrf.mxu0
        %v6125 = vadd.f32 0.0, %v6124
        %6126 = vdwg.mxu0
        %6127 = vrot.lane.b32.xlu0 %v3724, 104
        %v6128 = vpop.permute.xlu0 %6127
        %v6131 = vsel %vm617, %v5977, 0
        %6133 = vmatpush.msra.mxu0 0.0
        %6134 = vmatpush.msra.mxu0 0.0
        %6135 = vmatpush.msra.mxu0 0.0
        %6136 = vmatpush.msra.mxu0 0.0
        %6137 = vmatpush.msra.mxu0 0.0
        %6138 = vmatpush.msra.mxu0 0.0
        %6139 = vmatpush.msra.mxu0 0.0
        %6140 = vmatpush.msra.mxu0 0.0
        %6141 = vmatpush.msra.mxu0 0.0
        %6142 = vmatpush.msra.mxu0 0.0
        %6143 = vmatpush.msra.mxu0 0.0
        %6144 = vmatpush.msra.mxu0 0.0
        %6145 = vmatpush.msra.mxu0 0.0
        %6146 = vmatpush.msra.mxu0 0.0
        %6147 = vmatpush.msra.mxu0 0.0
        %6148 = vmatpush.msra.mxu0 %v6128
        %6149 = vmatmul.f32.gmra.mxu0 %v6131
        %v6150 = vpop.f32.mrf.mxu0
        %v6151 = vadd.f32 0.0, %v6150
        %6152 = vdwg.mxu0
        %6153 = vrot.lane.b32.xlu0 %v3727, 104
        %v6154 = vpop.permute.xlu0 %6153
        %v6157 = vsel %vm617, %v5992, 0
        %6159 = vmatpush.msra.mxu0 0.0
        %6160 = vmatpush.msra.mxu0 0.0
        %6161 = vmatpush.msra.mxu0 0.0
        %6162 = vmatpush.msra.mxu0 0.0
        %6163 = vmatpush.msra.mxu0 0.0
        %6164 = vmatpush.msra.mxu0 0.0
        %6165 = vmatpush.msra.mxu0 0.0
        %6166 = vmatpush.msra.mxu0 0.0
        %6167 = vmatpush.msra.mxu0 0.0
        %6168 = vmatpush.msra.mxu0 0.0
        %6169 = vmatpush.msra.mxu0 0.0
        %6170 = vmatpush.msra.mxu0 0.0
        %6171 = vmatpush.msra.mxu0 0.0
        %6172 = vmatpush.msra.mxu0 0.0
        %6173 = vmatpush.msra.mxu0 0.0
        %6174 = vmatpush.msra.mxu0 %v6154
        %6175 = vmatmul.f32.gmra.mxu0 %v6157
        %v6176 = vpop.f32.mrf.mxu0
        %v6177 = vadd.f32 0.0, %v6176
        %6178 = vdwg.mxu0
        %6179 = vrot.lane.b32.xlu0 %v3730, 104
        %v6180 = vpop.permute.xlu0 %6179
        %v6183 = vsel %vm617, %v6007, 0
        %6185 = vmatpush.msra.mxu0 0.0
        %6186 = vmatpush.msra.mxu0 0.0
        %6187 = vmatpush.msra.mxu0 0.0
        %6188 = vmatpush.msra.mxu0 0.0
        %6189 = vmatpush.msra.mxu0 0.0
        %6190 = vmatpush.msra.mxu0 0.0
        %6191 = vmatpush.msra.mxu0 0.0
        %6192 = vmatpush.msra.mxu0 0.0
        %6193 = vmatpush.msra.mxu0 0.0
        %6194 = vmatpush.msra.mxu0 0.0
        %6195 = vmatpush.msra.mxu0 0.0
        %6196 = vmatpush.msra.mxu0 0.0
        %6197 = vmatpush.msra.mxu0 0.0
        %6198 = vmatpush.msra.mxu0 0.0
        %6199 = vmatpush.msra.mxu0 0.0
        %6200 = vmatpush.msra.mxu0 %v6180
        %6201 = vmatmul.f32.gmra.mxu0 %v6183
        %v6202 = vpop.f32.mrf.mxu0
        %v6203 = vadd.f32 0.0, %v6202
        %6204 = vdwg.mxu0
        %6205 = vrot.lane.b32.xlu0 %v3733, 104
        %v6206 = vpop.permute.xlu0 %6205
        %v6209 = vsel %vm617, %v6022, 0
        %6211 = vmatpush.msra.mxu0 0.0
        %6212 = vmatpush.msra.mxu0 0.0
        %6213 = vmatpush.msra.mxu0 0.0
        %6214 = vmatpush.msra.mxu0 0.0
        %6215 = vmatpush.msra.mxu0 0.0
        %6216 = vmatpush.msra.mxu0 0.0
        %6217 = vmatpush.msra.mxu0 0.0
        %6218 = vmatpush.msra.mxu0 0.0
        %6219 = vmatpush.msra.mxu0 0.0
        %6220 = vmatpush.msra.mxu0 0.0
        %6221 = vmatpush.msra.mxu0 0.0
        %6222 = vmatpush.msra.mxu0 0.0
        %6223 = vmatpush.msra.mxu0 0.0
        %6224 = vmatpush.msra.mxu0 0.0
        %6225 = vmatpush.msra.mxu0 0.0
        %6226 = vmatpush.msra.mxu0 %v6206
        %6227 = vmatmul.f32.gmra.mxu0 %v6209
        %v6228 = vpop.f32.mrf.mxu0
        %v6229 = vadd.f32 0.0, %v6228
        %6230 = vdwg.mxu0
        %6239 = vrot.lane.b32.xlu0 %v4776, 8
        %v6240 = vpop.permute.xlu0 %6239
        %6241 = vrot.lane.b32.xlu0 %v4803, 8
        %v6242 = vpop.permute.xlu0 %6241
        %6243 = vrot.lane.b32.xlu0 %v4830, 8
        %v6244 = vpop.permute.xlu0 %6243
        %6245 = vrot.lane.b32.xlu0 %v4857, 8
        %v6246 = vpop.permute.xlu0 %6245
        %6247 = vrot.lane.b32.xlu0 %v4884, 8
        %v6248 = vpop.permute.xlu0 %6247
        %6249 = vrot.lane.b32.xlu0 %v4911, 8
        %v6250 = vpop.permute.xlu0 %6249
        %6251 = vrot.lane.b32.xlu0 %v4938, 8
        %v6252 = vpop.permute.xlu0 %6251
        %6253 = vrot.lane.b32.xlu0 %v4965, 8
        %v6254 = vpop.permute.xlu0 %6253
        %6271 = vrot.lane.b32.xlu0 %v5415, 16
        %v6272 = vpop.permute.xlu0 %6271
        %6273 = vrot.lane.b32.xlu0 %v5441, 16
        %v6274 = vpop.permute.xlu0 %6273
        %6275 = vrot.lane.b32.xlu0 %v5467, 16
        %v6276 = vpop.permute.xlu0 %6275
        %6277 = vrot.lane.b32.xlu0 %v5493, 16
        %v6278 = vpop.permute.xlu0 %6277
        %6279 = vrot.lane.b32.xlu0 %v5519, 16
        %v6280 = vpop.permute.xlu0 %6279
        %6281 = vrot.lane.b32.xlu0 %v5545, 16
        %v6282 = vpop.permute.xlu0 %6281
        %6283 = vrot.lane.b32.xlu0 %v5571, 16
        %v6284 = vpop.permute.xlu0 %6283
        %6285 = vrot.lane.b32.xlu0 %v5597, 16
        %v6286 = vpop.permute.xlu0 %6285
        %6303 = vrot.lane.b32.xlu0 %v6047, 24
        %v6304 = vpop.permute.xlu0 %6303
        %6305 = vrot.lane.b32.xlu0 %v6073, 24
        %v6306 = vpop.permute.xlu0 %6305
        %6307 = vrot.lane.b32.xlu0 %v6099, 24
        %v6308 = vpop.permute.xlu0 %6307
        %6309 = vrot.lane.b32.xlu0 %v6125, 24
        %v6310 = vpop.permute.xlu0 %6309
        %6311 = vrot.lane.b32.xlu0 %v6151, 24
        %v6312 = vpop.permute.xlu0 %6311
        %6313 = vrot.lane.b32.xlu0 %v6177, 24
        %v6314 = vpop.permute.xlu0 %6313
        %6315 = vrot.lane.b32.xlu0 %v6203, 24
        %v6316 = vpop.permute.xlu0 %6315
        %6317 = vrot.lane.b32.xlu0 %v6229, 24
        %v6318 = vpop.permute.xlu0 %6317
        %v6327 = vsel %vm617, %v4164, %v6240
        %v6328 = vsel %vm617, %v4187, %v6242
        %v6329 = vsel %vm617, %v4210, %v6244
        %v6330 = vsel %vm617, %v4233, %v6246
        %v6331 = vsel %vm617, %v4256, %v6248
        %v6332 = vsel %vm617, %v4279, %v6250
        %v6333 = vsel %vm617, %v4302, %v6252
        %v6334 = vsel %vm617, %v4325, %v6254
        %v6335 = vsel %vm3218, %v6327, %v6272
        %v6336 = vsel %vm3218, %v6328, %v6274
        %v6337 = vsel %vm3218, %v6329, %v6276
        %v6338 = vsel %vm3218, %v6330, %v6278
        %v6339 = vsel %vm3218, %v6331, %v6280
        %v6340 = vsel %vm3218, %v6332, %v6282
        %v6341 = vsel %vm3218, %v6333, %v6284
        %v6342 = vsel %vm3218, %v6334, %v6286
        %v6343 = vsel %vm3227, %v6335, %v6304
        %v6344 = vsel %vm3227, %v6336, %v6306
        %v6345 = vsel %vm3227, %v6337, %v6308
        %v6346 = vsel %vm3227, %v6338, %v6310
        %v6347 = vsel %vm3227, %v6339, %v6312
        %v6348 = vsel %vm3227, %v6340, %v6314
        %v6349 = vsel %vm3227, %v6341, %v6316
        %v6350 = vsel %vm3227, %v6342, %v6318
        %v6352 = vsel %vm469, %v6343, 0
        %v6355 = vsel %vm469, %v6344, 0
        %v6358 = vsel %vm469, %v6345, 0
        %v6361 = vsel %vm469, %v6346, 0
        %v6364 = vsel %vm469, %v6347, 0
        %v6367 = vsel %vm469, %v6348, 0
        %v6370 = vsel %vm469, %v6349, 0
        %v6373 = vsel %vm469, %v6350, 0
        %6375 = vmatpush.msra.mxu0 0.0
        %6376 = vmatpush.msra.mxu0 0.0
        %6377 = vmatpush.msra.mxu0 0.0
        %6378 = vmatpush.msra.mxu0 0.0
        %6379 = vmatpush.msra.mxu0 0.0
        %6380 = vmatpush.msra.mxu0 0.0
        %6381 = vmatpush.msra.mxu0 0.0
        %6382 = vmatpush.msra.mxu0 0.0
        %6383 = vmatpush.msra.mxu0 0.0
        %6384 = vmatpush.msra.mxu0 0.0
        %6385 = vmatpush.msra.mxu0 0.0
        %6386 = vmatpush.msra.mxu0 0.0
        %6387 = vmatpush.msra.mxu0 %v3584
        %6388 = vmatpush.msra.mxu0 %v3583
        %6389 = vmatpush.msra.mxu0 %v3582
        %6390 = vmatpush.msra.mxu0 %v3581
        %6391 = vmatmul.f32.gmra.mxu0 %v6352
        %v6392 = vpop.f32.mrf.mxu0
        %v6393 = vadd.f32 0.0, %v6392
        %6394 = vmatmul.f32.gmra.mxu0 %v6355
        %v6395 = vpop.f32.mrf.mxu0
        %v6396 = vadd.f32 0.0, %v6395
        %6397 = vmatmul.f32.gmra.mxu0 %v6358
        %v6398 = vpop.f32.mrf.mxu0
        %v6399 = vadd.f32 0.0, %v6398
        %6400 = vmatmul.f32.gmra.mxu0 %v6361
        %v6401 = vpop.f32.mrf.mxu0
        %v6402 = vadd.f32 0.0, %v6401
        %6403 = vmatmul.f32.gmra.mxu0 %v6364
        %v6404 = vpop.f32.mrf.mxu0
        %v6405 = vadd.f32 0.0, %v6404
        %6406 = vmatmul.f32.gmra.mxu0 %v6367
        %v6407 = vpop.f32.mrf.mxu0
        %v6408 = vadd.f32 0.0, %v6407
        %6409 = vmatmul.f32.gmra.mxu0 %v6370
        %v6410 = vpop.f32.mrf.mxu0
        %v6411 = vadd.f32 0.0, %v6410
        %6412 = vmatmul.f32.gmra.mxu0 %v6373
        %v6413 = vpop.f32.mrf.mxu0
        %v6414 = vadd.f32 0.0, %v6413
        %6415 = vdwg.mxu0
        %6416 = vmatpush.msra.mxu0 0.0
        %6417 = vmatpush.msra.mxu0 0.0
        %6418 = vmatpush.msra.mxu0 0.0
        %6419 = vmatpush.msra.mxu0 0.0
        %6420 = vmatpush.msra.mxu0 0.0
        %6421 = vmatpush.msra.mxu0 0.0
        %6422 = vmatpush.msra.mxu0 0.0
        %6423 = vmatpush.msra.mxu0 0.0
        %6424 = vmatpush.msra.mxu0 0.0
        %6425 = vmatpush.msra.mxu0 0.0
        %6426 = vmatpush.msra.mxu0 0.0
        %6427 = vmatpush.msra.mxu0 0.0
        %6428 = vmatpush.msra.mxu0 %v3579
        %6429 = vmatpush.msra.mxu0 %v3578
        %6430 = vmatpush.msra.mxu0 %v3577
        %6431 = vmatpush.msra.mxu0 %v3576
        %6432 = vmatmul.f32.gmra.mxu0 %v3589
        %v6433 = vpop.f32.mrf.mxu0
        %v6434 = vadd.f32 %v6393, %v6433
        %6435 = vmatmul.f32.gmra.mxu0 %v3592
        %v6436 = vpop.f32.mrf.mxu0
        %v6437 = vadd.f32 %v6396, %v6436
        %6438 = vmatmul.f32.gmra.mxu0 %v3595
        %v6439 = vpop.f32.mrf.mxu0
        %v6440 = vadd.f32 %v6399, %v6439
        %6441 = vmatmul.f32.gmra.mxu0 %v3598
        %v6442 = vpop.f32.mrf.mxu0
        %v6443 = vadd.f32 %v6402, %v6442
        %6444 = vmatmul.f32.gmra.mxu0 %v3601
        %v6445 = vpop.f32.mrf.mxu0
        %v6446 = vadd.f32 %v6405, %v6445
        %6447 = vmatmul.f32.gmra.mxu0 %v3604
        %v6448 = vpop.f32.mrf.mxu0
        %v6449 = vadd.f32 %v6408, %v6448
        %6450 = vmatmul.f32.gmra.mxu0 %v3607
        %v6451 = vpop.f32.mrf.mxu0
        %v6452 = vadd.f32 %v6411, %v6451
        %6453 = vmatmul.f32.gmra.mxu0 %v3610
        %v6454 = vpop.f32.mrf.mxu0
        %v6455 = vadd.f32 %v6414, %v6454
        %6456 = vdwg.mxu0
        %v6457 = vperm.slane %v3585, 0
        %v6458 = vadd.f32 %v6434, %v6457
        %v6459 = vadd.f32 %v6437, %v6457
        %v6460 = vadd.f32 %v6440, %v6457
        %v6461 = vadd.f32 %v6443, %v6457
        %v6462 = vadd.f32 %v6446, %v6457
        %v6463 = vadd.f32 %v6449, %v6457
        %v6464 = vadd.f32 %v6452, %v6457
        %v6465 = vadd.f32 %v6455, %v6457
        %v6466 = vadd.f32 %v6458, %v3552
        %v6467 = vadd.f32 %v6459, %v3553
        %v6468 = vadd.f32 %v6460, %v3554
        %v6469 = vadd.f32 %v6461, %v3555
        %v6470 = vadd.f32 %v6462, %v3556
        %v6471 = vadd.f32 %v6463, %v3557
        %v6472 = vadd.f32 %v6464, %v3558
        %v6473 = vadd.f32 %v6465, %v3559
        %v6474 = vsel %vm469, %v6466, 0.0
        %6475 = vadd.xlane.f32.xlu0 %v6474
        %v6476 = vpop.xlane.xlu0 %6475
        %v6477 = vsel %vm469, %v6467, 0.0
        %6478 = vadd.xlane.f32.xlu0 %v6477
        %v6479 = vpop.xlane.xlu0 %6478
        %v6480 = vsel %vm469, %v6468, 0.0
        %6481 = vadd.xlane.f32.xlu0 %v6480
        %v6482 = vpop.xlane.xlu0 %6481
        %v6483 = vsel %vm469, %v6469, 0.0
        %6484 = vadd.xlane.f32.xlu0 %v6483
        %v6485 = vpop.xlane.xlu0 %6484
        %v6486 = vsel %vm469, %v6470, 0.0
        %6487 = vadd.xlane.f32.xlu0 %v6486
        %v6488 = vpop.xlane.xlu0 %6487
        %v6489 = vsel %vm469, %v6471, 0.0
        %6490 = vadd.xlane.f32.xlu0 %v6489
        %v6491 = vpop.xlane.xlu0 %6490
        %v6492 = vsel %vm469, %v6472, 0.0
        %6493 = vadd.xlane.f32.xlu0 %v6492
        %v6494 = vpop.xlane.xlu0 %6493
        %v6495 = vsel %vm469, %v6473, 0.0
        %6496 = vadd.xlane.f32.xlu0 %v6495
        %v6497 = vpop.xlane.xlu0 %6496
        %v6498 = vmul.f32 %v6476, %v3389
        %v6499 = vmul.f32 %v6479, %v3389
        %v6500 = vmul.f32 %v6482, %v3389
        %v6501 = vmul.f32 %v6485, %v3389
        %v6502 = vmul.f32 %v6488, %v3389
        %v6503 = vmul.f32 %v6491, %v3389
        %v6504 = vmul.f32 %v6494, %v3389
        %v6505 = vmul.f32 %v6497, %v3389
        %v6506 = vsub.f32 %v6466, %v6498
        %v6507 = vsub.f32 %v6467, %v6499
        %v6508 = vsub.f32 %v6468, %v6500
        %v6509 = vsub.f32 %v6469, %v6501
        %v6510 = vsub.f32 %v6470, %v6502
        %v6511 = vsub.f32 %v6471, %v6503
        %v6512 = vsub.f32 %v6472, %v6504
        %v6513 = vsub.f32 %v6473, %v6505
        %v6514 = vmul.f32 %v6506, %v6506
        %v6515 = vmul.f32 %v6507, %v6507
        %v6516 = vmul.f32 %v6508, %v6508
        %v6517 = vmul.f32 %v6509, %v6509
        %v6518 = vmul.f32 %v6510, %v6510
        %v6519 = vmul.f32 %v6511, %v6511
        %v6520 = vmul.f32 %v6512, %v6512
        %v6521 = vmul.f32 %v6513, %v6513
        %v6522 = vsel %vm469, %v6514, 0.0
        %6523 = vadd.xlane.f32.xlu0 %v6522
        %v6524 = vpop.xlane.xlu0 %6523
        %v6525 = vsel %vm469, %v6515, 0.0
        %6526 = vadd.xlane.f32.xlu0 %v6525
        %v6527 = vpop.xlane.xlu0 %6526
        %v6528 = vsel %vm469, %v6516, 0.0
        %6529 = vadd.xlane.f32.xlu0 %v6528
        %v6530 = vpop.xlane.xlu0 %6529
        %v6531 = vsel %vm469, %v6517, 0.0
        %6532 = vadd.xlane.f32.xlu0 %v6531
        %v6533 = vpop.xlane.xlu0 %6532
        %v6534 = vsel %vm469, %v6518, 0.0
        %6535 = vadd.xlane.f32.xlu0 %v6534
        %v6536 = vpop.xlane.xlu0 %6535
        %v6537 = vsel %vm469, %v6519, 0.0
        %6538 = vadd.xlane.f32.xlu0 %v6537
        %v6539 = vpop.xlane.xlu0 %6538
        %v6540 = vsel %vm469, %v6520, 0.0
        %6541 = vadd.xlane.f32.xlu0 %v6540
        %v6542 = vpop.xlane.xlu0 %6541
        %v6543 = vsel %vm469, %v6521, 0.0
        %6544 = vadd.xlane.f32.xlu0 %v6543
        %v6545 = vpop.xlane.xlu0 %6544
        %v6546 = vmul.f32 %v6524, %v3389
        %v6547 = vmul.f32 %v6527, %v3389
        %v6548 = vmul.f32 %v6530, %v3389
        %v6549 = vmul.f32 %v6533, %v3389
        %v6550 = vmul.f32 %v6536, %v3389
        %v6551 = vmul.f32 %v6539, %v3389
        %v6552 = vmul.f32 %v6542, %v3389
        %v6553 = vmul.f32 %v6545, %v3389
        %v6554 = vadd.f32 %v6546, 1e-05
        %v6555 = vadd.f32 %v6547, 1e-05
        %v6556 = vadd.f32 %v6548, 1e-05
        %v6557 = vadd.f32 %v6549, 1e-05
        %v6558 = vadd.f32 %v6550, 1e-05
        %v6559 = vadd.f32 %v6551, 1e-05
        %v6560 = vadd.f32 %v6552, 1e-05
        %v6561 = vadd.f32 %v6553, 1e-05
        %v6562 = vrsqrt.pop %v6554
        %v6563 = vmul.f32 %v6562, %v6554
        %v6564 = vmul.f32 %v6563, %v6562
        %v6565 = vmul.f32 0.5, %v6564
        %v6566 = vsub.f32 1.5, %v6565
        %v6567 = vmul.f32 %v6562, %v6566
        %vm6568 = vweird.f32 %v6554
        %vm6569 = vweird.f32 %v6562
        %vm6570 = vmor %vm6568, %vm6569
        %v6571 = vsel %vm6570, %v6562, %v6567
        %v6572 = vrsqrt.pop %v6555
        %v6573 = vmul.f32 %v6572, %v6555
        %v6574 = vmul.f32 %v6573, %v6572
        %v6575 = vmul.f32 0.5, %v6574
        %v6576 = vsub.f32 1.5, %v6575
        %v6577 = vmul.f32 %v6572, %v6576
        %vm6578 = vweird.f32 %v6555
        %vm6579 = vweird.f32 %v6572
        %vm6580 = vmor %vm6578, %vm6579
        %v6581 = vsel %vm6580, %v6572, %v6577
        %v6582 = vrsqrt.pop %v6556
        %v6583 = vmul.f32 %v6582, %v6556
        %v6584 = vmul.f32 %v6583, %v6582
        %v6585 = vmul.f32 0.5, %v6584
        %v6586 = vsub.f32 1.5, %v6585
        %v6587 = vmul.f32 %v6582, %v6586
        %vm6588 = vweird.f32 %v6556
        %vm6589 = vweird.f32 %v6582
        %vm6590 = vmor %vm6588, %vm6589
        %v6591 = vsel %vm6590, %v6582, %v6587
        %v6592 = vrsqrt.pop %v6557
        %v6593 = vmul.f32 %v6592, %v6557
        %v6594 = vmul.f32 %v6593, %v6592
        %v6595 = vmul.f32 0.5, %v6594
        %v6596 = vsub.f32 1.5, %v6595
        %v6597 = vmul.f32 %v6592, %v6596
        %vm6598 = vweird.f32 %v6557
        %vm6599 = vweird.f32 %v6592
        %vm6600 = vmor %vm6598, %vm6599
        %v6601 = vsel %vm6600, %v6592, %v6597
        %v6602 = vrsqrt.pop %v6558
        %v6603 = vmul.f32 %v6602, %v6558
        %v6604 = vmul.f32 %v6603, %v6602
        %v6605 = vmul.f32 0.5, %v6604
        %v6606 = vsub.f32 1.5, %v6605
        %v6607 = vmul.f32 %v6602, %v6606
        %vm6608 = vweird.f32 %v6558
        %vm6609 = vweird.f32 %v6602
        %vm6610 = vmor %vm6608, %vm6609
        %v6611 = vsel %vm6610, %v6602, %v6607
        %v6612 = vrsqrt.pop %v6559
        %v6613 = vmul.f32 %v6612, %v6559
        %v6614 = vmul.f32 %v6613, %v6612
        %v6615 = vmul.f32 0.5, %v6614
        %v6616 = vsub.f32 1.5, %v6615
        %v6617 = vmul.f32 %v6612, %v6616
        %vm6618 = vweird.f32 %v6559
        %vm6619 = vweird.f32 %v6612
        %vm6620 = vmor %vm6618, %vm6619
        %v6621 = vsel %vm6620, %v6612, %v6617
        %v6622 = vrsqrt.pop %v6560
        %v6623 = vmul.f32 %v6622, %v6560
        %v6624 = vmul.f32 %v6623, %v6622
        %v6625 = vmul.f32 0.5, %v6624
        %v6626 = vsub.f32 1.5, %v6625
        %v6627 = vmul.f32 %v6622, %v6626
        %vm6628 = vweird.f32 %v6560
        %vm6629 = vweird.f32 %v6622
        %vm6630 = vmor %vm6628, %vm6629
        %v6631 = vsel %vm6630, %v6622, %v6627
        %v6632 = vrsqrt.pop %v6561
        %v6633 = vmul.f32 %v6632, %v6561
        %v6634 = vmul.f32 %v6633, %v6632
        %v6635 = vmul.f32 0.5, %v6634
        %v6636 = vsub.f32 1.5, %v6635
        %v6637 = vmul.f32 %v6632, %v6636
        %vm6638 = vweird.f32 %v6561
        %vm6639 = vweird.f32 %v6632
        %vm6640 = vmor %vm6638, %vm6639
        %v6641 = vsel %vm6640, %v6632, %v6637
        %v6642 = vmul.f32 %v6506, %v6571
        %v6643 = vmul.f32 %v6507, %v6581
        %v6644 = vmul.f32 %v6508, %v6591
        %v6645 = vmul.f32 %v6509, %v6601
        %v6646 = vmul.f32 %v6510, %v6611
        %v6647 = vmul.f32 %v6511, %v6621
        %v6648 = vmul.f32 %v6512, %v6631
        %v6649 = vmul.f32 %v6513, %v6641
        %v6650 = vperm.slane %v3586, 0
        %v6651 = vmul.f32 %v6642, %v6650
        %v6652 = vmul.f32 %v6643, %v6650
        %v6653 = vmul.f32 %v6644, %v6650
        %v6654 = vmul.f32 %v6645, %v6650
        %v6655 = vmul.f32 %v6646, %v6650
        %v6656 = vmul.f32 %v6647, %v6650
        %v6657 = vmul.f32 %v6648, %v6650
        %v6658 = vmul.f32 %v6649, %v6650
        %v6659 = vperm.slane %v3587, 0
        %v6660 = vadd.f32 %v6651, %v6659
        %v6661 = vadd.f32 %v6652, %v6659
        %v6662 = vadd.f32 %v6653, %v6659
        %v6663 = vadd.f32 %v6654, %v6659
        %v6664 = vadd.f32 %v6655, %v6659
        %v6665 = vadd.f32 %v6656, %v6659
        %v6666 = vadd.f32 %v6657, %v6659
        %v6667 = vadd.f32 %v6658, %v6659
        %v6668 = vsel %vm469, %v6660, 0.0
        %v6669 = vrot.slane %v6668, 4
        %v6670 = vadd.f32 %v6668, %v6669
        %v6671 = vrot.slane %v6670, 2
        %v6672 = vadd.f32 %v6670, %v6671
        %v6673 = vrot.slane %v6672, 1
        %v6674 = vadd.f32 %v6672, %v6673
        %v6675 = vsel %vm469, %v6661, 0.0
        %v6676 = vrot.slane %v6675, 4
        %v6677 = vadd.f32 %v6675, %v6676
        %v6678 = vrot.slane %v6677, 2
        %v6679 = vadd.f32 %v6677, %v6678
        %v6680 = vrot.slane %v6679, 1
        %v6681 = vadd.f32 %v6679, %v6680
        %v6682 = vsel %vm469, %v6662, 0.0
        %v6683 = vrot.slane %v6682, 4
        %v6684 = vadd.f32 %v6682, %v6683
        %v6685 = vrot.slane %v6684, 2
        %v6686 = vadd.f32 %v6684, %v6685
        %v6687 = vrot.slane %v6686, 1
        %v6688 = vadd.f32 %v6686, %v6687
        %v6689 = vsel %vm469, %v6663, 0.0
        %v6690 = vrot.slane %v6689, 4
        %v6691 = vadd.f32 %v6689, %v6690
        %v6692 = vrot.slane %v6691, 2
        %v6693 = vadd.f32 %v6691, %v6692
        %v6694 = vrot.slane %v6693, 1
        %v6695 = vadd.f32 %v6693, %v6694
        %v6696 = vsel %vm469, %v6664, 0.0
        %v6697 = vrot.slane %v6696, 4
        %v6698 = vadd.f32 %v6696, %v6697
        %v6699 = vrot.slane %v6698, 2
        %v6700 = vadd.f32 %v6698, %v6699
        %v6701 = vrot.slane %v6700, 1
        %v6702 = vadd.f32 %v6700, %v6701
        %v6703 = vsel %vm469, %v6665, 0.0
        %v6704 = vrot.slane %v6703, 4
        %v6705 = vadd.f32 %v6703, %v6704
        %v6706 = vrot.slane %v6705, 2
        %v6707 = vadd.f32 %v6705, %v6706
        %v6708 = vrot.slane %v6707, 1
        %v6709 = vadd.f32 %v6707, %v6708
        %v6710 = vsel %vm469, %v6666, 0.0
        %v6711 = vrot.slane %v6710, 4
        %v6712 = vadd.f32 %v6710, %v6711
        %v6713 = vrot.slane %v6712, 2
        %v6714 = vadd.f32 %v6712, %v6713
        %v6715 = vrot.slane %v6714, 1
        %v6716 = vadd.f32 %v6714, %v6715
        %v6717 = vsel %vm469, %v6667, 0.0
        %v6718 = vrot.slane %v6717, 4
        %v6719 = vadd.f32 %v6717, %v6718
        %v6720 = vrot.slane %v6719, 2
        %v6721 = vadd.f32 %v6719, %v6720
        %v6722 = vrot.slane %v6721, 1
        %v6723 = vadd.f32 %v6721, %v6722
        %v6724 = vrcp.pop 8.0
        %v6725 = vmul.f32 8.0, %v6724
        %v6726 = vsub.f32 1.0, %v6725
        %v6727 = vmul.f32 %v6724, %v6726
        %v6728 = vadd.f32 %v6724, %v6727
        %vm6729 = vweird.f32 %v6724
        %v6730 = vsel %vm6729, %v6724, %v6728
        %v6731 = vmul.f32 %v6674, %v6730
        %v6732 = vmul.f32 %v6681, %v6730
        %v6733 = vmul.f32 %v6688, %v6730
        %v6734 = vmul.f32 %v6695, %v6730
        %v6735 = vmul.f32 %v6702, %v6730
        %v6736 = vmul.f32 %v6709, %v6730
        %v6737 = vmul.f32 %v6716, %v6730
        %v6738 = vmul.f32 %v6723, %v6730
        %s6739 = scalar_lea.vmem %s2, 320
        %v6740 = vld [vmem:[%s6739] sm:$0xff]
        %v6741 = vld [vmem:[%s6739 + $0x8] sm:$0xff]
        %v6742 = vld [vmem:[%s6739 + $0x10] sm:$0xff]
        %v6743 = vld [vmem:[%s6739 + $0x18] sm:$0xff]
        %v6744 = vld [vmem:[%s3 + $0xa] sm:$0x1]
        %v6745 = vperm.slane %v6744, 0
        %vm6754 = vcmask 1041409
        %v6755 = vsel %vm6754, %v6732, %v6731
        %vm6756 = vcmask 1042434
        %v6757 = vsel %vm6756, %v6733, %v6755
        %vm6758 = vcmask 1043459
        %v6759 = vsel %vm6758, %v6734, %v6757
        %vm6760 = vcmask 1044484
        %v6761 = vsel %vm6760, %v6735, %v6759
        %vm6762 = vcmask 1045509
        %v6763 = vsel %vm6762, %v6736, %v6761
        %vm6764 = vcmask 1046534
        %v6765 = vsel %vm6764, %v6737, %v6763
        %vm6766 = vcmask 1047559
        %v6767 = vsel %vm6766, %v6738, %v6765
        %v6768 = vsel %vm469, %v6767, 0
        %6770 = vmatpush.msra.mxu0 0.0
        %6771 = vmatpush.msra.mxu0 0.0
        %6772 = vmatpush.msra.mxu0 0.0
        %6773 = vmatpush.msra.mxu0 0.0
        %6774 = vmatpush.msra.mxu0 0.0
        %6775 = vmatpush.msra.mxu0 0.0
        %6776 = vmatpush.msra.mxu0 0.0
        %6777 = vmatpush.msra.mxu0 0.0
        %6778 = vmatpush.msra.mxu0 0.0
        %6779 = vmatpush.msra.mxu0 0.0
        %6780 = vmatpush.msra.mxu0 0.0
        %6781 = vmatpush.msra.mxu0 0.0
        %6782 = vmatpush.msra.mxu0 %v6743
        %6783 = vmatpush.msra.mxu0 %v6742
        %6784 = vmatpush.msra.mxu0 %v6741
        %6785 = vmatpush.msra.mxu0 %v6740
        %6786 = vmatmul.f32.gmra.mxu0 %v6768
        %v6787 = vpop.f32.mrf.mxu0
        %v6788 = vadd.f32 %v6745, %v6787
        %6789 = vdwg.mxu0
        %v6790 = vmax.f32 %v6788, 0.0
        %s6791 = scalar_lea.vmem %s2, 352
        %v6792 = vld [vmem:[%s6791] sm:$0xff]
        %v6793 = vld [vmem:[%s6791 + $0x8] sm:$0xff]
        %v6794 = vld [vmem:[%s6791 + $0x10] sm:$0xff]
        %v6795 = vld [vmem:[%s6791 + $0x18] sm:$0xff]
        %v6796 = vld [vmem:[%s3 + $0xb] sm:$0x1]
        %v6797 = vperm.slane %v6796, 0
        %v6799 = vsel %vm469, %v6790, 0
        %6801 = vmatpush.msra.mxu0 0.0
        %6802 = vmatpush.msra.mxu0 0.0
        %6803 = vmatpush.msra.mxu0 0.0
        %6804 = vmatpush.msra.mxu0 0.0
        %6805 = vmatpush.msra.mxu0 0.0
        %6806 = vmatpush.msra.mxu0 0.0
        %6807 = vmatpush.msra.mxu0 0.0
        %6808 = vmatpush.msra.mxu0 0.0
        %6809 = vmatpush.msra.mxu0 0.0
        %6810 = vmatpush.msra.mxu0 0.0
        %6811 = vmatpush.msra.mxu0 0.0
        %6812 = vmatpush.msra.mxu0 0.0
        %6813 = vmatpush.msra.mxu0 %v6795
        %6814 = vmatpush.msra.mxu0 %v6794
        %6815 = vmatpush.msra.mxu0 %v6793
        %6816 = vmatpush.msra.mxu0 %v6792
        %6817 = vmatmul.f32.gmra.mxu0 %v6799
        %v6818 = vpop.f32.mrf.mxu0
        %v6819 = vadd.f32 %v6797, %v6818
        %6820 = vdwg.mxu0
        %s6821 = scalar_lea.vmem %s2, 384
        %v6822 = vld [vmem:[%s6821] sm:$0xff]
        %v6823 = vld [vmem:[%s6821 + $0x8] sm:$0xff]
        %v6824 = vld [vmem:[%s6821 + $0x10] sm:$0xff]
        %v6825 = vld [vmem:[%s6821 + $0x18] sm:$0xff]
        %v6826 = vld [vmem:[%s3 + $0xc] sm:$0x1]
        %v6827 = vperm.slane %v6826, 0
        %6828 = vmatpush.msra.mxu0 0.0
        %6829 = vmatpush.msra.mxu0 0.0
        %6830 = vmatpush.msra.mxu0 0.0
        %6831 = vmatpush.msra.mxu0 0.0
        %6832 = vmatpush.msra.mxu0 0.0
        %6833 = vmatpush.msra.mxu0 0.0
        %6834 = vmatpush.msra.mxu0 0.0
        %6835 = vmatpush.msra.mxu0 0.0
        %6836 = vmatpush.msra.mxu0 0.0
        %6837 = vmatpush.msra.mxu0 0.0
        %6838 = vmatpush.msra.mxu0 0.0
        %6839 = vmatpush.msra.mxu0 0.0
        %6840 = vmatpush.msra.mxu0 %v6825
        %6841 = vmatpush.msra.mxu0 %v6824
        %6842 = vmatpush.msra.mxu0 %v6823
        %6843 = vmatpush.msra.mxu0 %v6822
        %6844 = vmatmul.f32.gmra.mxu0 %v6799
        %v6845 = vpop.f32.mrf.mxu0
        %v6846 = vadd.f32 %v6827, %v6845
        %6847 = vdwg.mxu0
        %v6848 = vsub.f32 0.0, %v6846
        %v6849 = vmul.f32 %v6848, 1.442695
        %v6850 = vpow.pop %v6849
        %v6851 = vadd.f32 %v6850, 1.0
        %v6852 = vrcp.pop %v6851
        %v6853 = vmul.f32 %v6851, %v6852
        %v6854 = vsub.f32 1.0, %v6853
        %v6855 = vmul.f32 %v6852, %v6854
        %v6856 = vadd.f32 %v6852, %v6855
        %vm6857 = vweird.f32 %v6851
        %vm6858 = vweird.f32 %v6852
        %vm6859 = vmor %vm6857, %vm6858
        %v6860 = vsel %vm6859, %v6852, %v6856
        %v6861 = vand.u32 2147483647, %v6851
        %vm6862 = vcmp.eq.f32.partialorder %v6861, 8.507059e+37
        %v6863 = vand.u32 %v6851, 2147483648
        %v6864 = vor.u32 1.1754944e-38, %v6863
        %v6865 = vsel %vm6862, %v6864, %v6860
        %v6866 = vmul.f32 0.9, %v6865
        %v6867 = vadd.f32 %v6866, 0.1
        %6868 = vst.msk [vmem:[%s238] sm:$0xff] %vm469, %v6819
        %6869 = vst.msk [vmem:[%s245] sm:$0xff] %vm469, %v6867
        %s6870 = sand.u32 %s125, 1
        %s6871 = scalar_lea.sflag [#allocation3], %s6870
        %s6872 = sand.u32 %s125, 1
        %s6873 = smul.addr %s6872, 8
        %s6874 = scalar_lea.vmem [#allocation2], %s6873
        %s6875 = sand.u32 %s151, 1
        %s6876 = scalar_lea.sflag [#allocation5], %s6875
        %s6877 = sand.u32 %s151, 1
        %s6878 = smul.addr %s6877, 8
        %s6879 = scalar_lea.vmem [#allocation4], %s6878
        // Predicated region
        $region37: #{latent_encoder.1} parent=35 // pred_check
          %p6880 = pneg %p135
        $region38: #{latent_encoder.1} parent=35 // pred_check_branch
          %6882 = sbr.rel (%p6880) target = $region40
        $region39: #{latent_encoder.1} parent=35 // pred_region
          %6884 = vsyncadd %s6871, 0
          %s6885 = smul.addr %s23, 8
          %s6886 = scalar_lea.hbm %s4, %s6885
          %s6888 = sshll.u32 %s6874, 4
          %s6889 = int_to_ptr.vmem [resolvable:$true] %s6888
          %s6890 = sshll.u32 %s6886, 4
          %s6891 = int_to_ptr.hbm [resolvable:$true] %s6890
          %6893 = dma.vmem_to_hbm [thread:$0]  %s6889, 128, %s6891, %s6871
        $region40: #{latent_encoder.1} parent=35 // pred_fallthru
          _
        // Predicated region
        $region41: #{latent_encoder.1} parent=35 // pred_check
          %p6894 = pneg %p161
        $region42: #{latent_encoder.1} parent=35 // pred_check_branch
          %6896 = sbr.rel (%p6894) target = $region44
        $region43: #{latent_encoder.1} parent=35 // pred_region
          %6898 = vsyncadd %s6876, 0
          %s6899 = smul.addr %s23, 8
          %s6900 = scalar_lea.hbm %s5, %s6899
          %s6902 = sshll.u32 %s6879, 4
          %s6903 = int_to_ptr.vmem [resolvable:$true] %s6902
          %s6904 = sshll.u32 %s6900, 4
          %s6905 = int_to_ptr.hbm [resolvable:$true] %s6904
          %6907 = dma.vmem_to_hbm [thread:$0]  %s6903, 128, %s6905, %s6876
        $region44: #{latent_encoder.1} parent=35 // pred_fallthru
          _
      $region36: #{latent_encoder.1} parent=5 // pred_fallthru
        _
      %p6908 = scmp.le.s32.totalorder 2, %s18
      // Predicated region
      $region45: #{latent_encoder.1} parent=5 // pred_check
        %p6909 = pneg %p6908
      $region46: #{latent_encoder.1} parent=5 // pred_check_branch
        %6911 = sbr.rel (%p6909) target = $region48
      $region47: #{latent_encoder.1} parent=5 // pred_region
        %s6912 = ssub.s32 %s18, 2
        // Predicated region
        $region49: #{latent_encoder.1} parent=47 // pred_check
          %p6913 = pneg %p141
        $region50: #{latent_encoder.1} parent=47 // pred_check_branch
          %6915 = sbr.rel (%p6913) target = $region52
        $region51: #{latent_encoder.1} parent=47 // pred_region
          %s6916 = sand.u32 %s126, 1
          %s6917 = scalar_lea.sflag [#allocation3], %s6916
          %s6918 = sand.u32 %s126, 1
          %s6919 = smul.addr %s6918, 8
          %s6920 = scalar_lea.vmem [#allocation2], %s6919
          %6922 = dma.done %s6917, 128
        $region52: #{latent_encoder.1} parent=47 // pred_fallthru
          _
        // Predicated region
        $region53: #{latent_encoder.1} parent=47 // pred_check
          %p6923 = pneg %p167
        $region54: #{latent_encoder.1} parent=47 // pred_check_branch
          %6925 = sbr.rel (%p6923) target = $region56
        $region55: #{latent_encoder.1} parent=47 // pred_region
          %s6926 = sand.u32 %s152, 1
          %s6927 = scalar_lea.sflag [#allocation5], %s6926
          %s6928 = sand.u32 %s152, 1
          %s6929 = smul.addr %s6928, 8
          %s6930 = scalar_lea.vmem [#allocation4], %s6929
          %6932 = dma.done %s6927, 128
        $region56: #{latent_encoder.1} parent=47 // pred_fallthru
          _
      $region48: #{latent_encoder.1} parent=5 // pred_fallthru
        _
    $region6: #{latent_encoder.1} parent=1 // loop_footer
      %s22 = sadd.s32 1, %s18
    $region7: #{latent_encoder.1} parent=1 // loop_footer_branch
      %17 = sbr.rel target = $region3
    $region8: #{latent_encoder.1} parent=1 // loop_exit
      _
    %6933 = vsyncpa [#allocation3], 1
    %s6934 = scalar_lea.sflag [#allocation3], 1
    %6935 = vsyncpa %s6934, 1
    %6936 = vsyncpa [#allocation5], 1
    %s6937 = scalar_lea.sflag [#allocation5], 1
    %6938 = vsyncpa %s6937, 1

</llo_original>
